<compile_context>
chip_gen: v7x
topology: tpu7x:2x2x1
jax: 0.10.0
libtpu: 0.0.40
codegen_flags: <defaults>
</compile_context>

<pallas_src>
import functools

import jax
import jax.numpy as jnp
from jax.experimental import pallas as pl
from jax.experimental.pallas import tpu as pltpu

EPS = 1e-5  # PyTorch InstanceNorm2d default


# ----------------------------------------------------------------------------
# Pallas kernels
# ----------------------------------------------------------------------------
def _matmul_bias_kernel(a_ref, b_ref, bias_ref, o_ref, acc_ref):
    @pl.when(pl.program_id(2) == 0)
    def _():
        acc_ref[...] = jnp.zeros_like(acc_ref)

    acc_ref[...] += jnp.dot(a_ref[...], b_ref[...],
                            preferred_element_type=jnp.float32)

    @pl.when(pl.program_id(2) == pl.num_programs(2) - 1)
    def _():
        o_ref[...] = (acc_ref[...] + bias_ref[...]).astype(o_ref.dtype)


def matmul_bias(a, w, bias):
    """(M,K) @ (K,N) + bias(N,) -> (M,N) f32.

    bf16 operands on the MXU, f32 accumulation. Tiles go to 256 when the
    problem dimension exceeds 128 (fills the 256-wide MXU on v6e/v7x, matches
    the 128-wide MXU on v5e for small dims), which also minimizes padding.
    """
    M, K = a.shape
    K2, N = w.shape
    assert K == K2
    tm = 256 if M > 128 else 128
    tn = 256 if N > 128 else 128
    tk = 256 if K > 128 else 128
    Mp = pl.cdiv(M, tm) * tm
    Np = pl.cdiv(N, tn) * tn
    Kp = pl.cdiv(K, tk) * tk
    a_p = jnp.pad(a.astype(jnp.bfloat16), ((0, Mp - M), (0, Kp - K)))
    w_p = jnp.pad(w.astype(jnp.bfloat16), ((0, Kp - K), (0, Np - N)))
    b_p = jnp.pad(bias.astype(jnp.float32), (0, Np - N)).reshape(1, Np)

    out = pl.pallas_call(
        _matmul_bias_kernel,
        out_shape=jax.ShapeDtypeStruct((Mp, Np), jnp.float32),
        grid_spec=pltpu.PrefetchScalarGridSpec(
            num_scalar_prefetch=0,
            grid=(Mp // tm, Np // tn, Kp // tk),
            in_specs=[
                pl.BlockSpec((tm, tk), lambda i, j, k: (i, k)),
                pl.BlockSpec((tk, tn), lambda i, j, k: (k, j)),
                pl.BlockSpec((1, tn), lambda i, j, k: (0, j)),
            ],
            out_specs=pl.BlockSpec((tm, tn), lambda i, j, k: (i, j)),
            scratch_shapes=[pltpu.VMEM((tm, tn), jnp.float32)],
        ),
        compiler_params=pltpu.CompilerParams(
            dimension_semantics=("parallel", "parallel", "arbitrary"),
            vmem_limit_bytes=32 * 1024 * 1024,  # safe on v5e/v6e/v7x
        ),
    )(a_p, w_p, b_p)
    return out[:M, :N]


def _instnorm_kernel(x_ref, o_ref, *, relu):
    # block: (1, H*W, C); stats in f32, reduce over the spatial (sublane) axis.
    x = x_ref[0]
    mean = jnp.mean(x, axis=0, keepdims=True)
    cent = x - mean
    var = jnp.mean(cent * cent, axis=0, keepdims=True)
    y = cent * jax.lax.rsqrt(var + EPS)
    if relu:
        y = jnp.maximum(y, 0.0)
    o_ref[0] = y


def _instnorm_residual_kernel(x_ref, res_ref, o_ref):
    x = x_ref[0]
    mean = jnp.mean(x, axis=0, keepdims=True)
    cent = x - mean
    var = jnp.mean(cent * cent, axis=0, keepdims=True)
    o_ref[0] = res_ref[0] + cent * jax.lax.rsqrt(var + EPS)


def instance_norm_nhwc(x, residual=None, relu=False):
    """InstanceNorm2d (affine=False) on NHWC, optional fused ReLU / residual."""
    B, H, W, C = x.shape
    HW = H * W
    x3 = x.reshape(B, HW, C)
    spec = pl.BlockSpec((1, HW, C), lambda b: (b, 0, 0))
    cparams = pltpu.CompilerParams(dimension_semantics=("parallel",))

    if residual is None:
        out = pl.pallas_call(
            functools.partial(_instnorm_kernel, relu=relu),
            out_shape=jax.ShapeDtypeStruct((B, HW, C), jnp.float32),
            grid=(B,),
            in_specs=[spec],
            out_specs=spec,
            compiler_params=cparams,
        )(x3)
    else:
        r3 = residual.reshape(B, HW, C)
        out = pl.pallas_call(
            _instnorm_residual_kernel,
            out_shape=jax.ShapeDtypeStruct((B, HW, C), jnp.float32),
            grid=(B,),
            in_specs=[spec, spec],
            out_specs=spec,
            compiler_params=cparams,
        )(x3, r3)
    return out.reshape(B, H, W, C)


def _fc_tanh_logsoftmax_kernel(x_ref, wt_ref, b_ref, o_ref):
    # x_ref: (B, C, HW); wt_ref: (2, HW); b_ref: (1, 2); o_ref: (B, C, 2)
    # fc1 is tiny (N=2) -> lane-reduce on the VPU instead of a padded MXU call.
    wt = wt_ref[...]
    bias = b_ref[...]
    B = x_ref.shape[0]
    zs = []
    for b in range(B):
        xb = x_ref[b]                                            # (C, HW)
        z0 = jnp.sum(xb * wt[0:1, :], axis=-1, keepdims=True)    # (C, 1)
        z1 = jnp.sum(xb * wt[1:2, :], axis=-1, keepdims=True)    # (C, 1)
        z = jnp.concatenate([z0, z1], axis=-1) + bias            # (C, 2)
        zs.append(jnp.tanh(z))
    # log_softmax over the batch axis (PyTorch dim=None on 3-D -> dim 0)
    m = zs[0]
    for z in zs[1:]:
        m = jnp.maximum(m, z)
    s = jnp.zeros_like(m)
    for z in zs:
        s = s + jnp.exp(z - m)
    lse = m + jnp.log(s)
    for b in range(B):
        o_ref[b] = zs[b] - lse


def fc_tanh_logsoftmax(x_bchw_flat, fc_wT, fc_b):
    """x: (B, C, HW) -> (B, C, 2): fc1 + tanh + log_softmax(dim=0), fused."""
    B, C, HW = x_bchw_flat.shape
    return pl.pallas_call(
        _fc_tanh_logsoftmax_kernel,
        out_shape=jax.ShapeDtypeStruct((B, C, 2), jnp.float32),
    )(x_bchw_flat, fc_wT, fc_b.reshape(1, 2))


# ----------------------------------------------------------------------------
# Glue: padding / im2col / upsample (pure data movement, fused under jit)
# ----------------------------------------------------------------------------
def _im2col_nhwc(x, k, stride):
    """NHWC im2col; column order (di, dj, c) so channels stay lane-dense."""
    B, Hp, Wp, C = x.shape
    Ho = (Hp - k) // stride + 1
    Wo = (Wp - k) // stride + 1
    cols = []
    for di in range(k):
        for dj in range(k):
            cols.append(x[:, di:di + stride * Ho:stride,
                          dj:dj + stride * Wo:stride, :])
    p = jnp.concatenate(cols, axis=-1)            # (B, Ho, Wo, k*k*C)
    return p.reshape(B * Ho * Wo, k * k * C), Ho, Wo


def conv2d_nhwc(x, w2, bias, *, k, stride=1, padding=0, pad_mode="zero"):
    """NHWC conv2d; w2 is pre-transposed to (k*k*Cin, Cout), (di,dj,c) rows."""
    B = x.shape[0]
    if padding > 0:
        mode = "reflect" if pad_mode == "reflect" else "constant"
        x = jnp.pad(x, ((0, 0), (padding, padding), (padding, padding), (0, 0)),
                    mode=mode)
    a, Ho, Wo = _im2col_nhwc(x, k, stride)
    Cout = w2.shape[1]
    out = matmul_bias(a, w2, bias)                # (B*Ho*Wo, Cout)
    return out.reshape(B, Ho, Wo, Cout)           # no transpose needed (NHWC)


def upsample_nearest_2x_nhwc(x):
    # nn.Upsample(scale_factor=2), default mode='nearest'
    # TODO(synk): fold the 2x nearest upsample into the next conv's patch
    #             gather (index_map on the un-upsampled map) to avoid the 4x
    #             materialized activation.
    return jnp.repeat(jnp.repeat(x, 2, axis=1), 2, axis=2)


# ----------------------------------------------------------------------------
# Parameter init (deterministic, PyTorch-like init, weights pre-transposed)
# ----------------------------------------------------------------------------
def _init_conv(key, cout, cin, k):
    kw, kb = jax.random.split(key)
    fan_in = cin * k * k
    bound = 1.0 / (fan_in ** 0.5)
    w = jax.random.uniform(kw, (cout, cin, k, k), jnp.float32, -bound, bound)
    b = jax.random.uniform(kb, (cout,), jnp.float32, -bound, bound)
    # pre-transpose once to im2col layout: rows ordered (di, dj, cin)
    w2 = w.transpose(2, 3, 1, 0).reshape(k * k * cin, cout)
    return w2, b


def init_params(key, channels, num_residual_blocks, fc_in):
    keys = jax.random.split(key, 7 + 2 * num_residual_blocks)
    ki = iter(keys)
    p = {}

    # initial block: ReflectionPad2d(channels) + Conv2d(channels, 64, 7)
    p["c0_w"], p["c0_b"] = _init_conv(next(ki), 64, channels, 7)

    # downsampling: 64 -> 128 -> 256 (3x3, stride 2, pad 1)
    in_f = 64
    for i in range(2):
        out_f = in_f * 2
        p[f"down{i}_w"], p[f"down{i}_b"] = _init_conv(next(ki), out_f, in_f, 3)
        in_f = out_f

    # residual blocks at 256 features
    for i in range(num_residual_blocks):
        p[f"res{i}_w1"], p[f"res{i}_b1"] = _init_conv(next(ki), in_f, in_f, 3)
        p[f"res{i}_w2"], p[f"res{i}_b2"] = _init_conv(next(ki), in_f, in_f, 3)

    # upsampling: 256 -> 128 -> 64 (3x3, stride 1, pad 1 after 2x nearest)
    for i in range(2):
        out_f = in_f // 2
        p[f"up{i}_w"], p[f"up{i}_b"] = _init_conv(next(ki), out_f, in_f, 3)
        in_f = out_f

    # output block: ReflectionPad2d(channels) + Conv2d(64, channels, 7)
    p["cout_w"], p["cout_b"] = _init_conv(next(ki), channels, 64, 7)

    # fc1 (original hard-codes in_features=17664; derived from input here)
    kw, kb = jax.random.split(next(ki))
    bound = 1.0 / (fc_in ** 0.5)
    p["fc_wT"] = jax.random.uniform(kw, (2, fc_in), jnp.float32, -bound, bound)
    p["fc_b"] = jax.random.uniform(kb, (2,), jnp.float32, -bound, bound)
    return p


# ----------------------------------------------------------------------------
# Forward pass (mirrors Net.forward) — fully jitted
# ----------------------------------------------------------------------------
@functools.partial(jax.jit, static_argnames=("num_res",))
def net_forward(params, x_nchw, *, num_res):
    channels = x_nchw.shape[1]
    x = x_nchw.transpose(0, 2, 3, 1)  # NCHW -> NHWC, once at the boundary

    # ReflectionPad2d(channels) + Conv7 + InstanceNorm + ReLU
    h = conv2d_nhwc(x, params["c0_w"], params["c0_b"],
                    k=7, stride=1, padding=channels, pad_mode="reflect")
    h = instance_norm_nhwc(h, relu=True)

    # two downsampling blocks
    for i in range(2):
        h = conv2d_nhwc(h, params[f"down{i}_w"], params[f"down{i}_b"],
                        k=3, stride=2, padding=1)
        h = instance_norm_nhwc(h, relu=True)

    # residual blocks: x + IN(conv(relu(IN(conv(reflpad(x))))))
    for i in range(num_res):
        res = h
        t = conv2d_nhwc(h, params[f"res{i}_w1"], params[f"res{i}_b1"],
                        k=3, stride=1, padding=1, pad_mode="reflect")
        t = instance_norm_nhwc(t, relu=True)
        t = conv2d_nhwc(t, params[f"res{i}_w2"], params[f"res{i}_b2"],
                        k=3, stride=1, padding=1, pad_mode="reflect")
        h = instance_norm_nhwc(t, residual=res)

    # two upsampling blocks
    for i in range(2):
        h = upsample_nearest_2x_nhwc(h)
        h = conv2d_nhwc(h, params[f"up{i}_w"], params[f"up{i}_b"],
                        k=3, stride=1, padding=1)
        h = instance_norm_nhwc(h, relu=True)

    # ReflectionPad2d(channels) + Conv7 (no norm / relu)
    h = conv2d_nhwc(h, params["cout_w"], params["cout_b"],
                    k=7, stride=1, padding=channels, pad_mode="reflect")

    # head: view(B, C, -1) -> fc1 -> tanh -> log_softmax(dim=0), fused kernel
    B, H, W, C = h.shape
    z = h.transpose(0, 3, 1, 2).reshape(B, C, H * W)  # tiny, fused under jit
    return fc_tanh_logsoftmax(z, params["fc_wT"], params["fc_b"])


# ----------------------------------------------------------------------------
if __name__ == "__main__":
    B, C, H, W = 2, 3, 16, 16       # small NCHW input (RGB-like)
    num_residual_blocks = 2

    key = jax.random.PRNGKey(0)
    kx, kp = jax.random.split(key)
    x = jax.random.normal(kx, (B, C, H, W), dtype=jnp.float32)

    # final feature map is (B, C, H, W) for even H,W and channels=3,
    # so fc1 in_features = H*W (original module hard-codes 17664).
    fc_in = H * W
    params = init_params(kp, C, num_residual_blocks, fc_in)

    out = net_forward(params, x, num_res=num_residual_blocks)
    out = jax.block_until_ready(out)

    assert out.shape == (B, C, 2), out.shape
    assert bool(jnp.all(jnp.isfinite(out)))
    # log_softmax over dim 0 => exp-probs sum to 1 along batch axis
    assert bool(jnp.allclose(jnp.sum(jnp.exp(out), axis=0), 1.0, atol=1e-4))
    print("KERNEL_OK")
</pallas_src>

<mosaic_0001>
module attributes {stable_mosaic.version = 11 : i64} {
  func.func @_matmul_bias_kernel(%arg0: i32, %arg1: i32, %arg2: i32, %arg3: memref<256x256xbf16, #tpu.memory_space<vmem>>, %arg4: memref<256x128xbf16, #tpu.memory_space<vmem>>, %arg5: memref<1x128xf32, #tpu.memory_space<vmem>>, %arg6: memref<256x128xf32, #tpu.memory_space<vmem>>, %arg7: memref<256x128xf32, #tpu.memory_space<vmem>>) attributes {dimension_semantics = [#tpu.dimension_semantics<parallel>, #tpu.dimension_semantics<parallel>, #tpu.dimension_semantics<arbitrary>], iteration_bounds = array<i64: 2, 1, 1>, scalar_prefetch = 0 : i64, scratch_operands = 1 : i64, tpu.core_type = #tpu.core_type<tc>, window_params = [{transform_indices = @transform_0, window_bounds = array<i64: 256, 256>}, {transform_indices = @transform_1, window_bounds = array<i64: 256, 128>}, {transform_indices = @transform_2, window_bounds = array<i64: 1, 128>}, {transform_indices = @transform_3, window_bounds = array<i64: 256, 128>}]} {
    %c0_i32 = arith.constant 0 : i32
    %0 = arith.cmpi eq, %arg2, %c0_i32 : i32
    %1 = arith.extui %0 : i1 to i32
    %c0_i32_0 = arith.constant 0 : i32
    %2 = arith.cmpi ne, %1, %c0_i32_0 : i32
    scf.if %2 {
      %cst_10 = arith.constant 0.000000e+00 : f32
      %12 = vector.broadcast %cst_10 : f32 to vector<256x128xf32>
      %c0_11 = arith.constant 0 : index
      %c0_12 = arith.constant 0 : index
      %13 = vector.load %arg7[%c0_11, %c0_12] : memref<256x128xf32, #tpu.memory_space<vmem>>, vector<256x128xf32>
      tpu.vector_store %arg7[%c0_11, %c0_12], %12 {strides = array<i32>} : memref<256x128xf32, #tpu.memory_space<vmem>>, vector<256x128xf32>,
    } else {
    }
    %c0 = arith.constant 0 : index
    %c0_1 = arith.constant 0 : index
    %3 = vector.load %arg7[%c0, %c0_1] : memref<256x128xf32, #tpu.memory_space<vmem>>, vector<256x128xf32>
    %c0_2 = arith.constant 0 : index
    %c0_3 = arith.constant 0 : index
    %4 = vector.load %arg3[%c0_2, %c0_3] : memref<256x256xbf16, #tpu.memory_space<vmem>>, vector<256x256xbf16>
    %c0_4 = arith.constant 0 : index
    %c0_5 = arith.constant 0 : index
    %5 = vector.load %arg4[%c0_4, %c0_5] : memref<256x128xbf16, #tpu.memory_space<vmem>>, vector<256x128xbf16>
    %cst = arith.constant dense<0.000000e+00> : vector<256x128xf32>
    %6 = tpu.matmul %4, %5, %cst {dimension_numbers = #tpu.dot_dimension_numbers<[1], [0], [0], [1], [0, 0, 1, 1], [], []>} : vector<256x256xbf16>, vector<256x128xbf16>, vector<256x128xf32> -> vector<256x128xf32>
    %7 = arith.addf %3, %6 : vector<256x128xf32>
    %c0_6 = arith.constant 0 : index
    %c0_7 = arith.constant 0 : index
    %8 = vector.load %arg7[%c0_6, %c0_7] : memref<256x128xf32, #tpu.memory_space<vmem>>, vector<256x128xf32>
    tpu.vector_store %arg7[%c0_6, %c0_7], %7 {strides = array<i32>} : memref<256x128xf32, #tpu.memory_space<vmem>>, vector<256x128xf32>,
    %c0_i32_8 = arith.constant 0 : i32
    %9 = arith.cmpi eq, %arg2, %c0_i32_8 : i32
    %10 = arith.extui %9 : i1 to i32
    %c0_i32_9 = arith.constant 0 : i32
    %11 = arith.cmpi ne, %10, %c0_i32_9 : i32
    scf.if %11 {
      %c0_10 = arith.constant 0 : index
      %c0_11 = arith.constant 0 : index
      %12 = vector.load %arg7[%c0_10, %c0_11] : memref<256x128xf32, #tpu.memory_space<vmem>>, vector<256x128xf32>
      %c0_12 = arith.constant 0 : index
      %c0_13 = arith.constant 0 : index
      %13 = vector.load %arg5[%c0_12, %c0_13] : memref<1x128xf32, #tpu.memory_space<vmem>>, vector<1x128xf32>
      %14 = vector.broadcast %13 : vector<1x128xf32> to vector<256x128xf32>
      %15 = arith.addf %12, %14 : vector<256x128xf32>
      %c0_14 = arith.constant 0 : index
      %c0_15 = arith.constant 0 : index
      %16 = vector.load %arg6[%c0_14, %c0_15] : memref<256x128xf32, #tpu.memory_space<vmem>>, vector<256x128xf32>
      tpu.vector_store %arg6[%c0_14, %c0_15], %15 {strides = array<i32>} : memref<256x128xf32, #tpu.memory_space<vmem>>, vector<256x128xf32>,
    } else {
    }
    return
  }
  func.func @transform_0(%arg0: i32, %arg1: i32, %arg2: i32) -> (i32, i32) {
    %c0_i32 = arith.constant 0 : i32
    return %arg0, %arg2 : i32, i32
  }
  func.func @transform_1(%arg0: i32, %arg1: i32, %arg2: i32) -> (i32, i32) {
    %c0_i32 = arith.constant 0 : i32
    return %arg2, %arg1 : i32, i32
  }
  func.func @transform_2(%arg0: i32, %arg1: i32, %arg2: i32) -> (i32, i32) {
    %c0_i32 = arith.constant 0 : i32
    %c0_i32_0 = arith.constant 0 : i32
    return %c0_i32, %arg1 : i32, i32
  }
  func.func @transform_3(%arg0: i32, %arg1: i32, %arg2: i32) -> (i32, i32) {
    %c0_i32 = arith.constant 0 : i32
    return %arg0, %arg1 : i32, i32
  }
}

module attributes {stable_mosaic.version = 11 : i64} {
  func.func @_instnorm_kernel(%arg0: i32, %arg1: memref<1x256x64xf32, #tpu.memory_space<vmem>>, %arg2: memref<1x256x64xf32, #tpu.memory_space<vmem>>) attributes {dimension_semantics = [#tpu.dimension_semantics<parallel>], iteration_bounds = array<i64: 2>, scalar_prefetch = 0 : i64, scratch_operands = 0 : i64, tpu.core_type = #tpu.core_type<tc>, window_params = [{transform_indices = @transform_0, window_bounds = array<i64: 1, 256, 64>}, {transform_indices = @transform_1, window_bounds = array<i64: 1, 256, 64>}]} {
    %c0 = arith.constant 0 : index
    %c0_0 = arith.constant 0 : index
    %c0_1 = arith.constant 0 : index
    %0 = vector.load %arg1[%c0, %c0_0, %c0_1] : memref<1x256x64xf32, #tpu.memory_space<vmem>>, vector<1x256x64xf32>
    %1 = vector.shape_cast %0 : vector<1x256x64xf32> to vector<256x64xf32>
    %cst = arith.constant dense<0.000000e+00> : vector<64xf32>
    %2 = vector.multi_reduction <add>, %1, %cst [0] : vector<256x64xf32> to vector<64xf32>
    %3 = vector.shape_cast %2 : vector<64xf32> to vector<1x64xf32>
    %cst_2 = arith.constant 2.560000e+02 : f32
    %4 = vector.broadcast %cst_2 : f32 to vector<1x64xf32>
    %5 = arith.divf %3, %4 : vector<1x64xf32>
    %6 = vector.broadcast %5 : vector<1x64xf32> to vector<256x64xf32>
    %7 = arith.subf %1, %6 : vector<256x64xf32>
    %8 = arith.mulf %7, %7 : vector<256x64xf32>
    %cst_3 = arith.constant dense<0.000000e+00> : vector<64xf32>
    %9 = vector.multi_reduction <add>, %8, %cst_3 [0] : vector<256x64xf32> to vector<64xf32>
    %10 = vector.shape_cast %9 : vector<64xf32> to vector<1x64xf32>
    %cst_4 = arith.constant 2.560000e+02 : f32
    %11 = vector.broadcast %cst_4 : f32 to vector<1x64xf32>
    %12 = arith.divf %10, %11 : vector<1x64xf32>
    %cst_5 = arith.constant 9.99999974E-6 : f32
    %13 = vector.broadcast %cst_5 : f32 to vector<1x64xf32>
    %14 = arith.addf %12, %13 : vector<1x64xf32>
    %15 = math.rsqrt %14 : vector<1x64xf32>
    %16 = vector.broadcast %15 : vector<1x64xf32> to vector<256x64xf32>
    %17 = arith.mulf %7, %16 : vector<256x64xf32>
    %cst_6 = arith.constant 0.000000e+00 : f32
    %18 = vector.broadcast %cst_6 : f32 to vector<256x64xf32>
    %19 = arith.maximumf %17, %18 : vector<256x64xf32>
    %c0_7 = arith.constant 0 : index
    %c0_8 = arith.constant 0 : index
    %c0_9 = arith.constant 0 : index
    %20 = vector.load %arg2[%c0_7, %c0_8, %c0_9] : memref<1x256x64xf32, #tpu.memory_space<vmem>>, vector<1x256x64xf32>
    %21 = vector.shape_cast %20 : vector<1x256x64xf32> to vector<256x64xf32>
    %22 = vector.shape_cast %19 : vector<256x64xf32> to vector<1x256x64xf32>
    tpu.vector_store %arg2[%c0_7, %c0_8, %c0_9], %22 {strides = array<i32>} : memref<1x256x64xf32, #tpu.memory_space<vmem>>, vector<1x256x64xf32>,
    return
  }
  func.func @transform_0(%arg0: i32) -> (i32, i32, i32) {
    %c0_i32 = arith.constant 0 : i32
    %c0_i32_0 = arith.constant 0 : i32
    %c0_i32_1 = arith.constant 0 : i32
    return %arg0, %c0_i32, %c0_i32_0 : i32, i32, i32
  }
  func.func @transform_1(%arg0: i32) -> (i32, i32, i32) {
    %c0_i32 = arith.constant 0 : i32
    %c0_i32_0 = arith.constant 0 : i32
    %c0_i32_1 = arith.constant 0 : i32
    return %arg0, %c0_i32, %c0_i32_0 : i32, i32, i32
  }
}

module attributes {stable_mosaic.version = 11 : i64} {
  func.func @_matmul_bias_kernel(%arg0: i32, %arg1: i32, %arg2: i32, %arg3: memref<128x256xbf16, #tpu.memory_space<vmem>>, %arg4: memref<256x128xbf16, #tpu.memory_space<vmem>>, %arg5: memref<1x128xf32, #tpu.memory_space<vmem>>, %arg6: memref<128x128xf32, #tpu.memory_space<vmem>>, %arg7: memref<128x128xf32, #tpu.memory_space<vmem>>) attributes {dimension_semantics = [#tpu.dimension_semantics<parallel>, #tpu.dimension_semantics<parallel>, #tpu.dimension_semantics<arbitrary>], iteration_bounds = array<i64: 1, 1, 3>, scalar_prefetch = 0 : i64, scratch_operands = 1 : i64, tpu.core_type = #tpu.core_type<tc>, window_params = [{transform_indices = @transform_0, window_bounds = array<i64: 128, 256>}, {transform_indices = @transform_1, window_bounds = array<i64: 256, 128>}, {transform_indices = @transform_2, window_bounds = array<i64: 1, 128>}, {transform_indices = @transform_3, window_bounds = array<i64: 128, 128>}]} {
    %c0_i32 = arith.constant 0 : i32
    %0 = arith.cmpi eq, %arg2, %c0_i32 : i32
    %1 = arith.extui %0 : i1 to i32
    %c0_i32_0 = arith.constant 0 : i32
    %2 = arith.cmpi ne, %1, %c0_i32_0 : i32
    scf.if %2 {
      %cst_9 = arith.constant 0.000000e+00 : f32
      %12 = vector.broadcast %cst_9 : f32 to vector<128x128xf32>
      %c0_10 = arith.constant 0 : index
      %c0_11 = arith.constant 0 : index
      %13 = vector.load %arg7[%c0_10, %c0_11] : memref<128x128xf32, #tpu.memory_space<vmem>>, vector<128x128xf32>
      tpu.vector_store %arg7[%c0_10, %c0_11], %12 {strides = array<i32>} : memref<128x128xf32, #tpu.memory_space<vmem>>, vector<128x128xf32>,
    } else {
    }
    %c0 = arith.constant 0 : index
    %c0_1 = arith.constant 0 : index
    %3 = vector.load %arg7[%c0, %c0_1] : memref<128x128xf32, #tpu.memory_space<vmem>>, vector<128x128xf32>
    %c0_2 = arith.constant 0 : index
    %c0_3 = arith.constant 0 : index
    %4 = vector.load %arg3[%c0_2, %c0_3] : memref<128x256xbf16, #tpu.memory_space<vmem>>, vector<128x256xbf16>
    %c0_4 = arith.constant 0 : index
    %c0_5 = arith.constant 0 : index
    %5 = vector.load %arg4[%c0_4, %c0_5] : memref<256x128xbf16, #tpu.memory_space<vmem>>, vector<256x128xbf16>
    %cst = arith.constant dense<0.000000e+00> : vector<128x128xf32>
    %6 = tpu.matmul %4, %5, %cst {dimension_numbers = #tpu.dot_dimension_numbers<[1], [0], [0], [1], [0, 0, 1, 1], [], []>} : vector<128x256xbf16>, vector<256x128xbf16>, vector<128x128xf32> -> vector<128x128xf32>
    %7 = arith.addf %3, %6 : vector<128x128xf32>
    %c0_6 = arith.constant 0 : index
    %c0_7 = arith.constant 0 : index
    %8 = vector.load %arg7[%c0_6, %c0_7] : memref<128x128xf32, #tpu.memory_space<vmem>>, vector<128x128xf32>
    tpu.vector_store %arg7[%c0_6, %c0_7], %7 {strides = array<i32>} : memref<128x128xf32, #tpu.memory_space<vmem>>, vector<128x128xf32>,
    %c2_i32 = arith.constant 2 : i32
    %9 = arith.cmpi eq, %arg2, %c2_i32 : i32
    %10 = arith.extui %9 : i1 to i32
    %c0_i32_8 = arith.constant 0 : i32
    %11 = arith.cmpi ne, %10, %c0_i32_8 : i32
    scf.if %11 {
      %c0_9 = arith.constant 0 : index
      %c0_10 = arith.constant 0 : index
      %12 = vector.load %arg7[%c0_9, %c0_10] : memref<128x128xf32, #tpu.memory_space<vmem>>, vector<128x128xf32>
      %c0_11 = arith.constant 0 : index
      %c0_12 = arith.constant 0 : index
      %13 = vector.load %arg5[%c0_11, %c0_12] : memref<1x128xf32, #tpu.memory_space<vmem>>, vector<1x128xf32>
      %14 = vector.broadcast %13 : vector<1x128xf32> to vector<128x128xf32>
      %15 = arith.addf %12, %14 : vector<128x128xf32>
      %c0_13 = arith.constant 0 : index
      %c0_14 = arith.constant 0 : index
      %16 = vector.load %arg6[%c0_13, %c0_14] : memref<128x128xf32, #tpu.memory_space<vmem>>, vector<128x128xf32>
      tpu.vector_store %arg6[%c0_13, %c0_14], %15 {strides = array<i32>} : memref<128x128xf32, #tpu.memory_space<vmem>>, vector<128x128xf32>,
    } else {
    }
    return
  }
  func.func @transform_0(%arg0: i32, %arg1: i32, %arg2: i32) -> (i32, i32) {
    %c0_i32 = arith.constant 0 : i32
    return %arg0, %arg2 : i32, i32
  }
  func.func @transform_1(%arg0: i32, %arg1: i32, %arg2: i32) -> (i32, i32) {
    %c0_i32 = arith.constant 0 : i32
    return %arg2, %arg1 : i32, i32
  }
  func.func @transform_2(%arg0: i32, %arg1: i32, %arg2: i32) -> (i32, i32) {
    %c0_i32 = arith.constant 0 : i32
    %c0_i32_0 = arith.constant 0 : i32
    return %c0_i32, %arg1 : i32, i32
  }
  func.func @transform_3(%arg0: i32, %arg1: i32, %arg2: i32) -> (i32, i32) {
    %c0_i32 = arith.constant 0 : i32
    return %arg0, %arg1 : i32, i32
  }
}

module attributes {stable_mosaic.version = 11 : i64} {
  func.func @_instnorm_kernel(%arg0: i32, %arg1: memref<1x64x128xf32, #tpu.memory_space<vmem>>, %arg2: memref<1x64x128xf32, #tpu.memory_space<vmem>>) attributes {dimension_semantics = [#tpu.dimension_semantics<parallel>], iteration_bounds = array<i64: 2>, scalar_prefetch = 0 : i64, scratch_operands = 0 : i64, tpu.core_type = #tpu.core_type<tc>, window_params = [{transform_indices = @transform_0, window_bounds = array<i64: 1, 64, 128>}, {transform_indices = @transform_1, window_bounds = array<i64: 1, 64, 128>}]} {
    %c0 = arith.constant 0 : index
    %c0_0 = arith.constant 0 : index
    %c0_1 = arith.constant 0 : index
    %0 = vector.load %arg1[%c0, %c0_0, %c0_1] : memref<1x64x128xf32, #tpu.memory_space<vmem>>, vector<1x64x128xf32>
    %1 = vector.shape_cast %0 : vector<1x64x128xf32> to vector<64x128xf32>
    %cst = arith.constant dense<0.000000e+00> : vector<128xf32>
    %2 = vector.multi_reduction <add>, %1, %cst [0] : vector<64x128xf32> to vector<128xf32>
    %3 = vector.shape_cast %2 : vector<128xf32> to vector<1x128xf32>
    %cst_2 = arith.constant 6.400000e+01 : f32
    %4 = vector.broadcast %cst_2 : f32 to vector<1x128xf32>
    %5 = arith.divf %3, %4 : vector<1x128xf32>
    %6 = vector.broadcast %5 : vector<1x128xf32> to vector<64x128xf32>
    %7 = arith.subf %1, %6 : vector<64x128xf32>
    %8 = arith.mulf %7, %7 : vector<64x128xf32>
    %cst_3 = arith.constant dense<0.000000e+00> : vector<128xf32>
    %9 = vector.multi_reduction <add>, %8, %cst_3 [0] : vector<64x128xf32> to vector<128xf32>
    %10 = vector.shape_cast %9 : vector<128xf32> to vector<1x128xf32>
    %cst_4 = arith.constant 6.400000e+01 : f32
    %11 = vector.broadcast %cst_4 : f32 to vector<1x128xf32>
    %12 = arith.divf %10, %11 : vector<1x128xf32>
    %cst_5 = arith.constant 9.99999974E-6 : f32
    %13 = vector.broadcast %cst_5 : f32 to vector<1x128xf32>
    %14 = arith.addf %12, %13 : vector<1x128xf32>
    %15 = math.rsqrt %14 : vector<1x128xf32>
    %16 = vector.broadcast %15 : vector<1x128xf32> to vector<64x128xf32>
    %17 = arith.mulf %7, %16 : vector<64x128xf32>
    %cst_6 = arith.constant 0.000000e+00 : f32
    %18 = vector.broadcast %cst_6 : f32 to vector<64x128xf32>
    %19 = arith.maximumf %17, %18 : vector<64x128xf32>
    %c0_7 = arith.constant 0 : index
    %c0_8 = arith.constant 0 : index
    %c0_9 = arith.constant 0 : index
    %20 = vector.load %arg2[%c0_7, %c0_8, %c0_9] : memref<1x64x128xf32, #tpu.memory_space<vmem>>, vector<1x64x128xf32>
    %21 = vector.shape_cast %20 : vector<1x64x128xf32> to vector<64x128xf32>
    %22 = vector.shape_cast %19 : vector<64x128xf32> to vector<1x64x128xf32>
    tpu.vector_store %arg2[%c0_7, %c0_8, %c0_9], %22 {strides = array<i32>} : memref<1x64x128xf32, #tpu.memory_space<vmem>>, vector<1x64x128xf32>,
    return
  }
  func.func @transform_0(%arg0: i32) -> (i32, i32, i32) {
    %c0_i32 = arith.constant 0 : i32
    %c0_i32_0 = arith.constant 0 : i32
    %c0_i32_1 = arith.constant 0 : i32
    return %arg0, %c0_i32, %c0_i32_0 : i32, i32, i32
  }
  func.func @transform_1(%arg0: i32) -> (i32, i32, i32) {
    %c0_i32 = arith.constant 0 : i32
    %c0_i32_0 = arith.constant 0 : i32
    %c0_i32_1 = arith.constant 0 : i32
    return %arg0, %c0_i32, %c0_i32_0 : i32, i32, i32
  }
}

module attributes {stable_mosaic.version = 11 : i64} {
  func.func @_matmul_bias_kernel(%arg0: i32, %arg1: i32, %arg2: i32, %arg3: memref<128x256xbf16, #tpu.memory_space<vmem>>, %arg4: memref<256x256xbf16, #tpu.memory_space<vmem>>, %arg5: memref<1x256xf32, #tpu.memory_space<vmem>>, %arg6: memref<128x256xf32, #tpu.memory_space<vmem>>, %arg7: memref<128x256xf32, #tpu.memory_space<vmem>>) attributes {dimension_semantics = [#tpu.dimension_semantics<parallel>, #tpu.dimension_semantics<parallel>, #tpu.dimension_semantics<arbitrary>], iteration_bounds = array<i64: 1, 1, 5>, scalar_prefetch = 0 : i64, scratch_operands = 1 : i64, tpu.core_type = #tpu.core_type<tc>, window_params = [{transform_indices = @transform_0, window_bounds = array<i64: 128, 256>}, {transform_indices = @transform_1, window_bounds = array<i64: 256, 256>}, {transform_indices = @transform_2, window_bounds = array<i64: 1, 256>}, {transform_indices = @transform_3, window_bounds = array<i64: 128, 256>}]} {
    %c0_i32 = arith.constant 0 : i32
    %0 = arith.cmpi eq, %arg2, %c0_i32 : i32
    %1 = arith.extui %0 : i1 to i32
    %c0_i32_0 = arith.constant 0 : i32
    %2 = arith.cmpi ne, %1, %c0_i32_0 : i32
    scf.if %2 {
      %cst_9 = arith.constant 0.000000e+00 : f32
      %12 = vector.broadcast %cst_9 : f32 to vector<128x256xf32>
      %c0_10 = arith.constant 0 : index
      %c0_11 = arith.constant 0 : index
      %13 = vector.load %arg7[%c0_10, %c0_11] : memref<128x256xf32, #tpu.memory_space<vmem>>, vector<128x256xf32>
      tpu.vector_store %arg7[%c0_10, %c0_11], %12 {strides = array<i32>} : memref<128x256xf32, #tpu.memory_space<vmem>>, vector<128x256xf32>,
    } else {
    }
    %c0 = arith.constant 0 : index
    %c0_1 = arith.constant 0 : index
    %3 = vector.load %arg7[%c0, %c0_1] : memref<128x256xf32, #tpu.memory_space<vmem>>, vector<128x256xf32>
    %c0_2 = arith.constant 0 : index
    %c0_3 = arith.constant 0 : index
    %4 = vector.load %arg3[%c0_2, %c0_3] : memref<128x256xbf16, #tpu.memory_space<vmem>>, vector<128x256xbf16>
    %c0_4 = arith.constant 0 : index
    %c0_5 = arith.constant 0 : index
    %5 = vector.load %arg4[%c0_4, %c0_5] : memref<256x256xbf16, #tpu.memory_space<vmem>>, vector<256x256xbf16>
    %cst = arith.constant dense<0.000000e+00> : vector<128x256xf32>
    %6 = tpu.matmul %4, %5, %cst {dimension_numbers = #tpu.dot_dimension_numbers<[1], [0], [0], [1], [0, 0, 1, 1], [], []>} : vector<128x256xbf16>, vector<256x256xbf16>, vector<128x256xf32> -> vector<128x256xf32>
    %7 = arith.addf %3, %6 : vector<128x256xf32>
    %c0_6 = arith.constant 0 : index
    %c0_7 = arith.constant 0 : index
    %8 = vector.load %arg7[%c0_6, %c0_7] : memref<128x256xf32, #tpu.memory_space<vmem>>, vector<128x256xf32>
    tpu.vector_store %arg7[%c0_6, %c0_7], %7 {strides = array<i32>} : memref<128x256xf32, #tpu.memory_space<vmem>>, vector<128x256xf32>,
    %c4_i32 = arith.constant 4 : i32
    %9 = arith.cmpi eq, %arg2, %c4_i32 : i32
    %10 = arith.extui %9 : i1 to i32
    %c0_i32_8 = arith.constant 0 : i32
    %11 = arith.cmpi ne, %10, %c0_i32_8 : i32
    scf.if %11 {
      %c0_9 = arith.constant 0 : index
      %c0_10 = arith.constant 0 : index
      %12 = vector.load %arg7[%c0_9, %c0_10] : memref<128x256xf32, #tpu.memory_space<vmem>>, vector<128x256xf32>
      %c0_11 = arith.constant 0 : index
      %c0_12 = arith.constant 0 : index
      %13 = vector.load %arg5[%c0_11, %c0_12] : memref<1x256xf32, #tpu.memory_space<vmem>>, vector<1x256xf32>
      %14 = vector.broadcast %13 : vector<1x256xf32> to vector<128x256xf32>
      %15 = arith.addf %12, %14 : vector<128x256xf32>
      %c0_13 = arith.constant 0 : index
      %c0_14 = arith.constant 0 : index
      %16 = vector.load %arg6[%c0_13, %c0_14] : memref<128x256xf32, #tpu.memory_space<vmem>>, vector<128x256xf32>
      tpu.vector_store %arg6[%c0_13, %c0_14], %15 {strides = array<i32>} : memref<128x256xf32, #tpu.memory_space<vmem>>, vector<128x256xf32>,
    } else {
    }
    return
  }
  func.func @transform_0(%arg0: i32, %arg1: i32, %arg2: i32) -> (i32, i32) {
    %c0_i32 = arith.constant 0 : i32
    return %arg0, %arg2 : i32, i32
  }
  func.func @transform_1(%arg0: i32, %arg1: i32, %arg2: i32) -> (i32, i32) {
    %c0_i32 = arith.constant 0 : i32
    return %arg2, %arg1 : i32, i32
  }
  func.func @transform_2(%arg0: i32, %arg1: i32, %arg2: i32) -> (i32, i32) {
    %c0_i32 = arith.constant 0 : i32
    %c0_i32_0 = arith.constant 0 : i32
    return %c0_i32, %arg1 : i32, i32
  }
  func.func @transform_3(%arg0: i32, %arg1: i32, %arg2: i32) -> (i32, i32) {
    %c0_i32 = arith.constant 0 : i32
    return %arg0, %arg1 : i32, i32
  }
}

module attributes {stable_mosaic.version = 11 : i64} {
  func.func @_instnorm_kernel(%arg0: i32, %arg1: memref<1x16x256xf32, #tpu.memory_space<vmem>>, %arg2: memref<1x16x256xf32, #tpu.memory_space<vmem>>) attributes {dimension_semantics = [#tpu.dimension_semantics<parallel>], iteration_bounds = array<i64: 2>, scalar_prefetch = 0 : i64, scratch_operands = 0 : i64, tpu.core_type = #tpu.core_type<tc>, window_params = [{transform_indices = @transform_0, window_bounds = array<i64: 1, 16, 256>}, {transform_indices = @transform_1, window_bounds = array<i64: 1, 16, 256>}]} {
    %c0 = arith.constant 0 : index
    %c0_0 = arith.constant 0 : index
    %c0_1 = arith.constant 0 : index
    %0 = vector.load %arg1[%c0, %c0_0, %c0_1] : memref<1x16x256xf32, #tpu.memory_space<vmem>>, vector<1x16x256xf32>
    %1 = vector.shape_cast %0 : vector<1x16x256xf32> to vector<16x256xf32>
    %cst = arith.constant dense<0.000000e+00> : vector<256xf32>
    %2 = vector.multi_reduction <add>, %1, %cst [0] : vector<16x256xf32> to vector<256xf32>
    %3 = vector.shape_cast %2 : vector<256xf32> to vector<1x256xf32>
    %cst_2 = arith.constant 1.600000e+01 : f32
    %4 = vector.broadcast %cst_2 : f32 to vector<1x256xf32>
    %5 = arith.divf %3, %4 : vector<1x256xf32>
    %6 = vector.broadcast %5 : vector<1x256xf32> to vector<16x256xf32>
    %7 = arith.subf %1, %6 : vector<16x256xf32>
    %8 = arith.mulf %7, %7 : vector<16x256xf32>
    %cst_3 = arith.constant dense<0.000000e+00> : vector<256xf32>
    %9 = vector.multi_reduction <add>, %8, %cst_3 [0] : vector<16x256xf32> to vector<256xf32>
    %10 = vector.shape_cast %9 : vector<256xf32> to vector<1x256xf32>
    %cst_4 = arith.constant 1.600000e+01 : f32
    %11 = vector.broadcast %cst_4 : f32 to vector<1x256xf32>
    %12 = arith.divf %10, %11 : vector<1x256xf32>
    %cst_5 = arith.constant 9.99999974E-6 : f32
    %13 = vector.broadcast %cst_5 : f32 to vector<1x256xf32>
    %14 = arith.addf %12, %13 : vector<1x256xf32>
    %15 = math.rsqrt %14 : vector<1x256xf32>
    %16 = vector.broadcast %15 : vector<1x256xf32> to vector<16x256xf32>
    %17 = arith.mulf %7, %16 : vector<16x256xf32>
    %cst_6 = arith.constant 0.000000e+00 : f32
    %18 = vector.broadcast %cst_6 : f32 to vector<16x256xf32>
    %19 = arith.maximumf %17, %18 : vector<16x256xf32>
    %c0_7 = arith.constant 0 : index
    %c0_8 = arith.constant 0 : index
    %c0_9 = arith.constant 0 : index
    %20 = vector.load %arg2[%c0_7, %c0_8, %c0_9] : memref<1x16x256xf32, #tpu.memory_space<vmem>>, vector<1x16x256xf32>
    %21 = vector.shape_cast %20 : vector<1x16x256xf32> to vector<16x256xf32>
    %22 = vector.shape_cast %19 : vector<16x256xf32> to vector<1x16x256xf32>
    tpu.vector_store %arg2[%c0_7, %c0_8, %c0_9], %22 {strides = array<i32>} : memref<1x16x256xf32, #tpu.memory_space<vmem>>, vector<1x16x256xf32>,
    return
  }
  func.func @transform_0(%arg0: i32) -> (i32, i32, i32) {
    %c0_i32 = arith.constant 0 : i32
    %c0_i32_0 = arith.constant 0 : i32
    %c0_i32_1 = arith.constant 0 : i32
    return %arg0, %c0_i32, %c0_i32_0 : i32, i32, i32
  }
  func.func @transform_1(%arg0: i32) -> (i32, i32, i32) {
    %c0_i32 = arith.constant 0 : i32
    %c0_i32_0 = arith.constant 0 : i32
    %c0_i32_1 = arith.constant 0 : i32
    return %arg0, %c0_i32, %c0_i32_0 : i32, i32, i32
  }
}

module attributes {stable_mosaic.version = 11 : i64} {
  func.func @_matmul_bias_kernel(%arg0: i32, %arg1: i32, %arg2: i32, %arg3: memref<128x256xbf16, #tpu.memory_space<vmem>>, %arg4: memref<256x256xbf16, #tpu.memory_space<vmem>>, %arg5: memref<1x256xf32, #tpu.memory_space<vmem>>, %arg6: memref<128x256xf32, #tpu.memory_space<vmem>>, %arg7: memref<128x256xf32, #tpu.memory_space<vmem>>) attributes {dimension_semantics = [#tpu.dimension_semantics<parallel>, #tpu.dimension_semantics<parallel>, #tpu.dimension_semantics<arbitrary>], iteration_bounds = array<i64: 1, 1, 9>, scalar_prefetch = 0 : i64, scratch_operands = 1 : i64, tpu.core_type = #tpu.core_type<tc>, window_params = [{transform_indices = @transform_0, window_bounds = array<i64: 128, 256>}, {transform_indices = @transform_1, window_bounds = array<i64: 256, 256>}, {transform_indices = @transform_2, window_bounds = array<i64: 1, 256>}, {transform_indices = @transform_3, window_bounds = array<i64: 128, 256>}]} {
    %c0_i32 = arith.constant 0 : i32
    %0 = arith.cmpi eq, %arg2, %c0_i32 : i32
    %1 = arith.extui %0 : i1 to i32
    %c0_i32_0 = arith.constant 0 : i32
    %2 = arith.cmpi ne, %1, %c0_i32_0 : i32
    scf.if %2 {
      %cst_9 = arith.constant 0.000000e+00 : f32
      %12 = vector.broadcast %cst_9 : f32 to vector<128x256xf32>
      %c0_10 = arith.constant 0 : index
      %c0_11 = arith.constant 0 : index
      %13 = vector.load %arg7[%c0_10, %c0_11] : memref<128x256xf32, #tpu.memory_space<vmem>>, vector<128x256xf32>
      tpu.vector_store %arg7[%c0_10, %c0_11], %12 {strides = array<i32>} : memref<128x256xf32, #tpu.memory_space<vmem>>, vector<128x256xf32>,
    } else {
    }
    %c0 = arith.constant 0 : index
    %c0_1 = arith.constant 0 : index
    %3 = vector.load %arg7[%c0, %c0_1] : memref<128x256xf32, #tpu.memory_space<vmem>>, vector<128x256xf32>
    %c0_2 = arith.constant 0 : index
    %c0_3 = arith.constant 0 : index
    %4 = vector.load %arg3[%c0_2, %c0_3] : memref<128x256xbf16, #tpu.memory_space<vmem>>, vector<128x256xbf16>
    %c0_4 = arith.constant 0 : index
    %c0_5 = arith.constant 0 : index
    %5 = vector.load %arg4[%c0_4, %c0_5] : memref<256x256xbf16, #tpu.memory_space<vmem>>, vector<256x256xbf16>
    %cst = arith.constant dense<0.000000e+00> : vector<128x256xf32>
    %6 = tpu.matmul %4, %5, %cst {dimension_numbers = #tpu.dot_dimension_numbers<[1], [0], [0], [1], [0, 0, 1, 1], [], []>} : vector<128x256xbf16>, vector<256x256xbf16>, vector<128x256xf32> -> vector<128x256xf32>
    %7 = arith.addf %3, %6 : vector<128x256xf32>
    %c0_6 = arith.constant 0 : index
    %c0_7 = arith.constant 0 : index
    %8 = vector.load %arg7[%c0_6, %c0_7] : memref<128x256xf32, #tpu.memory_space<vmem>>, vector<128x256xf32>
    tpu.vector_store %arg7[%c0_6, %c0_7], %7 {strides = array<i32>} : memref<128x256xf32, #tpu.memory_space<vmem>>, vector<128x256xf32>,
    %c8_i32 = arith.constant 8 : i32
    %9 = arith.cmpi eq, %arg2, %c8_i32 : i32
    %10 = arith.extui %9 : i1 to i32
    %c0_i32_8 = arith.constant 0 : i32
    %11 = arith.cmpi ne, %10, %c0_i32_8 : i32
    scf.if %11 {
      %c0_9 = arith.constant 0 : index
      %c0_10 = arith.constant 0 : index
      %12 = vector.load %arg7[%c0_9, %c0_10] : memref<128x256xf32, #tpu.memory_space<vmem>>, vector<128x256xf32>
      %c0_11 = arith.constant 0 : index
      %c0_12 = arith.constant 0 : index
      %13 = vector.load %arg5[%c0_11, %c0_12] : memref<1x256xf32, #tpu.memory_space<vmem>>, vector<1x256xf32>
      %14 = vector.broadcast %13 : vector<1x256xf32> to vector<128x256xf32>
      %15 = arith.addf %12, %14 : vector<128x256xf32>
      %c0_13 = arith.constant 0 : index
      %c0_14 = arith.constant 0 : index
      %16 = vector.load %arg6[%c0_13, %c0_14] : memref<128x256xf32, #tpu.memory_space<vmem>>, vector<128x256xf32>
      tpu.vector_store %arg6[%c0_13, %c0_14], %15 {strides = array<i32>} : memref<128x256xf32, #tpu.memory_space<vmem>>, vector<128x256xf32>,
    } else {
    }
    return
  }
  func.func @transform_0(%arg0: i32, %arg1: i32, %arg2: i32) -> (i32, i32) {
    %c0_i32 = arith.constant 0 : i32
    return %arg0, %arg2 : i32, i32
  }
  func.func @transform_1(%arg0: i32, %arg1: i32, %arg2: i32) -> (i32, i32) {
    %c0_i32 = arith.constant 0 : i32
    return %arg2, %arg1 : i32, i32
  }
  func.func @transform_2(%arg0: i32, %arg1: i32, %arg2: i32) -> (i32, i32) {
    %c0_i32 = arith.constant 0 : i32
    %c0_i32_0 = arith.constant 0 : i32
    return %c0_i32, %arg1 : i32, i32
  }
  func.func @transform_3(%arg0: i32, %arg1: i32, %arg2: i32) -> (i32, i32) {
    %c0_i32 = arith.constant 0 : i32
    return %arg0, %arg1 : i32, i32
  }
}

module attributes {stable_mosaic.version = 11 : i64} {
  func.func @_instnorm_residual_kernel(%arg0: i32, %arg1: memref<1x16x256xf32, #tpu.memory_space<vmem>>, %arg2: memref<1x16x256xf32, #tpu.memory_space<vmem>>, %arg3: memref<1x16x256xf32, #tpu.memory_space<vmem>>) attributes {dimension_semantics = [#tpu.dimension_semantics<parallel>], iteration_bounds = array<i64: 2>, scalar_prefetch = 0 : i64, scratch_operands = 0 : i64, tpu.core_type = #tpu.core_type<tc>, window_params = [{transform_indices = @transform_0, window_bounds = array<i64: 1, 16, 256>}, {transform_indices = @transform_1, window_bounds = array<i64: 1, 16, 256>}, {transform_indices = @transform_2, window_bounds = array<i64: 1, 16, 256>}]} {
    %c0 = arith.constant 0 : index
    %c0_0 = arith.constant 0 : index
    %c0_1 = arith.constant 0 : index
    %0 = vector.load %arg1[%c0, %c0_0, %c0_1] : memref<1x16x256xf32, #tpu.memory_space<vmem>>, vector<1x16x256xf32>
    %1 = vector.shape_cast %0 : vector<1x16x256xf32> to vector<16x256xf32>
    %cst = arith.constant dense<0.000000e+00> : vector<256xf32>
    %2 = vector.multi_reduction <add>, %1, %cst [0] : vector<16x256xf32> to vector<256xf32>
    %3 = vector.shape_cast %2 : vector<256xf32> to vector<1x256xf32>
    %cst_2 = arith.constant 1.600000e+01 : f32
    %4 = vector.broadcast %cst_2 : f32 to vector<1x256xf32>
    %5 = arith.divf %3, %4 : vector<1x256xf32>
    %6 = vector.broadcast %5 : vector<1x256xf32> to vector<16x256xf32>
    %7 = arith.subf %1, %6 : vector<16x256xf32>
    %8 = arith.mulf %7, %7 : vector<16x256xf32>
    %cst_3 = arith.constant dense<0.000000e+00> : vector<256xf32>
    %9 = vector.multi_reduction <add>, %8, %cst_3 [0] : vector<16x256xf32> to vector<256xf32>
    %10 = vector.shape_cast %9 : vector<256xf32> to vector<1x256xf32>
    %cst_4 = arith.constant 1.600000e+01 : f32
    %11 = vector.broadcast %cst_4 : f32 to vector<1x256xf32>
    %12 = arith.divf %10, %11 : vector<1x256xf32>
    %c0_5 = arith.constant 0 : index
    %c0_6 = arith.constant 0 : index
    %c0_7 = arith.constant 0 : index
    %13 = vector.load %arg2[%c0_5, %c0_6, %c0_7] : memref<1x16x256xf32, #tpu.memory_space<vmem>>, vector<1x16x256xf32>
    %14 = vector.shape_cast %13 : vector<1x16x256xf32> to vector<16x256xf32>
    %cst_8 = arith.constant 9.99999974E-6 : f32
    %15 = vector.broadcast %cst_8 : f32 to vector<1x256xf32>
    %16 = arith.addf %12, %15 : vector<1x256xf32>
    %17 = math.rsqrt %16 : vector<1x256xf32>
    %18 = vector.broadcast %17 : vector<1x256xf32> to vector<16x256xf32>
    %19 = arith.mulf %7, %18 : vector<16x256xf32>
    %20 = arith.addf %14, %19 : vector<16x256xf32>
    %c0_9 = arith.constant 0 : index
    %c0_10 = arith.constant 0 : index
    %c0_11 = arith.constant 0 : index
    %21 = vector.load %arg3[%c0_9, %c0_10, %c0_11] : memref<1x16x256xf32, #tpu.memory_space<vmem>>, vector<1x16x256xf32>
    %22 = vector.shape_cast %21 : vector<1x16x256xf32> to vector<16x256xf32>
    %23 = vector.shape_cast %20 : vector<16x256xf32> to vector<1x16x256xf32>
    tpu.vector_store %arg3[%c0_9, %c0_10, %c0_11], %23 {strides = array<i32>} : memref<1x16x256xf32, #tpu.memory_space<vmem>>, vector<1x16x256xf32>,
    return
  }
  func.func @transform_0(%arg0: i32) -> (i32, i32, i32) {
    %c0_i32 = arith.constant 0 : i32
    %c0_i32_0 = arith.constant 0 : i32
    %c0_i32_1 = arith.constant 0 : i32
    return %arg0, %c0_i32, %c0_i32_0 : i32, i32, i32
  }
  func.func @transform_1(%arg0: i32) -> (i32, i32, i32) {
    %c0_i32 = arith.constant 0 : i32
    %c0_i32_0 = arith.constant 0 : i32
    %c0_i32_1 = arith.constant 0 : i32
    return %arg0, %c0_i32, %c0_i32_0 : i32, i32, i32
  }
  func.func @transform_2(%arg0: i32) -> (i32, i32, i32) {
    %c0_i32 = arith.constant 0 : i32
    %c0_i32_0 = arith.constant 0 : i32
    %c0_i32_1 = arith.constant 0 : i32
    return %arg0, %c0_i32, %c0_i32_0 : i32, i32, i32
  }
}

module attributes {stable_mosaic.version = 11 : i64} {
  func.func @_matmul_bias_kernel(%arg0: i32, %arg1: i32, %arg2: i32, %arg3: memref<128x256xbf16, #tpu.memory_space<vmem>>, %arg4: memref<256x128xbf16, #tpu.memory_space<vmem>>, %arg5: memref<1x128xf32, #tpu.memory_space<vmem>>, %arg6: memref<128x128xf32, #tpu.memory_space<vmem>>, %arg7: memref<128x128xf32, #tpu.memory_space<vmem>>) attributes {dimension_semantics = [#tpu.dimension_semantics<parallel>, #tpu.dimension_semantics<parallel>, #tpu.dimension_semantics<arbitrary>], iteration_bounds = array<i64: 1, 1, 9>, scalar_prefetch = 0 : i64, scratch_operands = 1 : i64, tpu.core_type = #tpu.core_type<tc>, window_params = [{transform_indices = @transform_0, window_bounds = array<i64: 128, 256>}, {transform_indices = @transform_1, window_bounds = array<i64: 256, 128>}, {transform_indices = @transform_2, window_bounds = array<i64: 1, 128>}, {transform_indices = @transform_3, window_bounds = array<i64: 128, 128>}]} {
    %c0_i32 = arith.constant 0 : i32
    %0 = arith.cmpi eq, %arg2, %c0_i32 : i32
    %1 = arith.extui %0 : i1 to i32
    %c0_i32_0 = arith.constant 0 : i32
    %2 = arith.cmpi ne, %1, %c0_i32_0 : i32
    scf.if %2 {
      %cst_9 = arith.constant 0.000000e+00 : f32
      %12 = vector.broadcast %cst_9 : f32 to vector<128x128xf32>
      %c0_10 = arith.constant 0 : index
      %c0_11 = arith.constant 0 : index
      %13 = vector.load %arg7[%c0_10, %c0_11] : memref<128x128xf32, #tpu.memory_space<vmem>>, vector<128x128xf32>
      tpu.vector_store %arg7[%c0_10, %c0_11], %12 {strides = array<i32>} : memref<128x128xf32, #tpu.memory_space<vmem>>, vector<128x128xf32>,
    } else {
    }
    %c0 = arith.constant 0 : index
    %c0_1 = arith.constant 0 : index
    %3 = vector.load %arg7[%c0, %c0_1] : memref<128x128xf32, #tpu.memory_space<vmem>>, vector<128x128xf32>
    %c0_2 = arith.constant 0 : index
    %c0_3 = arith.constant 0 : index
    %4 = vector.load %arg3[%c0_2, %c0_3] : memref<128x256xbf16, #tpu.memory_space<vmem>>, vector<128x256xbf16>
    %c0_4 = arith.constant 0 : index
    %c0_5 = arith.constant 0 : index
    %5 = vector.load %arg4[%c0_4, %c0_5] : memref<256x128xbf16, #tpu.memory_space<vmem>>, vector<256x128xbf16>
    %cst = arith.constant dense<0.000000e+00> : vector<128x128xf32>
    %6 = tpu.matmul %4, %5, %cst {dimension_numbers = #tpu.dot_dimension_numbers<[1], [0], [0], [1], [0, 0, 1, 1], [], []>} : vector<128x256xbf16>, vector<256x128xbf16>, vector<128x128xf32> -> vector<128x128xf32>
    %7 = arith.addf %3, %6 : vector<128x128xf32>
    %c0_6 = arith.constant 0 : index
    %c0_7 = arith.constant 0 : index
    %8 = vector.load %arg7[%c0_6, %c0_7] : memref<128x128xf32, #tpu.memory_space<vmem>>, vector<128x128xf32>
    tpu.vector_store %arg7[%c0_6, %c0_7], %7 {strides = array<i32>} : memref<128x128xf32, #tpu.memory_space<vmem>>, vector<128x128xf32>,
    %c8_i32 = arith.constant 8 : i32
    %9 = arith.cmpi eq, %arg2, %c8_i32 : i32
    %10 = arith.extui %9 : i1 to i32
    %c0_i32_8 = arith.constant 0 : i32
    %11 = arith.cmpi ne, %10, %c0_i32_8 : i32
    scf.if %11 {
      %c0_9 = arith.constant 0 : index
      %c0_10 = arith.constant 0 : index
      %12 = vector.load %arg7[%c0_9, %c0_10] : memref<128x128xf32, #tpu.memory_space<vmem>>, vector<128x128xf32>
      %c0_11 = arith.constant 0 : index
      %c0_12 = arith.constant 0 : index
      %13 = vector.load %arg5[%c0_11, %c0_12] : memref<1x128xf32, #tpu.memory_space<vmem>>, vector<1x128xf32>
      %14 = vector.broadcast %13 : vector<1x128xf32> to vector<128x128xf32>
      %15 = arith.addf %12, %14 : vector<128x128xf32>
      %c0_13 = arith.constant 0 : index
      %c0_14 = arith.constant 0 : index
      %16 = vector.load %arg6[%c0_13, %c0_14] : memref<128x128xf32, #tpu.memory_space<vmem>>, vector<128x128xf32>
      tpu.vector_store %arg6[%c0_13, %c0_14], %15 {strides = array<i32>} : memref<128x128xf32, #tpu.memory_space<vmem>>, vector<128x128xf32>,
    } else {
    }
    return
  }
  func.func @transform_0(%arg0: i32, %arg1: i32, %arg2: i32) -> (i32, i32) {
    %c0_i32 = arith.constant 0 : i32
    return %arg0, %arg2 : i32, i32
  }
  func.func @transform_1(%arg0: i32, %arg1: i32, %arg2: i32) -> (i32, i32) {
    %c0_i32 = arith.constant 0 : i32
    return %arg2, %arg1 : i32, i32
  }
  func.func @transform_2(%arg0: i32, %arg1: i32, %arg2: i32) -> (i32, i32) {
    %c0_i32 = arith.constant 0 : i32
    %c0_i32_0 = arith.constant 0 : i32
    return %c0_i32, %arg1 : i32, i32
  }
  func.func @transform_3(%arg0: i32, %arg1: i32, %arg2: i32) -> (i32, i32) {
    %c0_i32 = arith.constant 0 : i32
    return %arg0, %arg1 : i32, i32
  }
}

module attributes {stable_mosaic.version = 11 : i64} {
  func.func @_matmul_bias_kernel(%arg0: i32, %arg1: i32, %arg2: i32, %arg3: memref<256x256xbf16, #tpu.memory_space<vmem>>, %arg4: memref<256x128xbf16, #tpu.memory_space<vmem>>, %arg5: memref<1x128xf32, #tpu.memory_space<vmem>>, %arg6: memref<256x128xf32, #tpu.memory_space<vmem>>, %arg7: memref<256x128xf32, #tpu.memory_space<vmem>>) attributes {dimension_semantics = [#tpu.dimension_semantics<parallel>, #tpu.dimension_semantics<parallel>, #tpu.dimension_semantics<arbitrary>], iteration_bounds = array<i64: 2, 1, 5>, scalar_prefetch = 0 : i64, scratch_operands = 1 : i64, tpu.core_type = #tpu.core_type<tc>, window_params = [{transform_indices = @transform_0, window_bounds = array<i64: 256, 256>}, {transform_indices = @transform_1, window_bounds = array<i64: 256, 128>}, {transform_indices = @transform_2, window_bounds = array<i64: 1, 128>}, {transform_indices = @transform_3, window_bounds = array<i64: 256, 128>}]} {
    %c0_i32 = arith.constant 0 : i32
    %0 = arith.cmpi eq, %arg2, %c0_i32 : i32
    %1 = arith.extui %0 : i1 to i32
    %c0_i32_0 = arith.constant 0 : i32
    %2 = arith.cmpi ne, %1, %c0_i32_0 : i32
    scf.if %2 {
      %cst_9 = arith.constant 0.000000e+00 : f32
      %12 = vector.broadcast %cst_9 : f32 to vector<256x128xf32>
      %c0_10 = arith.constant 0 : index
      %c0_11 = arith.constant 0 : index
      %13 = vector.load %arg7[%c0_10, %c0_11] : memref<256x128xf32, #tpu.memory_space<vmem>>, vector<256x128xf32>
      tpu.vector_store %arg7[%c0_10, %c0_11], %12 {strides = array<i32>} : memref<256x128xf32, #tpu.memory_space<vmem>>, vector<256x128xf32>,
    } else {
    }
    %c0 = arith.constant 0 : index
    %c0_1 = arith.constant 0 : index
    %3 = vector.load %arg7[%c0, %c0_1] : memref<256x128xf32, #tpu.memory_space<vmem>>, vector<256x128xf32>
    %c0_2 = arith.constant 0 : index
    %c0_3 = arith.constant 0 : index
    %4 = vector.load %arg3[%c0_2, %c0_3] : memref<256x256xbf16, #tpu.memory_space<vmem>>, vector<256x256xbf16>
    %c0_4 = arith.constant 0 : index
    %c0_5 = arith.constant 0 : index
    %5 = vector.load %arg4[%c0_4, %c0_5] : memref<256x128xbf16, #tpu.memory_space<vmem>>, vector<256x128xbf16>
    %cst = arith.constant dense<0.000000e+00> : vector<256x128xf32>
    %6 = tpu.matmul %4, %5, %cst {dimension_numbers = #tpu.dot_dimension_numbers<[1], [0], [0], [1], [0, 0, 1, 1], [], []>} : vector<256x256xbf16>, vector<256x128xbf16>, vector<256x128xf32> -> vector<256x128xf32>
    %7 = arith.addf %3, %6 : vector<256x128xf32>
    %c0_6 = arith.constant 0 : index
    %c0_7 = arith.constant 0 : index
    %8 = vector.load %arg7[%c0_6, %c0_7] : memref<256x128xf32, #tpu.memory_space<vmem>>, vector<256x128xf32>
    tpu.vector_store %arg7[%c0_6, %c0_7], %7 {strides = array<i32>} : memref<256x128xf32, #tpu.memory_space<vmem>>, vector<256x128xf32>,
    %c4_i32 = arith.constant 4 : i32
    %9 = arith.cmpi eq, %arg2, %c4_i32 : i32
    %10 = arith.extui %9 : i1 to i32
    %c0_i32_8 = arith.constant 0 : i32
    %11 = arith.cmpi ne, %10, %c0_i32_8 : i32
    scf.if %11 {
      %c0_9 = arith.constant 0 : index
      %c0_10 = arith.constant 0 : index
      %12 = vector.load %arg7[%c0_9, %c0_10] : memref<256x128xf32, #tpu.memory_space<vmem>>, vector<256x128xf32>
      %c0_11 = arith.constant 0 : index
      %c0_12 = arith.constant 0 : index
      %13 = vector.load %arg5[%c0_11, %c0_12] : memref<1x128xf32, #tpu.memory_space<vmem>>, vector<1x128xf32>
      %14 = vector.broadcast %13 : vector<1x128xf32> to vector<256x128xf32>
      %15 = arith.addf %12, %14 : vector<256x128xf32>
      %c0_13 = arith.constant 0 : index
      %c0_14 = arith.constant 0 : index
      %16 = vector.load %arg6[%c0_13, %c0_14] : memref<256x128xf32, #tpu.memory_space<vmem>>, vector<256x128xf32>
      tpu.vector_store %arg6[%c0_13, %c0_14], %15 {strides = array<i32>} : memref<256x128xf32, #tpu.memory_space<vmem>>, vector<256x128xf32>,
    } else {
    }
    return
  }
  func.func @transform_0(%arg0: i32, %arg1: i32, %arg2: i32) -> (i32, i32) {
    %c0_i32 = arith.constant 0 : i32
    return %arg0, %arg2 : i32, i32
  }
  func.func @transform_1(%arg0: i32, %arg1: i32, %arg2: i32) -> (i32, i32) {
    %c0_i32 = arith.constant 0 : i32
    return %arg2, %arg1 : i32, i32
  }
  func.func @transform_2(%arg0: i32, %arg1: i32, %arg2: i32) -> (i32, i32) {
    %c0_i32 = arith.constant 0 : i32
    %c0_i32_0 = arith.constant 0 : i32
    return %c0_i32, %arg1 : i32, i32
  }
  func.func @transform_3(%arg0: i32, %arg1: i32, %arg2: i32) -> (i32, i32) {
    %c0_i32 = arith.constant 0 : i32
    return %arg0, %arg1 : i32, i32
  }
}

module attributes {stable_mosaic.version = 11 : i64} {
  func.func @_matmul_bias_kernel(%arg0: i32, %arg1: i32, %arg2: i32, %arg3: memref<256x256xbf16, #tpu.memory_space<vmem>>, %arg4: memref<256x128xbf16, #tpu.memory_space<vmem>>, %arg5: memref<1x128xf32, #tpu.memory_space<vmem>>, %arg6: memref<256x128xf32, #tpu.memory_space<vmem>>, %arg7: memref<256x128xf32, #tpu.memory_space<vmem>>) attributes {dimension_semantics = [#tpu.dimension_semantics<parallel>, #tpu.dimension_semantics<parallel>, #tpu.dimension_semantics<arbitrary>], iteration_bounds = array<i64: 2, 1, 13>, scalar_prefetch = 0 : i64, scratch_operands = 1 : i64, tpu.core_type = #tpu.core_type<tc>, window_params = [{transform_indices = @transform_0, window_bounds = array<i64: 256, 256>}, {transform_indices = @transform_1, window_bounds = array<i64: 256, 128>}, {transform_indices = @transform_2, window_bounds = array<i64: 1, 128>}, {transform_indices = @transform_3, window_bounds = array<i64: 256, 128>}]} {
    %c0_i32 = arith.constant 0 : i32
    %0 = arith.cmpi eq, %arg2, %c0_i32 : i32
    %1 = arith.extui %0 : i1 to i32
    %c0_i32_0 = arith.constant 0 : i32
    %2 = arith.cmpi ne, %1, %c0_i32_0 : i32
    scf.if %2 {
      %cst_9 = arith.constant 0.000000e+00 : f32
      %12 = vector.broadcast %cst_9 : f32 to vector<256x128xf32>
      %c0_10 = arith.constant 0 : index
      %c0_11 = arith.constant 0 : index
      %13 = vector.load %arg7[%c0_10, %c0_11] : memref<256x128xf32, #tpu.memory_space<vmem>>, vector<256x128xf32>
      tpu.vector_store %arg7[%c0_10, %c0_11], %12 {strides = array<i32>} : memref<256x128xf32, #tpu.memory_space<vmem>>, vector<256x128xf32>,
    } else {
    }
    %c0 = arith.constant 0 : index
    %c0_1 = arith.constant 0 : index
    %3 = vector.load %arg7[%c0, %c0_1] : memref<256x128xf32, #tpu.memory_space<vmem>>, vector<256x128xf32>
    %c0_2 = arith.constant 0 : index
    %c0_3 = arith.constant 0 : index
    %4 = vector.load %arg3[%c0_2, %c0_3] : memref<256x256xbf16, #tpu.memory_space<vmem>>, vector<256x256xbf16>
    %c0_4 = arith.constant 0 : index
    %c0_5 = arith.constant 0 : index
    %5 = vector.load %arg4[%c0_4, %c0_5] : memref<256x128xbf16, #tpu.memory_space<vmem>>, vector<256x128xbf16>
    %cst = arith.constant dense<0.000000e+00> : vector<256x128xf32>
    %6 = tpu.matmul %4, %5, %cst {dimension_numbers = #tpu.dot_dimension_numbers<[1], [0], [0], [1], [0, 0, 1, 1], [], []>} : vector<256x256xbf16>, vector<256x128xbf16>, vector<256x128xf32> -> vector<256x128xf32>
    %7 = arith.addf %3, %6 : vector<256x128xf32>
    %c0_6 = arith.constant 0 : index
    %c0_7 = arith.constant 0 : index
    %8 = vector.load %arg7[%c0_6, %c0_7] : memref<256x128xf32, #tpu.memory_space<vmem>>, vector<256x128xf32>
    tpu.vector_store %arg7[%c0_6, %c0_7], %7 {strides = array<i32>} : memref<256x128xf32, #tpu.memory_space<vmem>>, vector<256x128xf32>,
    %c12_i32 = arith.constant 12 : i32
    %9 = arith.cmpi eq, %arg2, %c12_i32 : i32
    %10 = arith.extui %9 : i1 to i32
    %c0_i32_8 = arith.constant 0 : i32
    %11 = arith.cmpi ne, %10, %c0_i32_8 : i32
    scf.if %11 {
      %c0_9 = arith.constant 0 : index
      %c0_10 = arith.constant 0 : index
      %12 = vector.load %arg7[%c0_9, %c0_10] : memref<256x128xf32, #tpu.memory_space<vmem>>, vector<256x128xf32>
      %c0_11 = arith.constant 0 : index
      %c0_12 = arith.constant 0 : index
      %13 = vector.load %arg5[%c0_11, %c0_12] : memref<1x128xf32, #tpu.memory_space<vmem>>, vector<1x128xf32>
      %14 = vector.broadcast %13 : vector<1x128xf32> to vector<256x128xf32>
      %15 = arith.addf %12, %14 : vector<256x128xf32>
      %c0_13 = arith.constant 0 : index
      %c0_14 = arith.constant 0 : index
      %16 = vector.load %arg6[%c0_13, %c0_14] : memref<256x128xf32, #tpu.memory_space<vmem>>, vector<256x128xf32>
      tpu.vector_store %arg6[%c0_13, %c0_14], %15 {strides = array<i32>} : memref<256x128xf32, #tpu.memory_space<vmem>>, vector<256x128xf32>,
    } else {
    }
    return
  }
  func.func @transform_0(%arg0: i32, %arg1: i32, %arg2: i32) -> (i32, i32) {
    %c0_i32 = arith.constant 0 : i32
    return %arg0, %arg2 : i32, i32
  }
  func.func @transform_1(%arg0: i32, %arg1: i32, %arg2: i32) -> (i32, i32) {
    %c0_i32 = arith.constant 0 : i32
    return %arg2, %arg1 : i32, i32
  }
  func.func @transform_2(%arg0: i32, %arg1: i32, %arg2: i32) -> (i32, i32) {
    %c0_i32 = arith.constant 0 : i32
    %c0_i32_0 = arith.constant 0 : i32
    return %c0_i32, %arg1 : i32, i32
  }
  func.func @transform_3(%arg0: i32, %arg1: i32, %arg2: i32) -> (i32, i32) {
    %c0_i32 = arith.constant 0 : i32
    return %arg0, %arg1 : i32, i32
  }
}

module attributes {stable_mosaic.version = 11 : i64} {
  func.func @_fc_tanh_logsoftmax_kernel(%arg0: memref<2x3x256xf32, #tpu.memory_space<vmem>>, %arg1: memref<2x256xf32, #tpu.memory_space<vmem>>, %arg2: memref<1x2xf32, #tpu.memory_space<vmem>>, %arg3: memref<2x3x2xf32, #tpu.memory_space<vmem>>) attributes {dimension_semantics = [], scalar_prefetch = 0 : i64, scratch_operands = 0 : i64, tpu.core_type = #tpu.core_type<tc>} {
    %c0 = arith.constant 0 : index
    %c0_0 = arith.constant 0 : index
    %0 = vector.load %arg1[%c0, %c0_0] : memref<2x256xf32, #tpu.memory_space<vmem>>, vector<2x256xf32>
    %c0_1 = arith.constant 0 : index
    %c0_2 = arith.constant 0 : index
    %1 = vector.load %arg2[%c0_1, %c0_2] : memref<1x2xf32, #tpu.memory_space<vmem>>, vector<1x2xf32>
    %c0_3 = arith.constant 0 : index
    %c0_4 = arith.constant 0 : index
    %c0_5 = arith.constant 0 : index
    %2 = vector.load %arg0[%c0_3, %c0_4, %c0_5] : memref<2x3x256xf32, #tpu.memory_space<vmem>>, vector<1x3x256xf32>
    %3 = vector.shape_cast %2 : vector<1x3x256xf32> to vector<3x256xf32>
    %4 = vector.extract_strided_slice %0 {offsets = [0, 0], sizes = [1, 256], strides = [1, 1]} : vector<2x256xf32> to vector<1x256xf32>
    %5 = vector.broadcast %4 : vector<1x256xf32> to vector<3x256xf32>
    %6 = arith.mulf %3, %5 : vector<3x256xf32>
    %cst = arith.constant dense<0.000000e+00> : vector<3xf32>
    %7 = vector.multi_reduction <add>, %6, %cst [1] : vector<3x256xf32> to vector<3xf32>
    %8 = vector.shape_cast %7 : vector<3xf32> to vector<3x1xf32>
    %9 = vector.extract_strided_slice %0 {offsets = [1, 0], sizes = [1, 256], strides = [1, 1]} : vector<2x256xf32> to vector<1x256xf32>
    %10 = vector.broadcast %9 : vector<1x256xf32> to vector<3x256xf32>
    %11 = arith.mulf %3, %10 : vector<3x256xf32>
    %cst_6 = arith.constant dense<0.000000e+00> : vector<3xf32>
    %12 = vector.multi_reduction <add>, %11, %cst_6 [1] : vector<3x256xf32> to vector<3xf32>
    %13 = vector.shape_cast %12 : vector<3xf32> to vector<3x1xf32>
    %14 = tpu.concatenate %8, %13 in 1 : vector<3x1xf32>, vector<3x1xf32> -> vector<3x2xf32>
    %15 = vector.broadcast %1 : vector<1x2xf32> to vector<3x2xf32>
    %16 = arith.addf %14, %15 : vector<3x2xf32>
    %17 = math.tanh %16 : vector<3x2xf32>
    %c1 = arith.constant 1 : index
    %c0_7 = arith.constant 0 : index
    %c0_8 = arith.constant 0 : index
    %18 = vector.load %arg0[%c1, %c0_7, %c0_8] : memref<2x3x256xf32, #tpu.memory_space<vmem>>, vector<1x3x256xf32>
    %19 = vector.shape_cast %18 : vector<1x3x256xf32> to vector<3x256xf32>
    %20 = vector.extract_strided_slice %0 {offsets = [0, 0], sizes = [1, 256], strides = [1, 1]} : vector<2x256xf32> to vector<1x256xf32>
    %21 = vector.broadcast %20 : vector<1x256xf32> to vector<3x256xf32>
    %22 = arith.mulf %19, %21 : vector<3x256xf32>
    %cst_9 = arith.constant dense<0.000000e+00> : vector<3xf32>
    %23 = vector.multi_reduction <add>, %22, %cst_9 [1] : vector<3x256xf32> to vector<3xf32>
    %24 = vector.shape_cast %23 : vector<3xf32> to vector<3x1xf32>
    %25 = vector.extract_strided_slice %0 {offsets = [1, 0], sizes = [1, 256], strides = [1, 1]} : vector<2x256xf32> to vector<1x256xf32>
    %26 = vector.broadcast %25 : vector<1x256xf32> to vector<3x256xf32>
    %27 = arith.mulf %19, %26 : vector<3x256xf32>
    %cst_10 = arith.constant dense<0.000000e+00> : vector<3xf32>
    %28 = vector.multi_reduction <add>, %27, %cst_10 [1] : vector<3x256xf32> to vector<3xf32>
    %29 = vector.shape_cast %28 : vector<3xf32> to vector<3x1xf32>
    %30 = tpu.concatenate %24, %29 in 1 : vector<3x1xf32>, vector<3x1xf32> -> vector<3x2xf32>
    %31 = vector.broadcast %1 : vector<1x2xf32> to vector<3x2xf32>
    %32 = arith.addf %30, %31 : vector<3x2xf32>
    %33 = math.tanh %32 : vector<3x2xf32>
    %34 = arith.maximumf %17, %33 : vector<3x2xf32>
    %cst_11 = arith.constant 0.000000e+00 : f32
    %35 = vector.broadcast %cst_11 : f32 to vector<3x2xf32>
    %36 = arith.subf %17, %34 : vector<3x2xf32>
    %37 = math.exp %36 : vector<3x2xf32>
    %38 = arith.addf %35, %37 : vector<3x2xf32>
    %39 = arith.subf %33, %34 : vector<3x2xf32>
    %40 = math.exp %39 : vector<3x2xf32>
    %41 = arith.addf %38, %40 : vector<3x2xf32>
    %42 = math.log %41 : vector<3x2xf32>
    %43 = arith.addf %34, %42 : vector<3x2xf32>
    %44 = arith.subf %17, %43 : vector<3x2xf32>
    %c0_12 = arith.constant 0 : index
    %c0_13 = arith.constant 0 : index
    %c0_14 = arith.constant 0 : index
    %45 = vector.load %arg3[%c0_12, %c0_13, %c0_14] : memref<2x3x2xf32, #tpu.memory_space<vmem>>, vector<1x3x2xf32>
    %46 = vector.shape_cast %45 : vector<1x3x2xf32> to vector<3x2xf32>
    %47 = vector.shape_cast %44 : vector<3x2xf32> to vector<1x3x2xf32>
    tpu.vector_store %arg3[%c0_12, %c0_13, %c0_14], %47 {strides = array<i32>} : memref<2x3x2xf32, #tpu.memory_space<vmem>>, vector<1x3x2xf32>,
    %48 = arith.subf %33, %43 : vector<3x2xf32>
    %c1_15 = arith.constant 1 : index
    %c0_16 = arith.constant 0 : index
    %c0_17 = arith.constant 0 : index
    %49 = vector.load %arg3[%c1_15, %c0_16, %c0_17] : memref<2x3x2xf32, #tpu.memory_space<vmem>>, vector<1x3x2xf32>
    %50 = vector.shape_cast %49 : vector<1x3x2xf32> to vector<3x2xf32>
    %51 = vector.shape_cast %48 : vector<3x2xf32> to vector<1x3x2xf32>
    tpu.vector_store %arg3[%c1_15, %c0_16, %c0_17], %51 {strides = array<i32>} : memref<2x3x2xf32, #tpu.memory_space<vmem>>, vector<1x3x2xf32>,
    return
  }
}

</mosaic_0001>

<llo_original>
// kernel: net_forward.21
$region0: #{net_forward.21}
  #allocation0 [shape = 'u32[]', space=smem, size = 0x4, offset = 0x4, fixed_abs, tag = 'smem constant byte address 0x4 - core index']
  #allocation1 [shape = 'u32[144,128]{1,0:T(1,128)}', space=vmem, size = 0x12000, scoped, tag = 'internal scratch']
  %s0 = inlined_call_operand.vmem [shape: f32[2,256,64], index: 0, kind: input, shape index: {}]
  %s1 = inlined_call_operand.vmem [shape: f32[2,256,64], index: 1, kind: output, shape index: {}]
  %s2 = sld [smem:[#allocation0]]
  $region37: #{net_forward.21} parent=0
    _
  %s4 = ssub.s32 1, %s2
  %s5 = scalar_select 0, %s4, %s2
  loop: start=0, step=1, limit=4
  $region2: #{net_forward.21} parent=0 // loop_pre_header
    _
  $region3: #{net_forward.21} parent=0 // loop_header
    %s7 = sphi 0, %s11
    %p8 = scmp.ge.s32.totalorder %s7, 4
    %s17 = sphi 0, %s19
    %s20 = sphi 0, %s17
    %s21 = sphi 0, %s20
    %s37 = sphi 0, %s21
    %s43 = sphi 0, %s45
    %s46 = sphi 0, %s43
    %s47 = sphi 0, %s46
    %s63 = sphi 0, %s47
  $region4: #{net_forward.21} parent=0 // loop_header_branch
    %10 = sbr.rel (%p8) target = $region8
  $region5: #{net_forward.21} parent=0 // loop_body
    %s12 = ssub.s32 %s7, 1
    %s13 = ssub.s32 %s7, 2
    %s14 = sadd.s32 %s7, 1
    %s15 = ssub.s32 %s7, %s14
    %p16 = scmp.eq.s32.totalorder %s15, 0
    %s18 = sadd.s32 %s17, 1
    %s19 = scalar_select %p16, %s17, %s18
    %p22 = pneg %p16
    %p23 = scmp.eq.s32.totalorder %s7, 1
    %p24 = por %p22, %p23
    %p25 = scmp.ne.s32.totalorder %s17, %s20
    %p26 = scmp.eq.s32.totalorder %s7, 0
    %p27 = por %p25, %p26
    %p28 = scmp.ne.s32.totalorder %s17, %s20
    %p29 = scmp.eq.s32.totalorder %s12, 1
    %p30 = por %p28, %p29
    %p31 = scmp.ne.s32.totalorder %s20, %s21
    %p32 = scmp.eq.s32.totalorder %s12, 0
    %p33 = por %p31, %p32
    %p34 = scmp.ne.s32.totalorder %s20, %s21
    %p35 = scmp.eq.s32.totalorder %s13, 1
    %p36 = por %p34, %p35
    %p38 = scmp.ne.s32.totalorder %s21, %s37
    %p39 = scmp.eq.s32.totalorder %s13, 0
    %p40 = por %p38, %p39
    %s41 = ssub.s32 %s7, %s14
    %p42 = scmp.eq.s32.totalorder %s41, 0
    %s44 = sadd.s32 %s43, 1
    %s45 = scalar_select %p42, %s43, %s44
    %p48 = pneg %p42
    %p49 = scmp.eq.s32.totalorder %s7, 1
    %p50 = por %p48, %p49
    %p51 = scmp.ne.s32.totalorder %s43, %s46
    %p52 = scmp.eq.s32.totalorder %s7, 0
    %p53 = por %p51, %p52
    %p54 = scmp.ne.s32.totalorder %s43, %s46
    %p55 = scmp.eq.s32.totalorder %s12, 1
    %p56 = por %p54, %p55
    %p57 = scmp.ne.s32.totalorder %s46, %s47
    %p58 = scmp.eq.s32.totalorder %s12, 0
    %p59 = por %p57, %p58
    %p60 = scmp.ne.s32.totalorder %s46, %s47
    %p61 = scmp.eq.s32.totalorder %s13, 1
    %p62 = por %p60, %p61
    %p64 = scmp.ne.s32.totalorder %s47, %s63
    %p65 = scmp.eq.s32.totalorder %s13, 0
    %p66 = por %p64, %p65
    %p67 = scmp.le.s32.totalorder 1, %s7
    %p68 = scmp.lt.s32.totalorder %s7, 3
    %p69 = pnand %p67, %p68
    %p70 = pneg %p69
    // Predicated region
    $region9: #{net_forward.21} parent=5 // pred_check
      _
    $region10: #{net_forward.21} parent=5 // pred_check_branch
      %72 = sbr.rel (%p69) target = $region12
    $region11: #{net_forward.21} parent=5 // pred_region
      %s73 = ssub.s32 %s7, 1
    $region12: #{net_forward.21} parent=5 // pred_fallthru
      _
    %p74 = scmp.lt.s32.totalorder %s7, 2
    // Predicated region
    $region13: #{net_forward.21} parent=5 // pred_check
      %p75 = pneg %p74
    $region14: #{net_forward.21} parent=5 // pred_check_branch
      %77 = sbr.rel (%p75) target = $region16
    $region15: #{net_forward.21} parent=5 // pred_region
      // Predicated region
      $region17: #{net_forward.21} parent=15 // pred_check
        %p78 = pneg %p27
      $region18: #{net_forward.21} parent=15 // pred_check_branch
        %80 = sbr.rel (%p78) target = $region20
      $region19: #{net_forward.21} parent=15 // pred_region
        %p81 = scmp.lt.s32.totalorder %s7, 1
        %s82 = scalar_select %p81, %s7, 1
        %s83 = smul.addr %s82, 32
        %s84 = smul.addr %s83, 8
        %s85 = scalar_lea.vmem %s0, %s84
      $region20: #{net_forward.21} parent=15 // pred_fallthru
        _
    $region16: #{net_forward.21} parent=5 // pred_fallthru
      _
    %p86 = scmp.le.s32.totalorder 1, %s7
    %p87 = scmp.lt.s32.totalorder %s7, 3
    %p88 = pnand %p86, %p87
    %p89 = pneg %p88
    // Predicated region
    $region21: #{net_forward.21} parent=5 // pred_check
      _
    $region22: #{net_forward.21} parent=5 // pred_check_branch
      %91 = sbr.rel (%p88) target = $region24
    $region23: #{net_forward.21} parent=5 // pred_region
      %s92 = ssub.s32 %s7, 1
      %p93 = scmp.lt.s32.totalorder %s12, 1
      %s94 = scalar_select %p93, %s12, 1
      %s95 = smul.addr %s94, 32
      %s96 = smul.addr %s95, 8
      %s97 = scalar_lea.vmem %s0, %s96
      %p98 = pneg %p33
      %p99 = pneg %p30
      %p100 = pneg %p59
      %p101 = pneg %p56
      %p102 = scmp.lt.s32.totalorder %s12, 1
      %s103 = scalar_select %p102, %s12, 1
      %s104 = smul.addr %s103, 32
      %s105 = smul.addr %s104, 8
      %s106 = scalar_lea.vmem %s1, %s105
      %p107 = scmp.lt.s32.totalorder %s12, 1
      %s108 = scalar_select %p107, %s12, 1
      %s109 = smul.addr %s108, 32
      %s110 = smul.addr %s109, 8
      %s111 = scalar_lea.vmem %s0, %s110
      %p112 = scmp.lt.s32.totalorder %s12, 1
      %s113 = scalar_select %p112, %s12, 1
      %s114 = smul.addr %s113, 32
      %s115 = smul.addr %s114, 8
      %s116 = scalar_lea.vmem %s1, %s115
      %v117 = vld [vmem:[%s111] sm:$0xff]
      %v118 = vld [vmem:[%s111 + $0x8] sm:$0xff]
      %v119 = vld [vmem:[%s111 + $0x10] sm:$0xff]
      %v120 = vld [vmem:[%s111 + $0x18] sm:$0xff]
      %v121 = vld [vmem:[%s111 + $0x20] sm:$0xff]
      %v122 = vld [vmem:[%s111 + $0x28] sm:$0xff]
      %v123 = vld [vmem:[%s111 + $0x30] sm:$0xff]
      %v124 = vld [vmem:[%s111 + $0x38] sm:$0xff]
      %v125 = vld [vmem:[%s111 + $0x40] sm:$0xff]
      %v126 = vld [vmem:[%s111 + $0x48] sm:$0xff]
      %v127 = vld [vmem:[%s111 + $0x50] sm:$0xff]
      %v128 = vld [vmem:[%s111 + $0x58] sm:$0xff]
      %v129 = vld [vmem:[%s111 + $0x60] sm:$0xff]
      %v130 = vld [vmem:[%s111 + $0x68] sm:$0xff]
      %v131 = vld [vmem:[%s111 + $0x70] sm:$0xff]
      %v132 = vld [vmem:[%s111 + $0x78] sm:$0xff]
      %v133 = vld [vmem:[%s111 + $0x80] sm:$0xff]
      %v134 = vld [vmem:[%s111 + $0x88] sm:$0xff]
      %v135 = vld [vmem:[%s111 + $0x90] sm:$0xff]
      %v136 = vld [vmem:[%s111 + $0x98] sm:$0xff]
      %v137 = vld [vmem:[%s111 + $0xa0] sm:$0xff]
      %v138 = vld [vmem:[%s111 + $0xa8] sm:$0xff]
      %v139 = vld [vmem:[%s111 + $0xb0] sm:$0xff]
      %v140 = vld [vmem:[%s111 + $0xb8] sm:$0xff]
      %v141 = vld [vmem:[%s111 + $0xc0] sm:$0xff]
      %v142 = vld [vmem:[%s111 + $0xc8] sm:$0xff]
      %v143 = vld [vmem:[%s111 + $0xd0] sm:$0xff]
      %v144 = vld [vmem:[%s111 + $0xd8] sm:$0xff]
      %v145 = vld [vmem:[%s111 + $0xe0] sm:$0xff]
      %v146 = vld [vmem:[%s111 + $0xe8] sm:$0xff]
      %v147 = vld [vmem:[%s111 + $0xf0] sm:$0xff]
      %v148 = vld [vmem:[%s111 + $0xf8] sm:$0xff]
      %vm149 = vcmask 523264
      %v150 = vsel %vm149, %v117, 0.0
      %v151 = vsel %vm149, %v118, 0.0
      %v152 = vadd.f32 %v150, %v151
      %v153 = vsel %vm149, %v119, 0.0
      %v154 = vadd.f32 %v152, %v153
      %v155 = vsel %vm149, %v120, 0.0
      %v156 = vadd.f32 %v154, %v155
      %v157 = vsel %vm149, %v121, 0.0
      %v158 = vadd.f32 %v156, %v157
      %v159 = vsel %vm149, %v122, 0.0
      %v160 = vadd.f32 %v158, %v159
      %v161 = vsel %vm149, %v123, 0.0
      %v162 = vadd.f32 %v160, %v161
      %v163 = vsel %vm149, %v124, 0.0
      %v164 = vadd.f32 %v162, %v163
      %v165 = vsel %vm149, %v125, 0.0
      %v166 = vadd.f32 %v164, %v165
      %v167 = vsel %vm149, %v126, 0.0
      %v168 = vadd.f32 %v166, %v167
      %v169 = vsel %vm149, %v127, 0.0
      %v170 = vadd.f32 %v168, %v169
      %v171 = vsel %vm149, %v128, 0.0
      %v172 = vadd.f32 %v170, %v171
      %v173 = vsel %vm149, %v129, 0.0
      %v174 = vadd.f32 %v172, %v173
      %v175 = vsel %vm149, %v130, 0.0
      %v176 = vadd.f32 %v174, %v175
      %v177 = vsel %vm149, %v131, 0.0
      %v178 = vadd.f32 %v176, %v177
      %v179 = vsel %vm149, %v132, 0.0
      %v180 = vadd.f32 %v178, %v179
      %v181 = vsel %vm149, %v133, 0.0
      %v182 = vadd.f32 %v180, %v181
      %v183 = vsel %vm149, %v134, 0.0
      %v184 = vadd.f32 %v182, %v183
      %v185 = vsel %vm149, %v135, 0.0
      %v186 = vadd.f32 %v184, %v185
      %v187 = vsel %vm149, %v136, 0.0
      %v188 = vadd.f32 %v186, %v187
      %v189 = vsel %vm149, %v137, 0.0
      %v190 = vadd.f32 %v188, %v189
      %v191 = vsel %vm149, %v138, 0.0
      %v192 = vadd.f32 %v190, %v191
      %v193 = vsel %vm149, %v139, 0.0
      %v194 = vadd.f32 %v192, %v193
      %v195 = vsel %vm149, %v140, 0.0
      %v196 = vadd.f32 %v194, %v195
      %v197 = vsel %vm149, %v141, 0.0
      %v198 = vadd.f32 %v196, %v197
      %v199 = vsel %vm149, %v142, 0.0
      %v200 = vadd.f32 %v198, %v199
      %v201 = vsel %vm149, %v143, 0.0
      %v202 = vadd.f32 %v200, %v201
      %v203 = vsel %vm149, %v144, 0.0
      %v204 = vadd.f32 %v202, %v203
      %v205 = vsel %vm149, %v145, 0.0
      %v206 = vadd.f32 %v204, %v205
      %v207 = vsel %vm149, %v146, 0.0
      %v208 = vadd.f32 %v206, %v207
      %v209 = vsel %vm149, %v147, 0.0
      %v210 = vadd.f32 %v208, %v209
      %v211 = vsel %vm149, %v148, 0.0
      %v212 = vadd.f32 %v210, %v211
      %v213 = vrot.slane %v212, 4
      %v214 = vadd.f32 %v212, %v213
      %v215 = vrot.slane %v214, 2
      %v216 = vadd.f32 %v214, %v215
      %v217 = vrot.slane %v216, 1
      %v218 = vadd.f32 %v216, %v217
      %v219 = vrcp.pop 256.0
      %v220 = vmul.f32 %v218, %v219
      %v221 = vsub.f32 %v117, %v220
      %v222 = vsub.f32 %v118, %v220
      %v223 = vsub.f32 %v119, %v220
      %v224 = vsub.f32 %v120, %v220
      %v225 = vsub.f32 %v121, %v220
      %v226 = vsub.f32 %v122, %v220
      %v227 = vsub.f32 %v123, %v220
      %v228 = vsub.f32 %v124, %v220
      %v229 = vsub.f32 %v125, %v220
      %v230 = vsub.f32 %v126, %v220
      %v231 = vsub.f32 %v127, %v220
      %v232 = vsub.f32 %v128, %v220
      %v233 = vsub.f32 %v129, %v220
      %v234 = vsub.f32 %v130, %v220
      %v235 = vsub.f32 %v131, %v220
      %v236 = vsub.f32 %v132, %v220
      %v237 = vsub.f32 %v133, %v220
      %v238 = vsub.f32 %v134, %v220
      %v239 = vsub.f32 %v135, %v220
      %v240 = vsub.f32 %v136, %v220
      %v241 = vsub.f32 %v137, %v220
      %v242 = vsub.f32 %v138, %v220
      %v243 = vsub.f32 %v139, %v220
      %v244 = vsub.f32 %v140, %v220
      %v245 = vsub.f32 %v141, %v220
      %v246 = vsub.f32 %v142, %v220
      %v247 = vsub.f32 %v143, %v220
      %v248 = vsub.f32 %v144, %v220
      %v249 = vsub.f32 %v145, %v220
      %v250 = vsub.f32 %v146, %v220
      %v251 = vsub.f32 %v147, %v220
      %v252 = vsub.f32 %v148, %v220
      %v253 = vmul.f32 %v221, %v221
      %v254 = vmul.f32 %v222, %v222
      %v255 = vmul.f32 %v223, %v223
      %v256 = vmul.f32 %v224, %v224
      %v257 = vmul.f32 %v225, %v225
      %v258 = vmul.f32 %v226, %v226
      %v259 = vmul.f32 %v227, %v227
      %v260 = vmul.f32 %v228, %v228
      %v261 = vmul.f32 %v229, %v229
      %v262 = vmul.f32 %v230, %v230
      %v263 = vmul.f32 %v231, %v231
      %v264 = vmul.f32 %v232, %v232
      %v265 = vmul.f32 %v233, %v233
      %v266 = vmul.f32 %v234, %v234
      %v267 = vmul.f32 %v235, %v235
      %v268 = vmul.f32 %v236, %v236
      %v269 = vmul.f32 %v237, %v237
      %v270 = vmul.f32 %v238, %v238
      %v271 = vmul.f32 %v239, %v239
      %v272 = vmul.f32 %v240, %v240
      %v273 = vmul.f32 %v241, %v241
      %v274 = vmul.f32 %v242, %v242
      %v275 = vmul.f32 %v243, %v243
      %v276 = vmul.f32 %v244, %v244
      %v277 = vmul.f32 %v245, %v245
      %v278 = vmul.f32 %v246, %v246
      %v279 = vmul.f32 %v247, %v247
      %v280 = vmul.f32 %v248, %v248
      %v281 = vmul.f32 %v249, %v249
      %v282 = vmul.f32 %v250, %v250
      %v283 = vmul.f32 %v251, %v251
      %v284 = vmul.f32 %v252, %v252
      %v285 = vsel %vm149, %v253, 0.0
      %v286 = vsel %vm149, %v254, 0.0
      %v287 = vadd.f32 %v285, %v286
      %v288 = vsel %vm149, %v255, 0.0
      %v289 = vadd.f32 %v287, %v288
      %v290 = vsel %vm149, %v256, 0.0
      %v291 = vadd.f32 %v289, %v290
      %v292 = vsel %vm149, %v257, 0.0
      %v293 = vadd.f32 %v291, %v292
      %v294 = vsel %vm149, %v258, 0.0
      %v295 = vadd.f32 %v293, %v294
      %v296 = vsel %vm149, %v259, 0.0
      %v297 = vadd.f32 %v295, %v296
      %v298 = vsel %vm149, %v260, 0.0
      %v299 = vadd.f32 %v297, %v298
      %v300 = vsel %vm149, %v261, 0.0
      %v301 = vadd.f32 %v299, %v300
      %v302 = vsel %vm149, %v262, 0.0
      %v303 = vadd.f32 %v301, %v302
      %v304 = vsel %vm149, %v263, 0.0
      %v305 = vadd.f32 %v303, %v304
      %v306 = vsel %vm149, %v264, 0.0
      %v307 = vadd.f32 %v305, %v306
      %v308 = vsel %vm149, %v265, 0.0
      %v309 = vadd.f32 %v307, %v308
      %v310 = vsel %vm149, %v266, 0.0
      %v311 = vadd.f32 %v309, %v310
      %v312 = vsel %vm149, %v267, 0.0
      %v313 = vadd.f32 %v311, %v312
      %v314 = vsel %vm149, %v268, 0.0
      %v315 = vadd.f32 %v313, %v314
      %v316 = vsel %vm149, %v269, 0.0
      %v317 = vadd.f32 %v315, %v316
      %v318 = vsel %vm149, %v270, 0.0
      %v319 = vadd.f32 %v317, %v318
      %v320 = vsel %vm149, %v271, 0.0
      %v321 = vadd.f32 %v319, %v320
      %v322 = vsel %vm149, %v272, 0.0
      %v323 = vadd.f32 %v321, %v322
      %v324 = vsel %vm149, %v273, 0.0
      %v325 = vadd.f32 %v323, %v324
      %v326 = vsel %vm149, %v274, 0.0
      %v327 = vadd.f32 %v325, %v326
      %v328 = vsel %vm149, %v275, 0.0
      %v329 = vadd.f32 %v327, %v328
      %v330 = vsel %vm149, %v276, 0.0
      %v331 = vadd.f32 %v329, %v330
      %v332 = vsel %vm149, %v277, 0.0
      %v333 = vadd.f32 %v331, %v332
      %v334 = vsel %vm149, %v278, 0.0
      %v335 = vadd.f32 %v333, %v334
      %v336 = vsel %vm149, %v279, 0.0
      %v337 = vadd.f32 %v335, %v336
      %v338 = vsel %vm149, %v280, 0.0
      %v339 = vadd.f32 %v337, %v338
      %v340 = vsel %vm149, %v281, 0.0
      %v341 = vadd.f32 %v339, %v340
      %v342 = vsel %vm149, %v282, 0.0
      %v343 = vadd.f32 %v341, %v342
      %v344 = vsel %vm149, %v283, 0.0
      %v345 = vadd.f32 %v343, %v344
      %v346 = vsel %vm149, %v284, 0.0
      %v347 = vadd.f32 %v345, %v346
      %v348 = vrot.slane %v347, 4
      %v349 = vadd.f32 %v347, %v348
      %v350 = vrot.slane %v349, 2
      %v351 = vadd.f32 %v349, %v350
      %v352 = vrot.slane %v351, 1
      %v353 = vadd.f32 %v351, %v352
      %v354 = vmul.f32 %v353, %v219
      %v355 = vadd.f32 %v354, 1e-05
      %v356 = vrsqrt.pop %v355
      %v357 = vmul.f32 %v221, %v356
      %v358 = vmul.f32 %v222, %v356
      %v359 = vmul.f32 %v223, %v356
      %v360 = vmul.f32 %v224, %v356
      %v361 = vmul.f32 %v225, %v356
      %v362 = vmul.f32 %v226, %v356
      %v363 = vmul.f32 %v227, %v356
      %v364 = vmul.f32 %v228, %v356
      %v365 = vmul.f32 %v229, %v356
      %v366 = vmul.f32 %v230, %v356
      %v367 = vmul.f32 %v231, %v356
      %v368 = vmul.f32 %v232, %v356
      %v369 = vmul.f32 %v233, %v356
      %v370 = vmul.f32 %v234, %v356
      %v371 = vmul.f32 %v235, %v356
      %v372 = vmul.f32 %v236, %v356
      %v373 = vmul.f32 %v237, %v356
      %v374 = vmul.f32 %v238, %v356
      %v375 = vmul.f32 %v239, %v356
      %v376 = vmul.f32 %v240, %v356
      %v377 = vmul.f32 %v241, %v356
      %v378 = vmul.f32 %v242, %v356
      %v379 = vmul.f32 %v243, %v356
      %v380 = vmul.f32 %v244, %v356
      %v381 = vmul.f32 %v245, %v356
      %v382 = vmul.f32 %v246, %v356
      %v383 = vmul.f32 %v247, %v356
      %v384 = vmul.f32 %v248, %v356
      %v385 = vmul.f32 %v249, %v356
      %v386 = vmul.f32 %v250, %v356
      %v387 = vmul.f32 %v251, %v356
      %v388 = vmul.f32 %v252, %v356
      %v389 = vmax.f32 %v357, 0.0
      %v390 = vmax.f32 %v358, 0.0
      %v391 = vmax.f32 %v359, 0.0
      %v392 = vmax.f32 %v360, 0.0
      %v393 = vmax.f32 %v361, 0.0
      %v394 = vmax.f32 %v362, 0.0
      %v395 = vmax.f32 %v363, 0.0
      %v396 = vmax.f32 %v364, 0.0
      %v397 = vmax.f32 %v365, 0.0
      %v398 = vmax.f32 %v366, 0.0
      %v399 = vmax.f32 %v367, 0.0
      %v400 = vmax.f32 %v368, 0.0
      %v401 = vmax.f32 %v369, 0.0
      %v402 = vmax.f32 %v370, 0.0
      %v403 = vmax.f32 %v371, 0.0
      %v404 = vmax.f32 %v372, 0.0
      %v405 = vmax.f32 %v373, 0.0
      %v406 = vmax.f32 %v374, 0.0
      %v407 = vmax.f32 %v375, 0.0
      %v408 = vmax.f32 %v376, 0.0
      %v409 = vmax.f32 %v377, 0.0
      %v410 = vmax.f32 %v378, 0.0
      %v411 = vmax.f32 %v379, 0.0
      %v412 = vmax.f32 %v380, 0.0
      %v413 = vmax.f32 %v381, 0.0
      %v414 = vmax.f32 %v382, 0.0
      %v415 = vmax.f32 %v383, 0.0
      %v416 = vmax.f32 %v384, 0.0
      %v417 = vmax.f32 %v385, 0.0
      %v418 = vmax.f32 %v386, 0.0
      %v419 = vmax.f32 %v387, 0.0
      %v420 = vmax.f32 %v388, 0.0
      %421 = vst.msk [vmem:[%s116] sm:$0xff] %vm149, %v389
      %422 = vst.msk [vmem:[%s116 + $0x8] sm:$0xff] %vm149, %v390
      %423 = vst.msk [vmem:[%s116 + $0x10] sm:$0xff] %vm149, %v391
      %424 = vst.msk [vmem:[%s116 + $0x18] sm:$0xff] %vm149, %v392
      %425 = vst.msk [vmem:[%s116 + $0x20] sm:$0xff] %vm149, %v393
      %426 = vst.msk [vmem:[%s116 + $0x28] sm:$0xff] %vm149, %v394
      %427 = vst.msk [vmem:[%s116 + $0x30] sm:$0xff] %vm149, %v395
      %428 = vst.msk [vmem:[%s116 + $0x38] sm:$0xff] %vm149, %v396
      %429 = vst.msk [vmem:[%s116 + $0x40] sm:$0xff] %vm149, %v397
      %430 = vst.msk [vmem:[%s116 + $0x48] sm:$0xff] %vm149, %v398
      %431 = vst.msk [vmem:[%s116 + $0x50] sm:$0xff] %vm149, %v399
      %432 = vst.msk [vmem:[%s116 + $0x58] sm:$0xff] %vm149, %v400
      %433 = vst.msk [vmem:[%s116 + $0x60] sm:$0xff] %vm149, %v401
      %434 = vst.msk [vmem:[%s116 + $0x68] sm:$0xff] %vm149, %v402
      %435 = vst.msk [vmem:[%s116 + $0x70] sm:$0xff] %vm149, %v403
      %436 = vst.msk [vmem:[%s116 + $0x78] sm:$0xff] %vm149, %v404
      %437 = vst.msk [vmem:[%s116 + $0x80] sm:$0xff] %vm149, %v405
      %438 = vst.msk [vmem:[%s116 + $0x88] sm:$0xff] %vm149, %v406
      %439 = vst.msk [vmem:[%s116 + $0x90] sm:$0xff] %vm149, %v407
      %440 = vst.msk [vmem:[%s116 + $0x98] sm:$0xff] %vm149, %v408
      %441 = vst.msk [vmem:[%s116 + $0xa0] sm:$0xff] %vm149, %v409
      %442 = vst.msk [vmem:[%s116 + $0xa8] sm:$0xff] %vm149, %v410
      %443 = vst.msk [vmem:[%s116 + $0xb0] sm:$0xff] %vm149, %v411
      %444 = vst.msk [vmem:[%s116 + $0xb8] sm:$0xff] %vm149, %v412
      %445 = vst.msk [vmem:[%s116 + $0xc0] sm:$0xff] %vm149, %v413
      %446 = vst.msk [vmem:[%s116 + $0xc8] sm:$0xff] %vm149, %v414
      %447 = vst.msk [vmem:[%s116 + $0xd0] sm:$0xff] %vm149, %v415
      %448 = vst.msk [vmem:[%s116 + $0xd8] sm:$0xff] %vm149, %v416
      %449 = vst.msk [vmem:[%s116 + $0xe0] sm:$0xff] %vm149, %v417
      %450 = vst.msk [vmem:[%s116 + $0xe8] sm:$0xff] %vm149, %v418
      %451 = vst.msk [vmem:[%s116 + $0xf0] sm:$0xff] %vm149, %v419
      %452 = vst.msk [vmem:[%s116 + $0xf8] sm:$0xff] %vm149, %v420
      %p453 = scmp.lt.s32.totalorder %s12, 1
      %s454 = scalar_select %p453, %s12, 1
      %s455 = smul.addr %s454, 32
      %s456 = smul.addr %s455, 8
      %s457 = scalar_lea.vmem %s1, %s456
      // Predicated region
      $region25: #{net_forward.21} parent=23 // pred_check
        %p458 = pneg %p56
      $region26: #{net_forward.21} parent=23 // pred_check_branch
        %460 = sbr.rel (%p458) target = $region28
      $region27: #{net_forward.21} parent=23 // pred_region
        _
      $region28: #{net_forward.21} parent=23 // pred_fallthru
        _
    $region24: #{net_forward.21} parent=5 // pred_fallthru
      _
    %p461 = scmp.le.s32.totalorder 2, %s7
    // Predicated region
    $region29: #{net_forward.21} parent=5 // pred_check
      %p462 = pneg %p461
    $region30: #{net_forward.21} parent=5 // pred_check_branch
      %464 = sbr.rel (%p462) target = $region32
    $region31: #{net_forward.21} parent=5 // pred_region
      %s465 = ssub.s32 %s7, 2
      // Predicated region
      $region33: #{net_forward.21} parent=31 // pred_check
        %p466 = pneg %p62
      $region34: #{net_forward.21} parent=31 // pred_check_branch
        %468 = sbr.rel (%p466) target = $region36
      $region35: #{net_forward.21} parent=31 // pred_region
        %p469 = scmp.lt.s32.totalorder %s13, 1
        %s470 = scalar_select %p469, %s13, 1
        %s471 = smul.addr %s470, 32
        %s472 = smul.addr %s471, 8
        %s473 = scalar_lea.vmem %s1, %s472
      $region36: #{net_forward.21} parent=31 // pred_fallthru
        _
    $region32: #{net_forward.21} parent=5 // pred_fallthru
      _
  $region6: #{net_forward.21} parent=0 // loop_footer
    %s11 = sadd.s32 1, %s7
  $region7: #{net_forward.21} parent=0 // loop_footer_branch
    %6 = sbr.rel target = $region3
  $region8: #{net_forward.21} parent=0 // loop_exit
    _

// kernel: net_forward.20
$region0: #{net_forward.20}
  #allocation0 [shape = 'u32[]', space=smem, size = 0x4, offset = 0x4, fixed_abs, tag = 'smem constant byte address 0x4 - core index']
  #allocation1 [shape = 'u32[144,128]{1,0:T(1,128)}', space=vmem, size = 0x12000, scoped, tag = 'internal scratch']
  #allocation2 [shape = 'f32[256,128]{1,0:T(8,128)}', space=vmem, size = 0x20000, scoped, tag = 'scratch operand']
  %s0 = inlined_call_operand.vmem [shape: bf16[512,256], index: 0, kind: input, shape index: {}]
  %s1 = inlined_call_operand.vmem [shape: bf16[256,128], index: 1, kind: input, shape index: {}]
  %s2 = inlined_call_operand.vmem [shape: f32[1,128], index: 2, kind: input, shape index: {}]
  %s3 = inlined_call_operand.vmem [shape: f32[512,128], index: 3, kind: output, shape index: {}]
  %s4 = sld [smem:[#allocation0]]
  $region53: #{net_forward.20} parent=0
    _
  %s6 = ssub.s32 1, %s4
  %s7 = scalar_select 0, %s6, %s4
  loop: start=0, step=1, limit=4
  $region2: #{net_forward.20} parent=0 // loop_pre_header
    _
  $region3: #{net_forward.20} parent=0 // loop_header
    %s9 = sphi 0, %s13
    %p10 = scmp.ge.s32.totalorder %s9, 4
    %s16 = sphi 0, %s35
    %s17 = sphi 0, %s31
    %s18 = sphi 0, %s27
    %s19 = sphi 0, %s16
    %s20 = sphi 0, %s17
    %s21 = sphi 0, %s18
    %s22 = sphi 0, %s19
    %s23 = sphi 0, %s20
    %s24 = sphi 0, %s21
    %s40 = sphi 0, %s42
    %s43 = sphi 0, %s40
    %s44 = sphi 0, %s43
    %s60 = sphi 0, %s44
    %s68 = sphi 0, %s70
    %s71 = sphi 0, %s68
    %s72 = sphi 0, %s71
    %s88 = sphi 0, %s72
    %s94 = sphi 0, %s96
    %s97 = sphi 0, %s94
    %s98 = sphi 0, %s97
    %s114 = sphi 0, %s98
    %s122 = sphi 0, %s124
    %s125 = sphi 0, %s122
    %s126 = sphi 0, %s125
    %s142 = sphi 0, %s126
  $region4: #{net_forward.20} parent=0 // loop_header_branch
    %12 = sbr.rel (%p10) target = $region8
  $region5: #{net_forward.20} parent=0 // loop_body
    %s14 = ssub.s32 %s9, 1
    %s15 = ssub.s32 %s9, 2
    %s25 = sadd.s32 1, %s18
    %p26 = scmp.ge.s32.totalorder %s25, 1
    %s27 = scalar_select %p26, 0, %s25
    %s28 = sadd.s32 1, %s17
    %s29 = scalar_select %p26, %s28, %s17
    %p30 = scmp.ge.s32.totalorder %s29, 1
    %s31 = scalar_select %p30, 0, %s29
    %s32 = sadd.s32 1, %s16
    %s33 = scalar_select %p30, %s32, %s16
    %p34 = scmp.ge.s32.totalorder %s33, 2
    %s35 = scalar_select %p34, 0, %s33
    %s36 = ssub.s32 %s16, %s35
    %s37 = ssub.s32 %s18, %s27
    %s38 = sor.u32 %s36, %s37
    %p39 = scmp.eq.s32.totalorder %s38, 0
    %s41 = sadd.s32 %s40, 1
    %s42 = scalar_select %p39, %s40, %s41
    %p45 = pneg %p39
    %p46 = scmp.eq.s32.totalorder %s9, 1
    %p47 = por %p45, %p46
    %p48 = scmp.ne.s32.totalorder %s40, %s43
    %p49 = scmp.eq.s32.totalorder %s9, 0
    %p50 = por %p48, %p49
    %p51 = scmp.ne.s32.totalorder %s40, %s43
    %p52 = scmp.eq.s32.totalorder %s14, 1
    %p53 = por %p51, %p52
    %p54 = scmp.ne.s32.totalorder %s43, %s44
    %p55 = scmp.eq.s32.totalorder %s14, 0
    %p56 = por %p54, %p55
    %p57 = scmp.ne.s32.totalorder %s43, %s44
    %p58 = scmp.eq.s32.totalorder %s15, 1
    %p59 = por %p57, %p58
    %p61 = scmp.ne.s32.totalorder %s44, %s60
    %p62 = scmp.eq.s32.totalorder %s15, 0
    %p63 = por %p61, %p62
    %s64 = ssub.s32 %s18, %s27
    %s65 = ssub.s32 %s17, %s31
    %s66 = sor.u32 %s64, %s65
    %p67 = scmp.eq.s32.totalorder %s66, 0
    %s69 = sadd.s32 %s68, 1
    %s70 = scalar_select %p67, %s68, %s69
    %p73 = pneg %p67
    %p74 = scmp.eq.s32.totalorder %s9, 1
    %p75 = por %p73, %p74
    %p76 = scmp.ne.s32.totalorder %s68, %s71
    %p77 = scmp.eq.s32.totalorder %s9, 0
    %p78 = por %p76, %p77
    %p79 = scmp.ne.s32.totalorder %s68, %s71
    %p80 = scmp.eq.s32.totalorder %s14, 1
    %p81 = por %p79, %p80
    %p82 = scmp.ne.s32.totalorder %s71, %s72
    %p83 = scmp.eq.s32.totalorder %s14, 0
    %p84 = por %p82, %p83
    %p85 = scmp.ne.s32.totalorder %s71, %s72
    %p86 = scmp.eq.s32.totalorder %s15, 1
    %p87 = por %p85, %p86
    %p89 = scmp.ne.s32.totalorder %s72, %s88
    %p90 = scmp.eq.s32.totalorder %s15, 0
    %p91 = por %p89, %p90
    %s92 = ssub.s32 %s17, %s31
    %p93 = scmp.eq.s32.totalorder %s92, 0
    %s95 = sadd.s32 %s94, 1
    %s96 = scalar_select %p93, %s94, %s95
    %p99 = pneg %p93
    %p100 = scmp.eq.s32.totalorder %s9, 1
    %p101 = por %p99, %p100
    %p102 = scmp.ne.s32.totalorder %s94, %s97
    %p103 = scmp.eq.s32.totalorder %s9, 0
    %p104 = por %p102, %p103
    %p105 = scmp.ne.s32.totalorder %s94, %s97
    %p106 = scmp.eq.s32.totalorder %s14, 1
    %p107 = por %p105, %p106
    %p108 = scmp.ne.s32.totalorder %s97, %s98
    %p109 = scmp.eq.s32.totalorder %s14, 0
    %p110 = por %p108, %p109
    %p111 = scmp.ne.s32.totalorder %s97, %s98
    %p112 = scmp.eq.s32.totalorder %s15, 1
    %p113 = por %p111, %p112
    %p115 = scmp.ne.s32.totalorder %s98, %s114
    %p116 = scmp.eq.s32.totalorder %s15, 0
    %p117 = por %p115, %p116
    %s118 = ssub.s32 %s16, %s35
    %s119 = ssub.s32 %s17, %s31
    %s120 = sor.u32 %s118, %s119
    %p121 = scmp.eq.s32.totalorder %s120, 0
    %s123 = sadd.s32 %s122, 1
    %s124 = scalar_select %p121, %s122, %s123
    %p127 = pneg %p121
    %p128 = scmp.eq.s32.totalorder %s9, 1
    %p129 = por %p127, %p128
    %p130 = scmp.ne.s32.totalorder %s122, %s125
    %p131 = scmp.eq.s32.totalorder %s9, 0
    %p132 = por %p130, %p131
    %p133 = scmp.ne.s32.totalorder %s122, %s125
    %p134 = scmp.eq.s32.totalorder %s14, 1
    %p135 = por %p133, %p134
    %p136 = scmp.ne.s32.totalorder %s125, %s126
    %p137 = scmp.eq.s32.totalorder %s14, 0
    %p138 = por %p136, %p137
    %p139 = scmp.ne.s32.totalorder %s125, %s126
    %p140 = scmp.eq.s32.totalorder %s15, 1
    %p141 = por %p139, %p140
    %p143 = scmp.ne.s32.totalorder %s126, %s142
    %p144 = scmp.eq.s32.totalorder %s15, 0
    %p145 = por %p143, %p144
    %p146 = scmp.le.s32.totalorder 1, %s9
    %p147 = scmp.lt.s32.totalorder %s9, 3
    %p148 = pnand %p146, %p147
    %p149 = pneg %p148
    // Predicated region
    $region9: #{net_forward.20} parent=5 // pred_check
      _
    $region10: #{net_forward.20} parent=5 // pred_check_branch
      %151 = sbr.rel (%p148) target = $region12
    $region11: #{net_forward.20} parent=5 // pred_region
      %s152 = ssub.s32 %s9, 1
      // Predicated region
      $region13: #{net_forward.20} parent=11 // pred_check
        %p153 = pneg %p84
      $region14: #{net_forward.20} parent=11 // pred_check_branch
        %155 = sbr.rel (%p153) target = $region16
      $region15: #{net_forward.20} parent=11 // pred_region
        %s156 = smul.u32 32, %s21
        %p157 = scmp.lt.s32.totalorder %s156, 31
        %s158 = scalar_select %p157, %s156, 31
        %p159 = scmp.lt.s32.totalorder %s20, 0
        %s160 = scalar_select %p159, %s20, 0
        %s161 = sadd.s32 %s160, %s158
        %s162 = smul.addr %s161, 4
        %s163 = scalar_lea.vmem %s1, %s162
        %s164 = smul.u32 32, %s21
      $region16: #{net_forward.20} parent=11 // pred_fallthru
        _
      // Predicated region
      $region17: #{net_forward.20} parent=11 // pred_check
        %p165 = pneg %p110
      $region18: #{net_forward.20} parent=11 // pred_check_branch
        %167 = sbr.rel (%p165) target = $region20
      $region19: #{net_forward.20} parent=11 // pred_region
        %p168 = scmp.lt.s32.totalorder %s20, 0
        %s169 = scalar_select %p168, %s20, 0
        %s170 = scalar_lea.vmem %s2, %s169
      $region20: #{net_forward.20} parent=11 // pred_fallthru
        _
    $region12: #{net_forward.20} parent=5 // pred_fallthru
      _
    %p171 = scmp.lt.s32.totalorder %s9, 2
    // Predicated region
    $region21: #{net_forward.20} parent=5 // pred_check
      %p172 = pneg %p171
    $region22: #{net_forward.20} parent=5 // pred_check_branch
      %174 = sbr.rel (%p172) target = $region24
    $region23: #{net_forward.20} parent=5 // pred_region
      // Predicated region
      $region25: #{net_forward.20} parent=23 // pred_check
        %p175 = pneg %p50
      $region26: #{net_forward.20} parent=23 // pred_check_branch
        %177 = sbr.rel (%p175) target = $region28
      $region27: #{net_forward.20} parent=23 // pred_region
        %s178 = smul.u32 32, %s16
        %s179 = smul.u32 2, %s18
        %p180 = scmp.lt.s32.totalorder %s178, 63
        %s181 = scalar_select %p180, %s178, 63
        %p182 = scmp.lt.s32.totalorder %s179, 1
        %s183 = scalar_select %p182, %s179, 1
        %s184 = smul.addr %s181, 2
        %s185 = sadd.s32 %s183, %s184
        %s186 = smul.addr %s185, 4
        %s187 = scalar_lea.vmem %s0, %s186
        %s188 = smul.u32 32, %s16
        %s189 = smul.u32 2, %s18
      $region28: #{net_forward.20} parent=23 // pred_fallthru
        _
    $region24: #{net_forward.20} parent=5 // pred_fallthru
      _
    %p190 = scmp.le.s32.totalorder 1, %s9
    %p191 = scmp.lt.s32.totalorder %s9, 3
    %p192 = pnand %p190, %p191
    %p193 = pneg %p192
    // Predicated region
    $region29: #{net_forward.20} parent=5 // pred_check
      _
    $region30: #{net_forward.20} parent=5 // pred_check_branch
      %195 = sbr.rel (%p192) target = $region32
    $region31: #{net_forward.20} parent=5 // pred_region
      %s196 = ssub.s32 %s9, 1
      %s197 = smul.u32 32, %s19
      %s198 = smul.u32 2, %s21
      %p199 = scmp.lt.s32.totalorder %s197, 63
      %s200 = scalar_select %p199, %s197, 63
      %p201 = scmp.lt.s32.totalorder %s198, 1
      %s202 = scalar_select %p201, %s198, 1
      %s203 = smul.addr %s200, 2
      %s204 = sadd.s32 %s202, %s203
      %s205 = smul.addr %s204, 4
      %s206 = scalar_lea.vmem %s0, %s205
      %p207 = pneg %p56
      %p208 = pneg %p53
      %s209 = smul.u32 32, %s21
      %p210 = scmp.lt.s32.totalorder %s209, 31
      %s211 = scalar_select %p210, %s209, 31
      %p212 = scmp.lt.s32.totalorder %s20, 0
      %s213 = scalar_select %p212, %s20, 0
      %s214 = sadd.s32 %s213, %s211
      %s215 = smul.addr %s214, 4
      %s216 = scalar_lea.vmem %s1, %s215
      %p217 = pneg %p84
      %p218 = pneg %p81
      %p219 = scmp.lt.s32.totalorder %s20, 0
      %s220 = scalar_select %p219, %s20, 0
      %s221 = scalar_lea.vmem %s2, %s220
      %p222 = pneg %p110
      %p223 = pneg %p107
      %p224 = pneg %p138
      %p225 = pneg %p135
      %s226 = smul.u32 32, %s19
      %p227 = scmp.lt.s32.totalorder %s226, 63
      %s228 = scalar_select %p227, %s226, 63
      %p229 = scmp.lt.s32.totalorder %s20, 0
      %s230 = scalar_select %p229, %s20, 0
      %s231 = sadd.s32 %s230, %s228
      %s232 = smul.addr %s231, 8
      %s233 = scalar_lea.vmem %s3, %s232
      %s234 = smul.u32 32, %s19
      %s235 = smul.u32 2, %s21
      %p236 = scmp.lt.s32.totalorder %s234, 63
      %s237 = scalar_select %p236, %s234, 63
      %p238 = scmp.lt.s32.totalorder %s235, 1
      %s239 = scalar_select %p238, %s235, 1
      %s240 = smul.addr %s237, 2
      %s241 = sadd.s32 %s239, %s240
      %s242 = smul.addr %s241, 4
      %s243 = scalar_lea.vmem %s0, %s242
      %s244 = smul.u32 32, %s19
      %s245 = smul.u32 2, %s21
      %s246 = smul.u32 32, %s21
      %p247 = scmp.lt.s32.totalorder %s246, 31
      %s248 = scalar_select %p247, %s246, 31
      %p249 = scmp.lt.s32.totalorder %s20, 0
      %s250 = scalar_select %p249, %s20, 0
      %s251 = sadd.s32 %s250, %s248
      %s252 = smul.addr %s251, 4
      %s253 = scalar_lea.vmem %s1, %s252
      %s254 = smul.u32 32, %s21
      %p255 = scmp.lt.s32.totalorder %s20, 0
      %s256 = scalar_select %p255, %s20, 0
      %s257 = scalar_lea.vmem %s2, %s256
      %s258 = smul.u32 32, %s19
      %p259 = scmp.lt.s32.totalorder %s258, 63
      %s260 = scalar_select %p259, %s258, 63
      %p261 = scmp.lt.s32.totalorder %s20, 0
      %s262 = scalar_select %p261, %s20, 0
      %s263 = sadd.s32 %s262, %s260
      %s264 = smul.addr %s263, 8
      %s265 = scalar_lea.vmem %s3, %s264
      %s266 = smul.u32 32, %s19
      %p268 = scmp.eq.s32.totalorder %s21, 0
      // Predicated region
      $region33: #{net_forward.20} parent=31 // pred_check
        %p269 = pneg %p268
      $region34: #{net_forward.20} parent=31 // pred_check_branch
        %271 = sbr.rel (%p269) target = $region36
      $region35: #{net_forward.20} parent=31 // pred_region
        %272 = vst [vmem:[#allocation2] sm:$0xff] 0.0
        %273 = vst [vmem:[#allocation2 + $0x8] sm:$0xff] 0.0
        %274 = vst [vmem:[#allocation2 + $0x10] sm:$0xff] 0.0
        %275 = vst [vmem:[#allocation2 + $0x18] sm:$0xff] 0.0
        %276 = vst [vmem:[#allocation2 + $0x20] sm:$0xff] 0.0
        %277 = vst [vmem:[#allocation2 + $0x28] sm:$0xff] 0.0
        %278 = vst [vmem:[#allocation2 + $0x30] sm:$0xff] 0.0
        %279 = vst [vmem:[#allocation2 + $0x38] sm:$0xff] 0.0
        %280 = vst [vmem:[#allocation2 + $0x40] sm:$0xff] 0.0
        %281 = vst [vmem:[#allocation2 + $0x48] sm:$0xff] 0.0
        %282 = vst [vmem:[#allocation2 + $0x50] sm:$0xff] 0.0
        %283 = vst [vmem:[#allocation2 + $0x58] sm:$0xff] 0.0
        %284 = vst [vmem:[#allocation2 + $0x60] sm:$0xff] 0.0
        %285 = vst [vmem:[#allocation2 + $0x68] sm:$0xff] 0.0
        %286 = vst [vmem:[#allocation2 + $0x70] sm:$0xff] 0.0
        %287 = vst [vmem:[#allocation2 + $0x78] sm:$0xff] 0.0
        %288 = vst [vmem:[#allocation2 + $0x80] sm:$0xff] 0.0
        %289 = vst [vmem:[#allocation2 + $0x88] sm:$0xff] 0.0
        %290 = vst [vmem:[#allocation2 + $0x90] sm:$0xff] 0.0
        %291 = vst [vmem:[#allocation2 + $0x98] sm:$0xff] 0.0
        %292 = vst [vmem:[#allocation2 + $0xa0] sm:$0xff] 0.0
        %293 = vst [vmem:[#allocation2 + $0xa8] sm:$0xff] 0.0
        %294 = vst [vmem:[#allocation2 + $0xb0] sm:$0xff] 0.0
        %295 = vst [vmem:[#allocation2 + $0xb8] sm:$0xff] 0.0
        %296 = vst [vmem:[#allocation2 + $0xc0] sm:$0xff] 0.0
        %297 = vst [vmem:[#allocation2 + $0xc8] sm:$0xff] 0.0
        %298 = vst [vmem:[#allocation2 + $0xd0] sm:$0xff] 0.0
        %299 = vst [vmem:[#allocation2 + $0xd8] sm:$0xff] 0.0
        %300 = vst [vmem:[#allocation2 + $0xe0] sm:$0xff] 0.0
        %301 = vst [vmem:[#allocation2 + $0xe8] sm:$0xff] 0.0
        %302 = vst [vmem:[#allocation2 + $0xf0] sm:$0xff] 0.0
        %303 = vst [vmem:[#allocation2 + $0xf8] sm:$0xff] 0.0
      $region36: #{net_forward.20} parent=31 // pred_fallthru
        _
      %v304 = vld [vmem:[#allocation2] sm:$0xff]
      %v305 = vld [vmem:[#allocation2 + $0x8] sm:$0xff]
      %v306 = vld [vmem:[#allocation2 + $0x10] sm:$0xff]
      %v307 = vld [vmem:[#allocation2 + $0x18] sm:$0xff]
      %v308 = vld [vmem:[#allocation2 + $0x20] sm:$0xff]
      %v309 = vld [vmem:[#allocation2 + $0x28] sm:$0xff]
      %v310 = vld [vmem:[#allocation2 + $0x30] sm:$0xff]
      %v311 = vld [vmem:[#allocation2 + $0x38] sm:$0xff]
      %v312 = vld [vmem:[#allocation2 + $0x40] sm:$0xff]
      %v313 = vld [vmem:[#allocation2 + $0x48] sm:$0xff]
      %v314 = vld [vmem:[#allocation2 + $0x50] sm:$0xff]
      %v315 = vld [vmem:[#allocation2 + $0x58] sm:$0xff]
      %v316 = vld [vmem:[#allocation2 + $0x60] sm:$0xff]
      %v317 = vld [vmem:[#allocation2 + $0x68] sm:$0xff]
      %v318 = vld [vmem:[#allocation2 + $0x70] sm:$0xff]
      %v319 = vld [vmem:[#allocation2 + $0x78] sm:$0xff]
      %v320 = vld [vmem:[#allocation2 + $0x80] sm:$0xff]
      %v321 = vld [vmem:[#allocation2 + $0x88] sm:$0xff]
      %v322 = vld [vmem:[#allocation2 + $0x90] sm:$0xff]
      %v323 = vld [vmem:[#allocation2 + $0x98] sm:$0xff]
      %v324 = vld [vmem:[#allocation2 + $0xa0] sm:$0xff]
      %v325 = vld [vmem:[#allocation2 + $0xa8] sm:$0xff]
      %v326 = vld [vmem:[#allocation2 + $0xb0] sm:$0xff]
      %v327 = vld [vmem:[#allocation2 + $0xb8] sm:$0xff]
      %v328 = vld [vmem:[#allocation2 + $0xc0] sm:$0xff]
      %v329 = vld [vmem:[#allocation2 + $0xc8] sm:$0xff]
      %v330 = vld [vmem:[#allocation2 + $0xd0] sm:$0xff]
      %v331 = vld [vmem:[#allocation2 + $0xd8] sm:$0xff]
      %v332 = vld [vmem:[#allocation2 + $0xe0] sm:$0xff]
      %v333 = vld [vmem:[#allocation2 + $0xe8] sm:$0xff]
      %v334 = vld [vmem:[#allocation2 + $0xf0] sm:$0xff]
      %v335 = vld [vmem:[#allocation2 + $0xf8] sm:$0xff]
      %v336 = vld [vmem:[%s243] sm:$0xff]
      %v337 = vld [vmem:[%s243 + $0x8] sm:$0xff]
      %v338 = vld [vmem:[%s243 + $0x10] sm:$0xff]
      %v339 = vld [vmem:[%s243 + $0x18] sm:$0xff]
      %v340 = vld [vmem:[%s243 + $0x20] sm:$0xff]
      %v341 = vld [vmem:[%s243 + $0x28] sm:$0xff]
      %v342 = vld [vmem:[%s243 + $0x30] sm:$0xff]
      %v343 = vld [vmem:[%s243 + $0x38] sm:$0xff]
      %v344 = vld [vmem:[%s243 + $0x40] sm:$0xff]
      %v345 = vld [vmem:[%s243 + $0x48] sm:$0xff]
      %v346 = vld [vmem:[%s243 + $0x50] sm:$0xff]
      %v347 = vld [vmem:[%s243 + $0x58] sm:$0xff]
      %v348 = vld [vmem:[%s243 + $0x60] sm:$0xff]
      %v349 = vld [vmem:[%s243 + $0x68] sm:$0xff]
      %v350 = vld [vmem:[%s243 + $0x70] sm:$0xff]
      %v351 = vld [vmem:[%s243 + $0x78] sm:$0xff]
      %v352 = vld [vmem:[%s243 + $0x80] sm:$0xff]
      %v353 = vld [vmem:[%s243 + $0x88] sm:$0xff]
      %v354 = vld [vmem:[%s243 + $0x90] sm:$0xff]
      %v355 = vld [vmem:[%s243 + $0x98] sm:$0xff]
      %v356 = vld [vmem:[%s243 + $0xa0] sm:$0xff]
      %v357 = vld [vmem:[%s243 + $0xa8] sm:$0xff]
      %v358 = vld [vmem:[%s243 + $0xb0] sm:$0xff]
      %v359 = vld [vmem:[%s243 + $0xb8] sm:$0xff]
      %v360 = vld [vmem:[%s243 + $0xc0] sm:$0xff]
      %v361 = vld [vmem:[%s243 + $0xc8] sm:$0xff]
      %v362 = vld [vmem:[%s243 + $0xd0] sm:$0xff]
      %v363 = vld [vmem:[%s243 + $0xd8] sm:$0xff]
      %v364 = vld [vmem:[%s243 + $0xe0] sm:$0xff]
      %v365 = vld [vmem:[%s243 + $0xe8] sm:$0xff]
      %v366 = vld [vmem:[%s243 + $0xf0] sm:$0xff]
      %v367 = vld [vmem:[%s243 + $0xf8] sm:$0xff]
      %v368 = vld [vmem:[%s253] sm:$0xf]
      %v369 = vld [vmem:[%s253 + $0x4] sm:$0xf]
      %v370 = vld [vmem:[%s253 + $0x8] sm:$0xf]
      %v371 = vld [vmem:[%s253 + $0xc] sm:$0xf]
      %v372 = vld [vmem:[%s253 + $0x10] sm:$0xf]
      %v373 = vld [vmem:[%s253 + $0x14] sm:$0xf]
      %v374 = vld [vmem:[%s253 + $0x18] sm:$0xf]
      %v375 = vld [vmem:[%s253 + $0x1c] sm:$0xf]
      %v376 = vld [vmem:[%s253 + $0x20] sm:$0xf]
      %v377 = vld [vmem:[%s253 + $0x24] sm:$0xf]
      %v378 = vld [vmem:[%s253 + $0x28] sm:$0xf]
      %v379 = vld [vmem:[%s253 + $0x2c] sm:$0xf]
      %v380 = vld [vmem:[%s253 + $0x30] sm:$0xf]
      %v381 = vld [vmem:[%s253 + $0x34] sm:$0xf]
      %v382 = vld [vmem:[%s253 + $0x38] sm:$0xf]
      %v383 = vld [vmem:[%s253 + $0x3c] sm:$0xf]
      %v384 = vld [vmem:[%s253 + $0x40] sm:$0xf]
      %v385 = vld [vmem:[%s253 + $0x44] sm:$0xf]
      %v386 = vld [vmem:[%s253 + $0x48] sm:$0xf]
      %v387 = vld [vmem:[%s253 + $0x4c] sm:$0xf]
      %v388 = vld [vmem:[%s253 + $0x50] sm:$0xf]
      %v389 = vld [vmem:[%s253 + $0x54] sm:$0xf]
      %v390 = vld [vmem:[%s253 + $0x58] sm:$0xf]
      %v391 = vld [vmem:[%s253 + $0x5c] sm:$0xf]
      %v392 = vld [vmem:[%s253 + $0x60] sm:$0xf]
      %v393 = vld [vmem:[%s253 + $0x64] sm:$0xf]
      %v394 = vld [vmem:[%s253 + $0x68] sm:$0xf]
      %v395 = vld [vmem:[%s253 + $0x6c] sm:$0xf]
      %v396 = vld [vmem:[%s253 + $0x70] sm:$0xf]
      %v397 = vld [vmem:[%s253 + $0x74] sm:$0xf]
      %v398 = vld [vmem:[%s253 + $0x78] sm:$0xf]
      %v399 = vld [vmem:[%s253 + $0x7c] sm:$0xf]
      %v432 = vunpack.c.l.b16 %v336
      %v433 = vunpack.c.h.b16 %v336
      %v434 = vunpack.c.l.b16 %v337
      %v435 = vunpack.c.h.b16 %v337
      %v436 = vunpack.c.l.b16 %v338
      %v437 = vunpack.c.h.b16 %v338
      %v438 = vunpack.c.l.b16 %v339
      %v439 = vunpack.c.h.b16 %v339
      %v440 = vunpack.c.l.b16 %v340
      %v441 = vunpack.c.h.b16 %v340
      %v442 = vunpack.c.l.b16 %v341
      %v443 = vunpack.c.h.b16 %v341
      %v444 = vunpack.c.l.b16 %v342
      %v445 = vunpack.c.h.b16 %v342
      %v446 = vunpack.c.l.b16 %v343
      %v447 = vunpack.c.h.b16 %v343
      %v448 = vunpack.c.l.b16 %v344
      %v449 = vunpack.c.h.b16 %v344
      %v450 = vunpack.c.l.b16 %v345
      %v451 = vunpack.c.h.b16 %v345
      %v452 = vunpack.c.l.b16 %v346
      %v453 = vunpack.c.h.b16 %v346
      %v454 = vunpack.c.l.b16 %v347
      %v455 = vunpack.c.h.b16 %v347
      %v456 = vunpack.c.l.b16 %v348
      %v457 = vunpack.c.h.b16 %v348
      %v458 = vunpack.c.l.b16 %v349
      %v459 = vunpack.c.h.b16 %v349
      %v460 = vunpack.c.l.b16 %v350
      %v461 = vunpack.c.h.b16 %v350
      %v462 = vunpack.c.l.b16 %v351
      %v463 = vunpack.c.h.b16 %v351
      %v464 = vunpack.c.l.b16 %v352
      %v465 = vunpack.c.h.b16 %v352
      %v466 = vunpack.c.l.b16 %v353
      %v467 = vunpack.c.h.b16 %v353
      %v468 = vunpack.c.l.b16 %v354
      %v469 = vunpack.c.h.b16 %v354
      %v470 = vunpack.c.l.b16 %v355
      %v471 = vunpack.c.h.b16 %v355
      %v472 = vunpack.c.l.b16 %v356
      %v473 = vunpack.c.h.b16 %v356
      %v474 = vunpack.c.l.b16 %v357
      %v475 = vunpack.c.h.b16 %v357
      %v476 = vunpack.c.l.b16 %v358
      %v477 = vunpack.c.h.b16 %v358
      %v478 = vunpack.c.l.b16 %v359
      %v479 = vunpack.c.h.b16 %v359
      %v480 = vunpack.c.l.b16 %v360
      %v481 = vunpack.c.h.b16 %v360
      %v482 = vunpack.c.l.b16 %v361
      %v483 = vunpack.c.h.b16 %v361
      %v484 = vunpack.c.l.b16 %v362
      %v485 = vunpack.c.h.b16 %v362
      %v486 = vunpack.c.l.b16 %v363
      %v487 = vunpack.c.h.b16 %v363
      %v488 = vunpack.c.l.b16 %v364
      %v489 = vunpack.c.h.b16 %v364
      %v490 = vunpack.c.l.b16 %v365
      %v491 = vunpack.c.h.b16 %v365
      %v492 = vunpack.c.l.b16 %v366
      %v493 = vunpack.c.h.b16 %v366
      %v494 = vunpack.c.l.b16 %v367
      %v495 = vunpack.c.h.b16 %v367
      %v496 = vpack.c.b16 %v434, %v432
      %v497 = vpack.c.b16 %v435, %v433
      %v498 = vpack.c.b16 %v438, %v436
      %v499 = vpack.c.b16 %v439, %v437
      %v500 = vpack.c.b16 %v442, %v440
      %v501 = vpack.c.b16 %v443, %v441
      %v502 = vpack.c.b16 %v446, %v444
      %v503 = vpack.c.b16 %v447, %v445
      %v504 = vpack.c.b16 %v450, %v448
      %v505 = vpack.c.b16 %v451, %v449
      %v506 = vpack.c.b16 %v454, %v452
      %v507 = vpack.c.b16 %v455, %v453
      %v508 = vpack.c.b16 %v458, %v456
      %v509 = vpack.c.b16 %v459, %v457
      %v510 = vpack.c.b16 %v462, %v460
      %v511 = vpack.c.b16 %v463, %v461
      %v512 = vpack.c.b16 %v466, %v464
      %v513 = vpack.c.b16 %v467, %v465
      %v514 = vpack.c.b16 %v470, %v468
      %v515 = vpack.c.b16 %v471, %v469
      %v516 = vpack.c.b16 %v474, %v472
      %v517 = vpack.c.b16 %v475, %v473
      %v518 = vpack.c.b16 %v478, %v476
      %v519 = vpack.c.b16 %v479, %v477
      %v520 = vpack.c.b16 %v482, %v480
      %v521 = vpack.c.b16 %v483, %v481
      %v522 = vpack.c.b16 %v486, %v484
      %v523 = vpack.c.b16 %v487, %v485
      %v524 = vpack.c.b16 %v490, %v488
      %v525 = vpack.c.b16 %v491, %v489
      %v526 = vpack.c.b16 %v494, %v492
      %v527 = vpack.c.b16 %v495, %v493
      %v592 = vunpack.c.l.b16 %v368
      %v593 = vunpack.c.l.b16 %v369
      %v594 = vunpack.c.l.b16 %v370
      %v595 = vunpack.c.l.b16 %v371
      %v596 = vunpack.c.l.b16 %v372
      %v597 = vunpack.c.l.b16 %v373
      %v598 = vunpack.c.l.b16 %v374
      %v599 = vunpack.c.l.b16 %v375
      %v600 = vunpack.c.l.b16 %v376
      %v601 = vunpack.c.l.b16 %v377
      %v602 = vunpack.c.l.b16 %v378
      %v603 = vunpack.c.l.b16 %v379
      %v604 = vunpack.c.l.b16 %v380
      %v605 = vunpack.c.l.b16 %v381
      %v606 = vunpack.c.l.b16 %v382
      %v607 = vunpack.c.l.b16 %v383
      %v608 = vunpack.c.l.b16 %v384
      %v609 = vunpack.c.l.b16 %v385
      %v610 = vunpack.c.l.b16 %v386
      %v611 = vunpack.c.l.b16 %v387
      %v612 = vunpack.c.l.b16 %v388
      %v613 = vunpack.c.l.b16 %v389
      %v614 = vunpack.c.l.b16 %v390
      %v615 = vunpack.c.l.b16 %v391
      %v616 = vunpack.c.l.b16 %v392
      %v617 = vunpack.c.l.b16 %v393
      %v618 = vunpack.c.l.b16 %v394
      %v619 = vunpack.c.l.b16 %v395
      %v620 = vunpack.c.l.b16 %v396
      %v621 = vunpack.c.l.b16 %v397
      %v622 = vunpack.c.l.b16 %v398
      %v623 = vunpack.c.l.b16 %v399
      %v624 = vpack.c.b16 %v593, %v592
      %v625 = vpack.c.b16 %v595, %v594
      %v626 = vpack.c.b16 %v597, %v596
      %v627 = vpack.c.b16 %v599, %v598
      %v628 = vpack.c.b16 %v601, %v600
      %v629 = vpack.c.b16 %v603, %v602
      %v630 = vpack.c.b16 %v605, %v604
      %v631 = vpack.c.b16 %v607, %v606
      %v632 = vpack.c.b16 %v609, %v608
      %v633 = vpack.c.b16 %v611, %v610
      %v634 = vpack.c.b16 %v613, %v612
      %v635 = vpack.c.b16 %v615, %v614
      %v636 = vpack.c.b16 %v617, %v616
      %v637 = vpack.c.b16 %v619, %v618
      %v638 = vpack.c.b16 %v621, %v620
      %v639 = vpack.c.b16 %v623, %v622
      %656 = vmatprep.subr.bf16.mxu0 0
      %657 = vmatpush1.bf16.msra.mxu0 %v624
      %658 = vmatprep.subr.bf16.mxu0 0
      %659 = vmatpush1.bf16.msra.mxu0 %v625
      %660 = vmatprep.subr.bf16.mxu0 0
      %661 = vmatpush1.bf16.msra.mxu0 %v626
      %662 = vmatprep.subr.bf16.mxu0 0
      %663 = vmatpush1.bf16.msra.mxu0 %v627
      %664 = vmatprep.subr.bf16.mxu0 0
      %665 = vmatpush1.bf16.msra.mxu0 %v628
      %666 = vmatprep.subr.bf16.mxu0 0
      %667 = vmatpush1.bf16.msra.mxu0 %v629
      %668 = vmatprep.subr.bf16.mxu0 0
      %669 = vmatpush1.bf16.msra.mxu0 %v630
      %670 = vmatprep.subr.bf16.mxu0 0
      %671 = vmatpush1.bf16.msra.mxu0 %v631
      %672 = vmatprep.subr.bf16.mxu0 0
      %673 = vmatpush1.bf16.msra.mxu0 %v632
      %674 = vmatprep.subr.bf16.mxu0 0
      %675 = vmatpush1.bf16.msra.mxu0 %v633
      %676 = vmatprep.subr.bf16.mxu0 0
      %677 = vmatpush1.bf16.msra.mxu0 %v634
      %678 = vmatprep.subr.bf16.mxu0 0
      %679 = vmatpush1.bf16.msra.mxu0 %v635
      %680 = vmatprep.subr.bf16.mxu0 0
      %681 = vmatpush1.bf16.msra.mxu0 %v636
      %682 = vmatprep.subr.bf16.mxu0 0
      %683 = vmatpush1.bf16.msra.mxu0 %v637
      %684 = vmatprep.subr.bf16.mxu0 0
      %685 = vmatpush1.bf16.msra.mxu0 %v638
      %686 = vmatprep.subr.bf16.mxu0 0
      %687 = vmatpush1.bf16.msra.mxu0 %v639
      %688 = vmatprep.mubr.bf16.mxu0 %v497
      %689 = vmatmul.mubr.bf16.gmra.mrb[0].mxu0 %v496
      %v690 = vpop.f32.mrb[0].mxu0
      %v691 = vadd.f32 0.0, %v690
      %v692 = vpop.f32.mrb[0].mxu0
      %v693 = vpop.f32.mrb[0].mxu0
      %v694 = vadd.f32 0.0, %v693
      %v695 = vpop.f32.mrb[0].mxu0
      %696 = vmatprep.mubr.bf16.mxu0 %v499
      %697 = vmatmul.mubr.bf16.gmra.mrb[0].mxu0 %v498
      %v698 = vpop.f32.mrb[0].mxu0
      %v699 = vadd.f32 0.0, %v698
      %v700 = vpop.f32.mrb[0].mxu0
      %v701 = vpop.f32.mrb[0].mxu0
      %v702 = vadd.f32 0.0, %v701
      %v703 = vpop.f32.mrb[0].mxu0
      %704 = vmatprep.mubr.bf16.mxu0 %v501
      %705 = vmatmul.mubr.bf16.gmra.mrb[0].mxu0 %v500
      %v706 = vpop.f32.mrb[0].mxu0
      %v707 = vadd.f32 0.0, %v706
      %v708 = vpop.f32.mrb[0].mxu0
      %v709 = vpop.f32.mrb[0].mxu0
      %v710 = vadd.f32 0.0, %v709
      %v711 = vpop.f32.mrb[0].mxu0
      %712 = vmatprep.mubr.bf16.mxu0 %v503
      %713 = vmatmul.mubr.bf16.gmra.mrb[0].mxu0 %v502
      %v714 = vpop.f32.mrb[0].mxu0
      %v715 = vadd.f32 0.0, %v714
      %v716 = vpop.f32.mrb[0].mxu0
      %v717 = vpop.f32.mrb[0].mxu0
      %v718 = vadd.f32 0.0, %v717
      %v719 = vpop.f32.mrb[0].mxu0
      %720 = vmatprep.mubr.bf16.mxu0 %v505
      %721 = vmatmul.mubr.bf16.gmra.mrb[0].mxu0 %v504
      %v722 = vpop.f32.mrb[0].mxu0
      %v723 = vadd.f32 0.0, %v722
      %v724 = vpop.f32.mrb[0].mxu0
      %v725 = vpop.f32.mrb[0].mxu0
      %v726 = vadd.f32 0.0, %v725
      %v727 = vpop.f32.mrb[0].mxu0
      %728 = vmatprep.mubr.bf16.mxu0 %v507
      %729 = vmatmul.mubr.bf16.gmra.mrb[0].mxu0 %v506
      %v730 = vpop.f32.mrb[0].mxu0
      %v731 = vadd.f32 0.0, %v730
      %v732 = vpop.f32.mrb[0].mxu0
      %v733 = vpop.f32.mrb[0].mxu0
      %v734 = vadd.f32 0.0, %v733
      %v735 = vpop.f32.mrb[0].mxu0
      %736 = vmatprep.mubr.bf16.mxu0 %v509
      %737 = vmatmul.mubr.bf16.gmra.mrb[0].mxu0 %v508
      %v738 = vpop.f32.mrb[0].mxu0
      %v739 = vadd.f32 0.0, %v738
      %v740 = vpop.f32.mrb[0].mxu0
      %v741 = vpop.f32.mrb[0].mxu0
      %v742 = vadd.f32 0.0, %v741
      %v743 = vpop.f32.mrb[0].mxu0
      %744 = vmatprep.mubr.bf16.mxu0 %v511
      %745 = vmatmul.mubr.bf16.gmra.mrb[0].mxu0 %v510
      %v746 = vpop.f32.mrb[0].mxu0
      %v747 = vadd.f32 0.0, %v746
      %v748 = vpop.f32.mrb[0].mxu0
      %v749 = vpop.f32.mrb[0].mxu0
      %v750 = vadd.f32 0.0, %v749
      %v751 = vpop.f32.mrb[0].mxu0
      %752 = vmatprep.mubr.bf16.mxu0 %v513
      %753 = vmatmul.mubr.bf16.gmra.mrb[0].mxu0 %v512
      %v754 = vpop.f32.mrb[0].mxu0
      %v755 = vadd.f32 0.0, %v754
      %v756 = vpop.f32.mrb[0].mxu0
      %v757 = vpop.f32.mrb[0].mxu0
      %v758 = vadd.f32 0.0, %v757
      %v759 = vpop.f32.mrb[0].mxu0
      %760 = vmatprep.mubr.bf16.mxu0 %v515
      %761 = vmatmul.mubr.bf16.gmra.mrb[0].mxu0 %v514
      %v762 = vpop.f32.mrb[0].mxu0
      %v763 = vadd.f32 0.0, %v762
      %v764 = vpop.f32.mrb[0].mxu0
      %v765 = vpop.f32.mrb[0].mxu0
      %v766 = vadd.f32 0.0, %v765
      %v767 = vpop.f32.mrb[0].mxu0
      %768 = vmatprep.mubr.bf16.mxu0 %v517
      %769 = vmatmul.mubr.bf16.gmra.mrb[0].mxu0 %v516
      %v770 = vpop.f32.mrb[0].mxu0
      %v771 = vadd.f32 0.0, %v770
      %v772 = vpop.f32.mrb[0].mxu0
      %v773 = vpop.f32.mrb[0].mxu0
      %v774 = vadd.f32 0.0, %v773
      %v775 = vpop.f32.mrb[0].mxu0
      %776 = vmatprep.mubr.bf16.mxu0 %v519
      %777 = vmatmul.mubr.bf16.gmra.mrb[0].mxu0 %v518
      %v778 = vpop.f32.mrb[0].mxu0
      %v779 = vadd.f32 0.0, %v778
      %v780 = vpop.f32.mrb[0].mxu0
      %v781 = vpop.f32.mrb[0].mxu0
      %v782 = vadd.f32 0.0, %v781
      %v783 = vpop.f32.mrb[0].mxu0
      %784 = vmatprep.mubr.bf16.mxu0 %v521
      %785 = vmatmul.mubr.bf16.gmra.mrb[0].mxu0 %v520
      %v786 = vpop.f32.mrb[0].mxu0
      %v787 = vadd.f32 0.0, %v786
      %v788 = vpop.f32.mrb[0].mxu0
      %v789 = vpop.f32.mrb[0].mxu0
      %v790 = vadd.f32 0.0, %v789
      %v791 = vpop.f32.mrb[0].mxu0
      %792 = vmatprep.mubr.bf16.mxu0 %v523
      %793 = vmatmul.mubr.bf16.gmra.mrb[0].mxu0 %v522
      %v794 = vpop.f32.mrb[0].mxu0
      %v795 = vadd.f32 0.0, %v794
      %v796 = vpop.f32.mrb[0].mxu0
      %v797 = vpop.f32.mrb[0].mxu0
      %v798 = vadd.f32 0.0, %v797
      %v799 = vpop.f32.mrb[0].mxu0
      %800 = vmatprep.mubr.bf16.mxu0 %v525
      %801 = vmatmul.mubr.bf16.gmra.mrb[0].mxu0 %v524
      %v802 = vpop.f32.mrb[0].mxu0
      %v803 = vadd.f32 0.0, %v802
      %v804 = vpop.f32.mrb[0].mxu0
      %v805 = vpop.f32.mrb[0].mxu0
      %v806 = vadd.f32 0.0, %v805
      %v807 = vpop.f32.mrb[0].mxu0
      %808 = vmatprep.mubr.bf16.mxu0 %v527
      %809 = vmatmul.mubr.bf16.gmra.mrb[0].mxu0 %v526
      %v810 = vpop.f32.mrb[0].mxu0
      %v811 = vadd.f32 0.0, %v810
      %v812 = vpop.f32.mrb[0].mxu0
      %v813 = vpop.f32.mrb[0].mxu0
      %v814 = vadd.f32 0.0, %v813
      %v815 = vpop.f32.mrb[0].mxu0
      %816 = vdwg.mxu0
      %v817 = vadd.f32 %v304, %v691
      %v818 = vadd.f32 %v305, %v694
      %v819 = vadd.f32 %v306, %v699
      %v820 = vadd.f32 %v307, %v702
      %v821 = vadd.f32 %v308, %v707
      %v822 = vadd.f32 %v309, %v710
      %v823 = vadd.f32 %v310, %v715
      %v824 = vadd.f32 %v311, %v718
      %v825 = vadd.f32 %v312, %v723
      %v826 = vadd.f32 %v313, %v726
      %v827 = vadd.f32 %v314, %v731
      %v828 = vadd.f32 %v315, %v734
      %v829 = vadd.f32 %v316, %v739
      %v830 = vadd.f32 %v317, %v742
      %v831 = vadd.f32 %v318, %v747
      %v832 = vadd.f32 %v319, %v750
      %v833 = vadd.f32 %v320, %v755
      %v834 = vadd.f32 %v321, %v758
      %v835 = vadd.f32 %v322, %v763
      %v836 = vadd.f32 %v323, %v766
      %v837 = vadd.f32 %v324, %v771
      %v838 = vadd.f32 %v325, %v774
      %v839 = vadd.f32 %v326, %v779
      %v840 = vadd.f32 %v327, %v782
      %v841 = vadd.f32 %v328, %v787
      %v842 = vadd.f32 %v329, %v790
      %v843 = vadd.f32 %v330, %v795
      %v844 = vadd.f32 %v331, %v798
      %v845 = vadd.f32 %v332, %v803
      %v846 = vadd.f32 %v333, %v806
      %v847 = vadd.f32 %v334, %v811
      %v848 = vadd.f32 %v335, %v814
      %849 = vst [vmem:[#allocation2] sm:$0xff] %v817
      %850 = vst [vmem:[#allocation2 + $0x8] sm:$0xff] %v818
      %851 = vst [vmem:[#allocation2 + $0x10] sm:$0xff] %v819
      %852 = vst [vmem:[#allocation2 + $0x18] sm:$0xff] %v820
      %853 = vst [vmem:[#allocation2 + $0x20] sm:$0xff] %v821
      %854 = vst [vmem:[#allocation2 + $0x28] sm:$0xff] %v822
      %855 = vst [vmem:[#allocation2 + $0x30] sm:$0xff] %v823
      %856 = vst [vmem:[#allocation2 + $0x38] sm:$0xff] %v824
      %857 = vst [vmem:[#allocation2 + $0x40] sm:$0xff] %v825
      %858 = vst [vmem:[#allocation2 + $0x48] sm:$0xff] %v826
      %859 = vst [vmem:[#allocation2 + $0x50] sm:$0xff] %v827
      %860 = vst [vmem:[#allocation2 + $0x58] sm:$0xff] %v828
      %861 = vst [vmem:[#allocation2 + $0x60] sm:$0xff] %v829
      %862 = vst [vmem:[#allocation2 + $0x68] sm:$0xff] %v830
      %863 = vst [vmem:[#allocation2 + $0x70] sm:$0xff] %v831
      %864 = vst [vmem:[#allocation2 + $0x78] sm:$0xff] %v832
      %865 = vst [vmem:[#allocation2 + $0x80] sm:$0xff] %v833
      %866 = vst [vmem:[#allocation2 + $0x88] sm:$0xff] %v834
      %867 = vst [vmem:[#allocation2 + $0x90] sm:$0xff] %v835
      %868 = vst [vmem:[#allocation2 + $0x98] sm:$0xff] %v836
      %869 = vst [vmem:[#allocation2 + $0xa0] sm:$0xff] %v837
      %870 = vst [vmem:[#allocation2 + $0xa8] sm:$0xff] %v838
      %871 = vst [vmem:[#allocation2 + $0xb0] sm:$0xff] %v839
      %872 = vst [vmem:[#allocation2 + $0xb8] sm:$0xff] %v840
      %873 = vst [vmem:[#allocation2 + $0xc0] sm:$0xff] %v841
      %874 = vst [vmem:[#allocation2 + $0xc8] sm:$0xff] %v842
      %875 = vst [vmem:[#allocation2 + $0xd0] sm:$0xff] %v843
      %876 = vst [vmem:[#allocation2 + $0xd8] sm:$0xff] %v844
      %877 = vst [vmem:[#allocation2 + $0xe0] sm:$0xff] %v845
      %878 = vst [vmem:[#allocation2 + $0xe8] sm:$0xff] %v846
      %879 = vst [vmem:[#allocation2 + $0xf0] sm:$0xff] %v847
      %880 = vst [vmem:[#allocation2 + $0xf8] sm:$0xff] %v848
      // Predicated region
      $region37: #{net_forward.20} parent=31 // pred_check
        %p881 = pneg %p268
      $region38: #{net_forward.20} parent=31 // pred_check_branch
        %883 = sbr.rel (%p881) target = $region40
      $region39: #{net_forward.20} parent=31 // pred_region
        %v884 = vld [vmem:[#allocation2] sm:$0xff]
        %v885 = vld [vmem:[#allocation2 + $0x8] sm:$0xff]
        %v886 = vld [vmem:[#allocation2 + $0x10] sm:$0xff]
        %v887 = vld [vmem:[#allocation2 + $0x18] sm:$0xff]
        %v888 = vld [vmem:[#allocation2 + $0x20] sm:$0xff]
        %v889 = vld [vmem:[#allocation2 + $0x28] sm:$0xff]
        %v890 = vld [vmem:[#allocation2 + $0x30] sm:$0xff]
        %v891 = vld [vmem:[#allocation2 + $0x38] sm:$0xff]
        %v892 = vld [vmem:[#allocation2 + $0x40] sm:$0xff]
        %v893 = vld [vmem:[#allocation2 + $0x48] sm:$0xff]
        %v894 = vld [vmem:[#allocation2 + $0x50] sm:$0xff]
        %v895 = vld [vmem:[#allocation2 + $0x58] sm:$0xff]
        %v896 = vld [vmem:[#allocation2 + $0x60] sm:$0xff]
        %v897 = vld [vmem:[#allocation2 + $0x68] sm:$0xff]
        %v898 = vld [vmem:[#allocation2 + $0x70] sm:$0xff]
        %v899 = vld [vmem:[#allocation2 + $0x78] sm:$0xff]
        %v900 = vld [vmem:[#allocation2 + $0x80] sm:$0xff]
        %v901 = vld [vmem:[#allocation2 + $0x88] sm:$0xff]
        %v902 = vld [vmem:[#allocation2 + $0x90] sm:$0xff]
        %v903 = vld [vmem:[#allocation2 + $0x98] sm:$0xff]
        %v904 = vld [vmem:[#allocation2 + $0xa0] sm:$0xff]
        %v905 = vld [vmem:[#allocation2 + $0xa8] sm:$0xff]
        %v906 = vld [vmem:[#allocation2 + $0xb0] sm:$0xff]
        %v907 = vld [vmem:[#allocation2 + $0xb8] sm:$0xff]
        %v908 = vld [vmem:[#allocation2 + $0xc0] sm:$0xff]
        %v909 = vld [vmem:[#allocation2 + $0xc8] sm:$0xff]
        %v910 = vld [vmem:[#allocation2 + $0xd0] sm:$0xff]
        %v911 = vld [vmem:[#allocation2 + $0xd8] sm:$0xff]
        %v912 = vld [vmem:[#allocation2 + $0xe0] sm:$0xff]
        %v913 = vld [vmem:[#allocation2 + $0xe8] sm:$0xff]
        %v914 = vld [vmem:[#allocation2 + $0xf0] sm:$0xff]
        %v915 = vld [vmem:[#allocation2 + $0xf8] sm:$0xff]
        %v916 = vld [vmem:[%s257] sm:$0x1]
        %v918 = vlaneseq
        %v919 = vshrl.u32 %v918, 7
        %v920 = vsub.s32 0, %v919
        %v921 = vrot.slane %v916, %v920
        %v923 = vadd.f32 %v884, %v921
        %v924 = vadd.f32 %v885, %v921
        %v925 = vadd.f32 %v886, %v921
        %v926 = vadd.f32 %v887, %v921
        %v927 = vadd.f32 %v888, %v921
        %v928 = vadd.f32 %v889, %v921
        %v929 = vadd.f32 %v890, %v921
        %v930 = vadd.f32 %v891, %v921
        %v931 = vadd.f32 %v892, %v921
        %v932 = vadd.f32 %v893, %v921
        %v933 = vadd.f32 %v894, %v921
        %v934 = vadd.f32 %v895, %v921
        %v935 = vadd.f32 %v896, %v921
        %v936 = vadd.f32 %v897, %v921
        %v937 = vadd.f32 %v898, %v921
        %v938 = vadd.f32 %v899, %v921
        %v939 = vadd.f32 %v900, %v921
        %v940 = vadd.f32 %v901, %v921
        %v941 = vadd.f32 %v902, %v921
        %v942 = vadd.f32 %v903, %v921
        %v943 = vadd.f32 %v904, %v921
        %v944 = vadd.f32 %v905, %v921
        %v945 = vadd.f32 %v906, %v921
        %v946 = vadd.f32 %v907, %v921
        %v947 = vadd.f32 %v908, %v921
        %v948 = vadd.f32 %v909, %v921
        %v949 = vadd.f32 %v910, %v921
        %v950 = vadd.f32 %v911, %v921
        %v951 = vadd.f32 %v912, %v921
        %v952 = vadd.f32 %v913, %v921
        %v953 = vadd.f32 %v914, %v921
        %v954 = vadd.f32 %v915, %v921
        %955 = vst [vmem:[%s265] sm:$0xff] %v923
        %956 = vst [vmem:[%s265 + $0x8] sm:$0xff] %v924
        %957 = vst [vmem:[%s265 + $0x10] sm:$0xff] %v925
        %958 = vst [vmem:[%s265 + $0x18] sm:$0xff] %v926
        %959 = vst [vmem:[%s265 + $0x20] sm:$0xff] %v927
        %960 = vst [vmem:[%s265 + $0x28] sm:$0xff] %v928
        %961 = vst [vmem:[%s265 + $0x30] sm:$0xff] %v929
        %962 = vst [vmem:[%s265 + $0x38] sm:$0xff] %v930
        %963 = vst [vmem:[%s265 + $0x40] sm:$0xff] %v931
        %964 = vst [vmem:[%s265 + $0x48] sm:$0xff] %v932
        %965 = vst [vmem:[%s265 + $0x50] sm:$0xff] %v933
        %966 = vst [vmem:[%s265 + $0x58] sm:$0xff] %v934
        %967 = vst [vmem:[%s265 + $0x60] sm:$0xff] %v935
        %968 = vst [vmem:[%s265 + $0x68] sm:$0xff] %v936
        %969 = vst [vmem:[%s265 + $0x70] sm:$0xff] %v937
        %970 = vst [vmem:[%s265 + $0x78] sm:$0xff] %v938
        %971 = vst [vmem:[%s265 + $0x80] sm:$0xff] %v939
        %972 = vst [vmem:[%s265 + $0x88] sm:$0xff] %v940
        %973 = vst [vmem:[%s265 + $0x90] sm:$0xff] %v941
        %974 = vst [vmem:[%s265 + $0x98] sm:$0xff] %v942
        %975 = vst [vmem:[%s265 + $0xa0] sm:$0xff] %v943
        %976 = vst [vmem:[%s265 + $0xa8] sm:$0xff] %v944
        %977 = vst [vmem:[%s265 + $0xb0] sm:$0xff] %v945
        %978 = vst [vmem:[%s265 + $0xb8] sm:$0xff] %v946
        %979 = vst [vmem:[%s265 + $0xc0] sm:$0xff] %v947
        %980 = vst [vmem:[%s265 + $0xc8] sm:$0xff] %v948
        %981 = vst [vmem:[%s265 + $0xd0] sm:$0xff] %v949
        %982 = vst [vmem:[%s265 + $0xd8] sm:$0xff] %v950
        %983 = vst [vmem:[%s265 + $0xe0] sm:$0xff] %v951
        %984 = vst [vmem:[%s265 + $0xe8] sm:$0xff] %v952
        %985 = vst [vmem:[%s265 + $0xf0] sm:$0xff] %v953
        %986 = vst [vmem:[%s265 + $0xf8] sm:$0xff] %v954
      $region40: #{net_forward.20} parent=31 // pred_fallthru
        _
      %s987 = smul.u32 32, %s19
      %p988 = scmp.lt.s32.totalorder %s987, 63
      %s989 = scalar_select %p988, %s987, 63
      %p990 = scmp.lt.s32.totalorder %s20, 0
      %s991 = scalar_select %p990, %s20, 0
      %s992 = sadd.s32 %s991, %s989
      %s993 = smul.addr %s992, 8
      %s994 = scalar_lea.vmem %s3, %s993
      // Predicated region
      $region41: #{net_forward.20} parent=31 // pred_check
        %p995 = pneg %p135
      $region42: #{net_forward.20} parent=31 // pred_check_branch
        %997 = sbr.rel (%p995) target = $region44
      $region43: #{net_forward.20} parent=31 // pred_region
        %s998 = smul.u32 32, %s19
      $region44: #{net_forward.20} parent=31 // pred_fallthru
        _
    $region32: #{net_forward.20} parent=5 // pred_fallthru
      _
    %p999 = scmp.le.s32.totalorder 2, %s9
    // Predicated region
    $region45: #{net_forward.20} parent=5 // pred_check
      %p1000 = pneg %p999
    $region46: #{net_forward.20} parent=5 // pred_check_branch
      %1002 = sbr.rel (%p1000) target = $region48
    $region47: #{net_forward.20} parent=5 // pred_region
      %s1003 = ssub.s32 %s9, 2
      // Predicated region
      $region49: #{net_forward.20} parent=47 // pred_check
        %p1004 = pneg %p141
      $region50: #{net_forward.20} parent=47 // pred_check_branch
        %1006 = sbr.rel (%p1004) target = $region52
      $region51: #{net_forward.20} parent=47 // pred_region
        %s1007 = smul.u32 32, %s22
        %p1008 = scmp.lt.s32.totalorder %s1007, 63
        %s1009 = scalar_select %p1008, %s1007, 63
        %p1010 = scmp.lt.s32.totalorder %s23, 0
        %s1011 = scalar_select %p1010, %s23, 0
        %s1012 = sadd.s32 %s1011, %s1009
        %s1013 = smul.addr %s1012, 8
        %s1014 = scalar_lea.vmem %s3, %s1013
      $region52: #{net_forward.20} parent=47 // pred_fallthru
        _
    $region48: #{net_forward.20} parent=5 // pred_fallthru
      _
  $region6: #{net_forward.20} parent=0 // loop_footer
    %s13 = sadd.s32 1, %s9
  $region7: #{net_forward.20} parent=0 // loop_footer_branch
    %8 = sbr.rel target = $region3
  $region8: #{net_forward.20} parent=0 // loop_exit
    _

// kernel: net_forward.22
$region0: #{net_forward.22}
  #allocation0 [shape = 'u32[]', space=smem, size = 0x4, offset = 0x4, fixed_abs, tag = 'smem constant byte address 0x4 - core index']
  #allocation1 [shape = 'u32[144,128]{1,0:T(1,128)}', space=vmem, size = 0x12000, scoped, tag = 'internal scratch']
  #allocation2 [shape = 'f32[128,128]{1,0:T(8,128)}', space=vmem, size = 0x10000, scoped, tag = 'scratch operand']
  %s0 = inlined_call_operand.vmem [shape: bf16[128,768], index: 0, kind: input, shape index: {}]
  %s1 = inlined_call_operand.vmem [shape: bf16[768,128], index: 1, kind: input, shape index: {}]
  %s2 = inlined_call_operand.vmem [shape: f32[1,128], index: 2, kind: input, shape index: {}]
  %s3 = inlined_call_operand.vmem [shape: f32[128,128], index: 3, kind: output, shape index: {}]
  %s4 = sld [smem:[#allocation0]]
  $region91: #{net_forward.22} parent=0
    _
  %s6 = ssub.s32 1, %s4
  %s7 = scalar_select 0, %s6, %s4
  $region1: #{net_forward.22} parent=0
    #allocation3 [shape = 'u8[131072]{0}', space=vmem, size = 0x20000, scoped, tag = 'input window, operand 0']
    loop: start=0, step=1, limit=5
    $region2: #{net_forward.22} parent=1 // loop_pre_header
      _
    $region3: #{net_forward.22} parent=1 // loop_header
      %s9 = sphi 0, %s13
      %p10 = scmp.ge.s32.totalorder %s9, 5
      %s16 = sphi 0, %s35
      %s17 = sphi 0, %s31
      %s18 = sphi 0, %s27
      %s19 = sphi 0, %s16
      %s20 = sphi 0, %s17
      %s21 = sphi 0, %s18
      %s22 = sphi 0, %s19
      %s23 = sphi 0, %s20
      %s24 = sphi 0, %s21
      %s40 = sphi 0, %s42
      %s43 = sphi 0, %s40
      %s44 = sphi 0, %s43
      %s60 = sphi 0, %s44
      %s68 = sphi 0, %s70
      %s71 = sphi 0, %s68
      %s72 = sphi 0, %s71
      %s88 = sphi 0, %s72
      %s94 = sphi 0, %s96
      %s97 = sphi 0, %s94
      %s98 = sphi 0, %s97
      %s114 = sphi 0, %s98
      %s122 = sphi 0, %s124
      %s125 = sphi 0, %s122
      %s126 = sphi 0, %s125
      %s142 = sphi 0, %s126
    $region4: #{net_forward.22} parent=1 // loop_header_branch
      %12 = sbr.rel (%p10) target = $region8
    $region5: #{net_forward.22} parent=1 // loop_body
      %s14 = ssub.s32 %s9, 1
      %s15 = ssub.s32 %s9, 2
      %s25 = sadd.s32 1, %s18
      %p26 = scmp.ge.s32.totalorder %s25, 3
      %s27 = scalar_select %p26, 0, %s25
      %s28 = sadd.s32 1, %s17
      %s29 = scalar_select %p26, %s28, %s17
      %p30 = scmp.ge.s32.totalorder %s29, 1
      %s31 = scalar_select %p30, 0, %s29
      %s32 = sadd.s32 1, %s16
      %s33 = scalar_select %p30, %s32, %s16
      %p34 = scmp.ge.s32.totalorder %s33, 1
      %s35 = scalar_select %p34, 0, %s33
      %s36 = ssub.s32 %s16, %s35
      %s37 = ssub.s32 %s18, %s27
      %s38 = sor.u32 %s36, %s37
      %p39 = scmp.eq.s32.totalorder %s38, 0
      %s41 = sadd.s32 %s40, 1
      %s42 = scalar_select %p39, %s40, %s41
      %p45 = pneg %p39
      %p46 = scmp.eq.s32.totalorder %s9, 2
      %p47 = por %p45, %p46
      %p48 = scmp.ne.s32.totalorder %s40, %s43
      %p49 = scmp.eq.s32.totalorder %s9, 0
      %p50 = por %p48, %p49
      %p51 = scmp.ne.s32.totalorder %s40, %s43
      %p52 = scmp.eq.s32.totalorder %s14, 2
      %p53 = por %p51, %p52
      %p54 = scmp.ne.s32.totalorder %s43, %s44
      %p55 = scmp.eq.s32.totalorder %s14, 0
      %p56 = por %p54, %p55
      %p57 = scmp.ne.s32.totalorder %s43, %s44
      %p58 = scmp.eq.s32.totalorder %s15, 2
      %p59 = por %p57, %p58
      %p61 = scmp.ne.s32.totalorder %s44, %s60
      %p62 = scmp.eq.s32.totalorder %s15, 0
      %p63 = por %p61, %p62
      %s64 = ssub.s32 %s18, %s27
      %s65 = ssub.s32 %s17, %s31
      %s66 = sor.u32 %s64, %s65
      %p67 = scmp.eq.s32.totalorder %s66, 0
      %s69 = sadd.s32 %s68, 1
      %s70 = scalar_select %p67, %s68, %s69
      %p73 = pneg %p67
      %p74 = scmp.eq.s32.totalorder %s9, 2
      %p75 = por %p73, %p74
      %p76 = scmp.ne.s32.totalorder %s68, %s71
      %p77 = scmp.eq.s32.totalorder %s9, 0
      %p78 = por %p76, %p77
      %p79 = scmp.ne.s32.totalorder %s68, %s71
      %p80 = scmp.eq.s32.totalorder %s14, 2
      %p81 = por %p79, %p80
      %p82 = scmp.ne.s32.totalorder %s71, %s72
      %p83 = scmp.eq.s32.totalorder %s14, 0
      %p84 = por %p82, %p83
      %p85 = scmp.ne.s32.totalorder %s71, %s72
      %p86 = scmp.eq.s32.totalorder %s15, 2
      %p87 = por %p85, %p86
      %p89 = scmp.ne.s32.totalorder %s72, %s88
      %p90 = scmp.eq.s32.totalorder %s15, 0
      %p91 = por %p89, %p90
      %s92 = ssub.s32 %s17, %s31
      %p93 = scmp.eq.s32.totalorder %s92, 0
      %s95 = sadd.s32 %s94, 1
      %s96 = scalar_select %p93, %s94, %s95
      %p99 = pneg %p93
      %p100 = scmp.eq.s32.totalorder %s9, 2
      %p101 = por %p99, %p100
      %p102 = scmp.ne.s32.totalorder %s94, %s97
      %p103 = scmp.eq.s32.totalorder %s9, 0
      %p104 = por %p102, %p103
      %p105 = scmp.ne.s32.totalorder %s94, %s97
      %p106 = scmp.eq.s32.totalorder %s14, 2
      %p107 = por %p105, %p106
      %p108 = scmp.ne.s32.totalorder %s97, %s98
      %p109 = scmp.eq.s32.totalorder %s14, 0
      %p110 = por %p108, %p109
      %p111 = scmp.ne.s32.totalorder %s97, %s98
      %p112 = scmp.eq.s32.totalorder %s15, 2
      %p113 = por %p111, %p112
      %p115 = scmp.ne.s32.totalorder %s98, %s114
      %p116 = scmp.eq.s32.totalorder %s15, 0
      %p117 = por %p115, %p116
      %s118 = ssub.s32 %s16, %s35
      %s119 = ssub.s32 %s17, %s31
      %s120 = sor.u32 %s118, %s119
      %p121 = scmp.eq.s32.totalorder %s120, 0
      %s123 = sadd.s32 %s122, 1
      %s124 = scalar_select %p121, %s122, %s123
      %p127 = pneg %p121
      %p128 = scmp.eq.s32.totalorder %s9, 2
      %p129 = por %p127, %p128
      %p130 = scmp.ne.s32.totalorder %s122, %s125
      %p131 = scmp.eq.s32.totalorder %s9, 0
      %p132 = por %p130, %p131
      %p133 = scmp.ne.s32.totalorder %s122, %s125
      %p134 = scmp.eq.s32.totalorder %s14, 2
      %p135 = por %p133, %p134
      %p136 = scmp.ne.s32.totalorder %s125, %s126
      %p137 = scmp.eq.s32.totalorder %s14, 0
      %p138 = por %p136, %p137
      %p139 = scmp.ne.s32.totalorder %s125, %s126
      %p140 = scmp.eq.s32.totalorder %s15, 2
      %p141 = por %p139, %p140
      %p143 = scmp.ne.s32.totalorder %s126, %s142
      %p144 = scmp.eq.s32.totalorder %s15, 0
      %p145 = por %p143, %p144
      %p146 = scmp.le.s32.totalorder 1, %s9
      %p147 = scmp.lt.s32.totalorder %s9, 4
      %p148 = pnand %p146, %p147
      %p149 = pneg %p148
      // Predicated region
      $region9: #{net_forward.22} parent=5 // pred_check
        _
      $region10: #{net_forward.22} parent=5 // pred_check_branch
        %151 = sbr.rel (%p148) target = $region12
      $region11: #{net_forward.22} parent=5 // pred_region
        %s152 = ssub.s32 %s9, 1
        // Predicated region
        $region13: #{net_forward.22} parent=11 // pred_check
          %p153 = pneg %p110
        $region14: #{net_forward.22} parent=11 // pred_check_branch
          %155 = sbr.rel (%p153) target = $region16
        $region15: #{net_forward.22} parent=11 // pred_region
          %p156 = scmp.lt.s32.totalorder %s20, 0
          %s157 = scalar_select %p156, %s20, 0
          %s158 = scalar_lea.vmem %s2, %s157
        $region16: #{net_forward.22} parent=11 // pred_fallthru
          _
      $region12: #{net_forward.22} parent=5 // pred_fallthru
        _
      %p159 = scmp.lt.s32.totalorder %s9, 3
      // Predicated region
      $region17: #{net_forward.22} parent=5 // pred_check
        %p160 = pneg %p159
      $region18: #{net_forward.22} parent=5 // pred_check_branch
        %162 = sbr.rel (%p160) target = $region20
      $region19: #{net_forward.22} parent=5 // pred_region
        // Predicated region
        $region21: #{net_forward.22} parent=19 // pred_check
          %p163 = pneg %p50
        $region22: #{net_forward.22} parent=19 // pred_check_branch
          %165 = sbr.rel (%p163) target = $region24
        $region23: #{net_forward.22} parent=19 // pred_region
          %s166 = sand.u32 %s40, 1
          %s167 = sand.u32 %s40, 1
          %s168 = smul.addr %s167, 128
          %s169 = scalar_lea.vmem [#allocation3], %s168
          %s170 = smul.u32 16, %s16
          %s171 = smul.u32 2, %s18
          %s172 = smul.addr %s170, 6
          %s173 = sadd.s32 %s171, %s172
          %s174 = smul.addr %s173, 4
          %s175 = scalar_lea.vmem %s0, %s174
          // Predicated region
          $region25: #{net_forward.22} parent=23 // pred_check
            _
          $region26: #{net_forward.22} parent=23 // pred_check_branch
            %177 = sbr.rel (0) target = $region28
          $region27: #{net_forward.22} parent=23 // pred_region
            // Predicated region
            $region29: #{net_forward.22} parent=27 // pred_check
              _
            $region30: #{net_forward.22} parent=27 // pred_check_branch
              %179 = sbr.rel (0) target = $region32
            $region31: #{net_forward.22} parent=27 // pred_region
              // Predicated region
              $region44: #{net_forward.22} parent=31 // pred_check
                _
              $region45: #{net_forward.22} parent=31 // pred_check_branch
                %224 = sbr.rel (0) target = $region47
              $region46: #{net_forward.22} parent=31 // pred_region
                loop: start=0, step=1, limit=1
                $region48: #{net_forward.22} parent=46 // loop_pre_header
                  _
                $region49: #{net_forward.22} parent=46 // loop_header
                  %s226 = sphi 0, %s230
                  %p227 = scmp.ge.s32.totalorder %s226, 1
                  %s231 = sphi %s175, %s175
                  %s232 = sphi %s169, %s169
                $region50: #{net_forward.22} parent=46 // loop_header_branch
                  %229 = sbr.rel (%p227) target = $region54
                $region51: #{net_forward.22} parent=46 // loop_body
                  %v233 = vld [vmem:[%s231] sm:$0xff]
                  %234 = vst [vmem:[%s232] sm:$0xff] %v233
                  %v235 = vld [vmem:[%s231 + $0x18] sm:$0xff]
                  %236 = vst [vmem:[%s232 + $0x8] sm:$0xff] %v235
                  %v237 = vld [vmem:[%s231 + $0x30] sm:$0xff]
                  %238 = vst [vmem:[%s232 + $0x10] sm:$0xff] %v237
                  %v239 = vld [vmem:[%s231 + $0x48] sm:$0xff]
                  %240 = vst [vmem:[%s232 + $0x18] sm:$0xff] %v239
                  %v241 = vld [vmem:[%s231 + $0x60] sm:$0xff]
                  %242 = vst [vmem:[%s232 + $0x20] sm:$0xff] %v241
                  %v243 = vld [vmem:[%s231 + $0x78] sm:$0xff]
                  %244 = vst [vmem:[%s232 + $0x28] sm:$0xff] %v243
                  %v245 = vld [vmem:[%s231 + $0x90] sm:$0xff]
                  %246 = vst [vmem:[%s232 + $0x30] sm:$0xff] %v245
                  %v247 = vld [vmem:[%s231 + $0xa8] sm:$0xff]
                  %248 = vst [vmem:[%s232 + $0x38] sm:$0xff] %v247
                  %v249 = vld [vmem:[%s231 + $0xc0] sm:$0xff]
                  %250 = vst [vmem:[%s232 + $0x40] sm:$0xff] %v249
                  %v251 = vld [vmem:[%s231 + $0xd8] sm:$0xff]
                  %252 = vst [vmem:[%s232 + $0x48] sm:$0xff] %v251
                  %v253 = vld [vmem:[%s231 + $0xf0] sm:$0xff]
                  %254 = vst [vmem:[%s232 + $0x50] sm:$0xff] %v253
                  %v255 = vld [vmem:[%s231 + $0x108] sm:$0xff]
                  %256 = vst [vmem:[%s232 + $0x58] sm:$0xff] %v255
                  %v257 = vld [vmem:[%s231 + $0x120] sm:$0xff]
                  %258 = vst [vmem:[%s232 + $0x60] sm:$0xff] %v257
                  %v259 = vld [vmem:[%s231 + $0x138] sm:$0xff]
                  %260 = vst [vmem:[%s232 + $0x68] sm:$0xff] %v259
                  %v261 = vld [vmem:[%s231 + $0x150] sm:$0xff]
                  %262 = vst [vmem:[%s232 + $0x70] sm:$0xff] %v261
                  %v263 = vld [vmem:[%s231 + $0x168] sm:$0xff]
                  %264 = vst [vmem:[%s232 + $0x78] sm:$0xff] %v263
                $region52: #{net_forward.22} parent=46 // loop_footer
                  %s230 = sadd.s32 1, %s226
                $region53: #{net_forward.22} parent=46 // loop_footer_branch
                  %225 = sbr.rel target = $region49
                $region54: #{net_forward.22} parent=46 // loop_exit
                  _
              $region47: #{net_forward.22} parent=31 // pred_fallthru
                _
              // Predicated region
              $region55: #{net_forward.22} parent=31 // pred_check
                _
              $region56: #{net_forward.22} parent=31 // pred_check_branch
                %266 = sbr.rel target = $region58
              $region57: #{net_forward.22} parent=31 // pred_region
                _
              $region58: #{net_forward.22} parent=31 // pred_fallthru
                _
            $region32: #{net_forward.22} parent=27 // pred_fallthru
              _
            // Predicated region
            $region33: #{net_forward.22} parent=27 // pred_check
              _
            $region34: #{net_forward.22} parent=27 // pred_check_branch
              %181 = sbr.rel target = $region36
            $region35: #{net_forward.22} parent=27 // pred_region
              loop: start=0, step=1, limit=1
              $region37: #{net_forward.22} parent=35 // loop_pre_header
                _
              $region38: #{net_forward.22} parent=35 // loop_header
                %s184 = sphi 0, %s188
                %p185 = scmp.ge.s32.totalorder %s184, 1
                %s189 = sphi %s175, %s175
                %s190 = sphi %s169, %s169
              $region39: #{net_forward.22} parent=35 // loop_header_branch
                %187 = sbr.rel (%p185) target = $region43
              $region40: #{net_forward.22} parent=35 // loop_body
                %v191 = vld [vmem:[%s189] sm:$0xff]
                %192 = vst [vmem:[%s190] sm:$0xff] %v191
                %v193 = vld [vmem:[%s189 + $0x18] sm:$0xff]
                %194 = vst [vmem:[%s190 + $0x8] sm:$0xff] %v193
                %v195 = vld [vmem:[%s189 + $0x30] sm:$0xff]
                %196 = vst [vmem:[%s190 + $0x10] sm:$0xff] %v195
                %v197 = vld [vmem:[%s189 + $0x48] sm:$0xff]
                %198 = vst [vmem:[%s190 + $0x18] sm:$0xff] %v197
                %v199 = vld [vmem:[%s189 + $0x60] sm:$0xff]
                %200 = vst [vmem:[%s190 + $0x20] sm:$0xff] %v199
                %v201 = vld [vmem:[%s189 + $0x78] sm:$0xff]
                %202 = vst [vmem:[%s190 + $0x28] sm:$0xff] %v201
                %v203 = vld [vmem:[%s189 + $0x90] sm:$0xff]
                %204 = vst [vmem:[%s190 + $0x30] sm:$0xff] %v203
                %v205 = vld [vmem:[%s189 + $0xa8] sm:$0xff]
                %206 = vst [vmem:[%s190 + $0x38] sm:$0xff] %v205
                %v207 = vld [vmem:[%s189 + $0xc0] sm:$0xff]
                %208 = vst [vmem:[%s190 + $0x40] sm:$0xff] %v207
                %v209 = vld [vmem:[%s189 + $0xd8] sm:$0xff]
                %210 = vst [vmem:[%s190 + $0x48] sm:$0xff] %v209
                %v211 = vld [vmem:[%s189 + $0xf0] sm:$0xff]
                %212 = vst [vmem:[%s190 + $0x50] sm:$0xff] %v211
                %v213 = vld [vmem:[%s189 + $0x108] sm:$0xff]
                %214 = vst [vmem:[%s190 + $0x58] sm:$0xff] %v213
                %v215 = vld [vmem:[%s189 + $0x120] sm:$0xff]
                %216 = vst [vmem:[%s190 + $0x60] sm:$0xff] %v215
                %v217 = vld [vmem:[%s189 + $0x138] sm:$0xff]
                %218 = vst [vmem:[%s190 + $0x68] sm:$0xff] %v217
                %v219 = vld [vmem:[%s189 + $0x150] sm:$0xff]
                %220 = vst [vmem:[%s190 + $0x70] sm:$0xff] %v219
                %v221 = vld [vmem:[%s189 + $0x168] sm:$0xff]
                %222 = vst [vmem:[%s190 + $0x78] sm:$0xff] %v221
              $region41: #{net_forward.22} parent=35 // loop_footer
                %s188 = sadd.s32 1, %s184
              $region42: #{net_forward.22} parent=35 // loop_footer_branch
                %183 = sbr.rel target = $region38
              $region43: #{net_forward.22} parent=35 // loop_exit
                _
            $region36: #{net_forward.22} parent=27 // pred_fallthru
              _
          $region28: #{net_forward.22} parent=23 // pred_fallthru
            _
          %267 = vnop
        $region24: #{net_forward.22} parent=19 // pred_fallthru
          _
        // Predicated region
        $region59: #{net_forward.22} parent=19 // pred_check
          %p268 = pneg %p78
        $region60: #{net_forward.22} parent=19 // pred_check_branch
          %270 = sbr.rel (%p268) target = $region62
        $region61: #{net_forward.22} parent=19 // pred_region
          %s271 = smul.u32 32, %s18
          %p272 = scmp.lt.s32.totalorder %s271, 95
          %s273 = scalar_select %p272, %s271, 95
          %p274 = scmp.lt.s32.totalorder %s17, 0
          %s275 = scalar_select %p274, %s17, 0
          %s276 = sadd.s32 %s275, %s273
          %s277 = smul.addr %s276, 4
          %s278 = scalar_lea.vmem %s1, %s277
          %s279 = smul.u32 32, %s18
        $region62: #{net_forward.22} parent=19 // pred_fallthru
          _
      $region20: #{net_forward.22} parent=5 // pred_fallthru
        _
      %p280 = scmp.le.s32.totalorder 1, %s9
      %p281 = scmp.lt.s32.totalorder %s9, 4
      %p282 = pnand %p280, %p281
      %p283 = pneg %p282
      // Predicated region
      $region63: #{net_forward.22} parent=5 // pred_check
        _
      $region64: #{net_forward.22} parent=5 // pred_check_branch
        %285 = sbr.rel (%p282) target = $region66
      $region65: #{net_forward.22} parent=5 // pred_region
        %s286 = ssub.s32 %s9, 1
        %s287 = sand.u32 %s43, 1
        %s288 = sand.u32 %s43, 1
        %s289 = smul.addr %s288, 128
        %s290 = scalar_lea.vmem [#allocation3], %s289
        // Predicated region
        $region67: #{net_forward.22} parent=65 // pred_check
          %p291 = pneg %p56
        $region68: #{net_forward.22} parent=65 // pred_check_branch
          %293 = sbr.rel (%p291) target = $region70
        $region69: #{net_forward.22} parent=65 // pred_region
          _
        $region70: #{net_forward.22} parent=65 // pred_fallthru
          _
        %s294 = sand.u32 %s43, 1
        %s295 = sand.u32 %s43, 1
        %s296 = smul.addr %s295, 128
        %s297 = scalar_lea.vmem [#allocation3], %s296
        %p298 = pneg %p56
        %p299 = pneg %p53
        %s300 = smul.u32 32, %s21
        %p301 = scmp.lt.s32.totalorder %s300, 95
        %s302 = scalar_select %p301, %s300, 95
        %p303 = scmp.lt.s32.totalorder %s20, 0
        %s304 = scalar_select %p303, %s20, 0
        %s305 = sadd.s32 %s304, %s302
        %s306 = smul.addr %s305, 4
        %s307 = scalar_lea.vmem %s1, %s306
        %p308 = pneg %p84
        %p309 = pneg %p81
        %p310 = scmp.lt.s32.totalorder %s20, 0
        %s311 = scalar_select %p310, %s20, 0
        %s312 = scalar_lea.vmem %s2, %s311
        %p313 = pneg %p110
        %p314 = pneg %p107
        %p315 = pneg %p138
        %p316 = pneg %p135
        %s317 = smul.u32 16, %s19
        %p318 = scmp.lt.s32.totalorder %s317, 15
        %s319 = scalar_select %p318, %s317, 15
        %p320 = scmp.lt.s32.totalorder %s20, 0
        %s321 = scalar_select %p320, %s20, 0
        %s322 = sadd.s32 %s321, %s319
        %s323 = smul.addr %s322, 8
        %s324 = scalar_lea.vmem %s3, %s323
        %s325 = smul.u32 16, %s19
        %s326 = smul.u32 2, %s21
        %s327 = smul.u32 32, %s21
        %p328 = scmp.lt.s32.totalorder %s327, 95
        %s329 = scalar_select %p328, %s327, 95
        %p330 = scmp.lt.s32.totalorder %s20, 0
        %s331 = scalar_select %p330, %s20, 0
        %s332 = sadd.s32 %s331, %s329
        %s333 = smul.addr %s332, 4
        %s334 = scalar_lea.vmem %s1, %s333
        %s335 = smul.u32 32, %s21
        %p336 = scmp.lt.s32.totalorder %s20, 0
        %s337 = scalar_select %p336, %s20, 0
        %s338 = scalar_lea.vmem %s2, %s337
        %s339 = smul.u32 16, %s19
        %p340 = scmp.lt.s32.totalorder %s339, 15
        %s341 = scalar_select %p340, %s339, 15
        %p342 = scmp.lt.s32.totalorder %s20, 0
        %s343 = scalar_select %p342, %s20, 0
        %s344 = sadd.s32 %s343, %s341
        %s345 = smul.addr %s344, 8
        %s346 = scalar_lea.vmem %s3, %s345
        %s347 = smul.u32 16, %s19
        %p349 = scmp.eq.s32.totalorder %s21, 0
        // Predicated region
        $region71: #{net_forward.22} parent=65 // pred_check
          %p350 = pneg %p349
        $region72: #{net_forward.22} parent=65 // pred_check_branch
          %352 = sbr.rel (%p350) target = $region74
        $region73: #{net_forward.22} parent=65 // pred_region
          %353 = vst [vmem:[#allocation2] sm:$0xff] 0.0
          %354 = vst [vmem:[#allocation2 + $0x8] sm:$0xff] 0.0
          %355 = vst [vmem:[#allocation2 + $0x10] sm:$0xff] 0.0
          %356 = vst [vmem:[#allocation2 + $0x18] sm:$0xff] 0.0
          %357 = vst [vmem:[#allocation2 + $0x20] sm:$0xff] 0.0
          %358 = vst [vmem:[#allocation2 + $0x28] sm:$0xff] 0.0
          %359 = vst [vmem:[#allocation2 + $0x30] sm:$0xff] 0.0
          %360 = vst [vmem:[#allocation2 + $0x38] sm:$0xff] 0.0
          %361 = vst [vmem:[#allocation2 + $0x40] sm:$0xff] 0.0
          %362 = vst [vmem:[#allocation2 + $0x48] sm:$0xff] 0.0
          %363 = vst [vmem:[#allocation2 + $0x50] sm:$0xff] 0.0
          %364 = vst [vmem:[#allocation2 + $0x58] sm:$0xff] 0.0
          %365 = vst [vmem:[#allocation2 + $0x60] sm:$0xff] 0.0
          %366 = vst [vmem:[#allocation2 + $0x68] sm:$0xff] 0.0
          %367 = vst [vmem:[#allocation2 + $0x70] sm:$0xff] 0.0
          %368 = vst [vmem:[#allocation2 + $0x78] sm:$0xff] 0.0
        $region74: #{net_forward.22} parent=65 // pred_fallthru
          _
        %v369 = vld [vmem:[#allocation2] sm:$0xff]
        %v370 = vld [vmem:[#allocation2 + $0x8] sm:$0xff]
        %v371 = vld [vmem:[#allocation2 + $0x10] sm:$0xff]
        %v372 = vld [vmem:[#allocation2 + $0x18] sm:$0xff]
        %v373 = vld [vmem:[#allocation2 + $0x20] sm:$0xff]
        %v374 = vld [vmem:[#allocation2 + $0x28] sm:$0xff]
        %v375 = vld [vmem:[#allocation2 + $0x30] sm:$0xff]
        %v376 = vld [vmem:[#allocation2 + $0x38] sm:$0xff]
        %v377 = vld [vmem:[#allocation2 + $0x40] sm:$0xff]
        %v378 = vld [vmem:[#allocation2 + $0x48] sm:$0xff]
        %v379 = vld [vmem:[#allocation2 + $0x50] sm:$0xff]
        %v380 = vld [vmem:[#allocation2 + $0x58] sm:$0xff]
        %v381 = vld [vmem:[#allocation2 + $0x60] sm:$0xff]
        %v382 = vld [vmem:[#allocation2 + $0x68] sm:$0xff]
        %v383 = vld [vmem:[#allocation2 + $0x70] sm:$0xff]
        %v384 = vld [vmem:[#allocation2 + $0x78] sm:$0xff]
        %v385 = vld [vmem:[%s290] sm:$0xff]
        %v386 = vld [vmem:[%s290 + $0x8] sm:$0xff]
        %v387 = vld [vmem:[%s290 + $0x10] sm:$0xff]
        %v388 = vld [vmem:[%s290 + $0x18] sm:$0xff]
        %v389 = vld [vmem:[%s290 + $0x20] sm:$0xff]
        %v390 = vld [vmem:[%s290 + $0x28] sm:$0xff]
        %v391 = vld [vmem:[%s290 + $0x30] sm:$0xff]
        %v392 = vld [vmem:[%s290 + $0x38] sm:$0xff]
        %v393 = vld [vmem:[%s290 + $0x40] sm:$0xff]
        %v394 = vld [vmem:[%s290 + $0x48] sm:$0xff]
        %v395 = vld [vmem:[%s290 + $0x50] sm:$0xff]
        %v396 = vld [vmem:[%s290 + $0x58] sm:$0xff]
        %v397 = vld [vmem:[%s290 + $0x60] sm:$0xff]
        %v398 = vld [vmem:[%s290 + $0x68] sm:$0xff]
        %v399 = vld [vmem:[%s290 + $0x70] sm:$0xff]
        %v400 = vld [vmem:[%s290 + $0x78] sm:$0xff]
        %v401 = vld [vmem:[%s334] sm:$0xf]
        %v402 = vld [vmem:[%s334 + $0x4] sm:$0xf]
        %v403 = vld [vmem:[%s334 + $0x8] sm:$0xf]
        %v404 = vld [vmem:[%s334 + $0xc] sm:$0xf]
        %v405 = vld [vmem:[%s334 + $0x10] sm:$0xf]
        %v406 = vld [vmem:[%s334 + $0x14] sm:$0xf]
        %v407 = vld [vmem:[%s334 + $0x18] sm:$0xf]
        %v408 = vld [vmem:[%s334 + $0x1c] sm:$0xf]
        %v409 = vld [vmem:[%s334 + $0x20] sm:$0xf]
        %v410 = vld [vmem:[%s334 + $0x24] sm:$0xf]
        %v411 = vld [vmem:[%s334 + $0x28] sm:$0xf]
        %v412 = vld [vmem:[%s334 + $0x2c] sm:$0xf]
        %v413 = vld [vmem:[%s334 + $0x30] sm:$0xf]
        %v414 = vld [vmem:[%s334 + $0x34] sm:$0xf]
        %v415 = vld [vmem:[%s334 + $0x38] sm:$0xf]
        %v416 = vld [vmem:[%s334 + $0x3c] sm:$0xf]
        %v417 = vld [vmem:[%s334 + $0x40] sm:$0xf]
        %v418 = vld [vmem:[%s334 + $0x44] sm:$0xf]
        %v419 = vld [vmem:[%s334 + $0x48] sm:$0xf]
        %v420 = vld [vmem:[%s334 + $0x4c] sm:$0xf]
        %v421 = vld [vmem:[%s334 + $0x50] sm:$0xf]
        %v422 = vld [vmem:[%s334 + $0x54] sm:$0xf]
        %v423 = vld [vmem:[%s334 + $0x58] sm:$0xf]
        %v424 = vld [vmem:[%s334 + $0x5c] sm:$0xf]
        %v425 = vld [vmem:[%s334 + $0x60] sm:$0xf]
        %v426 = vld [vmem:[%s334 + $0x64] sm:$0xf]
        %v427 = vld [vmem:[%s334 + $0x68] sm:$0xf]
        %v428 = vld [vmem:[%s334 + $0x6c] sm:$0xf]
        %v429 = vld [vmem:[%s334 + $0x70] sm:$0xf]
        %v430 = vld [vmem:[%s334 + $0x74] sm:$0xf]
        %v431 = vld [vmem:[%s334 + $0x78] sm:$0xf]
        %v432 = vld [vmem:[%s334 + $0x7c] sm:$0xf]
        %v449 = vunpack.c.l.b16 %v385
        %v450 = vunpack.c.h.b16 %v385
        %v451 = vunpack.c.l.b16 %v386
        %v452 = vunpack.c.h.b16 %v386
        %v453 = vunpack.c.l.b16 %v387
        %v454 = vunpack.c.h.b16 %v387
        %v455 = vunpack.c.l.b16 %v388
        %v456 = vunpack.c.h.b16 %v388
        %v457 = vunpack.c.l.b16 %v389
        %v458 = vunpack.c.h.b16 %v389
        %v459 = vunpack.c.l.b16 %v390
        %v460 = vunpack.c.h.b16 %v390
        %v461 = vunpack.c.l.b16 %v391
        %v462 = vunpack.c.h.b16 %v391
        %v463 = vunpack.c.l.b16 %v392
        %v464 = vunpack.c.h.b16 %v392
        %v465 = vunpack.c.l.b16 %v393
        %v466 = vunpack.c.h.b16 %v393
        %v467 = vunpack.c.l.b16 %v394
        %v468 = vunpack.c.h.b16 %v394
        %v469 = vunpack.c.l.b16 %v395
        %v470 = vunpack.c.h.b16 %v395
        %v471 = vunpack.c.l.b16 %v396
        %v472 = vunpack.c.h.b16 %v396
        %v473 = vunpack.c.l.b16 %v397
        %v474 = vunpack.c.h.b16 %v397
        %v475 = vunpack.c.l.b16 %v398
        %v476 = vunpack.c.h.b16 %v398
        %v477 = vunpack.c.l.b16 %v399
        %v478 = vunpack.c.h.b16 %v399
        %v479 = vunpack.c.l.b16 %v400
        %v480 = vunpack.c.h.b16 %v400
        %v481 = vpack.c.b16 %v451, %v449
        %v482 = vpack.c.b16 %v452, %v450
        %v483 = vpack.c.b16 %v455, %v453
        %v484 = vpack.c.b16 %v456, %v454
        %v485 = vpack.c.b16 %v459, %v457
        %v486 = vpack.c.b16 %v460, %v458
        %v487 = vpack.c.b16 %v463, %v461
        %v488 = vpack.c.b16 %v464, %v462
        %v489 = vpack.c.b16 %v467, %v465
        %v490 = vpack.c.b16 %v468, %v466
        %v491 = vpack.c.b16 %v471, %v469
        %v492 = vpack.c.b16 %v472, %v470
        %v493 = vpack.c.b16 %v475, %v473
        %v494 = vpack.c.b16 %v476, %v474
        %v495 = vpack.c.b16 %v479, %v477
        %v496 = vpack.c.b16 %v480, %v478
        %v545 = vunpack.c.l.b16 %v401
        %v546 = vunpack.c.l.b16 %v402
        %v547 = vunpack.c.l.b16 %v403
        %v548 = vunpack.c.l.b16 %v404
        %v549 = vunpack.c.l.b16 %v405
        %v550 = vunpack.c.l.b16 %v406
        %v551 = vunpack.c.l.b16 %v407
        %v552 = vunpack.c.l.b16 %v408
        %v553 = vunpack.c.l.b16 %v409
        %v554 = vunpack.c.l.b16 %v410
        %v555 = vunpack.c.l.b16 %v411
        %v556 = vunpack.c.l.b16 %v412
        %v557 = vunpack.c.l.b16 %v413
        %v558 = vunpack.c.l.b16 %v414
        %v559 = vunpack.c.l.b16 %v415
        %v560 = vunpack.c.l.b16 %v416
        %v561 = vunpack.c.l.b16 %v417
        %v562 = vunpack.c.l.b16 %v418
        %v563 = vunpack.c.l.b16 %v419
        %v564 = vunpack.c.l.b16 %v420
        %v565 = vunpack.c.l.b16 %v421
        %v566 = vunpack.c.l.b16 %v422
        %v567 = vunpack.c.l.b16 %v423
        %v568 = vunpack.c.l.b16 %v424
        %v569 = vunpack.c.l.b16 %v425
        %v570 = vunpack.c.l.b16 %v426
        %v571 = vunpack.c.l.b16 %v427
        %v572 = vunpack.c.l.b16 %v428
        %v573 = vunpack.c.l.b16 %v429
        %v574 = vunpack.c.l.b16 %v430
        %v575 = vunpack.c.l.b16 %v431
        %v576 = vunpack.c.l.b16 %v432
        %v577 = vpack.c.b16 %v546, %v545
        %v578 = vpack.c.b16 %v548, %v547
        %v579 = vpack.c.b16 %v550, %v549
        %v580 = vpack.c.b16 %v552, %v551
        %v581 = vpack.c.b16 %v554, %v553
        %v582 = vpack.c.b16 %v556, %v555
        %v583 = vpack.c.b16 %v558, %v557
        %v584 = vpack.c.b16 %v560, %v559
        %v585 = vpack.c.b16 %v562, %v561
        %v586 = vpack.c.b16 %v564, %v563
        %v587 = vpack.c.b16 %v566, %v565
        %v588 = vpack.c.b16 %v568, %v567
        %v589 = vpack.c.b16 %v570, %v569
        %v590 = vpack.c.b16 %v572, %v571
        %v591 = vpack.c.b16 %v574, %v573
        %v592 = vpack.c.b16 %v576, %v575
        %609 = vmatprep.subr.bf16.mxu0 0
        %610 = vmatpush1.bf16.msra.mxu0 %v577
        %611 = vmatprep.subr.bf16.mxu0 0
        %612 = vmatpush1.bf16.msra.mxu0 %v578
        %613 = vmatprep.subr.bf16.mxu0 0
        %614 = vmatpush1.bf16.msra.mxu0 %v579
        %615 = vmatprep.subr.bf16.mxu0 0
        %616 = vmatpush1.bf16.msra.mxu0 %v580
        %617 = vmatprep.subr.bf16.mxu0 0
        %618 = vmatpush1.bf16.msra.mxu0 %v581
        %619 = vmatprep.subr.bf16.mxu0 0
        %620 = vmatpush1.bf16.msra.mxu0 %v582
        %621 = vmatprep.subr.bf16.mxu0 0
        %622 = vmatpush1.bf16.msra.mxu0 %v583
        %623 = vmatprep.subr.bf16.mxu0 0
        %624 = vmatpush1.bf16.msra.mxu0 %v584
        %625 = vmatprep.subr.bf16.mxu0 0
        %626 = vmatpush1.bf16.msra.mxu0 %v585
        %627 = vmatprep.subr.bf16.mxu0 0
        %628 = vmatpush1.bf16.msra.mxu0 %v586
        %629 = vmatprep.subr.bf16.mxu0 0
        %630 = vmatpush1.bf16.msra.mxu0 %v587
        %631 = vmatprep.subr.bf16.mxu0 0
        %632 = vmatpush1.bf16.msra.mxu0 %v588
        %633 = vmatprep.subr.bf16.mxu0 0
        %634 = vmatpush1.bf16.msra.mxu0 %v589
        %635 = vmatprep.subr.bf16.mxu0 0
        %636 = vmatpush1.bf16.msra.mxu0 %v590
        %637 = vmatprep.subr.bf16.mxu0 0
        %638 = vmatpush1.bf16.msra.mxu0 %v591
        %639 = vmatprep.subr.bf16.mxu0 0
        %640 = vmatpush1.bf16.msra.mxu0 %v592
        %641 = vmatprep.mubr.bf16.mxu0 %v482
        %642 = vmatmul.mubr.bf16.gmra.mrb[0].mxu0 %v481
        %v643 = vpop.f32.mrb[0].mxu0
        %v644 = vadd.f32 0.0, %v643
        %v645 = vpop.f32.mrb[0].mxu0
        %v646 = vpop.f32.mrb[0].mxu0
        %v647 = vadd.f32 0.0, %v646
        %v648 = vpop.f32.mrb[0].mxu0
        %649 = vmatprep.mubr.bf16.mxu0 %v484
        %650 = vmatmul.mubr.bf16.gmra.mrb[0].mxu0 %v483
        %v651 = vpop.f32.mrb[0].mxu0
        %v652 = vadd.f32 0.0, %v651
        %v653 = vpop.f32.mrb[0].mxu0
        %v654 = vpop.f32.mrb[0].mxu0
        %v655 = vadd.f32 0.0, %v654
        %v656 = vpop.f32.mrb[0].mxu0
        %657 = vmatprep.mubr.bf16.mxu0 %v486
        %658 = vmatmul.mubr.bf16.gmra.mrb[0].mxu0 %v485
        %v659 = vpop.f32.mrb[0].mxu0
        %v660 = vadd.f32 0.0, %v659
        %v661 = vpop.f32.mrb[0].mxu0
        %v662 = vpop.f32.mrb[0].mxu0
        %v663 = vadd.f32 0.0, %v662
        %v664 = vpop.f32.mrb[0].mxu0
        %665 = vmatprep.mubr.bf16.mxu0 %v488
        %666 = vmatmul.mubr.bf16.gmra.mrb[0].mxu0 %v487
        %v667 = vpop.f32.mrb[0].mxu0
        %v668 = vadd.f32 0.0, %v667
        %v669 = vpop.f32.mrb[0].mxu0
        %v670 = vpop.f32.mrb[0].mxu0
        %v671 = vadd.f32 0.0, %v670
        %v672 = vpop.f32.mrb[0].mxu0
        %673 = vmatprep.mubr.bf16.mxu0 %v490
        %674 = vmatmul.mubr.bf16.gmra.mrb[0].mxu0 %v489
        %v675 = vpop.f32.mrb[0].mxu0
        %v676 = vadd.f32 0.0, %v675
        %v677 = vpop.f32.mrb[0].mxu0
        %v678 = vpop.f32.mrb[0].mxu0
        %v679 = vadd.f32 0.0, %v678
        %v680 = vpop.f32.mrb[0].mxu0
        %681 = vmatprep.mubr.bf16.mxu0 %v492
        %682 = vmatmul.mubr.bf16.gmra.mrb[0].mxu0 %v491
        %v683 = vpop.f32.mrb[0].mxu0
        %v684 = vadd.f32 0.0, %v683
        %v685 = vpop.f32.mrb[0].mxu0
        %v686 = vpop.f32.mrb[0].mxu0
        %v687 = vadd.f32 0.0, %v686
        %v688 = vpop.f32.mrb[0].mxu0
        %689 = vmatprep.mubr.bf16.mxu0 %v494
        %690 = vmatmul.mubr.bf16.gmra.mrb[0].mxu0 %v493
        %v691 = vpop.f32.mrb[0].mxu0
        %v692 = vadd.f32 0.0, %v691
        %v693 = vpop.f32.mrb[0].mxu0
        %v694 = vpop.f32.mrb[0].mxu0
        %v695 = vadd.f32 0.0, %v694
        %v696 = vpop.f32.mrb[0].mxu0
        %697 = vmatprep.mubr.bf16.mxu0 %v496
        %698 = vmatmul.mubr.bf16.gmra.mrb[0].mxu0 %v495
        %v699 = vpop.f32.mrb[0].mxu0
        %v700 = vadd.f32 0.0, %v699
        %v701 = vpop.f32.mrb[0].mxu0
        %v702 = vpop.f32.mrb[0].mxu0
        %v703 = vadd.f32 0.0, %v702
        %v704 = vpop.f32.mrb[0].mxu0
        %705 = vdwg.mxu0
        %v706 = vadd.f32 %v369, %v644
        %v707 = vadd.f32 %v370, %v647
        %v708 = vadd.f32 %v371, %v652
        %v709 = vadd.f32 %v372, %v655
        %v710 = vadd.f32 %v373, %v660
        %v711 = vadd.f32 %v374, %v663
        %v712 = vadd.f32 %v375, %v668
        %v713 = vadd.f32 %v376, %v671
        %v714 = vadd.f32 %v377, %v676
        %v715 = vadd.f32 %v378, %v679
        %v716 = vadd.f32 %v379, %v684
        %v717 = vadd.f32 %v380, %v687
        %v718 = vadd.f32 %v381, %v692
        %v719 = vadd.f32 %v382, %v695
        %v720 = vadd.f32 %v383, %v700
        %v721 = vadd.f32 %v384, %v703
        %722 = vst [vmem:[#allocation2] sm:$0xff] %v706
        %723 = vst [vmem:[#allocation2 + $0x8] sm:$0xff] %v707
        %724 = vst [vmem:[#allocation2 + $0x10] sm:$0xff] %v708
        %725 = vst [vmem:[#allocation2 + $0x18] sm:$0xff] %v709
        %726 = vst [vmem:[#allocation2 + $0x20] sm:$0xff] %v710
        %727 = vst [vmem:[#allocation2 + $0x28] sm:$0xff] %v711
        %728 = vst [vmem:[#allocation2 + $0x30] sm:$0xff] %v712
        %729 = vst [vmem:[#allocation2 + $0x38] sm:$0xff] %v713
        %730 = vst [vmem:[#allocation2 + $0x40] sm:$0xff] %v714
        %731 = vst [vmem:[#allocation2 + $0x48] sm:$0xff] %v715
        %732 = vst [vmem:[#allocation2 + $0x50] sm:$0xff] %v716
        %733 = vst [vmem:[#allocation2 + $0x58] sm:$0xff] %v717
        %734 = vst [vmem:[#allocation2 + $0x60] sm:$0xff] %v718
        %735 = vst [vmem:[#allocation2 + $0x68] sm:$0xff] %v719
        %736 = vst [vmem:[#allocation2 + $0x70] sm:$0xff] %v720
        %737 = vst [vmem:[#allocation2 + $0x78] sm:$0xff] %v721
        %p738 = scmp.eq.s32.totalorder %s21, 2
        // Predicated region
        $region75: #{net_forward.22} parent=65 // pred_check
          %p739 = pneg %p738
        $region76: #{net_forward.22} parent=65 // pred_check_branch
          %741 = sbr.rel (%p739) target = $region78
        $region77: #{net_forward.22} parent=65 // pred_region
          %v742 = vld [vmem:[#allocation2] sm:$0xff]
          %v743 = vld [vmem:[#allocation2 + $0x8] sm:$0xff]
          %v744 = vld [vmem:[#allocation2 + $0x10] sm:$0xff]
          %v745 = vld [vmem:[#allocation2 + $0x18] sm:$0xff]
          %v746 = vld [vmem:[#allocation2 + $0x20] sm:$0xff]
          %v747 = vld [vmem:[#allocation2 + $0x28] sm:$0xff]
          %v748 = vld [vmem:[#allocation2 + $0x30] sm:$0xff]
          %v749 = vld [vmem:[#allocation2 + $0x38] sm:$0xff]
          %v750 = vld [vmem:[#allocation2 + $0x40] sm:$0xff]
          %v751 = vld [vmem:[#allocation2 + $0x48] sm:$0xff]
          %v752 = vld [vmem:[#allocation2 + $0x50] sm:$0xff]
          %v753 = vld [vmem:[#allocation2 + $0x58] sm:$0xff]
          %v754 = vld [vmem:[#allocation2 + $0x60] sm:$0xff]
          %v755 = vld [vmem:[#allocation2 + $0x68] sm:$0xff]
          %v756 = vld [vmem:[#allocation2 + $0x70] sm:$0xff]
          %v757 = vld [vmem:[#allocation2 + $0x78] sm:$0xff]
          %v758 = vld [vmem:[%s338] sm:$0x1]
          %v760 = vlaneseq
          %v761 = vshrl.u32 %v760, 7
          %v762 = vsub.s32 0, %v761
          %v763 = vrot.slane %v758, %v762
          %v765 = vadd.f32 %v742, %v763
          %v766 = vadd.f32 %v743, %v763
          %v767 = vadd.f32 %v744, %v763
          %v768 = vadd.f32 %v745, %v763
          %v769 = vadd.f32 %v746, %v763
          %v770 = vadd.f32 %v747, %v763
          %v771 = vadd.f32 %v748, %v763
          %v772 = vadd.f32 %v749, %v763
          %v773 = vadd.f32 %v750, %v763
          %v774 = vadd.f32 %v751, %v763
          %v775 = vadd.f32 %v752, %v763
          %v776 = vadd.f32 %v753, %v763
          %v777 = vadd.f32 %v754, %v763
          %v778 = vadd.f32 %v755, %v763
          %v779 = vadd.f32 %v756, %v763
          %v780 = vadd.f32 %v757, %v763
          %781 = vst [vmem:[%s346] sm:$0xff] %v765
          %782 = vst [vmem:[%s346 + $0x8] sm:$0xff] %v766
          %783 = vst [vmem:[%s346 + $0x10] sm:$0xff] %v767
          %784 = vst [vmem:[%s346 + $0x18] sm:$0xff] %v768
          %785 = vst [vmem:[%s346 + $0x20] sm:$0xff] %v769
          %786 = vst [vmem:[%s346 + $0x28] sm:$0xff] %v770
          %787 = vst [vmem:[%s346 + $0x30] sm:$0xff] %v771
          %788 = vst [vmem:[%s346 + $0x38] sm:$0xff] %v772
          %789 = vst [vmem:[%s346 + $0x40] sm:$0xff] %v773
          %790 = vst [vmem:[%s346 + $0x48] sm:$0xff] %v774
          %791 = vst [vmem:[%s346 + $0x50] sm:$0xff] %v775
          %792 = vst [vmem:[%s346 + $0x58] sm:$0xff] %v776
          %793 = vst [vmem:[%s346 + $0x60] sm:$0xff] %v777
          %794 = vst [vmem:[%s346 + $0x68] sm:$0xff] %v778
          %795 = vst [vmem:[%s346 + $0x70] sm:$0xff] %v779
          %796 = vst [vmem:[%s346 + $0x78] sm:$0xff] %v780
        $region78: #{net_forward.22} parent=65 // pred_fallthru
          _
        %s797 = smul.u32 16, %s19
        %p798 = scmp.lt.s32.totalorder %s797, 15
        %s799 = scalar_select %p798, %s797, 15
        %p800 = scmp.lt.s32.totalorder %s20, 0
        %s801 = scalar_select %p800, %s20, 0
        %s802 = sadd.s32 %s801, %s799
        %s803 = smul.addr %s802, 8
        %s804 = scalar_lea.vmem %s3, %s803
        // Predicated region
        $region79: #{net_forward.22} parent=65 // pred_check
          %p805 = pneg %p135
        $region80: #{net_forward.22} parent=65 // pred_check_branch
          %807 = sbr.rel (%p805) target = $region82
        $region81: #{net_forward.22} parent=65 // pred_region
          %s808 = smul.u32 16, %s19
        $region82: #{net_forward.22} parent=65 // pred_fallthru
          _
        // Predicated region
        $region83: #{net_forward.22} parent=65 // pred_check
          %p809 = pneg %p135
        $region84: #{net_forward.22} parent=65 // pred_check_branch
          %811 = sbr.rel (%p809) target = $region86
        $region85: #{net_forward.22} parent=65 // pred_region
          %s812 = smul.u32 16, %s19
          %p813 = scmp.lt.s32.totalorder %s812, 15
          %s814 = scalar_select %p813, %s812, 15
          %p815 = scmp.lt.s32.totalorder %s20, 0
          %s816 = scalar_select %p815, %s20, 0
          %s817 = sadd.s32 %s816, %s814
          %s818 = smul.addr %s817, 8
          %s819 = scalar_lea.vmem %s3, %s818
        $region86: #{net_forward.22} parent=65 // pred_fallthru
          _
      $region66: #{net_forward.22} parent=5 // pred_fallthru
        _
      %p820 = scmp.le.s32.totalorder 2, %s9
      // Predicated region
      $region87: #{net_forward.22} parent=5 // pred_check
        %p821 = pneg %p820
      $region88: #{net_forward.22} parent=5 // pred_check_branch
        %823 = sbr.rel (%p821) target = $region90
      $region89: #{net_forward.22} parent=5 // pred_region
        %s824 = ssub.s32 %s9, 2
      $region90: #{net_forward.22} parent=5 // pred_fallthru
        _
    $region6: #{net_forward.22} parent=1 // loop_footer
      %s13 = sadd.s32 1, %s9
    $region7: #{net_forward.22} parent=1 // loop_footer_branch
      %8 = sbr.rel target = $region3
    $region8: #{net_forward.22} parent=1 // loop_exit
      _

// kernel: net_forward.23
$region0: #{net_forward.23}
  #allocation0 [shape = 'u32[]', space=smem, size = 0x4, offset = 0x4, fixed_abs, tag = 'smem constant byte address 0x4 - core index']
  #allocation1 [shape = 'u32[144,128]{1,0:T(1,128)}', space=vmem, size = 0x12000, scoped, tag = 'internal scratch']
  %s0 = inlined_call_operand.vmem [shape: f32[2,64,128], index: 0, kind: input, shape index: {}]
  %s1 = inlined_call_operand.vmem [shape: f32[2,64,128], index: 1, kind: output, shape index: {}]
  %s2 = sld [smem:[#allocation0]]
  $region37: #{net_forward.23} parent=0
    _
  %s4 = ssub.s32 1, %s2
  %s5 = scalar_select 0, %s4, %s2
  loop: start=0, step=1, limit=4
  $region2: #{net_forward.23} parent=0 // loop_pre_header
    _
  $region3: #{net_forward.23} parent=0 // loop_header
    %s7 = sphi 0, %s11
    %p8 = scmp.ge.s32.totalorder %s7, 4
    %s17 = sphi 0, %s19
    %s20 = sphi 0, %s17
    %s21 = sphi 0, %s20
    %s37 = sphi 0, %s21
    %s43 = sphi 0, %s45
    %s46 = sphi 0, %s43
    %s47 = sphi 0, %s46
    %s63 = sphi 0, %s47
  $region4: #{net_forward.23} parent=0 // loop_header_branch
    %10 = sbr.rel (%p8) target = $region8
  $region5: #{net_forward.23} parent=0 // loop_body
    %s12 = ssub.s32 %s7, 1
    %s13 = ssub.s32 %s7, 2
    %s14 = sadd.s32 %s7, 1
    %s15 = ssub.s32 %s7, %s14
    %p16 = scmp.eq.s32.totalorder %s15, 0
    %s18 = sadd.s32 %s17, 1
    %s19 = scalar_select %p16, %s17, %s18
    %p22 = pneg %p16
    %p23 = scmp.eq.s32.totalorder %s7, 1
    %p24 = por %p22, %p23
    %p25 = scmp.ne.s32.totalorder %s17, %s20
    %p26 = scmp.eq.s32.totalorder %s7, 0
    %p27 = por %p25, %p26
    %p28 = scmp.ne.s32.totalorder %s17, %s20
    %p29 = scmp.eq.s32.totalorder %s12, 1
    %p30 = por %p28, %p29
    %p31 = scmp.ne.s32.totalorder %s20, %s21
    %p32 = scmp.eq.s32.totalorder %s12, 0
    %p33 = por %p31, %p32
    %p34 = scmp.ne.s32.totalorder %s20, %s21
    %p35 = scmp.eq.s32.totalorder %s13, 1
    %p36 = por %p34, %p35
    %p38 = scmp.ne.s32.totalorder %s21, %s37
    %p39 = scmp.eq.s32.totalorder %s13, 0
    %p40 = por %p38, %p39
    %s41 = ssub.s32 %s7, %s14
    %p42 = scmp.eq.s32.totalorder %s41, 0
    %s44 = sadd.s32 %s43, 1
    %s45 = scalar_select %p42, %s43, %s44
    %p48 = pneg %p42
    %p49 = scmp.eq.s32.totalorder %s7, 1
    %p50 = por %p48, %p49
    %p51 = scmp.ne.s32.totalorder %s43, %s46
    %p52 = scmp.eq.s32.totalorder %s7, 0
    %p53 = por %p51, %p52
    %p54 = scmp.ne.s32.totalorder %s43, %s46
    %p55 = scmp.eq.s32.totalorder %s12, 1
    %p56 = por %p54, %p55
    %p57 = scmp.ne.s32.totalorder %s46, %s47
    %p58 = scmp.eq.s32.totalorder %s12, 0
    %p59 = por %p57, %p58
    %p60 = scmp.ne.s32.totalorder %s46, %s47
    %p61 = scmp.eq.s32.totalorder %s13, 1
    %p62 = por %p60, %p61
    %p64 = scmp.ne.s32.totalorder %s47, %s63
    %p65 = scmp.eq.s32.totalorder %s13, 0
    %p66 = por %p64, %p65
    %p67 = scmp.le.s32.totalorder 1, %s7
    %p68 = scmp.lt.s32.totalorder %s7, 3
    %p69 = pnand %p67, %p68
    %p70 = pneg %p69
    // Predicated region
    $region9: #{net_forward.23} parent=5 // pred_check
      _
    $region10: #{net_forward.23} parent=5 // pred_check_branch
      %72 = sbr.rel (%p69) target = $region12
    $region11: #{net_forward.23} parent=5 // pred_region
      %s73 = ssub.s32 %s7, 1
    $region12: #{net_forward.23} parent=5 // pred_fallthru
      _
    %p74 = scmp.lt.s32.totalorder %s7, 2
    // Predicated region
    $region13: #{net_forward.23} parent=5 // pred_check
      %p75 = pneg %p74
    $region14: #{net_forward.23} parent=5 // pred_check_branch
      %77 = sbr.rel (%p75) target = $region16
    $region15: #{net_forward.23} parent=5 // pred_region
      // Predicated region
      $region17: #{net_forward.23} parent=15 // pred_check
        %p78 = pneg %p27
      $region18: #{net_forward.23} parent=15 // pred_check_branch
        %80 = sbr.rel (%p78) target = $region20
      $region19: #{net_forward.23} parent=15 // pred_region
        %p81 = scmp.lt.s32.totalorder %s7, 1
        %s82 = scalar_select %p81, %s7, 1
        %s83 = smul.addr %s82, 8
        %s84 = smul.addr %s83, 8
        %s85 = scalar_lea.vmem %s0, %s84
      $region20: #{net_forward.23} parent=15 // pred_fallthru
        _
    $region16: #{net_forward.23} parent=5 // pred_fallthru
      _
    %p86 = scmp.le.s32.totalorder 1, %s7
    %p87 = scmp.lt.s32.totalorder %s7, 3
    %p88 = pnand %p86, %p87
    %p89 = pneg %p88
    // Predicated region
    $region21: #{net_forward.23} parent=5 // pred_check
      _
    $region22: #{net_forward.23} parent=5 // pred_check_branch
      %91 = sbr.rel (%p88) target = $region24
    $region23: #{net_forward.23} parent=5 // pred_region
      %s92 = ssub.s32 %s7, 1
      %p93 = scmp.lt.s32.totalorder %s12, 1
      %s94 = scalar_select %p93, %s12, 1
      %s95 = smul.addr %s94, 8
      %s96 = smul.addr %s95, 8
      %s97 = scalar_lea.vmem %s0, %s96
      %p98 = pneg %p33
      %p99 = pneg %p30
      %p100 = pneg %p59
      %p101 = pneg %p56
      %p102 = scmp.lt.s32.totalorder %s12, 1
      %s103 = scalar_select %p102, %s12, 1
      %s104 = smul.addr %s103, 8
      %s105 = smul.addr %s104, 8
      %s106 = scalar_lea.vmem %s1, %s105
      %p107 = scmp.lt.s32.totalorder %s12, 1
      %s108 = scalar_select %p107, %s12, 1
      %s109 = smul.addr %s108, 8
      %s110 = smul.addr %s109, 8
      %s111 = scalar_lea.vmem %s0, %s110
      %p112 = scmp.lt.s32.totalorder %s12, 1
      %s113 = scalar_select %p112, %s12, 1
      %s114 = smul.addr %s113, 8
      %s115 = smul.addr %s114, 8
      %s116 = scalar_lea.vmem %s1, %s115
      %v117 = vld [vmem:[%s111] sm:$0xff]
      %v118 = vld [vmem:[%s111 + $0x8] sm:$0xff]
      %v119 = vld [vmem:[%s111 + $0x10] sm:$0xff]
      %v120 = vld [vmem:[%s111 + $0x18] sm:$0xff]
      %v121 = vld [vmem:[%s111 + $0x20] sm:$0xff]
      %v122 = vld [vmem:[%s111 + $0x28] sm:$0xff]
      %v123 = vld [vmem:[%s111 + $0x30] sm:$0xff]
      %v124 = vld [vmem:[%s111 + $0x38] sm:$0xff]
      %v125 = vadd.f32 %v117, %v118
      %v126 = vadd.f32 %v125, %v119
      %v127 = vadd.f32 %v126, %v120
      %v128 = vadd.f32 %v127, %v121
      %v129 = vadd.f32 %v128, %v122
      %v130 = vadd.f32 %v129, %v123
      %v131 = vadd.f32 %v130, %v124
      %v132 = vrot.slane %v131, 4
      %v133 = vadd.f32 %v131, %v132
      %v134 = vrot.slane %v133, 2
      %v135 = vadd.f32 %v133, %v134
      %v136 = vrot.slane %v135, 1
      %v137 = vadd.f32 %v135, %v136
      %v138 = vrcp.pop 64.0
      %v139 = vmul.f32 %v137, %v138
      %v140 = vsub.f32 %v117, %v139
      %v141 = vsub.f32 %v118, %v139
      %v142 = vsub.f32 %v119, %v139
      %v143 = vsub.f32 %v120, %v139
      %v144 = vsub.f32 %v121, %v139
      %v145 = vsub.f32 %v122, %v139
      %v146 = vsub.f32 %v123, %v139
      %v147 = vsub.f32 %v124, %v139
      %v148 = vmul.f32 %v140, %v140
      %v149 = vmul.f32 %v141, %v141
      %v150 = vmul.f32 %v142, %v142
      %v151 = vmul.f32 %v143, %v143
      %v152 = vmul.f32 %v144, %v144
      %v153 = vmul.f32 %v145, %v145
      %v154 = vmul.f32 %v146, %v146
      %v155 = vmul.f32 %v147, %v147
      %v156 = vadd.f32 %v148, %v149
      %v157 = vadd.f32 %v156, %v150
      %v158 = vadd.f32 %v157, %v151
      %v159 = vadd.f32 %v158, %v152
      %v160 = vadd.f32 %v159, %v153
      %v161 = vadd.f32 %v160, %v154
      %v162 = vadd.f32 %v161, %v155
      %v163 = vrot.slane %v162, 4
      %v164 = vadd.f32 %v162, %v163
      %v165 = vrot.slane %v164, 2
      %v166 = vadd.f32 %v164, %v165
      %v167 = vrot.slane %v166, 1
      %v168 = vadd.f32 %v166, %v167
      %v169 = vmul.f32 %v168, %v138
      %v170 = vadd.f32 %v169, 1e-05
      %v171 = vrsqrt.pop %v170
      %v172 = vmul.f32 %v140, %v171
      %v173 = vmul.f32 %v141, %v171
      %v174 = vmul.f32 %v142, %v171
      %v175 = vmul.f32 %v143, %v171
      %v176 = vmul.f32 %v144, %v171
      %v177 = vmul.f32 %v145, %v171
      %v178 = vmul.f32 %v146, %v171
      %v179 = vmul.f32 %v147, %v171
      %v180 = vmax.f32 %v172, 0.0
      %v181 = vmax.f32 %v173, 0.0
      %v182 = vmax.f32 %v174, 0.0
      %v183 = vmax.f32 %v175, 0.0
      %v184 = vmax.f32 %v176, 0.0
      %v185 = vmax.f32 %v177, 0.0
      %v186 = vmax.f32 %v178, 0.0
      %v187 = vmax.f32 %v179, 0.0
      %188 = vst [vmem:[%s116] sm:$0xff] %v180
      %189 = vst [vmem:[%s116 + $0x8] sm:$0xff] %v181
      %190 = vst [vmem:[%s116 + $0x10] sm:$0xff] %v182
      %191 = vst [vmem:[%s116 + $0x18] sm:$0xff] %v183
      %192 = vst [vmem:[%s116 + $0x20] sm:$0xff] %v184
      %193 = vst [vmem:[%s116 + $0x28] sm:$0xff] %v185
      %194 = vst [vmem:[%s116 + $0x30] sm:$0xff] %v186
      %195 = vst [vmem:[%s116 + $0x38] sm:$0xff] %v187
      %p196 = scmp.lt.s32.totalorder %s12, 1
      %s197 = scalar_select %p196, %s12, 1
      %s198 = smul.addr %s197, 8
      %s199 = smul.addr %s198, 8
      %s200 = scalar_lea.vmem %s1, %s199
      // Predicated region
      $region25: #{net_forward.23} parent=23 // pred_check
        %p201 = pneg %p56
      $region26: #{net_forward.23} parent=23 // pred_check_branch
        %203 = sbr.rel (%p201) target = $region28
      $region27: #{net_forward.23} parent=23 // pred_region
        _
      $region28: #{net_forward.23} parent=23 // pred_fallthru
        _
    $region24: #{net_forward.23} parent=5 // pred_fallthru
      _
    %p204 = scmp.le.s32.totalorder 2, %s7
    // Predicated region
    $region29: #{net_forward.23} parent=5 // pred_check
      %p205 = pneg %p204
    $region30: #{net_forward.23} parent=5 // pred_check_branch
      %207 = sbr.rel (%p205) target = $region32
    $region31: #{net_forward.23} parent=5 // pred_region
      %s208 = ssub.s32 %s7, 2
      // Predicated region
      $region33: #{net_forward.23} parent=31 // pred_check
        %p209 = pneg %p62
      $region34: #{net_forward.23} parent=31 // pred_check_branch
        %211 = sbr.rel (%p209) target = $region36
      $region35: #{net_forward.23} parent=31 // pred_region
        %p212 = scmp.lt.s32.totalorder %s13, 1
        %s213 = scalar_select %p212, %s13, 1
        %s214 = smul.addr %s213, 8
        %s215 = smul.addr %s214, 8
        %s216 = scalar_lea.vmem %s1, %s215
      $region36: #{net_forward.23} parent=31 // pred_fallthru
        _
    $region32: #{net_forward.23} parent=5 // pred_fallthru
      _
  $region6: #{net_forward.23} parent=0 // loop_footer
    %s11 = sadd.s32 1, %s7
  $region7: #{net_forward.23} parent=0 // loop_footer_branch
    %6 = sbr.rel target = $region3
  $region8: #{net_forward.23} parent=0 // loop_exit
    _

// kernel: net_forward.25
$region0: #{net_forward.25}
  #allocation0 [shape = 'u32[]', space=smem, size = 0x4, offset = 0x4, fixed_abs, tag = 'smem constant byte address 0x4 - core index']
  #allocation1 [shape = 'u32[144,128]{1,0:T(1,128)}', space=vmem, size = 0x12000, scoped, tag = 'internal scratch']
  %s0 = inlined_call_operand.vmem [shape: f32[2,16,256], index: 0, kind: input, shape index: {}]
  %s1 = inlined_call_operand.vmem [shape: f32[2,16,256], index: 1, kind: output, shape index: {}]
  %s2 = sld [smem:[#allocation0]]
  $region37: #{net_forward.25} parent=0
    _
  %s4 = ssub.s32 1, %s2
  %s5 = scalar_select 0, %s4, %s2
  loop: start=0, step=1, limit=4
  $region2: #{net_forward.25} parent=0 // loop_pre_header
    _
  $region3: #{net_forward.25} parent=0 // loop_header
    %s7 = sphi 0, %s11
    %p8 = scmp.ge.s32.totalorder %s7, 4
    %s17 = sphi 0, %s19
    %s20 = sphi 0, %s17
    %s21 = sphi 0, %s20
    %s37 = sphi 0, %s21
    %s43 = sphi 0, %s45
    %s46 = sphi 0, %s43
    %s47 = sphi 0, %s46
    %s63 = sphi 0, %s47
  $region4: #{net_forward.25} parent=0 // loop_header_branch
    %10 = sbr.rel (%p8) target = $region8
  $region5: #{net_forward.25} parent=0 // loop_body
    %s12 = ssub.s32 %s7, 1
    %s13 = ssub.s32 %s7, 2
    %s14 = sadd.s32 %s7, 1
    %s15 = ssub.s32 %s7, %s14
    %p16 = scmp.eq.s32.totalorder %s15, 0
    %s18 = sadd.s32 %s17, 1
    %s19 = scalar_select %p16, %s17, %s18
    %p22 = pneg %p16
    %p23 = scmp.eq.s32.totalorder %s7, 1
    %p24 = por %p22, %p23
    %p25 = scmp.ne.s32.totalorder %s17, %s20
    %p26 = scmp.eq.s32.totalorder %s7, 0
    %p27 = por %p25, %p26
    %p28 = scmp.ne.s32.totalorder %s17, %s20
    %p29 = scmp.eq.s32.totalorder %s12, 1
    %p30 = por %p28, %p29
    %p31 = scmp.ne.s32.totalorder %s20, %s21
    %p32 = scmp.eq.s32.totalorder %s12, 0
    %p33 = por %p31, %p32
    %p34 = scmp.ne.s32.totalorder %s20, %s21
    %p35 = scmp.eq.s32.totalorder %s13, 1
    %p36 = por %p34, %p35
    %p38 = scmp.ne.s32.totalorder %s21, %s37
    %p39 = scmp.eq.s32.totalorder %s13, 0
    %p40 = por %p38, %p39
    %s41 = ssub.s32 %s7, %s14
    %p42 = scmp.eq.s32.totalorder %s41, 0
    %s44 = sadd.s32 %s43, 1
    %s45 = scalar_select %p42, %s43, %s44
    %p48 = pneg %p42
    %p49 = scmp.eq.s32.totalorder %s7, 1
    %p50 = por %p48, %p49
    %p51 = scmp.ne.s32.totalorder %s43, %s46
    %p52 = scmp.eq.s32.totalorder %s7, 0
    %p53 = por %p51, %p52
    %p54 = scmp.ne.s32.totalorder %s43, %s46
    %p55 = scmp.eq.s32.totalorder %s12, 1
    %p56 = por %p54, %p55
    %p57 = scmp.ne.s32.totalorder %s46, %s47
    %p58 = scmp.eq.s32.totalorder %s12, 0
    %p59 = por %p57, %p58
    %p60 = scmp.ne.s32.totalorder %s46, %s47
    %p61 = scmp.eq.s32.totalorder %s13, 1
    %p62 = por %p60, %p61
    %p64 = scmp.ne.s32.totalorder %s47, %s63
    %p65 = scmp.eq.s32.totalorder %s13, 0
    %p66 = por %p64, %p65
    %p67 = scmp.le.s32.totalorder 1, %s7
    %p68 = scmp.lt.s32.totalorder %s7, 3
    %p69 = pnand %p67, %p68
    %p70 = pneg %p69
    // Predicated region
    $region9: #{net_forward.25} parent=5 // pred_check
      _
    $region10: #{net_forward.25} parent=5 // pred_check_branch
      %72 = sbr.rel (%p69) target = $region12
    $region11: #{net_forward.25} parent=5 // pred_region
      %s73 = ssub.s32 %s7, 1
    $region12: #{net_forward.25} parent=5 // pred_fallthru
      _
    %p74 = scmp.lt.s32.totalorder %s7, 2
    // Predicated region
    $region13: #{net_forward.25} parent=5 // pred_check
      %p75 = pneg %p74
    $region14: #{net_forward.25} parent=5 // pred_check_branch
      %77 = sbr.rel (%p75) target = $region16
    $region15: #{net_forward.25} parent=5 // pred_region
      // Predicated region
      $region17: #{net_forward.25} parent=15 // pred_check
        %p78 = pneg %p27
      $region18: #{net_forward.25} parent=15 // pred_check_branch
        %80 = sbr.rel (%p78) target = $region20
      $region19: #{net_forward.25} parent=15 // pred_region
        %p81 = scmp.lt.s32.totalorder %s7, 1
        %s82 = scalar_select %p81, %s7, 1
        %s83 = smul.addr %s82, 4
        %s84 = smul.addr %s83, 8
        %s85 = scalar_lea.vmem %s0, %s84
      $region20: #{net_forward.25} parent=15 // pred_fallthru
        _
    $region16: #{net_forward.25} parent=5 // pred_fallthru
      _
    %p86 = scmp.le.s32.totalorder 1, %s7
    %p87 = scmp.lt.s32.totalorder %s7, 3
    %p88 = pnand %p86, %p87
    %p89 = pneg %p88
    // Predicated region
    $region21: #{net_forward.25} parent=5 // pred_check
      _
    $region22: #{net_forward.25} parent=5 // pred_check_branch
      %91 = sbr.rel (%p88) target = $region24
    $region23: #{net_forward.25} parent=5 // pred_region
      %s92 = ssub.s32 %s7, 1
      %p93 = scmp.lt.s32.totalorder %s12, 1
      %s94 = scalar_select %p93, %s12, 1
      %s95 = smul.addr %s94, 4
      %s96 = smul.addr %s95, 8
      %s97 = scalar_lea.vmem %s0, %s96
      %p98 = pneg %p33
      %p99 = pneg %p30
      %p100 = pneg %p59
      %p101 = pneg %p56
      %p102 = scmp.lt.s32.totalorder %s12, 1
      %s103 = scalar_select %p102, %s12, 1
      %s104 = smul.addr %s103, 4
      %s105 = smul.addr %s104, 8
      %s106 = scalar_lea.vmem %s1, %s105
      %p107 = scmp.lt.s32.totalorder %s12, 1
      %s108 = scalar_select %p107, %s12, 1
      %s109 = smul.addr %s108, 4
      %s110 = smul.addr %s109, 8
      %s111 = scalar_lea.vmem %s0, %s110
      %p112 = scmp.lt.s32.totalorder %s12, 1
      %s113 = scalar_select %p112, %s12, 1
      %s114 = smul.addr %s113, 4
      %s115 = smul.addr %s114, 8
      %s116 = scalar_lea.vmem %s1, %s115
      %v117 = vld [vmem:[%s111] sm:$0xff]
      %v118 = vld [vmem:[%s111 + $0x8] sm:$0xff]
      %v119 = vld [vmem:[%s111 + $0x10] sm:$0xff]
      %v120 = vld [vmem:[%s111 + $0x18] sm:$0xff]
      %v121 = vadd.f32 %v117, %v119
      %v122 = vrot.slane %v121, 4
      %v123 = vadd.f32 %v121, %v122
      %v124 = vrot.slane %v123, 2
      %v125 = vadd.f32 %v123, %v124
      %v126 = vrot.slane %v125, 1
      %v127 = vadd.f32 %v125, %v126
      %v128 = vadd.f32 %v118, %v120
      %v129 = vrot.slane %v128, 4
      %v130 = vadd.f32 %v128, %v129
      %v131 = vrot.slane %v130, 2
      %v132 = vadd.f32 %v130, %v131
      %v133 = vrot.slane %v132, 1
      %v134 = vadd.f32 %v132, %v133
      %v135 = vrcp.pop 16.0
      %v136 = vmul.f32 %v127, %v135
      %v137 = vmul.f32 %v134, %v135
      %v138 = vsub.f32 %v117, %v136
      %v139 = vsub.f32 %v118, %v137
      %v140 = vsub.f32 %v119, %v136
      %v141 = vsub.f32 %v120, %v137
      %v142 = vmul.f32 %v138, %v138
      %v143 = vmul.f32 %v139, %v139
      %v144 = vmul.f32 %v140, %v140
      %v145 = vmul.f32 %v141, %v141
      %v146 = vadd.f32 %v142, %v144
      %v147 = vrot.slane %v146, 4
      %v148 = vadd.f32 %v146, %v147
      %v149 = vrot.slane %v148, 2
      %v150 = vadd.f32 %v148, %v149
      %v151 = vrot.slane %v150, 1
      %v152 = vadd.f32 %v150, %v151
      %v153 = vadd.f32 %v143, %v145
      %v154 = vrot.slane %v153, 4
      %v155 = vadd.f32 %v153, %v154
      %v156 = vrot.slane %v155, 2
      %v157 = vadd.f32 %v155, %v156
      %v158 = vrot.slane %v157, 1
      %v159 = vadd.f32 %v157, %v158
      %v160 = vmul.f32 %v152, %v135
      %v161 = vmul.f32 %v159, %v135
      %v162 = vadd.f32 %v160, 1e-05
      %v163 = vadd.f32 %v161, 1e-05
      %v164 = vrsqrt.pop %v162
      %v165 = vrsqrt.pop %v163
      %v166 = vmul.f32 %v138, %v164
      %v167 = vmul.f32 %v139, %v165
      %v168 = vmul.f32 %v140, %v164
      %v169 = vmul.f32 %v141, %v165
      %v170 = vmax.f32 %v166, 0.0
      %v171 = vmax.f32 %v167, 0.0
      %v172 = vmax.f32 %v168, 0.0
      %v173 = vmax.f32 %v169, 0.0
      %174 = vst [vmem:[%s116] sm:$0xff] %v170
      %175 = vst [vmem:[%s116 + $0x8] sm:$0xff] %v171
      %176 = vst [vmem:[%s116 + $0x10] sm:$0xff] %v172
      %177 = vst [vmem:[%s116 + $0x18] sm:$0xff] %v173
      %p178 = scmp.lt.s32.totalorder %s12, 1
      %s179 = scalar_select %p178, %s12, 1
      %s180 = smul.addr %s179, 4
      %s181 = smul.addr %s180, 8
      %s182 = scalar_lea.vmem %s1, %s181
      // Predicated region
      $region25: #{net_forward.25} parent=23 // pred_check
        %p183 = pneg %p56
      $region26: #{net_forward.25} parent=23 // pred_check_branch
        %185 = sbr.rel (%p183) target = $region28
      $region27: #{net_forward.25} parent=23 // pred_region
        _
      $region28: #{net_forward.25} parent=23 // pred_fallthru
        _
    $region24: #{net_forward.25} parent=5 // pred_fallthru
      _
    %p186 = scmp.le.s32.totalorder 2, %s7
    // Predicated region
    $region29: #{net_forward.25} parent=5 // pred_check
      %p187 = pneg %p186
    $region30: #{net_forward.25} parent=5 // pred_check_branch
      %189 = sbr.rel (%p187) target = $region32
    $region31: #{net_forward.25} parent=5 // pred_region
      %s190 = ssub.s32 %s7, 2
      // Predicated region
      $region33: #{net_forward.25} parent=31 // pred_check
        %p191 = pneg %p62
      $region34: #{net_forward.25} parent=31 // pred_check_branch
        %193 = sbr.rel (%p191) target = $region36
      $region35: #{net_forward.25} parent=31 // pred_region
        %p194 = scmp.lt.s32.totalorder %s13, 1
        %s195 = scalar_select %p194, %s13, 1
        %s196 = smul.addr %s195, 4
        %s197 = smul.addr %s196, 8
        %s198 = scalar_lea.vmem %s1, %s197
      $region36: #{net_forward.25} parent=31 // pred_fallthru
        _
    $region32: #{net_forward.25} parent=5 // pred_fallthru
      _
  $region6: #{net_forward.25} parent=0 // loop_footer
    %s11 = sadd.s32 1, %s7
  $region7: #{net_forward.25} parent=0 // loop_footer_branch
    %6 = sbr.rel target = $region3
  $region8: #{net_forward.25} parent=0 // loop_exit
    _

// kernel: net_forward.24
$region0: #{net_forward.24}
  #allocation0 [shape = 'u32[]', space=smem, size = 0x4, offset = 0x4, fixed_abs, tag = 'smem constant byte address 0x4 - core index']
  #allocation1 [shape = 'u32[144,128]{1,0:T(1,128)}', space=vmem, size = 0x12000, scoped, tag = 'internal scratch']
  #allocation2 [shape = 'f32[128,256]{1,0:T(8,128)}', space=vmem, size = 0x20000, scoped, tag = 'scratch operand']
  %s0 = inlined_call_operand.vmem [shape: bf16[128,1280], index: 0, kind: input, shape index: {}]
  %s1 = inlined_call_operand.vmem [shape: bf16[1280,256], index: 1, kind: input, shape index: {}]
  %s2 = inlined_call_operand.vmem [shape: f32[1,256], index: 2, kind: input, shape index: {}]
  %s3 = inlined_call_operand.vmem [shape: f32[128,256], index: 3, kind: output, shape index: {}]
  %s4 = sld [smem:[#allocation0]]
  $region91: #{net_forward.24} parent=0
    _
  %s6 = ssub.s32 1, %s4
  %s7 = scalar_select 0, %s6, %s4
  $region1: #{net_forward.24} parent=0
    #allocation3 [shape = 'u8[131072]{0}', space=vmem, size = 0x20000, scoped, tag = 'input window, operand 0']
    loop: start=0, step=1, limit=7
    $region2: #{net_forward.24} parent=1 // loop_pre_header
      _
    $region3: #{net_forward.24} parent=1 // loop_header
      %s9 = sphi 0, %s13
      %p10 = scmp.ge.s32.totalorder %s9, 7
      %s16 = sphi 0, %s35
      %s17 = sphi 0, %s31
      %s18 = sphi 0, %s27
      %s19 = sphi 0, %s16
      %s20 = sphi 0, %s17
      %s21 = sphi 0, %s18
      %s22 = sphi 0, %s19
      %s23 = sphi 0, %s20
      %s24 = sphi 0, %s21
      %s40 = sphi 0, %s42
      %s43 = sphi 0, %s40
      %s44 = sphi 0, %s43
      %s60 = sphi 0, %s44
      %s68 = sphi 0, %s70
      %s71 = sphi 0, %s68
      %s72 = sphi 0, %s71
      %s88 = sphi 0, %s72
      %s94 = sphi 0, %s96
      %s97 = sphi 0, %s94
      %s98 = sphi 0, %s97
      %s114 = sphi 0, %s98
      %s122 = sphi 0, %s124
      %s125 = sphi 0, %s122
      %s126 = sphi 0, %s125
      %s142 = sphi 0, %s126
    $region4: #{net_forward.24} parent=1 // loop_header_branch
      %12 = sbr.rel (%p10) target = $region8
    $region5: #{net_forward.24} parent=1 // loop_body
      %s14 = ssub.s32 %s9, 1
      %s15 = ssub.s32 %s9, 2
      %s25 = sadd.s32 1, %s18
      %p26 = scmp.ge.s32.totalorder %s25, 5
      %s27 = scalar_select %p26, 0, %s25
      %s28 = sadd.s32 1, %s17
      %s29 = scalar_select %p26, %s28, %s17
      %p30 = scmp.ge.s32.totalorder %s29, 1
      %s31 = scalar_select %p30, 0, %s29
      %s32 = sadd.s32 1, %s16
      %s33 = scalar_select %p30, %s32, %s16
      %p34 = scmp.ge.s32.totalorder %s33, 1
      %s35 = scalar_select %p34, 0, %s33
      %s36 = ssub.s32 %s16, %s35
      %s37 = ssub.s32 %s18, %s27
      %s38 = sor.u32 %s36, %s37
      %p39 = scmp.eq.s32.totalorder %s38, 0
      %s41 = sadd.s32 %s40, 1
      %s42 = scalar_select %p39, %s40, %s41
      %p45 = pneg %p39
      %p46 = scmp.eq.s32.totalorder %s9, 4
      %p47 = por %p45, %p46
      %p48 = scmp.ne.s32.totalorder %s40, %s43
      %p49 = scmp.eq.s32.totalorder %s9, 0
      %p50 = por %p48, %p49
      %p51 = scmp.ne.s32.totalorder %s40, %s43
      %p52 = scmp.eq.s32.totalorder %s14, 4
      %p53 = por %p51, %p52
      %p54 = scmp.ne.s32.totalorder %s43, %s44
      %p55 = scmp.eq.s32.totalorder %s14, 0
      %p56 = por %p54, %p55
      %p57 = scmp.ne.s32.totalorder %s43, %s44
      %p58 = scmp.eq.s32.totalorder %s15, 4
      %p59 = por %p57, %p58
      %p61 = scmp.ne.s32.totalorder %s44, %s60
      %p62 = scmp.eq.s32.totalorder %s15, 0
      %p63 = por %p61, %p62
      %s64 = ssub.s32 %s18, %s27
      %s65 = ssub.s32 %s17, %s31
      %s66 = sor.u32 %s64, %s65
      %p67 = scmp.eq.s32.totalorder %s66, 0
      %s69 = sadd.s32 %s68, 1
      %s70 = scalar_select %p67, %s68, %s69
      %p73 = pneg %p67
      %p74 = scmp.eq.s32.totalorder %s9, 4
      %p75 = por %p73, %p74
      %p76 = scmp.ne.s32.totalorder %s68, %s71
      %p77 = scmp.eq.s32.totalorder %s9, 0
      %p78 = por %p76, %p77
      %p79 = scmp.ne.s32.totalorder %s68, %s71
      %p80 = scmp.eq.s32.totalorder %s14, 4
      %p81 = por %p79, %p80
      %p82 = scmp.ne.s32.totalorder %s71, %s72
      %p83 = scmp.eq.s32.totalorder %s14, 0
      %p84 = por %p82, %p83
      %p85 = scmp.ne.s32.totalorder %s71, %s72
      %p86 = scmp.eq.s32.totalorder %s15, 4
      %p87 = por %p85, %p86
      %p89 = scmp.ne.s32.totalorder %s72, %s88
      %p90 = scmp.eq.s32.totalorder %s15, 0
      %p91 = por %p89, %p90
      %s92 = ssub.s32 %s17, %s31
      %p93 = scmp.eq.s32.totalorder %s92, 0
      %s95 = sadd.s32 %s94, 1
      %s96 = scalar_select %p93, %s94, %s95
      %p99 = pneg %p93
      %p100 = scmp.eq.s32.totalorder %s9, 4
      %p101 = por %p99, %p100
      %p102 = scmp.ne.s32.totalorder %s94, %s97
      %p103 = scmp.eq.s32.totalorder %s9, 0
      %p104 = por %p102, %p103
      %p105 = scmp.ne.s32.totalorder %s94, %s97
      %p106 = scmp.eq.s32.totalorder %s14, 4
      %p107 = por %p105, %p106
      %p108 = scmp.ne.s32.totalorder %s97, %s98
      %p109 = scmp.eq.s32.totalorder %s14, 0
      %p110 = por %p108, %p109
      %p111 = scmp.ne.s32.totalorder %s97, %s98
      %p112 = scmp.eq.s32.totalorder %s15, 4
      %p113 = por %p111, %p112
      %p115 = scmp.ne.s32.totalorder %s98, %s114
      %p116 = scmp.eq.s32.totalorder %s15, 0
      %p117 = por %p115, %p116
      %s118 = ssub.s32 %s16, %s35
      %s119 = ssub.s32 %s17, %s31
      %s120 = sor.u32 %s118, %s119
      %p121 = scmp.eq.s32.totalorder %s120, 0
      %s123 = sadd.s32 %s122, 1
      %s124 = scalar_select %p121, %s122, %s123
      %p127 = pneg %p121
      %p128 = scmp.eq.s32.totalorder %s9, 4
      %p129 = por %p127, %p128
      %p130 = scmp.ne.s32.totalorder %s122, %s125
      %p131 = scmp.eq.s32.totalorder %s9, 0
      %p132 = por %p130, %p131
      %p133 = scmp.ne.s32.totalorder %s122, %s125
      %p134 = scmp.eq.s32.totalorder %s14, 4
      %p135 = por %p133, %p134
      %p136 = scmp.ne.s32.totalorder %s125, %s126
      %p137 = scmp.eq.s32.totalorder %s14, 0
      %p138 = por %p136, %p137
      %p139 = scmp.ne.s32.totalorder %s125, %s126
      %p140 = scmp.eq.s32.totalorder %s15, 4
      %p141 = por %p139, %p140
      %p143 = scmp.ne.s32.totalorder %s126, %s142
      %p144 = scmp.eq.s32.totalorder %s15, 0
      %p145 = por %p143, %p144
      %p146 = scmp.le.s32.totalorder 1, %s9
      %p147 = scmp.lt.s32.totalorder %s9, 6
      %p148 = pnand %p146, %p147
      %p149 = pneg %p148
      // Predicated region
      $region9: #{net_forward.24} parent=5 // pred_check
        _
      $region10: #{net_forward.24} parent=5 // pred_check_branch
        %151 = sbr.rel (%p148) target = $region12
      $region11: #{net_forward.24} parent=5 // pred_region
        %s152 = ssub.s32 %s9, 1
        // Predicated region
        $region13: #{net_forward.24} parent=11 // pred_check
          %p153 = pneg %p110
        $region14: #{net_forward.24} parent=11 // pred_check_branch
          %155 = sbr.rel (%p153) target = $region16
        $region15: #{net_forward.24} parent=11 // pred_region
          %s156 = smul.u32 2, %s20
          %p157 = scmp.lt.s32.totalorder %s156, 1
          %s158 = scalar_select %p157, %s156, 1
          %s159 = scalar_lea.vmem %s2, %s158
          %s160 = smul.u32 2, %s20
        $region16: #{net_forward.24} parent=11 // pred_fallthru
          _
      $region12: #{net_forward.24} parent=5 // pred_fallthru
        _
      %p161 = scmp.lt.s32.totalorder %s9, 5
      // Predicated region
      $region17: #{net_forward.24} parent=5 // pred_check
        %p162 = pneg %p161
      $region18: #{net_forward.24} parent=5 // pred_check_branch
        %164 = sbr.rel (%p162) target = $region20
      $region19: #{net_forward.24} parent=5 // pred_region
        // Predicated region
        $region21: #{net_forward.24} parent=19 // pred_check
          %p165 = pneg %p50
        $region22: #{net_forward.24} parent=19 // pred_check_branch
          %167 = sbr.rel (%p165) target = $region24
        $region23: #{net_forward.24} parent=19 // pred_region
          %s168 = sand.u32 %s40, 1
          %s169 = sand.u32 %s40, 1
          %s170 = smul.addr %s169, 128
          %s171 = scalar_lea.vmem [#allocation3], %s170
          %s172 = smul.u32 16, %s16
          %s173 = smul.u32 2, %s18
          %s174 = smul.addr %s172, 10
          %s175 = sadd.s32 %s173, %s174
          %s176 = smul.addr %s175, 4
          %s177 = scalar_lea.vmem %s0, %s176
          // Predicated region
          $region25: #{net_forward.24} parent=23 // pred_check
            _
          $region26: #{net_forward.24} parent=23 // pred_check_branch
            %179 = sbr.rel (0) target = $region28
          $region27: #{net_forward.24} parent=23 // pred_region
            // Predicated region
            $region29: #{net_forward.24} parent=27 // pred_check
              _
            $region30: #{net_forward.24} parent=27 // pred_check_branch
              %181 = sbr.rel (0) target = $region32
            $region31: #{net_forward.24} parent=27 // pred_region
              // Predicated region
              $region44: #{net_forward.24} parent=31 // pred_check
                _
              $region45: #{net_forward.24} parent=31 // pred_check_branch
                %226 = sbr.rel (0) target = $region47
              $region46: #{net_forward.24} parent=31 // pred_region
                loop: start=0, step=1, limit=1
                $region48: #{net_forward.24} parent=46 // loop_pre_header
                  _
                $region49: #{net_forward.24} parent=46 // loop_header
                  %s228 = sphi 0, %s232
                  %p229 = scmp.ge.s32.totalorder %s228, 1
                  %s233 = sphi %s177, %s177
                  %s234 = sphi %s171, %s171
                $region50: #{net_forward.24} parent=46 // loop_header_branch
                  %231 = sbr.rel (%p229) target = $region54
                $region51: #{net_forward.24} parent=46 // loop_body
                  %v235 = vld [vmem:[%s233] sm:$0xff]
                  %236 = vst [vmem:[%s234] sm:$0xff] %v235
                  %v237 = vld [vmem:[%s233 + $0x28] sm:$0xff]
                  %238 = vst [vmem:[%s234 + $0x8] sm:$0xff] %v237
                  %v239 = vld [vmem:[%s233 + $0x50] sm:$0xff]
                  %240 = vst [vmem:[%s234 + $0x10] sm:$0xff] %v239
                  %v241 = vld [vmem:[%s233 + $0x78] sm:$0xff]
                  %242 = vst [vmem:[%s234 + $0x18] sm:$0xff] %v241
                  %v243 = vld [vmem:[%s233 + $0xa0] sm:$0xff]
                  %244 = vst [vmem:[%s234 + $0x20] sm:$0xff] %v243
                  %v245 = vld [vmem:[%s233 + $0xc8] sm:$0xff]
                  %246 = vst [vmem:[%s234 + $0x28] sm:$0xff] %v245
                  %v247 = vld [vmem:[%s233 + $0xf0] sm:$0xff]
                  %248 = vst [vmem:[%s234 + $0x30] sm:$0xff] %v247
                  %v249 = vld [vmem:[%s233 + $0x118] sm:$0xff]
                  %250 = vst [vmem:[%s234 + $0x38] sm:$0xff] %v249
                  %v251 = vld [vmem:[%s233 + $0x140] sm:$0xff]
                  %252 = vst [vmem:[%s234 + $0x40] sm:$0xff] %v251
                  %v253 = vld [vmem:[%s233 + $0x168] sm:$0xff]
                  %254 = vst [vmem:[%s234 + $0x48] sm:$0xff] %v253
                  %v255 = vld [vmem:[%s233 + $0x190] sm:$0xff]
                  %256 = vst [vmem:[%s234 + $0x50] sm:$0xff] %v255
                  %v257 = vld [vmem:[%s233 + $0x1b8] sm:$0xff]
                  %258 = vst [vmem:[%s234 + $0x58] sm:$0xff] %v257
                  %v259 = vld [vmem:[%s233 + $0x1e0] sm:$0xff]
                  %260 = vst [vmem:[%s234 + $0x60] sm:$0xff] %v259
                  %v261 = vld [vmem:[%s233 + $0x208] sm:$0xff]
                  %262 = vst [vmem:[%s234 + $0x68] sm:$0xff] %v261
                  %v263 = vld [vmem:[%s233 + $0x230] sm:$0xff]
                  %264 = vst [vmem:[%s234 + $0x70] sm:$0xff] %v263
                  %v265 = vld [vmem:[%s233 + $0x258] sm:$0xff]
                  %266 = vst [vmem:[%s234 + $0x78] sm:$0xff] %v265
                $region52: #{net_forward.24} parent=46 // loop_footer
                  %s232 = sadd.s32 1, %s228
                $region53: #{net_forward.24} parent=46 // loop_footer_branch
                  %227 = sbr.rel target = $region49
                $region54: #{net_forward.24} parent=46 // loop_exit
                  _
              $region47: #{net_forward.24} parent=31 // pred_fallthru
                _
              // Predicated region
              $region55: #{net_forward.24} parent=31 // pred_check
                _
              $region56: #{net_forward.24} parent=31 // pred_check_branch
                %268 = sbr.rel target = $region58
              $region57: #{net_forward.24} parent=31 // pred_region
                _
              $region58: #{net_forward.24} parent=31 // pred_fallthru
                _
            $region32: #{net_forward.24} parent=27 // pred_fallthru
              _
            // Predicated region
            $region33: #{net_forward.24} parent=27 // pred_check
              _
            $region34: #{net_forward.24} parent=27 // pred_check_branch
              %183 = sbr.rel target = $region36
            $region35: #{net_forward.24} parent=27 // pred_region
              loop: start=0, step=1, limit=1
              $region37: #{net_forward.24} parent=35 // loop_pre_header
                _
              $region38: #{net_forward.24} parent=35 // loop_header
                %s186 = sphi 0, %s190
                %p187 = scmp.ge.s32.totalorder %s186, 1
                %s191 = sphi %s177, %s177
                %s192 = sphi %s171, %s171
              $region39: #{net_forward.24} parent=35 // loop_header_branch
                %189 = sbr.rel (%p187) target = $region43
              $region40: #{net_forward.24} parent=35 // loop_body
                %v193 = vld [vmem:[%s191] sm:$0xff]
                %194 = vst [vmem:[%s192] sm:$0xff] %v193
                %v195 = vld [vmem:[%s191 + $0x28] sm:$0xff]
                %196 = vst [vmem:[%s192 + $0x8] sm:$0xff] %v195
                %v197 = vld [vmem:[%s191 + $0x50] sm:$0xff]
                %198 = vst [vmem:[%s192 + $0x10] sm:$0xff] %v197
                %v199 = vld [vmem:[%s191 + $0x78] sm:$0xff]
                %200 = vst [vmem:[%s192 + $0x18] sm:$0xff] %v199
                %v201 = vld [vmem:[%s191 + $0xa0] sm:$0xff]
                %202 = vst [vmem:[%s192 + $0x20] sm:$0xff] %v201
                %v203 = vld [vmem:[%s191 + $0xc8] sm:$0xff]
                %204 = vst [vmem:[%s192 + $0x28] sm:$0xff] %v203
                %v205 = vld [vmem:[%s191 + $0xf0] sm:$0xff]
                %206 = vst [vmem:[%s192 + $0x30] sm:$0xff] %v205
                %v207 = vld [vmem:[%s191 + $0x118] sm:$0xff]
                %208 = vst [vmem:[%s192 + $0x38] sm:$0xff] %v207
                %v209 = vld [vmem:[%s191 + $0x140] sm:$0xff]
                %210 = vst [vmem:[%s192 + $0x40] sm:$0xff] %v209
                %v211 = vld [vmem:[%s191 + $0x168] sm:$0xff]
                %212 = vst [vmem:[%s192 + $0x48] sm:$0xff] %v211
                %v213 = vld [vmem:[%s191 + $0x190] sm:$0xff]
                %214 = vst [vmem:[%s192 + $0x50] sm:$0xff] %v213
                %v215 = vld [vmem:[%s191 + $0x1b8] sm:$0xff]
                %216 = vst [vmem:[%s192 + $0x58] sm:$0xff] %v215
                %v217 = vld [vmem:[%s191 + $0x1e0] sm:$0xff]
                %218 = vst [vmem:[%s192 + $0x60] sm:$0xff] %v217
                %v219 = vld [vmem:[%s191 + $0x208] sm:$0xff]
                %220 = vst [vmem:[%s192 + $0x68] sm:$0xff] %v219
                %v221 = vld [vmem:[%s191 + $0x230] sm:$0xff]
                %222 = vst [vmem:[%s192 + $0x70] sm:$0xff] %v221
                %v223 = vld [vmem:[%s191 + $0x258] sm:$0xff]
                %224 = vst [vmem:[%s192 + $0x78] sm:$0xff] %v223
              $region41: #{net_forward.24} parent=35 // loop_footer
                %s190 = sadd.s32 1, %s186
              $region42: #{net_forward.24} parent=35 // loop_footer_branch
                %185 = sbr.rel target = $region38
              $region43: #{net_forward.24} parent=35 // loop_exit
                _
            $region36: #{net_forward.24} parent=27 // pred_fallthru
              _
          $region28: #{net_forward.24} parent=23 // pred_fallthru
            _
          %269 = vnop
        $region24: #{net_forward.24} parent=19 // pred_fallthru
          _
        // Predicated region
        $region59: #{net_forward.24} parent=19 // pred_check
          %p270 = pneg %p78
        $region60: #{net_forward.24} parent=19 // pred_check_branch
          %272 = sbr.rel (%p270) target = $region62
        $region61: #{net_forward.24} parent=19 // pred_region
          %s273 = smul.u32 32, %s18
          %s274 = smul.u32 2, %s17
          %p275 = scmp.lt.s32.totalorder %s273, 159
          %s276 = scalar_select %p275, %s273, 159
          %p277 = scmp.lt.s32.totalorder %s274, 1
          %s278 = scalar_select %p277, %s274, 1
          %s279 = smul.addr %s276, 2
          %s280 = sadd.s32 %s278, %s279
          %s281 = smul.addr %s280, 4
          %s282 = scalar_lea.vmem %s1, %s281
          %s283 = smul.u32 32, %s18
          %s284 = smul.u32 2, %s17
        $region62: #{net_forward.24} parent=19 // pred_fallthru
          _
      $region20: #{net_forward.24} parent=5 // pred_fallthru
        _
      %p285 = scmp.le.s32.totalorder 1, %s9
      %p286 = scmp.lt.s32.totalorder %s9, 6
      %p287 = pnand %p285, %p286
      %p288 = pneg %p287
      // Predicated region
      $region63: #{net_forward.24} parent=5 // pred_check
        _
      $region64: #{net_forward.24} parent=5 // pred_check_branch
        %290 = sbr.rel (%p287) target = $region66
      $region65: #{net_forward.24} parent=5 // pred_region
        %s291 = ssub.s32 %s9, 1
        %s292 = sand.u32 %s43, 1
        %s293 = sand.u32 %s43, 1
        %s294 = smul.addr %s293, 128
        %s295 = scalar_lea.vmem [#allocation3], %s294
        // Predicated region
        $region67: #{net_forward.24} parent=65 // pred_check
          %p296 = pneg %p56
        $region68: #{net_forward.24} parent=65 // pred_check_branch
          %298 = sbr.rel (%p296) target = $region70
        $region69: #{net_forward.24} parent=65 // pred_region
          _
        $region70: #{net_forward.24} parent=65 // pred_fallthru
          _
        %s299 = sand.u32 %s43, 1
        %s300 = sand.u32 %s43, 1
        %s301 = smul.addr %s300, 128
        %s302 = scalar_lea.vmem [#allocation3], %s301
        %p303 = pneg %p56
        %p304 = pneg %p53
        %s305 = smul.u32 32, %s21
        %s306 = smul.u32 2, %s20
        %p307 = scmp.lt.s32.totalorder %s305, 159
        %s308 = scalar_select %p307, %s305, 159
        %p309 = scmp.lt.s32.totalorder %s306, 1
        %s310 = scalar_select %p309, %s306, 1
        %s311 = smul.addr %s308, 2
        %s312 = sadd.s32 %s310, %s311
        %s313 = smul.addr %s312, 4
        %s314 = scalar_lea.vmem %s1, %s313
        %p315 = pneg %p84
        %p316 = pneg %p81
        %s317 = smul.u32 2, %s20
        %p318 = scmp.lt.s32.totalorder %s317, 1
        %s319 = scalar_select %p318, %s317, 1
        %s320 = scalar_lea.vmem %s2, %s319
        %p321 = pneg %p110
        %p322 = pneg %p107
        %p323 = pneg %p138
        %p324 = pneg %p135
        %s325 = smul.u32 16, %s19
        %s326 = smul.u32 2, %s20
        %p327 = scmp.lt.s32.totalorder %s325, 15
        %s328 = scalar_select %p327, %s325, 15
        %p329 = scmp.lt.s32.totalorder %s326, 1
        %s330 = scalar_select %p329, %s326, 1
        %s331 = smul.addr %s328, 2
        %s332 = sadd.s32 %s330, %s331
        %s333 = smul.addr %s332, 8
        %s334 = scalar_lea.vmem %s3, %s333
        %s335 = smul.u32 16, %s19
        %s336 = smul.u32 2, %s21
        %s337 = smul.u32 32, %s21
        %s338 = smul.u32 2, %s20
        %p339 = scmp.lt.s32.totalorder %s337, 159
        %s340 = scalar_select %p339, %s337, 159
        %p341 = scmp.lt.s32.totalorder %s338, 1
        %s342 = scalar_select %p341, %s338, 1
        %s343 = smul.addr %s340, 2
        %s344 = sadd.s32 %s342, %s343
        %s345 = smul.addr %s344, 4
        %s346 = scalar_lea.vmem %s1, %s345
        %s347 = smul.u32 32, %s21
        %s348 = smul.u32 2, %s20
        %s349 = smul.u32 2, %s20
        %p350 = scmp.lt.s32.totalorder %s349, 1
        %s351 = scalar_select %p350, %s349, 1
        %s352 = scalar_lea.vmem %s2, %s351
        %s353 = smul.u32 2, %s20
        %s354 = smul.u32 16, %s19
        %s355 = smul.u32 2, %s20
        %p356 = scmp.lt.s32.totalorder %s354, 15
        %s357 = scalar_select %p356, %s354, 15
        %p358 = scmp.lt.s32.totalorder %s355, 1
        %s359 = scalar_select %p358, %s355, 1
        %s360 = smul.addr %s357, 2
        %s361 = sadd.s32 %s359, %s360
        %s362 = smul.addr %s361, 8
        %s363 = scalar_lea.vmem %s3, %s362
        %s364 = smul.u32 16, %s19
        %s365 = smul.u32 2, %s20
        %p366 = scmp.eq.s32.totalorder %s21, 0
        // Predicated region
        $region71: #{net_forward.24} parent=65 // pred_check
          %p367 = pneg %p366
        $region72: #{net_forward.24} parent=65 // pred_check_branch
          %369 = sbr.rel (%p367) target = $region74
        $region73: #{net_forward.24} parent=65 // pred_region
          %370 = vst [vmem:[#allocation2] sm:$0xff] 0.0
          %371 = vst [vmem:[#allocation2 + $0x8] sm:$0xff] 0.0
          %372 = vst [vmem:[#allocation2 + $0x10] sm:$0xff] 0.0
          %373 = vst [vmem:[#allocation2 + $0x18] sm:$0xff] 0.0
          %374 = vst [vmem:[#allocation2 + $0x20] sm:$0xff] 0.0
          %375 = vst [vmem:[#allocation2 + $0x28] sm:$0xff] 0.0
          %376 = vst [vmem:[#allocation2 + $0x30] sm:$0xff] 0.0
          %377 = vst [vmem:[#allocation2 + $0x38] sm:$0xff] 0.0
          %378 = vst [vmem:[#allocation2 + $0x40] sm:$0xff] 0.0
          %379 = vst [vmem:[#allocation2 + $0x48] sm:$0xff] 0.0
          %380 = vst [vmem:[#allocation2 + $0x50] sm:$0xff] 0.0
          %381 = vst [vmem:[#allocation2 + $0x58] sm:$0xff] 0.0
          %382 = vst [vmem:[#allocation2 + $0x60] sm:$0xff] 0.0
          %383 = vst [vmem:[#allocation2 + $0x68] sm:$0xff] 0.0
          %384 = vst [vmem:[#allocation2 + $0x70] sm:$0xff] 0.0
          %385 = vst [vmem:[#allocation2 + $0x78] sm:$0xff] 0.0
          %386 = vst [vmem:[#allocation2 + $0x80] sm:$0xff] 0.0
          %387 = vst [vmem:[#allocation2 + $0x88] sm:$0xff] 0.0
          %388 = vst [vmem:[#allocation2 + $0x90] sm:$0xff] 0.0
          %389 = vst [vmem:[#allocation2 + $0x98] sm:$0xff] 0.0
          %390 = vst [vmem:[#allocation2 + $0xa0] sm:$0xff] 0.0
          %391 = vst [vmem:[#allocation2 + $0xa8] sm:$0xff] 0.0
          %392 = vst [vmem:[#allocation2 + $0xb0] sm:$0xff] 0.0
          %393 = vst [vmem:[#allocation2 + $0xb8] sm:$0xff] 0.0
          %394 = vst [vmem:[#allocation2 + $0xc0] sm:$0xff] 0.0
          %395 = vst [vmem:[#allocation2 + $0xc8] sm:$0xff] 0.0
          %396 = vst [vmem:[#allocation2 + $0xd0] sm:$0xff] 0.0
          %397 = vst [vmem:[#allocation2 + $0xd8] sm:$0xff] 0.0
          %398 = vst [vmem:[#allocation2 + $0xe0] sm:$0xff] 0.0
          %399 = vst [vmem:[#allocation2 + $0xe8] sm:$0xff] 0.0
          %400 = vst [vmem:[#allocation2 + $0xf0] sm:$0xff] 0.0
          %401 = vst [vmem:[#allocation2 + $0xf8] sm:$0xff] 0.0
        $region74: #{net_forward.24} parent=65 // pred_fallthru
          _
        %v402 = vld [vmem:[#allocation2] sm:$0xff]
        %v403 = vld [vmem:[#allocation2 + $0x8] sm:$0xff]
        %v404 = vld [vmem:[#allocation2 + $0x10] sm:$0xff]
        %v405 = vld [vmem:[#allocation2 + $0x18] sm:$0xff]
        %v406 = vld [vmem:[#allocation2 + $0x20] sm:$0xff]
        %v407 = vld [vmem:[#allocation2 + $0x28] sm:$0xff]
        %v408 = vld [vmem:[#allocation2 + $0x30] sm:$0xff]
        %v409 = vld [vmem:[#allocation2 + $0x38] sm:$0xff]
        %v410 = vld [vmem:[#allocation2 + $0x40] sm:$0xff]
        %v411 = vld [vmem:[#allocation2 + $0x48] sm:$0xff]
        %v412 = vld [vmem:[#allocation2 + $0x50] sm:$0xff]
        %v413 = vld [vmem:[#allocation2 + $0x58] sm:$0xff]
        %v414 = vld [vmem:[#allocation2 + $0x60] sm:$0xff]
        %v415 = vld [vmem:[#allocation2 + $0x68] sm:$0xff]
        %v416 = vld [vmem:[#allocation2 + $0x70] sm:$0xff]
        %v417 = vld [vmem:[#allocation2 + $0x78] sm:$0xff]
        %v418 = vld [vmem:[#allocation2 + $0x80] sm:$0xff]
        %v419 = vld [vmem:[#allocation2 + $0x88] sm:$0xff]
        %v420 = vld [vmem:[#allocation2 + $0x90] sm:$0xff]
        %v421 = vld [vmem:[#allocation2 + $0x98] sm:$0xff]
        %v422 = vld [vmem:[#allocation2 + $0xa0] sm:$0xff]
        %v423 = vld [vmem:[#allocation2 + $0xa8] sm:$0xff]
        %v424 = vld [vmem:[#allocation2 + $0xb0] sm:$0xff]
        %v425 = vld [vmem:[#allocation2 + $0xb8] sm:$0xff]
        %v426 = vld [vmem:[#allocation2 + $0xc0] sm:$0xff]
        %v427 = vld [vmem:[#allocation2 + $0xc8] sm:$0xff]
        %v428 = vld [vmem:[#allocation2 + $0xd0] sm:$0xff]
        %v429 = vld [vmem:[#allocation2 + $0xd8] sm:$0xff]
        %v430 = vld [vmem:[#allocation2 + $0xe0] sm:$0xff]
        %v431 = vld [vmem:[#allocation2 + $0xe8] sm:$0xff]
        %v432 = vld [vmem:[#allocation2 + $0xf0] sm:$0xff]
        %v433 = vld [vmem:[#allocation2 + $0xf8] sm:$0xff]
        %v434 = vld [vmem:[%s295] sm:$0xff]
        %v435 = vld [vmem:[%s295 + $0x8] sm:$0xff]
        %v436 = vld [vmem:[%s295 + $0x10] sm:$0xff]
        %v437 = vld [vmem:[%s295 + $0x18] sm:$0xff]
        %v438 = vld [vmem:[%s295 + $0x20] sm:$0xff]
        %v439 = vld [vmem:[%s295 + $0x28] sm:$0xff]
        %v440 = vld [vmem:[%s295 + $0x30] sm:$0xff]
        %v441 = vld [vmem:[%s295 + $0x38] sm:$0xff]
        %v442 = vld [vmem:[%s295 + $0x40] sm:$0xff]
        %v443 = vld [vmem:[%s295 + $0x48] sm:$0xff]
        %v444 = vld [vmem:[%s295 + $0x50] sm:$0xff]
        %v445 = vld [vmem:[%s295 + $0x58] sm:$0xff]
        %v446 = vld [vmem:[%s295 + $0x60] sm:$0xff]
        %v447 = vld [vmem:[%s295 + $0x68] sm:$0xff]
        %v448 = vld [vmem:[%s295 + $0x70] sm:$0xff]
        %v449 = vld [vmem:[%s295 + $0x78] sm:$0xff]
        %v450 = vld [vmem:[%s346] sm:$0xff]
        %v451 = vld [vmem:[%s346 + $0x8] sm:$0xff]
        %v452 = vld [vmem:[%s346 + $0x10] sm:$0xff]
        %v453 = vld [vmem:[%s346 + $0x18] sm:$0xff]
        %v454 = vld [vmem:[%s346 + $0x20] sm:$0xff]
        %v455 = vld [vmem:[%s346 + $0x28] sm:$0xff]
        %v456 = vld [vmem:[%s346 + $0x30] sm:$0xff]
        %v457 = vld [vmem:[%s346 + $0x38] sm:$0xff]
        %v458 = vld [vmem:[%s346 + $0x40] sm:$0xff]
        %v459 = vld [vmem:[%s346 + $0x48] sm:$0xff]
        %v460 = vld [vmem:[%s346 + $0x50] sm:$0xff]
        %v461 = vld [vmem:[%s346 + $0x58] sm:$0xff]
        %v462 = vld [vmem:[%s346 + $0x60] sm:$0xff]
        %v463 = vld [vmem:[%s346 + $0x68] sm:$0xff]
        %v464 = vld [vmem:[%s346 + $0x70] sm:$0xff]
        %v465 = vld [vmem:[%s346 + $0x78] sm:$0xff]
        %v466 = vld [vmem:[%s346 + $0x80] sm:$0xff]
        %v467 = vld [vmem:[%s346 + $0x88] sm:$0xff]
        %v468 = vld [vmem:[%s346 + $0x90] sm:$0xff]
        %v469 = vld [vmem:[%s346 + $0x98] sm:$0xff]
        %v470 = vld [vmem:[%s346 + $0xa0] sm:$0xff]
        %v471 = vld [vmem:[%s346 + $0xa8] sm:$0xff]
        %v472 = vld [vmem:[%s346 + $0xb0] sm:$0xff]
        %v473 = vld [vmem:[%s346 + $0xb8] sm:$0xff]
        %v474 = vld [vmem:[%s346 + $0xc0] sm:$0xff]
        %v475 = vld [vmem:[%s346 + $0xc8] sm:$0xff]
        %v476 = vld [vmem:[%s346 + $0xd0] sm:$0xff]
        %v477 = vld [vmem:[%s346 + $0xd8] sm:$0xff]
        %v478 = vld [vmem:[%s346 + $0xe0] sm:$0xff]
        %v479 = vld [vmem:[%s346 + $0xe8] sm:$0xff]
        %v480 = vld [vmem:[%s346 + $0xf0] sm:$0xff]
        %v481 = vld [vmem:[%s346 + $0xf8] sm:$0xff]
        %v498 = vunpack.c.l.b16 %v434
        %v499 = vunpack.c.h.b16 %v434
        %v500 = vunpack.c.l.b16 %v435
        %v501 = vunpack.c.h.b16 %v435
        %v502 = vunpack.c.l.b16 %v436
        %v503 = vunpack.c.h.b16 %v436
        %v504 = vunpack.c.l.b16 %v437
        %v505 = vunpack.c.h.b16 %v437
        %v506 = vunpack.c.l.b16 %v438
        %v507 = vunpack.c.h.b16 %v438
        %v508 = vunpack.c.l.b16 %v439
        %v509 = vunpack.c.h.b16 %v439
        %v510 = vunpack.c.l.b16 %v440
        %v511 = vunpack.c.h.b16 %v440
        %v512 = vunpack.c.l.b16 %v441
        %v513 = vunpack.c.h.b16 %v441
        %v514 = vunpack.c.l.b16 %v442
        %v515 = vunpack.c.h.b16 %v442
        %v516 = vunpack.c.l.b16 %v443
        %v517 = vunpack.c.h.b16 %v443
        %v518 = vunpack.c.l.b16 %v444
        %v519 = vunpack.c.h.b16 %v444
        %v520 = vunpack.c.l.b16 %v445
        %v521 = vunpack.c.h.b16 %v445
        %v522 = vunpack.c.l.b16 %v446
        %v523 = vunpack.c.h.b16 %v446
        %v524 = vunpack.c.l.b16 %v447
        %v525 = vunpack.c.h.b16 %v447
        %v526 = vunpack.c.l.b16 %v448
        %v527 = vunpack.c.h.b16 %v448
        %v528 = vunpack.c.l.b16 %v449
        %v529 = vunpack.c.h.b16 %v449
        %v530 = vpack.c.b16 %v500, %v498
        %v531 = vpack.c.b16 %v501, %v499
        %v532 = vpack.c.b16 %v504, %v502
        %v533 = vpack.c.b16 %v505, %v503
        %v534 = vpack.c.b16 %v508, %v506
        %v535 = vpack.c.b16 %v509, %v507
        %v536 = vpack.c.b16 %v512, %v510
        %v537 = vpack.c.b16 %v513, %v511
        %v538 = vpack.c.b16 %v516, %v514
        %v539 = vpack.c.b16 %v517, %v515
        %v540 = vpack.c.b16 %v520, %v518
        %v541 = vpack.c.b16 %v521, %v519
        %v542 = vpack.c.b16 %v524, %v522
        %v543 = vpack.c.b16 %v525, %v523
        %v544 = vpack.c.b16 %v528, %v526
        %v545 = vpack.c.b16 %v529, %v527
        %v594 = vunpack.c.l.b16 %v450
        %v595 = vunpack.c.h.b16 %v450
        %v596 = vunpack.c.l.b16 %v451
        %v597 = vunpack.c.h.b16 %v451
        %v598 = vunpack.c.l.b16 %v452
        %v599 = vunpack.c.h.b16 %v452
        %v600 = vunpack.c.l.b16 %v453
        %v601 = vunpack.c.h.b16 %v453
        %v602 = vunpack.c.l.b16 %v454
        %v603 = vunpack.c.h.b16 %v454
        %v604 = vunpack.c.l.b16 %v455
        %v605 = vunpack.c.h.b16 %v455
        %v606 = vunpack.c.l.b16 %v456
        %v607 = vunpack.c.h.b16 %v456
        %v608 = vunpack.c.l.b16 %v457
        %v609 = vunpack.c.h.b16 %v457
        %v610 = vunpack.c.l.b16 %v458
        %v611 = vunpack.c.h.b16 %v458
        %v612 = vunpack.c.l.b16 %v459
        %v613 = vunpack.c.h.b16 %v459
        %v614 = vunpack.c.l.b16 %v460
        %v615 = vunpack.c.h.b16 %v460
        %v616 = vunpack.c.l.b16 %v461
        %v617 = vunpack.c.h.b16 %v461
        %v618 = vunpack.c.l.b16 %v462
        %v619 = vunpack.c.h.b16 %v462
        %v620 = vunpack.c.l.b16 %v463
        %v621 = vunpack.c.h.b16 %v463
        %v622 = vunpack.c.l.b16 %v464
        %v623 = vunpack.c.h.b16 %v464
        %v624 = vunpack.c.l.b16 %v465
        %v625 = vunpack.c.h.b16 %v465
        %v626 = vunpack.c.l.b16 %v466
        %v627 = vunpack.c.h.b16 %v466
        %v628 = vunpack.c.l.b16 %v467
        %v629 = vunpack.c.h.b16 %v467
        %v630 = vunpack.c.l.b16 %v468
        %v631 = vunpack.c.h.b16 %v468
        %v632 = vunpack.c.l.b16 %v469
        %v633 = vunpack.c.h.b16 %v469
        %v634 = vunpack.c.l.b16 %v470
        %v635 = vunpack.c.h.b16 %v470
        %v636 = vunpack.c.l.b16 %v471
        %v637 = vunpack.c.h.b16 %v471
        %v638 = vunpack.c.l.b16 %v472
        %v639 = vunpack.c.h.b16 %v472
        %v640 = vunpack.c.l.b16 %v473
        %v641 = vunpack.c.h.b16 %v473
        %v642 = vunpack.c.l.b16 %v474
        %v643 = vunpack.c.h.b16 %v474
        %v644 = vunpack.c.l.b16 %v475
        %v645 = vunpack.c.h.b16 %v475
        %v646 = vunpack.c.l.b16 %v476
        %v647 = vunpack.c.h.b16 %v476
        %v648 = vunpack.c.l.b16 %v477
        %v649 = vunpack.c.h.b16 %v477
        %v650 = vunpack.c.l.b16 %v478
        %v651 = vunpack.c.h.b16 %v478
        %v652 = vunpack.c.l.b16 %v479
        %v653 = vunpack.c.h.b16 %v479
        %v654 = vunpack.c.l.b16 %v480
        %v655 = vunpack.c.h.b16 %v480
        %v656 = vunpack.c.l.b16 %v481
        %v657 = vunpack.c.h.b16 %v481
        %v658 = vpack.c.b16 %v596, %v594
        %v659 = vpack.c.b16 %v597, %v595
        %v660 = vpack.c.b16 %v600, %v598
        %v661 = vpack.c.b16 %v601, %v599
        %v662 = vpack.c.b16 %v604, %v602
        %v663 = vpack.c.b16 %v605, %v603
        %v664 = vpack.c.b16 %v608, %v606
        %v665 = vpack.c.b16 %v609, %v607
        %v666 = vpack.c.b16 %v612, %v610
        %v667 = vpack.c.b16 %v613, %v611
        %v668 = vpack.c.b16 %v616, %v614
        %v669 = vpack.c.b16 %v617, %v615
        %v670 = vpack.c.b16 %v620, %v618
        %v671 = vpack.c.b16 %v621, %v619
        %v672 = vpack.c.b16 %v624, %v622
        %v673 = vpack.c.b16 %v625, %v623
        %v674 = vpack.c.b16 %v628, %v626
        %v675 = vpack.c.b16 %v629, %v627
        %v676 = vpack.c.b16 %v632, %v630
        %v677 = vpack.c.b16 %v633, %v631
        %v678 = vpack.c.b16 %v636, %v634
        %v679 = vpack.c.b16 %v637, %v635
        %v680 = vpack.c.b16 %v640, %v638
        %v681 = vpack.c.b16 %v641, %v639
        %v682 = vpack.c.b16 %v644, %v642
        %v683 = vpack.c.b16 %v645, %v643
        %v684 = vpack.c.b16 %v648, %v646
        %v685 = vpack.c.b16 %v649, %v647
        %v686 = vpack.c.b16 %v652, %v650
        %v687 = vpack.c.b16 %v653, %v651
        %v688 = vpack.c.b16 %v656, %v654
        %v689 = vpack.c.b16 %v657, %v655
        %722 = vmatprep.subr.bf16.mxu0 %v659
        %723 = vmatpush1.bf16.msra.mxu0 %v658
        %724 = vmatprep.subr.bf16.mxu0 %v661
        %725 = vmatpush1.bf16.msra.mxu0 %v660
        %726 = vmatprep.subr.bf16.mxu0 %v663
        %727 = vmatpush1.bf16.msra.mxu0 %v662
        %728 = vmatprep.subr.bf16.mxu0 %v665
        %729 = vmatpush1.bf16.msra.mxu0 %v664
        %730 = vmatprep.subr.bf16.mxu0 %v667
        %731 = vmatpush1.bf16.msra.mxu0 %v666
        %732 = vmatprep.subr.bf16.mxu0 %v669
        %733 = vmatpush1.bf16.msra.mxu0 %v668
        %734 = vmatprep.subr.bf16.mxu0 %v671
        %735 = vmatpush1.bf16.msra.mxu0 %v670
        %736 = vmatprep.subr.bf16.mxu0 %v673
        %737 = vmatpush1.bf16.msra.mxu0 %v672
        %738 = vmatprep.subr.bf16.mxu0 %v675
        %739 = vmatpush1.bf16.msra.mxu0 %v674
        %740 = vmatprep.subr.bf16.mxu0 %v677
        %741 = vmatpush1.bf16.msra.mxu0 %v676
        %742 = vmatprep.subr.bf16.mxu0 %v679
        %743 = vmatpush1.bf16.msra.mxu0 %v678
        %744 = vmatprep.subr.bf16.mxu0 %v681
        %745 = vmatpush1.bf16.msra.mxu0 %v680
        %746 = vmatprep.subr.bf16.mxu0 %v683
        %747 = vmatpush1.bf16.msra.mxu0 %v682
        %748 = vmatprep.subr.bf16.mxu0 %v685
        %749 = vmatpush1.bf16.msra.mxu0 %v684
        %750 = vmatprep.subr.bf16.mxu0 %v687
        %751 = vmatpush1.bf16.msra.mxu0 %v686
        %752 = vmatprep.subr.bf16.mxu0 %v689
        %753 = vmatpush1.bf16.msra.mxu0 %v688
        %754 = vmatprep.mubr.bf16.mxu0 %v531
        %755 = vmatmul.mubr.bf16.gmra.mrb[0].mxu0 %v530
        %v756 = vpop.f32.mrb[0].mxu0
        %v757 = vadd.f32 0.0, %v756
        %v758 = vpop.f32.mrb[0].mxu0
        %v759 = vadd.f32 0.0, %v758
        %v760 = vpop.f32.mrb[0].mxu0
        %v761 = vadd.f32 0.0, %v760
        %v762 = vpop.f32.mrb[0].mxu0
        %v763 = vadd.f32 0.0, %v762
        %764 = vmatprep.mubr.bf16.mxu0 %v533
        %765 = vmatmul.mubr.bf16.gmra.mrb[0].mxu0 %v532
        %v766 = vpop.f32.mrb[0].mxu0
        %v767 = vadd.f32 0.0, %v766
        %v768 = vpop.f32.mrb[0].mxu0
        %v769 = vadd.f32 0.0, %v768
        %v770 = vpop.f32.mrb[0].mxu0
        %v771 = vadd.f32 0.0, %v770
        %v772 = vpop.f32.mrb[0].mxu0
        %v773 = vadd.f32 0.0, %v772
        %774 = vmatprep.mubr.bf16.mxu0 %v535
        %775 = vmatmul.mubr.bf16.gmra.mrb[0].mxu0 %v534
        %v776 = vpop.f32.mrb[0].mxu0
        %v777 = vadd.f32 0.0, %v776
        %v778 = vpop.f32.mrb[0].mxu0
        %v779 = vadd.f32 0.0, %v778
        %v780 = vpop.f32.mrb[0].mxu0
        %v781 = vadd.f32 0.0, %v780
        %v782 = vpop.f32.mrb[0].mxu0
        %v783 = vadd.f32 0.0, %v782
        %784 = vmatprep.mubr.bf16.mxu0 %v537
        %785 = vmatmul.mubr.bf16.gmra.mrb[0].mxu0 %v536
        %v786 = vpop.f32.mrb[0].mxu0
        %v787 = vadd.f32 0.0, %v786
        %v788 = vpop.f32.mrb[0].mxu0
        %v789 = vadd.f32 0.0, %v788
        %v790 = vpop.f32.mrb[0].mxu0
        %v791 = vadd.f32 0.0, %v790
        %v792 = vpop.f32.mrb[0].mxu0
        %v793 = vadd.f32 0.0, %v792
        %794 = vmatprep.mubr.bf16.mxu0 %v539
        %795 = vmatmul.mubr.bf16.gmra.mrb[0].mxu0 %v538
        %v796 = vpop.f32.mrb[0].mxu0
        %v797 = vadd.f32 0.0, %v796
        %v798 = vpop.f32.mrb[0].mxu0
        %v799 = vadd.f32 0.0, %v798
        %v800 = vpop.f32.mrb[0].mxu0
        %v801 = vadd.f32 0.0, %v800
        %v802 = vpop.f32.mrb[0].mxu0
        %v803 = vadd.f32 0.0, %v802
        %804 = vmatprep.mubr.bf16.mxu0 %v541
        %805 = vmatmul.mubr.bf16.gmra.mrb[0].mxu0 %v540
        %v806 = vpop.f32.mrb[0].mxu0
        %v807 = vadd.f32 0.0, %v806
        %v808 = vpop.f32.mrb[0].mxu0
        %v809 = vadd.f32 0.0, %v808
        %v810 = vpop.f32.mrb[0].mxu0
        %v811 = vadd.f32 0.0, %v810
        %v812 = vpop.f32.mrb[0].mxu0
        %v813 = vadd.f32 0.0, %v812
        %814 = vmatprep.mubr.bf16.mxu0 %v543
        %815 = vmatmul.mubr.bf16.gmra.mrb[0].mxu0 %v542
        %v816 = vpop.f32.mrb[0].mxu0
        %v817 = vadd.f32 0.0, %v816
        %v818 = vpop.f32.mrb[0].mxu0
        %v819 = vadd.f32 0.0, %v818
        %v820 = vpop.f32.mrb[0].mxu0
        %v821 = vadd.f32 0.0, %v820
        %v822 = vpop.f32.mrb[0].mxu0
        %v823 = vadd.f32 0.0, %v822
        %824 = vmatprep.mubr.bf16.mxu0 %v545
        %825 = vmatmul.mubr.bf16.gmra.mrb[0].mxu0 %v544
        %v826 = vpop.f32.mrb[0].mxu0
        %v827 = vadd.f32 0.0, %v826
        %v828 = vpop.f32.mrb[0].mxu0
        %v829 = vadd.f32 0.0, %v828
        %v830 = vpop.f32.mrb[0].mxu0
        %v831 = vadd.f32 0.0, %v830
        %v832 = vpop.f32.mrb[0].mxu0
        %v833 = vadd.f32 0.0, %v832
        %834 = vdwg.mxu0
        %v835 = vadd.f32 %v402, %v757
        %v836 = vadd.f32 %v403, %v759
        %v837 = vadd.f32 %v404, %v761
        %v838 = vadd.f32 %v405, %v763
        %v839 = vadd.f32 %v406, %v767
        %v840 = vadd.f32 %v407, %v769
        %v841 = vadd.f32 %v408, %v771
        %v842 = vadd.f32 %v409, %v773
        %v843 = vadd.f32 %v410, %v777
        %v844 = vadd.f32 %v411, %v779
        %v845 = vadd.f32 %v412, %v781
        %v846 = vadd.f32 %v413, %v783
        %v847 = vadd.f32 %v414, %v787
        %v848 = vadd.f32 %v415, %v789
        %v849 = vadd.f32 %v416, %v791
        %v850 = vadd.f32 %v417, %v793
        %v851 = vadd.f32 %v418, %v797
        %v852 = vadd.f32 %v419, %v799
        %v853 = vadd.f32 %v420, %v801
        %v854 = vadd.f32 %v421, %v803
        %v855 = vadd.f32 %v422, %v807
        %v856 = vadd.f32 %v423, %v809
        %v857 = vadd.f32 %v424, %v811
        %v858 = vadd.f32 %v425, %v813
        %v859 = vadd.f32 %v426, %v817
        %v860 = vadd.f32 %v427, %v819
        %v861 = vadd.f32 %v428, %v821
        %v862 = vadd.f32 %v429, %v823
        %v863 = vadd.f32 %v430, %v827
        %v864 = vadd.f32 %v431, %v829
        %v865 = vadd.f32 %v432, %v831
        %v866 = vadd.f32 %v433, %v833
        %867 = vst [vmem:[#allocation2] sm:$0xff] %v835
        %868 = vst [vmem:[#allocation2 + $0x8] sm:$0xff] %v836
        %869 = vst [vmem:[#allocation2 + $0x10] sm:$0xff] %v837
        %870 = vst [vmem:[#allocation2 + $0x18] sm:$0xff] %v838
        %871 = vst [vmem:[#allocation2 + $0x20] sm:$0xff] %v839
        %872 = vst [vmem:[#allocation2 + $0x28] sm:$0xff] %v840
        %873 = vst [vmem:[#allocation2 + $0x30] sm:$0xff] %v841
        %874 = vst [vmem:[#allocation2 + $0x38] sm:$0xff] %v842
        %875 = vst [vmem:[#allocation2 + $0x40] sm:$0xff] %v843
        %876 = vst [vmem:[#allocation2 + $0x48] sm:$0xff] %v844
        %877 = vst [vmem:[#allocation2 + $0x50] sm:$0xff] %v845
        %878 = vst [vmem:[#allocation2 + $0x58] sm:$0xff] %v846
        %879 = vst [vmem:[#allocation2 + $0x60] sm:$0xff] %v847
        %880 = vst [vmem:[#allocation2 + $0x68] sm:$0xff] %v848
        %881 = vst [vmem:[#allocation2 + $0x70] sm:$0xff] %v849
        %882 = vst [vmem:[#allocation2 + $0x78] sm:$0xff] %v850
        %883 = vst [vmem:[#allocation2 + $0x80] sm:$0xff] %v851
        %884 = vst [vmem:[#allocation2 + $0x88] sm:$0xff] %v852
        %885 = vst [vmem:[#allocation2 + $0x90] sm:$0xff] %v853
        %886 = vst [vmem:[#allocation2 + $0x98] sm:$0xff] %v854
        %887 = vst [vmem:[#allocation2 + $0xa0] sm:$0xff] %v855
        %888 = vst [vmem:[#allocation2 + $0xa8] sm:$0xff] %v856
        %889 = vst [vmem:[#allocation2 + $0xb0] sm:$0xff] %v857
        %890 = vst [vmem:[#allocation2 + $0xb8] sm:$0xff] %v858
        %891 = vst [vmem:[#allocation2 + $0xc0] sm:$0xff] %v859
        %892 = vst [vmem:[#allocation2 + $0xc8] sm:$0xff] %v860
        %893 = vst [vmem:[#allocation2 + $0xd0] sm:$0xff] %v861
        %894 = vst [vmem:[#allocation2 + $0xd8] sm:$0xff] %v862
        %895 = vst [vmem:[#allocation2 + $0xe0] sm:$0xff] %v863
        %896 = vst [vmem:[#allocation2 + $0xe8] sm:$0xff] %v864
        %897 = vst [vmem:[#allocation2 + $0xf0] sm:$0xff] %v865
        %898 = vst [vmem:[#allocation2 + $0xf8] sm:$0xff] %v866
        %p899 = scmp.eq.s32.totalorder %s21, 4
        // Predicated region
        $region75: #{net_forward.24} parent=65 // pred_check
          %p900 = pneg %p899
        $region76: #{net_forward.24} parent=65 // pred_check_branch
          %902 = sbr.rel (%p900) target = $region78
        $region77: #{net_forward.24} parent=65 // pred_region
          %v903 = vld [vmem:[#allocation2] sm:$0xff]
          %v904 = vld [vmem:[#allocation2 + $0x8] sm:$0xff]
          %v905 = vld [vmem:[#allocation2 + $0x10] sm:$0xff]
          %v906 = vld [vmem:[#allocation2 + $0x18] sm:$0xff]
          %v907 = vld [vmem:[#allocation2 + $0x20] sm:$0xff]
          %v908 = vld [vmem:[#allocation2 + $0x28] sm:$0xff]
          %v909 = vld [vmem:[#allocation2 + $0x30] sm:$0xff]
          %v910 = vld [vmem:[#allocation2 + $0x38] sm:$0xff]
          %v911 = vld [vmem:[#allocation2 + $0x40] sm:$0xff]
          %v912 = vld [vmem:[#allocation2 + $0x48] sm:$0xff]
          %v913 = vld [vmem:[#allocation2 + $0x50] sm:$0xff]
          %v914 = vld [vmem:[#allocation2 + $0x58] sm:$0xff]
          %v915 = vld [vmem:[#allocation2 + $0x60] sm:$0xff]
          %v916 = vld [vmem:[#allocation2 + $0x68] sm:$0xff]
          %v917 = vld [vmem:[#allocation2 + $0x70] sm:$0xff]
          %v918 = vld [vmem:[#allocation2 + $0x78] sm:$0xff]
          %v919 = vld [vmem:[#allocation2 + $0x80] sm:$0xff]
          %v920 = vld [vmem:[#allocation2 + $0x88] sm:$0xff]
          %v921 = vld [vmem:[#allocation2 + $0x90] sm:$0xff]
          %v922 = vld [vmem:[#allocation2 + $0x98] sm:$0xff]
          %v923 = vld [vmem:[#allocation2 + $0xa0] sm:$0xff]
          %v924 = vld [vmem:[#allocation2 + $0xa8] sm:$0xff]
          %v925 = vld [vmem:[#allocation2 + $0xb0] sm:$0xff]
          %v926 = vld [vmem:[#allocation2 + $0xb8] sm:$0xff]
          %v927 = vld [vmem:[#allocation2 + $0xc0] sm:$0xff]
          %v928 = vld [vmem:[#allocation2 + $0xc8] sm:$0xff]
          %v929 = vld [vmem:[#allocation2 + $0xd0] sm:$0xff]
          %v930 = vld [vmem:[#allocation2 + $0xd8] sm:$0xff]
          %v931 = vld [vmem:[#allocation2 + $0xe0] sm:$0xff]
          %v932 = vld [vmem:[#allocation2 + $0xe8] sm:$0xff]
          %v933 = vld [vmem:[#allocation2 + $0xf0] sm:$0xff]
          %v934 = vld [vmem:[#allocation2 + $0xf8] sm:$0xff]
          %v935 = vld [vmem:[%s352] sm:$0x3]
          %v937 = vlaneseq
          %v938 = vshrl.u32 %v937, 7
          %v939 = vsub.s32 0, %v938
          %v940 = vrot.slane %v935, %v939
          %v941 = vlaneseq
          %v942 = vshrl.u32 %v941, 7
          %v943 = vsub.s32 1, %v942
          %v944 = vrot.slane %v935, %v943
          %v947 = vadd.f32 %v903, %v940
          %v948 = vadd.f32 %v904, %v944
          %v949 = vadd.f32 %v905, %v940
          %v950 = vadd.f32 %v906, %v944
          %v951 = vadd.f32 %v907, %v940
          %v952 = vadd.f32 %v908, %v944
          %v953 = vadd.f32 %v909, %v940
          %v954 = vadd.f32 %v910, %v944
          %v955 = vadd.f32 %v911, %v940
          %v956 = vadd.f32 %v912, %v944
          %v957 = vadd.f32 %v913, %v940
          %v958 = vadd.f32 %v914, %v944
          %v959 = vadd.f32 %v915, %v940
          %v960 = vadd.f32 %v916, %v944
          %v961 = vadd.f32 %v917, %v940
          %v962 = vadd.f32 %v918, %v944
          %v963 = vadd.f32 %v919, %v940
          %v964 = vadd.f32 %v920, %v944
          %v965 = vadd.f32 %v921, %v940
          %v966 = vadd.f32 %v922, %v944
          %v967 = vadd.f32 %v923, %v940
          %v968 = vadd.f32 %v924, %v944
          %v969 = vadd.f32 %v925, %v940
          %v970 = vadd.f32 %v926, %v944
          %v971 = vadd.f32 %v927, %v940
          %v972 = vadd.f32 %v928, %v944
          %v973 = vadd.f32 %v929, %v940
          %v974 = vadd.f32 %v930, %v944
          %v975 = vadd.f32 %v931, %v940
          %v976 = vadd.f32 %v932, %v944
          %v977 = vadd.f32 %v933, %v940
          %v978 = vadd.f32 %v934, %v944
          %979 = vst [vmem:[%s363] sm:$0xff] %v947
          %980 = vst [vmem:[%s363 + $0x8] sm:$0xff] %v948
          %981 = vst [vmem:[%s363 + $0x10] sm:$0xff] %v949
          %982 = vst [vmem:[%s363 + $0x18] sm:$0xff] %v950
          %983 = vst [vmem:[%s363 + $0x20] sm:$0xff] %v951
          %984 = vst [vmem:[%s363 + $0x28] sm:$0xff] %v952
          %985 = vst [vmem:[%s363 + $0x30] sm:$0xff] %v953
          %986 = vst [vmem:[%s363 + $0x38] sm:$0xff] %v954
          %987 = vst [vmem:[%s363 + $0x40] sm:$0xff] %v955
          %988 = vst [vmem:[%s363 + $0x48] sm:$0xff] %v956
          %989 = vst [vmem:[%s363 + $0x50] sm:$0xff] %v957
          %990 = vst [vmem:[%s363 + $0x58] sm:$0xff] %v958
          %991 = vst [vmem:[%s363 + $0x60] sm:$0xff] %v959
          %992 = vst [vmem:[%s363 + $0x68] sm:$0xff] %v960
          %993 = vst [vmem:[%s363 + $0x70] sm:$0xff] %v961
          %994 = vst [vmem:[%s363 + $0x78] sm:$0xff] %v962
          %995 = vst [vmem:[%s363 + $0x80] sm:$0xff] %v963
          %996 = vst [vmem:[%s363 + $0x88] sm:$0xff] %v964
          %997 = vst [vmem:[%s363 + $0x90] sm:$0xff] %v965
          %998 = vst [vmem:[%s363 + $0x98] sm:$0xff] %v966
          %999 = vst [vmem:[%s363 + $0xa0] sm:$0xff] %v967
          %1000 = vst [vmem:[%s363 + $0xa8] sm:$0xff] %v968
          %1001 = vst [vmem:[%s363 + $0xb0] sm:$0xff] %v969
          %1002 = vst [vmem:[%s363 + $0xb8] sm:$0xff] %v970
          %1003 = vst [vmem:[%s363 + $0xc0] sm:$0xff] %v971
          %1004 = vst [vmem:[%s363 + $0xc8] sm:$0xff] %v972
          %1005 = vst [vmem:[%s363 + $0xd0] sm:$0xff] %v973
          %1006 = vst [vmem:[%s363 + $0xd8] sm:$0xff] %v974
          %1007 = vst [vmem:[%s363 + $0xe0] sm:$0xff] %v975
          %1008 = vst [vmem:[%s363 + $0xe8] sm:$0xff] %v976
          %1009 = vst [vmem:[%s363 + $0xf0] sm:$0xff] %v977
          %1010 = vst [vmem:[%s363 + $0xf8] sm:$0xff] %v978
        $region78: #{net_forward.24} parent=65 // pred_fallthru
          _
        %s1011 = smul.u32 16, %s19
        %s1012 = smul.u32 2, %s20
        %p1013 = scmp.lt.s32.totalorder %s1011, 15
        %s1014 = scalar_select %p1013, %s1011, 15
        %p1015 = scmp.lt.s32.totalorder %s1012, 1
        %s1016 = scalar_select %p1015, %s1012, 1
        %s1017 = smul.addr %s1014, 2
        %s1018 = sadd.s32 %s1016, %s1017
        %s1019 = smul.addr %s1018, 8
        %s1020 = scalar_lea.vmem %s3, %s1019
        // Predicated region
        $region79: #{net_forward.24} parent=65 // pred_check
          %p1021 = pneg %p135
        $region80: #{net_forward.24} parent=65 // pred_check_branch
          %1023 = sbr.rel (%p1021) target = $region82
        $region81: #{net_forward.24} parent=65 // pred_region
          %s1024 = smul.u32 16, %s19
          %s1025 = smul.u32 2, %s20
        $region82: #{net_forward.24} parent=65 // pred_fallthru
          _
        // Predicated region
        $region83: #{net_forward.24} parent=65 // pred_check
          %p1026 = pneg %p135
        $region84: #{net_forward.24} parent=65 // pred_check_branch
          %1028 = sbr.rel (%p1026) target = $region86
        $region85: #{net_forward.24} parent=65 // pred_region
          %s1029 = smul.u32 16, %s19
          %s1030 = smul.u32 2, %s20
          %p1031 = scmp.lt.s32.totalorder %s1029, 15
          %s1032 = scalar_select %p1031, %s1029, 15
          %p1033 = scmp.lt.s32.totalorder %s1030, 1
          %s1034 = scalar_select %p1033, %s1030, 1
          %s1035 = smul.addr %s1032, 2
          %s1036 = sadd.s32 %s1034, %s1035
          %s1037 = smul.addr %s1036, 8
          %s1038 = scalar_lea.vmem %s3, %s1037
        $region86: #{net_forward.24} parent=65 // pred_fallthru
          _
      $region66: #{net_forward.24} parent=5 // pred_fallthru
        _
      %p1039 = scmp.le.s32.totalorder 2, %s9
      // Predicated region
      $region87: #{net_forward.24} parent=5 // pred_check
        %p1040 = pneg %p1039
      $region88: #{net_forward.24} parent=5 // pred_check_branch
        %1042 = sbr.rel (%p1040) target = $region90
      $region89: #{net_forward.24} parent=5 // pred_region
        %s1043 = ssub.s32 %s9, 2
      $region90: #{net_forward.24} parent=5 // pred_fallthru
        _
    $region6: #{net_forward.24} parent=1 // loop_footer
      %s13 = sadd.s32 1, %s9
    $region7: #{net_forward.24} parent=1 // loop_footer_branch
      %8 = sbr.rel target = $region3
    $region8: #{net_forward.24} parent=1 // loop_exit
      _

// kernel: net_forward.29
$region0: #{net_forward.29}
  #allocation0 [shape = 'u32[]', space=smem, size = 0x4, offset = 0x4, fixed_abs, tag = 'smem constant byte address 0x4 - core index']
  #allocation1 [shape = 'u32[144,128]{1,0:T(1,128)}', space=vmem, size = 0x12000, scoped, tag = 'internal scratch']
  %s0 = inlined_call_operand.vmem [shape: f32[2,16,256], index: 0, kind: input, shape index: {}]
  %s1 = inlined_call_operand.vmem [shape: f32[2,16,256], index: 1, kind: input, shape index: {}]
  %s2 = inlined_call_operand.vmem [shape: f32[2,16,256], index: 2, kind: output, shape index: {}]
  %s3 = sld [smem:[#allocation0]]
  $region41: #{net_forward.29} parent=0
    _
  %s5 = ssub.s32 1, %s3
  %s6 = scalar_select 0, %s5, %s3
  loop: start=0, step=1, limit=4
  $region2: #{net_forward.29} parent=0 // loop_pre_header
    _
  $region3: #{net_forward.29} parent=0 // loop_header
    %s8 = sphi 0, %s12
    %p9 = scmp.ge.s32.totalorder %s8, 4
    %s18 = sphi 0, %s20
    %s21 = sphi 0, %s18
    %s22 = sphi 0, %s21
    %s38 = sphi 0, %s22
    %s44 = sphi 0, %s46
    %s47 = sphi 0, %s44
    %s48 = sphi 0, %s47
    %s64 = sphi 0, %s48
    %s70 = sphi 0, %s72
    %s73 = sphi 0, %s70
    %s74 = sphi 0, %s73
    %s90 = sphi 0, %s74
  $region4: #{net_forward.29} parent=0 // loop_header_branch
    %11 = sbr.rel (%p9) target = $region8
  $region5: #{net_forward.29} parent=0 // loop_body
    %s13 = ssub.s32 %s8, 1
    %s14 = ssub.s32 %s8, 2
    %s15 = sadd.s32 %s8, 1
    %s16 = ssub.s32 %s8, %s15
    %p17 = scmp.eq.s32.totalorder %s16, 0
    %s19 = sadd.s32 %s18, 1
    %s20 = scalar_select %p17, %s18, %s19
    %p23 = pneg %p17
    %p24 = scmp.eq.s32.totalorder %s8, 1
    %p25 = por %p23, %p24
    %p26 = scmp.ne.s32.totalorder %s18, %s21
    %p27 = scmp.eq.s32.totalorder %s8, 0
    %p28 = por %p26, %p27
    %p29 = scmp.ne.s32.totalorder %s18, %s21
    %p30 = scmp.eq.s32.totalorder %s13, 1
    %p31 = por %p29, %p30
    %p32 = scmp.ne.s32.totalorder %s21, %s22
    %p33 = scmp.eq.s32.totalorder %s13, 0
    %p34 = por %p32, %p33
    %p35 = scmp.ne.s32.totalorder %s21, %s22
    %p36 = scmp.eq.s32.totalorder %s14, 1
    %p37 = por %p35, %p36
    %p39 = scmp.ne.s32.totalorder %s22, %s38
    %p40 = scmp.eq.s32.totalorder %s14, 0
    %p41 = por %p39, %p40
    %s42 = ssub.s32 %s8, %s15
    %p43 = scmp.eq.s32.totalorder %s42, 0
    %s45 = sadd.s32 %s44, 1
    %s46 = scalar_select %p43, %s44, %s45
    %p49 = pneg %p43
    %p50 = scmp.eq.s32.totalorder %s8, 1
    %p51 = por %p49, %p50
    %p52 = scmp.ne.s32.totalorder %s44, %s47
    %p53 = scmp.eq.s32.totalorder %s8, 0
    %p54 = por %p52, %p53
    %p55 = scmp.ne.s32.totalorder %s44, %s47
    %p56 = scmp.eq.s32.totalorder %s13, 1
    %p57 = por %p55, %p56
    %p58 = scmp.ne.s32.totalorder %s47, %s48
    %p59 = scmp.eq.s32.totalorder %s13, 0
    %p60 = por %p58, %p59
    %p61 = scmp.ne.s32.totalorder %s47, %s48
    %p62 = scmp.eq.s32.totalorder %s14, 1
    %p63 = por %p61, %p62
    %p65 = scmp.ne.s32.totalorder %s48, %s64
    %p66 = scmp.eq.s32.totalorder %s14, 0
    %p67 = por %p65, %p66
    %s68 = ssub.s32 %s8, %s15
    %p69 = scmp.eq.s32.totalorder %s68, 0
    %s71 = sadd.s32 %s70, 1
    %s72 = scalar_select %p69, %s70, %s71
    %p75 = pneg %p69
    %p76 = scmp.eq.s32.totalorder %s8, 1
    %p77 = por %p75, %p76
    %p78 = scmp.ne.s32.totalorder %s70, %s73
    %p79 = scmp.eq.s32.totalorder %s8, 0
    %p80 = por %p78, %p79
    %p81 = scmp.ne.s32.totalorder %s70, %s73
    %p82 = scmp.eq.s32.totalorder %s13, 1
    %p83 = por %p81, %p82
    %p84 = scmp.ne.s32.totalorder %s73, %s74
    %p85 = scmp.eq.s32.totalorder %s13, 0
    %p86 = por %p84, %p85
    %p87 = scmp.ne.s32.totalorder %s73, %s74
    %p88 = scmp.eq.s32.totalorder %s14, 1
    %p89 = por %p87, %p88
    %p91 = scmp.ne.s32.totalorder %s74, %s90
    %p92 = scmp.eq.s32.totalorder %s14, 0
    %p93 = por %p91, %p92
    %p94 = scmp.le.s32.totalorder 1, %s8
    %p95 = scmp.lt.s32.totalorder %s8, 3
    %p96 = pnand %p94, %p95
    %p97 = pneg %p96
    // Predicated region
    $region9: #{net_forward.29} parent=5 // pred_check
      _
    $region10: #{net_forward.29} parent=5 // pred_check_branch
      %99 = sbr.rel (%p96) target = $region12
    $region11: #{net_forward.29} parent=5 // pred_region
      %s100 = ssub.s32 %s8, 1
    $region12: #{net_forward.29} parent=5 // pred_fallthru
      _
    %p101 = scmp.lt.s32.totalorder %s8, 2
    // Predicated region
    $region13: #{net_forward.29} parent=5 // pred_check
      %p102 = pneg %p101
    $region14: #{net_forward.29} parent=5 // pred_check_branch
      %104 = sbr.rel (%p102) target = $region16
    $region15: #{net_forward.29} parent=5 // pred_region
      // Predicated region
      $region17: #{net_forward.29} parent=15 // pred_check
        %p105 = pneg %p28
      $region18: #{net_forward.29} parent=15 // pred_check_branch
        %107 = sbr.rel (%p105) target = $region20
      $region19: #{net_forward.29} parent=15 // pred_region
        %p108 = scmp.lt.s32.totalorder %s8, 1
        %s109 = scalar_select %p108, %s8, 1
        %s110 = smul.addr %s109, 4
        %s111 = smul.addr %s110, 8
        %s112 = scalar_lea.vmem %s0, %s111
      $region20: #{net_forward.29} parent=15 // pred_fallthru
        _
      // Predicated region
      $region21: #{net_forward.29} parent=15 // pred_check
        %p113 = pneg %p54
      $region22: #{net_forward.29} parent=15 // pred_check_branch
        %115 = sbr.rel (%p113) target = $region24
      $region23: #{net_forward.29} parent=15 // pred_region
        %p116 = scmp.lt.s32.totalorder %s8, 1
        %s117 = scalar_select %p116, %s8, 1
        %s118 = smul.addr %s117, 4
        %s119 = smul.addr %s118, 8
        %s120 = scalar_lea.vmem %s1, %s119
      $region24: #{net_forward.29} parent=15 // pred_fallthru
        _
    $region16: #{net_forward.29} parent=5 // pred_fallthru
      _
    %p121 = scmp.le.s32.totalorder 1, %s8
    %p122 = scmp.lt.s32.totalorder %s8, 3
    %p123 = pnand %p121, %p122
    %p124 = pneg %p123
    // Predicated region
    $region25: #{net_forward.29} parent=5 // pred_check
      _
    $region26: #{net_forward.29} parent=5 // pred_check_branch
      %126 = sbr.rel (%p123) target = $region28
    $region27: #{net_forward.29} parent=5 // pred_region
      %s127 = ssub.s32 %s8, 1
      %p128 = scmp.lt.s32.totalorder %s13, 1
      %s129 = scalar_select %p128, %s13, 1
      %s130 = smul.addr %s129, 4
      %s131 = smul.addr %s130, 8
      %s132 = scalar_lea.vmem %s0, %s131
      %p133 = pneg %p34
      %p134 = pneg %p31
      %p135 = scmp.lt.s32.totalorder %s13, 1
      %s136 = scalar_select %p135, %s13, 1
      %s137 = smul.addr %s136, 4
      %s138 = smul.addr %s137, 8
      %s139 = scalar_lea.vmem %s1, %s138
      %p140 = pneg %p60
      %p141 = pneg %p57
      %p142 = pneg %p86
      %p143 = pneg %p83
      %p144 = scmp.lt.s32.totalorder %s13, 1
      %s145 = scalar_select %p144, %s13, 1
      %s146 = smul.addr %s145, 4
      %s147 = smul.addr %s146, 8
      %s148 = scalar_lea.vmem %s2, %s147
      %p149 = scmp.lt.s32.totalorder %s13, 1
      %s150 = scalar_select %p149, %s13, 1
      %s151 = smul.addr %s150, 4
      %s152 = smul.addr %s151, 8
      %s153 = scalar_lea.vmem %s0, %s152
      %p154 = scmp.lt.s32.totalorder %s13, 1
      %s155 = scalar_select %p154, %s13, 1
      %s156 = smul.addr %s155, 4
      %s157 = smul.addr %s156, 8
      %s158 = scalar_lea.vmem %s1, %s157
      %p159 = scmp.lt.s32.totalorder %s13, 1
      %s160 = scalar_select %p159, %s13, 1
      %s161 = smul.addr %s160, 4
      %s162 = smul.addr %s161, 8
      %s163 = scalar_lea.vmem %s2, %s162
      %v164 = vld [vmem:[%s153] sm:$0xff]
      %v165 = vld [vmem:[%s153 + $0x8] sm:$0xff]
      %v166 = vld [vmem:[%s153 + $0x10] sm:$0xff]
      %v167 = vld [vmem:[%s153 + $0x18] sm:$0xff]
      %v168 = vadd.f32 %v164, %v166
      %v169 = vrot.slane %v168, 4
      %v170 = vadd.f32 %v168, %v169
      %v171 = vrot.slane %v170, 2
      %v172 = vadd.f32 %v170, %v171
      %v173 = vrot.slane %v172, 1
      %v174 = vadd.f32 %v172, %v173
      %v175 = vadd.f32 %v165, %v167
      %v176 = vrot.slane %v175, 4
      %v177 = vadd.f32 %v175, %v176
      %v178 = vrot.slane %v177, 2
      %v179 = vadd.f32 %v177, %v178
      %v180 = vrot.slane %v179, 1
      %v181 = vadd.f32 %v179, %v180
      %v182 = vrcp.pop 16.0
      %v183 = vmul.f32 %v174, %v182
      %v184 = vmul.f32 %v181, %v182
      %v185 = vsub.f32 %v164, %v183
      %v186 = vsub.f32 %v165, %v184
      %v187 = vsub.f32 %v166, %v183
      %v188 = vsub.f32 %v167, %v184
      %v189 = vmul.f32 %v185, %v185
      %v190 = vmul.f32 %v186, %v186
      %v191 = vmul.f32 %v187, %v187
      %v192 = vmul.f32 %v188, %v188
      %v193 = vadd.f32 %v189, %v191
      %v194 = vrot.slane %v193, 4
      %v195 = vadd.f32 %v193, %v194
      %v196 = vrot.slane %v195, 2
      %v197 = vadd.f32 %v195, %v196
      %v198 = vrot.slane %v197, 1
      %v199 = vadd.f32 %v197, %v198
      %v200 = vadd.f32 %v190, %v192
      %v201 = vrot.slane %v200, 4
      %v202 = vadd.f32 %v200, %v201
      %v203 = vrot.slane %v202, 2
      %v204 = vadd.f32 %v202, %v203
      %v205 = vrot.slane %v204, 1
      %v206 = vadd.f32 %v204, %v205
      %v207 = vmul.f32 %v199, %v182
      %v208 = vmul.f32 %v206, %v182
      %v209 = vld [vmem:[%s158] sm:$0xff]
      %v210 = vld [vmem:[%s158 + $0x8] sm:$0xff]
      %v211 = vld [vmem:[%s158 + $0x10] sm:$0xff]
      %v212 = vld [vmem:[%s158 + $0x18] sm:$0xff]
      %v213 = vadd.f32 %v207, 1e-05
      %v214 = vadd.f32 %v208, 1e-05
      %v215 = vrsqrt.pop %v213
      %v216 = vrsqrt.pop %v214
      %v217 = vmul.f32 %v185, %v215
      %v218 = vmul.f32 %v186, %v216
      %v219 = vmul.f32 %v187, %v215
      %v220 = vmul.f32 %v188, %v216
      %v221 = vadd.f32 %v209, %v217
      %v222 = vadd.f32 %v210, %v218
      %v223 = vadd.f32 %v211, %v219
      %v224 = vadd.f32 %v212, %v220
      %225 = vst [vmem:[%s163] sm:$0xff] %v221
      %226 = vst [vmem:[%s163 + $0x8] sm:$0xff] %v222
      %227 = vst [vmem:[%s163 + $0x10] sm:$0xff] %v223
      %228 = vst [vmem:[%s163 + $0x18] sm:$0xff] %v224
      %p229 = scmp.lt.s32.totalorder %s13, 1
      %s230 = scalar_select %p229, %s13, 1
      %s231 = smul.addr %s230, 4
      %s232 = smul.addr %s231, 8
      %s233 = scalar_lea.vmem %s2, %s232
      // Predicated region
      $region29: #{net_forward.29} parent=27 // pred_check
        %p234 = pneg %p83
      $region30: #{net_forward.29} parent=27 // pred_check_branch
        %236 = sbr.rel (%p234) target = $region32
      $region31: #{net_forward.29} parent=27 // pred_region
        _
      $region32: #{net_forward.29} parent=27 // pred_fallthru
        _
    $region28: #{net_forward.29} parent=5 // pred_fallthru
      _
    %p237 = scmp.le.s32.totalorder 2, %s8
    // Predicated region
    $region33: #{net_forward.29} parent=5 // pred_check
      %p238 = pneg %p237
    $region34: #{net_forward.29} parent=5 // pred_check_branch
      %240 = sbr.rel (%p238) target = $region36
    $region35: #{net_forward.29} parent=5 // pred_region
      %s241 = ssub.s32 %s8, 2
      // Predicated region
      $region37: #{net_forward.29} parent=35 // pred_check
        %p242 = pneg %p89
      $region38: #{net_forward.29} parent=35 // pred_check_branch
        %244 = sbr.rel (%p242) target = $region40
      $region39: #{net_forward.29} parent=35 // pred_region
        %p245 = scmp.lt.s32.totalorder %s14, 1
        %s246 = scalar_select %p245, %s14, 1
        %s247 = smul.addr %s246, 4
        %s248 = smul.addr %s247, 8
        %s249 = scalar_lea.vmem %s2, %s248
      $region40: #{net_forward.29} parent=35 // pred_fallthru
        _
    $region36: #{net_forward.29} parent=5 // pred_fallthru
      _
  $region6: #{net_forward.29} parent=0 // loop_footer
    %s12 = sadd.s32 1, %s8
  $region7: #{net_forward.29} parent=0 // loop_footer_branch
    %7 = sbr.rel target = $region3
  $region8: #{net_forward.29} parent=0 // loop_exit
    _

// kernel: net_forward.26
$region0: #{net_forward.26}
  #allocation0 [shape = 'u32[]', space=smem, size = 0x4, offset = 0x4, fixed_abs, tag = 'smem constant byte address 0x4 - core index']
  #allocation1 [shape = 'u32[144,128]{1,0:T(1,128)}', space=vmem, size = 0x12000, scoped, tag = 'internal scratch']
  #allocation2 [shape = 'f32[128,256]{1,0:T(8,128)}', space=vmem, size = 0x20000, scoped, tag = 'scratch operand']
  %s0 = inlined_call_operand.vmem [shape: bf16[128,2304], index: 0, kind: input, shape index: {}]
  %s1 = inlined_call_operand.vmem [shape: bf16[2304,256], index: 1, kind: input, shape index: {}]
  %s2 = inlined_call_operand.vmem [shape: f32[1,256], index: 2, kind: input, shape index: {}]
  %s3 = inlined_call_operand.vmem [shape: f32[128,256], index: 3, kind: output, shape index: {}]
  %s4 = sld [smem:[#allocation0]]
  $region91: #{net_forward.26} parent=0
    _
  %s6 = ssub.s32 1, %s4
  %s7 = scalar_select 0, %s6, %s4
  $region1: #{net_forward.26} parent=0
    #allocation3 [shape = 'u8[131072]{0}', space=vmem, size = 0x20000, scoped, tag = 'input window, operand 0']
    loop: start=0, step=1, limit=11
    $region2: #{net_forward.26} parent=1 // loop_pre_header
      _
    $region3: #{net_forward.26} parent=1 // loop_header
      %s9 = sphi 0, %s13
      %p10 = scmp.ge.s32.totalorder %s9, 11
      %s16 = sphi 0, %s35
      %s17 = sphi 0, %s31
      %s18 = sphi 0, %s27
      %s19 = sphi 0, %s16
      %s20 = sphi 0, %s17
      %s21 = sphi 0, %s18
      %s22 = sphi 0, %s19
      %s23 = sphi 0, %s20
      %s24 = sphi 0, %s21
      %s40 = sphi 0, %s42
      %s43 = sphi 0, %s40
      %s44 = sphi 0, %s43
      %s60 = sphi 0, %s44
      %s68 = sphi 0, %s70
      %s71 = sphi 0, %s68
      %s72 = sphi 0, %s71
      %s88 = sphi 0, %s72
      %s94 = sphi 0, %s96
      %s97 = sphi 0, %s94
      %s98 = sphi 0, %s97
      %s114 = sphi 0, %s98
      %s122 = sphi 0, %s124
      %s125 = sphi 0, %s122
      %s126 = sphi 0, %s125
      %s142 = sphi 0, %s126
    $region4: #{net_forward.26} parent=1 // loop_header_branch
      %12 = sbr.rel (%p10) target = $region8
    $region5: #{net_forward.26} parent=1 // loop_body
      %s14 = ssub.s32 %s9, 1
      %s15 = ssub.s32 %s9, 2
      %s25 = sadd.s32 1, %s18
      %p26 = scmp.ge.s32.totalorder %s25, 9
      %s27 = scalar_select %p26, 0, %s25
      %s28 = sadd.s32 1, %s17
      %s29 = scalar_select %p26, %s28, %s17
      %p30 = scmp.ge.s32.totalorder %s29, 1
      %s31 = scalar_select %p30, 0, %s29
      %s32 = sadd.s32 1, %s16
      %s33 = scalar_select %p30, %s32, %s16
      %p34 = scmp.ge.s32.totalorder %s33, 1
      %s35 = scalar_select %p34, 0, %s33
      %s36 = ssub.s32 %s16, %s35
      %s37 = ssub.s32 %s18, %s27
      %s38 = sor.u32 %s36, %s37
      %p39 = scmp.eq.s32.totalorder %s38, 0
      %s41 = sadd.s32 %s40, 1
      %s42 = scalar_select %p39, %s40, %s41
      %p45 = pneg %p39
      %p46 = scmp.eq.s32.totalorder %s9, 8
      %p47 = por %p45, %p46
      %p48 = scmp.ne.s32.totalorder %s40, %s43
      %p49 = scmp.eq.s32.totalorder %s9, 0
      %p50 = por %p48, %p49
      %p51 = scmp.ne.s32.totalorder %s40, %s43
      %p52 = scmp.eq.s32.totalorder %s14, 8
      %p53 = por %p51, %p52
      %p54 = scmp.ne.s32.totalorder %s43, %s44
      %p55 = scmp.eq.s32.totalorder %s14, 0
      %p56 = por %p54, %p55
      %p57 = scmp.ne.s32.totalorder %s43, %s44
      %p58 = scmp.eq.s32.totalorder %s15, 8
      %p59 = por %p57, %p58
      %p61 = scmp.ne.s32.totalorder %s44, %s60
      %p62 = scmp.eq.s32.totalorder %s15, 0
      %p63 = por %p61, %p62
      %s64 = ssub.s32 %s18, %s27
      %s65 = ssub.s32 %s17, %s31
      %s66 = sor.u32 %s64, %s65
      %p67 = scmp.eq.s32.totalorder %s66, 0
      %s69 = sadd.s32 %s68, 1
      %s70 = scalar_select %p67, %s68, %s69
      %p73 = pneg %p67
      %p74 = scmp.eq.s32.totalorder %s9, 8
      %p75 = por %p73, %p74
      %p76 = scmp.ne.s32.totalorder %s68, %s71
      %p77 = scmp.eq.s32.totalorder %s9, 0
      %p78 = por %p76, %p77
      %p79 = scmp.ne.s32.totalorder %s68, %s71
      %p80 = scmp.eq.s32.totalorder %s14, 8
      %p81 = por %p79, %p80
      %p82 = scmp.ne.s32.totalorder %s71, %s72
      %p83 = scmp.eq.s32.totalorder %s14, 0
      %p84 = por %p82, %p83
      %p85 = scmp.ne.s32.totalorder %s71, %s72
      %p86 = scmp.eq.s32.totalorder %s15, 8
      %p87 = por %p85, %p86
      %p89 = scmp.ne.s32.totalorder %s72, %s88
      %p90 = scmp.eq.s32.totalorder %s15, 0
      %p91 = por %p89, %p90
      %s92 = ssub.s32 %s17, %s31
      %p93 = scmp.eq.s32.totalorder %s92, 0
      %s95 = sadd.s32 %s94, 1
      %s96 = scalar_select %p93, %s94, %s95
      %p99 = pneg %p93
      %p100 = scmp.eq.s32.totalorder %s9, 8
      %p101 = por %p99, %p100
      %p102 = scmp.ne.s32.totalorder %s94, %s97
      %p103 = scmp.eq.s32.totalorder %s9, 0
      %p104 = por %p102, %p103
      %p105 = scmp.ne.s32.totalorder %s94, %s97
      %p106 = scmp.eq.s32.totalorder %s14, 8
      %p107 = por %p105, %p106
      %p108 = scmp.ne.s32.totalorder %s97, %s98
      %p109 = scmp.eq.s32.totalorder %s14, 0
      %p110 = por %p108, %p109
      %p111 = scmp.ne.s32.totalorder %s97, %s98
      %p112 = scmp.eq.s32.totalorder %s15, 8
      %p113 = por %p111, %p112
      %p115 = scmp.ne.s32.totalorder %s98, %s114
      %p116 = scmp.eq.s32.totalorder %s15, 0
      %p117 = por %p115, %p116
      %s118 = ssub.s32 %s16, %s35
      %s119 = ssub.s32 %s17, %s31
      %s120 = sor.u32 %s118, %s119
      %p121 = scmp.eq.s32.totalorder %s120, 0
      %s123 = sadd.s32 %s122, 1
      %s124 = scalar_select %p121, %s122, %s123
      %p127 = pneg %p121
      %p128 = scmp.eq.s32.totalorder %s9, 8
      %p129 = por %p127, %p128
      %p130 = scmp.ne.s32.totalorder %s122, %s125
      %p131 = scmp.eq.s32.totalorder %s9, 0
      %p132 = por %p130, %p131
      %p133 = scmp.ne.s32.totalorder %s122, %s125
      %p134 = scmp.eq.s32.totalorder %s14, 8
      %p135 = por %p133, %p134
      %p136 = scmp.ne.s32.totalorder %s125, %s126
      %p137 = scmp.eq.s32.totalorder %s14, 0
      %p138 = por %p136, %p137
      %p139 = scmp.ne.s32.totalorder %s125, %s126
      %p140 = scmp.eq.s32.totalorder %s15, 8
      %p141 = por %p139, %p140
      %p143 = scmp.ne.s32.totalorder %s126, %s142
      %p144 = scmp.eq.s32.totalorder %s15, 0
      %p145 = por %p143, %p144
      %p146 = scmp.le.s32.totalorder 1, %s9
      %p147 = scmp.lt.s32.totalorder %s9, 10
      %p148 = pnand %p146, %p147
      %p149 = pneg %p148
      // Predicated region
      $region9: #{net_forward.26} parent=5 // pred_check
        _
      $region10: #{net_forward.26} parent=5 // pred_check_branch
        %151 = sbr.rel (%p148) target = $region12
      $region11: #{net_forward.26} parent=5 // pred_region
        %s152 = ssub.s32 %s9, 1
        // Predicated region
        $region13: #{net_forward.26} parent=11 // pred_check
          %p153 = pneg %p110
        $region14: #{net_forward.26} parent=11 // pred_check_branch
          %155 = sbr.rel (%p153) target = $region16
        $region15: #{net_forward.26} parent=11 // pred_region
          %s156 = smul.u32 2, %s20
          %p157 = scmp.lt.s32.totalorder %s156, 1
          %s158 = scalar_select %p157, %s156, 1
          %s159 = scalar_lea.vmem %s2, %s158
          %s160 = smul.u32 2, %s20
        $region16: #{net_forward.26} parent=11 // pred_fallthru
          _
      $region12: #{net_forward.26} parent=5 // pred_fallthru
        _
      %p161 = scmp.lt.s32.totalorder %s9, 9
      // Predicated region
      $region17: #{net_forward.26} parent=5 // pred_check
        %p162 = pneg %p161
      $region18: #{net_forward.26} parent=5 // pred_check_branch
        %164 = sbr.rel (%p162) target = $region20
      $region19: #{net_forward.26} parent=5 // pred_region
        // Predicated region
        $region21: #{net_forward.26} parent=19 // pred_check
          %p165 = pneg %p50
        $region22: #{net_forward.26} parent=19 // pred_check_branch
          %167 = sbr.rel (%p165) target = $region24
        $region23: #{net_forward.26} parent=19 // pred_region
          %s168 = sand.u32 %s40, 1
          %s169 = sand.u32 %s40, 1
          %s170 = smul.addr %s169, 128
          %s171 = scalar_lea.vmem [#allocation3], %s170
          %s172 = smul.u32 16, %s16
          %s173 = smul.u32 2, %s18
          %s174 = smul.addr %s172, 18
          %s175 = sadd.s32 %s173, %s174
          %s176 = smul.addr %s175, 4
          %s177 = scalar_lea.vmem %s0, %s176
          // Predicated region
          $region25: #{net_forward.26} parent=23 // pred_check
            _
          $region26: #{net_forward.26} parent=23 // pred_check_branch
            %179 = sbr.rel (0) target = $region28
          $region27: #{net_forward.26} parent=23 // pred_region
            // Predicated region
            $region29: #{net_forward.26} parent=27 // pred_check
              _
            $region30: #{net_forward.26} parent=27 // pred_check_branch
              %181 = sbr.rel (0) target = $region32
            $region31: #{net_forward.26} parent=27 // pred_region
              // Predicated region
              $region44: #{net_forward.26} parent=31 // pred_check
                _
              $region45: #{net_forward.26} parent=31 // pred_check_branch
                %226 = sbr.rel (0) target = $region47
              $region46: #{net_forward.26} parent=31 // pred_region
                loop: start=0, step=1, limit=1
                $region48: #{net_forward.26} parent=46 // loop_pre_header
                  _
                $region49: #{net_forward.26} parent=46 // loop_header
                  %s228 = sphi 0, %s232
                  %p229 = scmp.ge.s32.totalorder %s228, 1
                  %s233 = sphi %s177, %s177
                  %s234 = sphi %s171, %s171
                $region50: #{net_forward.26} parent=46 // loop_header_branch
                  %231 = sbr.rel (%p229) target = $region54
                $region51: #{net_forward.26} parent=46 // loop_body
                  %v235 = vld [vmem:[%s233] sm:$0xff]
                  %236 = vst [vmem:[%s234] sm:$0xff] %v235
                  %v237 = vld [vmem:[%s233 + $0x48] sm:$0xff]
                  %238 = vst [vmem:[%s234 + $0x8] sm:$0xff] %v237
                  %v239 = vld [vmem:[%s233 + $0x90] sm:$0xff]
                  %240 = vst [vmem:[%s234 + $0x10] sm:$0xff] %v239
                  %v241 = vld [vmem:[%s233 + $0xd8] sm:$0xff]
                  %242 = vst [vmem:[%s234 + $0x18] sm:$0xff] %v241
                  %v243 = vld [vmem:[%s233 + $0x120] sm:$0xff]
                  %244 = vst [vmem:[%s234 + $0x20] sm:$0xff] %v243
                  %v245 = vld [vmem:[%s233 + $0x168] sm:$0xff]
                  %246 = vst [vmem:[%s234 + $0x28] sm:$0xff] %v245
                  %v247 = vld [vmem:[%s233 + $0x1b0] sm:$0xff]
                  %248 = vst [vmem:[%s234 + $0x30] sm:$0xff] %v247
                  %v249 = vld [vmem:[%s233 + $0x1f8] sm:$0xff]
                  %250 = vst [vmem:[%s234 + $0x38] sm:$0xff] %v249
                  %v251 = vld [vmem:[%s233 + $0x240] sm:$0xff]
                  %252 = vst [vmem:[%s234 + $0x40] sm:$0xff] %v251
                  %v253 = vld [vmem:[%s233 + $0x288] sm:$0xff]
                  %254 = vst [vmem:[%s234 + $0x48] sm:$0xff] %v253
                  %v255 = vld [vmem:[%s233 + $0x2d0] sm:$0xff]
                  %256 = vst [vmem:[%s234 + $0x50] sm:$0xff] %v255
                  %v257 = vld [vmem:[%s233 + $0x318] sm:$0xff]
                  %258 = vst [vmem:[%s234 + $0x58] sm:$0xff] %v257
                  %v259 = vld [vmem:[%s233 + $0x360] sm:$0xff]
                  %260 = vst [vmem:[%s234 + $0x60] sm:$0xff] %v259
                  %v261 = vld [vmem:[%s233 + $0x3a8] sm:$0xff]
                  %262 = vst [vmem:[%s234 + $0x68] sm:$0xff] %v261
                  %v263 = vld [vmem:[%s233 + $0x3f0] sm:$0xff]
                  %264 = vst [vmem:[%s234 + $0x70] sm:$0xff] %v263
                  %v265 = vld [vmem:[%s233 + $0x438] sm:$0xff]
                  %266 = vst [vmem:[%s234 + $0x78] sm:$0xff] %v265
                $region52: #{net_forward.26} parent=46 // loop_footer
                  %s232 = sadd.s32 1, %s228
                $region53: #{net_forward.26} parent=46 // loop_footer_branch
                  %227 = sbr.rel target = $region49
                $region54: #{net_forward.26} parent=46 // loop_exit
                  _
              $region47: #{net_forward.26} parent=31 // pred_fallthru
                _
              // Predicated region
              $region55: #{net_forward.26} parent=31 // pred_check
                _
              $region56: #{net_forward.26} parent=31 // pred_check_branch
                %268 = sbr.rel target = $region58
              $region57: #{net_forward.26} parent=31 // pred_region
                _
              $region58: #{net_forward.26} parent=31 // pred_fallthru
                _
            $region32: #{net_forward.26} parent=27 // pred_fallthru
              _
            // Predicated region
            $region33: #{net_forward.26} parent=27 // pred_check
              _
            $region34: #{net_forward.26} parent=27 // pred_check_branch
              %183 = sbr.rel target = $region36
            $region35: #{net_forward.26} parent=27 // pred_region
              loop: start=0, step=1, limit=1
              $region37: #{net_forward.26} parent=35 // loop_pre_header
                _
              $region38: #{net_forward.26} parent=35 // loop_header
                %s186 = sphi 0, %s190
                %p187 = scmp.ge.s32.totalorder %s186, 1
                %s191 = sphi %s177, %s177
                %s192 = sphi %s171, %s171
              $region39: #{net_forward.26} parent=35 // loop_header_branch
                %189 = sbr.rel (%p187) target = $region43
              $region40: #{net_forward.26} parent=35 // loop_body
                %v193 = vld [vmem:[%s191] sm:$0xff]
                %194 = vst [vmem:[%s192] sm:$0xff] %v193
                %v195 = vld [vmem:[%s191 + $0x48] sm:$0xff]
                %196 = vst [vmem:[%s192 + $0x8] sm:$0xff] %v195
                %v197 = vld [vmem:[%s191 + $0x90] sm:$0xff]
                %198 = vst [vmem:[%s192 + $0x10] sm:$0xff] %v197
                %v199 = vld [vmem:[%s191 + $0xd8] sm:$0xff]
                %200 = vst [vmem:[%s192 + $0x18] sm:$0xff] %v199
                %v201 = vld [vmem:[%s191 + $0x120] sm:$0xff]
                %202 = vst [vmem:[%s192 + $0x20] sm:$0xff] %v201
                %v203 = vld [vmem:[%s191 + $0x168] sm:$0xff]
                %204 = vst [vmem:[%s192 + $0x28] sm:$0xff] %v203
                %v205 = vld [vmem:[%s191 + $0x1b0] sm:$0xff]
                %206 = vst [vmem:[%s192 + $0x30] sm:$0xff] %v205
                %v207 = vld [vmem:[%s191 + $0x1f8] sm:$0xff]
                %208 = vst [vmem:[%s192 + $0x38] sm:$0xff] %v207
                %v209 = vld [vmem:[%s191 + $0x240] sm:$0xff]
                %210 = vst [vmem:[%s192 + $0x40] sm:$0xff] %v209
                %v211 = vld [vmem:[%s191 + $0x288] sm:$0xff]
                %212 = vst [vmem:[%s192 + $0x48] sm:$0xff] %v211
                %v213 = vld [vmem:[%s191 + $0x2d0] sm:$0xff]
                %214 = vst [vmem:[%s192 + $0x50] sm:$0xff] %v213
                %v215 = vld [vmem:[%s191 + $0x318] sm:$0xff]
                %216 = vst [vmem:[%s192 + $0x58] sm:$0xff] %v215
                %v217 = vld [vmem:[%s191 + $0x360] sm:$0xff]
                %218 = vst [vmem:[%s192 + $0x60] sm:$0xff] %v217
                %v219 = vld [vmem:[%s191 + $0x3a8] sm:$0xff]
                %220 = vst [vmem:[%s192 + $0x68] sm:$0xff] %v219
                %v221 = vld [vmem:[%s191 + $0x3f0] sm:$0xff]
                %222 = vst [vmem:[%s192 + $0x70] sm:$0xff] %v221
                %v223 = vld [vmem:[%s191 + $0x438] sm:$0xff]
                %224 = vst [vmem:[%s192 + $0x78] sm:$0xff] %v223
              $region41: #{net_forward.26} parent=35 // loop_footer
                %s190 = sadd.s32 1, %s186
              $region42: #{net_forward.26} parent=35 // loop_footer_branch
                %185 = sbr.rel target = $region38
              $region43: #{net_forward.26} parent=35 // loop_exit
                _
            $region36: #{net_forward.26} parent=27 // pred_fallthru
              _
          $region28: #{net_forward.26} parent=23 // pred_fallthru
            _
          %269 = vnop
        $region24: #{net_forward.26} parent=19 // pred_fallthru
          _
        // Predicated region
        $region59: #{net_forward.26} parent=19 // pred_check
          %p270 = pneg %p78
        $region60: #{net_forward.26} parent=19 // pred_check_branch
          %272 = sbr.rel (%p270) target = $region62
        $region61: #{net_forward.26} parent=19 // pred_region
          %s273 = smul.u32 32, %s18
          %s274 = smul.u32 2, %s17
          %p275 = scmp.lt.s32.totalorder %s273, 287
          %s276 = scalar_select %p275, %s273, 287
          %p277 = scmp.lt.s32.totalorder %s274, 1
          %s278 = scalar_select %p277, %s274, 1
          %s279 = smul.addr %s276, 2
          %s280 = sadd.s32 %s278, %s279
          %s281 = smul.addr %s280, 4
          %s282 = scalar_lea.vmem %s1, %s281
          %s283 = smul.u32 32, %s18
          %s284 = smul.u32 2, %s17
        $region62: #{net_forward.26} parent=19 // pred_fallthru
          _
      $region20: #{net_forward.26} parent=5 // pred_fallthru
        _
      %p285 = scmp.le.s32.totalorder 1, %s9
      %p286 = scmp.lt.s32.totalorder %s9, 10
      %p287 = pnand %p285, %p286
      %p288 = pneg %p287
      // Predicated region
      $region63: #{net_forward.26} parent=5 // pred_check
        _
      $region64: #{net_forward.26} parent=5 // pred_check_branch
        %290 = sbr.rel (%p287) target = $region66
      $region65: #{net_forward.26} parent=5 // pred_region
        %s291 = ssub.s32 %s9, 1
        %s292 = sand.u32 %s43, 1
        %s293 = sand.u32 %s43, 1
        %s294 = smul.addr %s293, 128
        %s295 = scalar_lea.vmem [#allocation3], %s294
        // Predicated region
        $region67: #{net_forward.26} parent=65 // pred_check
          %p296 = pneg %p56
        $region68: #{net_forward.26} parent=65 // pred_check_branch
          %298 = sbr.rel (%p296) target = $region70
        $region69: #{net_forward.26} parent=65 // pred_region
          _
        $region70: #{net_forward.26} parent=65 // pred_fallthru
          _
        %s299 = sand.u32 %s43, 1
        %s300 = sand.u32 %s43, 1
        %s301 = smul.addr %s300, 128
        %s302 = scalar_lea.vmem [#allocation3], %s301
        %p303 = pneg %p56
        %p304 = pneg %p53
        %s305 = smul.u32 32, %s21
        %s306 = smul.u32 2, %s20
        %p307 = scmp.lt.s32.totalorder %s305, 287
        %s308 = scalar_select %p307, %s305, 287
        %p309 = scmp.lt.s32.totalorder %s306, 1
        %s310 = scalar_select %p309, %s306, 1
        %s311 = smul.addr %s308, 2
        %s312 = sadd.s32 %s310, %s311
        %s313 = smul.addr %s312, 4
        %s314 = scalar_lea.vmem %s1, %s313
        %p315 = pneg %p84
        %p316 = pneg %p81
        %s317 = smul.u32 2, %s20
        %p318 = scmp.lt.s32.totalorder %s317, 1
        %s319 = scalar_select %p318, %s317, 1
        %s320 = scalar_lea.vmem %s2, %s319
        %p321 = pneg %p110
        %p322 = pneg %p107
        %p323 = pneg %p138
        %p324 = pneg %p135
        %s325 = smul.u32 16, %s19
        %s326 = smul.u32 2, %s20
        %p327 = scmp.lt.s32.totalorder %s325, 15
        %s328 = scalar_select %p327, %s325, 15
        %p329 = scmp.lt.s32.totalorder %s326, 1
        %s330 = scalar_select %p329, %s326, 1
        %s331 = smul.addr %s328, 2
        %s332 = sadd.s32 %s330, %s331
        %s333 = smul.addr %s332, 8
        %s334 = scalar_lea.vmem %s3, %s333
        %s335 = smul.u32 16, %s19
        %s336 = smul.u32 2, %s21
        %s337 = smul.u32 32, %s21
        %s338 = smul.u32 2, %s20
        %p339 = scmp.lt.s32.totalorder %s337, 287
        %s340 = scalar_select %p339, %s337, 287
        %p341 = scmp.lt.s32.totalorder %s338, 1
        %s342 = scalar_select %p341, %s338, 1
        %s343 = smul.addr %s340, 2
        %s344 = sadd.s32 %s342, %s343
        %s345 = smul.addr %s344, 4
        %s346 = scalar_lea.vmem %s1, %s345
        %s347 = smul.u32 32, %s21
        %s348 = smul.u32 2, %s20
        %s349 = smul.u32 2, %s20
        %p350 = scmp.lt.s32.totalorder %s349, 1
        %s351 = scalar_select %p350, %s349, 1
        %s352 = scalar_lea.vmem %s2, %s351
        %s353 = smul.u32 2, %s20
        %s354 = smul.u32 16, %s19
        %s355 = smul.u32 2, %s20
        %p356 = scmp.lt.s32.totalorder %s354, 15
        %s357 = scalar_select %p356, %s354, 15
        %p358 = scmp.lt.s32.totalorder %s355, 1
        %s359 = scalar_select %p358, %s355, 1
        %s360 = smul.addr %s357, 2
        %s361 = sadd.s32 %s359, %s360
        %s362 = smul.addr %s361, 8
        %s363 = scalar_lea.vmem %s3, %s362
        %s364 = smul.u32 16, %s19
        %s365 = smul.u32 2, %s20
        %p366 = scmp.eq.s32.totalorder %s21, 0
        // Predicated region
        $region71: #{net_forward.26} parent=65 // pred_check
          %p367 = pneg %p366
        $region72: #{net_forward.26} parent=65 // pred_check_branch
          %369 = sbr.rel (%p367) target = $region74
        $region73: #{net_forward.26} parent=65 // pred_region
          %370 = vst [vmem:[#allocation2] sm:$0xff] 0.0
          %371 = vst [vmem:[#allocation2 + $0x8] sm:$0xff] 0.0
          %372 = vst [vmem:[#allocation2 + $0x10] sm:$0xff] 0.0
          %373 = vst [vmem:[#allocation2 + $0x18] sm:$0xff] 0.0
          %374 = vst [vmem:[#allocation2 + $0x20] sm:$0xff] 0.0
          %375 = vst [vmem:[#allocation2 + $0x28] sm:$0xff] 0.0
          %376 = vst [vmem:[#allocation2 + $0x30] sm:$0xff] 0.0
          %377 = vst [vmem:[#allocation2 + $0x38] sm:$0xff] 0.0
          %378 = vst [vmem:[#allocation2 + $0x40] sm:$0xff] 0.0
          %379 = vst [vmem:[#allocation2 + $0x48] sm:$0xff] 0.0
          %380 = vst [vmem:[#allocation2 + $0x50] sm:$0xff] 0.0
          %381 = vst [vmem:[#allocation2 + $0x58] sm:$0xff] 0.0
          %382 = vst [vmem:[#allocation2 + $0x60] sm:$0xff] 0.0
          %383 = vst [vmem:[#allocation2 + $0x68] sm:$0xff] 0.0
          %384 = vst [vmem:[#allocation2 + $0x70] sm:$0xff] 0.0
          %385 = vst [vmem:[#allocation2 + $0x78] sm:$0xff] 0.0
          %386 = vst [vmem:[#allocation2 + $0x80] sm:$0xff] 0.0
          %387 = vst [vmem:[#allocation2 + $0x88] sm:$0xff] 0.0
          %388 = vst [vmem:[#allocation2 + $0x90] sm:$0xff] 0.0
          %389 = vst [vmem:[#allocation2 + $0x98] sm:$0xff] 0.0
          %390 = vst [vmem:[#allocation2 + $0xa0] sm:$0xff] 0.0
          %391 = vst [vmem:[#allocation2 + $0xa8] sm:$0xff] 0.0
          %392 = vst [vmem:[#allocation2 + $0xb0] sm:$0xff] 0.0
          %393 = vst [vmem:[#allocation2 + $0xb8] sm:$0xff] 0.0
          %394 = vst [vmem:[#allocation2 + $0xc0] sm:$0xff] 0.0
          %395 = vst [vmem:[#allocation2 + $0xc8] sm:$0xff] 0.0
          %396 = vst [vmem:[#allocation2 + $0xd0] sm:$0xff] 0.0
          %397 = vst [vmem:[#allocation2 + $0xd8] sm:$0xff] 0.0
          %398 = vst [vmem:[#allocation2 + $0xe0] sm:$0xff] 0.0
          %399 = vst [vmem:[#allocation2 + $0xe8] sm:$0xff] 0.0
          %400 = vst [vmem:[#allocation2 + $0xf0] sm:$0xff] 0.0
          %401 = vst [vmem:[#allocation2 + $0xf8] sm:$0xff] 0.0
        $region74: #{net_forward.26} parent=65 // pred_fallthru
          _
        %v402 = vld [vmem:[#allocation2] sm:$0xff]
        %v403 = vld [vmem:[#allocation2 + $0x8] sm:$0xff]
        %v404 = vld [vmem:[#allocation2 + $0x10] sm:$0xff]
        %v405 = vld [vmem:[#allocation2 + $0x18] sm:$0xff]
        %v406 = vld [vmem:[#allocation2 + $0x20] sm:$0xff]
        %v407 = vld [vmem:[#allocation2 + $0x28] sm:$0xff]
        %v408 = vld [vmem:[#allocation2 + $0x30] sm:$0xff]
        %v409 = vld [vmem:[#allocation2 + $0x38] sm:$0xff]
        %v410 = vld [vmem:[#allocation2 + $0x40] sm:$0xff]
        %v411 = vld [vmem:[#allocation2 + $0x48] sm:$0xff]
        %v412 = vld [vmem:[#allocation2 + $0x50] sm:$0xff]
        %v413 = vld [vmem:[#allocation2 + $0x58] sm:$0xff]
        %v414 = vld [vmem:[#allocation2 + $0x60] sm:$0xff]
        %v415 = vld [vmem:[#allocation2 + $0x68] sm:$0xff]
        %v416 = vld [vmem:[#allocation2 + $0x70] sm:$0xff]
        %v417 = vld [vmem:[#allocation2 + $0x78] sm:$0xff]
        %v418 = vld [vmem:[#allocation2 + $0x80] sm:$0xff]
        %v419 = vld [vmem:[#allocation2 + $0x88] sm:$0xff]
        %v420 = vld [vmem:[#allocation2 + $0x90] sm:$0xff]
        %v421 = vld [vmem:[#allocation2 + $0x98] sm:$0xff]
        %v422 = vld [vmem:[#allocation2 + $0xa0] sm:$0xff]
        %v423 = vld [vmem:[#allocation2 + $0xa8] sm:$0xff]
        %v424 = vld [vmem:[#allocation2 + $0xb0] sm:$0xff]
        %v425 = vld [vmem:[#allocation2 + $0xb8] sm:$0xff]
        %v426 = vld [vmem:[#allocation2 + $0xc0] sm:$0xff]
        %v427 = vld [vmem:[#allocation2 + $0xc8] sm:$0xff]
        %v428 = vld [vmem:[#allocation2 + $0xd0] sm:$0xff]
        %v429 = vld [vmem:[#allocation2 + $0xd8] sm:$0xff]
        %v430 = vld [vmem:[#allocation2 + $0xe0] sm:$0xff]
        %v431 = vld [vmem:[#allocation2 + $0xe8] sm:$0xff]
        %v432 = vld [vmem:[#allocation2 + $0xf0] sm:$0xff]
        %v433 = vld [vmem:[#allocation2 + $0xf8] sm:$0xff]
        %v434 = vld [vmem:[%s295] sm:$0xff]
        %v435 = vld [vmem:[%s295 + $0x8] sm:$0xff]
        %v436 = vld [vmem:[%s295 + $0x10] sm:$0xff]
        %v437 = vld [vmem:[%s295 + $0x18] sm:$0xff]
        %v438 = vld [vmem:[%s295 + $0x20] sm:$0xff]
        %v439 = vld [vmem:[%s295 + $0x28] sm:$0xff]
        %v440 = vld [vmem:[%s295 + $0x30] sm:$0xff]
        %v441 = vld [vmem:[%s295 + $0x38] sm:$0xff]
        %v442 = vld [vmem:[%s295 + $0x40] sm:$0xff]
        %v443 = vld [vmem:[%s295 + $0x48] sm:$0xff]
        %v444 = vld [vmem:[%s295 + $0x50] sm:$0xff]
        %v445 = vld [vmem:[%s295 + $0x58] sm:$0xff]
        %v446 = vld [vmem:[%s295 + $0x60] sm:$0xff]
        %v447 = vld [vmem:[%s295 + $0x68] sm:$0xff]
        %v448 = vld [vmem:[%s295 + $0x70] sm:$0xff]
        %v449 = vld [vmem:[%s295 + $0x78] sm:$0xff]
        %v450 = vld [vmem:[%s346] sm:$0xff]
        %v451 = vld [vmem:[%s346 + $0x8] sm:$0xff]
        %v452 = vld [vmem:[%s346 + $0x10] sm:$0xff]
        %v453 = vld [vmem:[%s346 + $0x18] sm:$0xff]
        %v454 = vld [vmem:[%s346 + $0x20] sm:$0xff]
        %v455 = vld [vmem:[%s346 + $0x28] sm:$0xff]
        %v456 = vld [vmem:[%s346 + $0x30] sm:$0xff]
        %v457 = vld [vmem:[%s346 + $0x38] sm:$0xff]
        %v458 = vld [vmem:[%s346 + $0x40] sm:$0xff]
        %v459 = vld [vmem:[%s346 + $0x48] sm:$0xff]
        %v460 = vld [vmem:[%s346 + $0x50] sm:$0xff]
        %v461 = vld [vmem:[%s346 + $0x58] sm:$0xff]
        %v462 = vld [vmem:[%s346 + $0x60] sm:$0xff]
        %v463 = vld [vmem:[%s346 + $0x68] sm:$0xff]
        %v464 = vld [vmem:[%s346 + $0x70] sm:$0xff]
        %v465 = vld [vmem:[%s346 + $0x78] sm:$0xff]
        %v466 = vld [vmem:[%s346 + $0x80] sm:$0xff]
        %v467 = vld [vmem:[%s346 + $0x88] sm:$0xff]
        %v468 = vld [vmem:[%s346 + $0x90] sm:$0xff]
        %v469 = vld [vmem:[%s346 + $0x98] sm:$0xff]
        %v470 = vld [vmem:[%s346 + $0xa0] sm:$0xff]
        %v471 = vld [vmem:[%s346 + $0xa8] sm:$0xff]
        %v472 = vld [vmem:[%s346 + $0xb0] sm:$0xff]
        %v473 = vld [vmem:[%s346 + $0xb8] sm:$0xff]
        %v474 = vld [vmem:[%s346 + $0xc0] sm:$0xff]
        %v475 = vld [vmem:[%s346 + $0xc8] sm:$0xff]
        %v476 = vld [vmem:[%s346 + $0xd0] sm:$0xff]
        %v477 = vld [vmem:[%s346 + $0xd8] sm:$0xff]
        %v478 = vld [vmem:[%s346 + $0xe0] sm:$0xff]
        %v479 = vld [vmem:[%s346 + $0xe8] sm:$0xff]
        %v480 = vld [vmem:[%s346 + $0xf0] sm:$0xff]
        %v481 = vld [vmem:[%s346 + $0xf8] sm:$0xff]
        %v498 = vunpack.c.l.b16 %v434
        %v499 = vunpack.c.h.b16 %v434
        %v500 = vunpack.c.l.b16 %v435
        %v501 = vunpack.c.h.b16 %v435
        %v502 = vunpack.c.l.b16 %v436
        %v503 = vunpack.c.h.b16 %v436
        %v504 = vunpack.c.l.b16 %v437
        %v505 = vunpack.c.h.b16 %v437
        %v506 = vunpack.c.l.b16 %v438
        %v507 = vunpack.c.h.b16 %v438
        %v508 = vunpack.c.l.b16 %v439
        %v509 = vunpack.c.h.b16 %v439
        %v510 = vunpack.c.l.b16 %v440
        %v511 = vunpack.c.h.b16 %v440
        %v512 = vunpack.c.l.b16 %v441
        %v513 = vunpack.c.h.b16 %v441
        %v514 = vunpack.c.l.b16 %v442
        %v515 = vunpack.c.h.b16 %v442
        %v516 = vunpack.c.l.b16 %v443
        %v517 = vunpack.c.h.b16 %v443
        %v518 = vunpack.c.l.b16 %v444
        %v519 = vunpack.c.h.b16 %v444
        %v520 = vunpack.c.l.b16 %v445
        %v521 = vunpack.c.h.b16 %v445
        %v522 = vunpack.c.l.b16 %v446
        %v523 = vunpack.c.h.b16 %v446
        %v524 = vunpack.c.l.b16 %v447
        %v525 = vunpack.c.h.b16 %v447
        %v526 = vunpack.c.l.b16 %v448
        %v527 = vunpack.c.h.b16 %v448
        %v528 = vunpack.c.l.b16 %v449
        %v529 = vunpack.c.h.b16 %v449
        %v530 = vpack.c.b16 %v500, %v498
        %v531 = vpack.c.b16 %v501, %v499
        %v532 = vpack.c.b16 %v504, %v502
        %v533 = vpack.c.b16 %v505, %v503
        %v534 = vpack.c.b16 %v508, %v506
        %v535 = vpack.c.b16 %v509, %v507
        %v536 = vpack.c.b16 %v512, %v510
        %v537 = vpack.c.b16 %v513, %v511
        %v538 = vpack.c.b16 %v516, %v514
        %v539 = vpack.c.b16 %v517, %v515
        %v540 = vpack.c.b16 %v520, %v518
        %v541 = vpack.c.b16 %v521, %v519
        %v542 = vpack.c.b16 %v524, %v522
        %v543 = vpack.c.b16 %v525, %v523
        %v544 = vpack.c.b16 %v528, %v526
        %v545 = vpack.c.b16 %v529, %v527
        %v594 = vunpack.c.l.b16 %v450
        %v595 = vunpack.c.h.b16 %v450
        %v596 = vunpack.c.l.b16 %v451
        %v597 = vunpack.c.h.b16 %v451
        %v598 = vunpack.c.l.b16 %v452
        %v599 = vunpack.c.h.b16 %v452
        %v600 = vunpack.c.l.b16 %v453
        %v601 = vunpack.c.h.b16 %v453
        %v602 = vunpack.c.l.b16 %v454
        %v603 = vunpack.c.h.b16 %v454
        %v604 = vunpack.c.l.b16 %v455
        %v605 = vunpack.c.h.b16 %v455
        %v606 = vunpack.c.l.b16 %v456
        %v607 = vunpack.c.h.b16 %v456
        %v608 = vunpack.c.l.b16 %v457
        %v609 = vunpack.c.h.b16 %v457
        %v610 = vunpack.c.l.b16 %v458
        %v611 = vunpack.c.h.b16 %v458
        %v612 = vunpack.c.l.b16 %v459
        %v613 = vunpack.c.h.b16 %v459
        %v614 = vunpack.c.l.b16 %v460
        %v615 = vunpack.c.h.b16 %v460
        %v616 = vunpack.c.l.b16 %v461
        %v617 = vunpack.c.h.b16 %v461
        %v618 = vunpack.c.l.b16 %v462
        %v619 = vunpack.c.h.b16 %v462
        %v620 = vunpack.c.l.b16 %v463
        %v621 = vunpack.c.h.b16 %v463
        %v622 = vunpack.c.l.b16 %v464
        %v623 = vunpack.c.h.b16 %v464
        %v624 = vunpack.c.l.b16 %v465
        %v625 = vunpack.c.h.b16 %v465
        %v626 = vunpack.c.l.b16 %v466
        %v627 = vunpack.c.h.b16 %v466
        %v628 = vunpack.c.l.b16 %v467
        %v629 = vunpack.c.h.b16 %v467
        %v630 = vunpack.c.l.b16 %v468
        %v631 = vunpack.c.h.b16 %v468
        %v632 = vunpack.c.l.b16 %v469
        %v633 = vunpack.c.h.b16 %v469
        %v634 = vunpack.c.l.b16 %v470
        %v635 = vunpack.c.h.b16 %v470
        %v636 = vunpack.c.l.b16 %v471
        %v637 = vunpack.c.h.b16 %v471
        %v638 = vunpack.c.l.b16 %v472
        %v639 = vunpack.c.h.b16 %v472
        %v640 = vunpack.c.l.b16 %v473
        %v641 = vunpack.c.h.b16 %v473
        %v642 = vunpack.c.l.b16 %v474
        %v643 = vunpack.c.h.b16 %v474
        %v644 = vunpack.c.l.b16 %v475
        %v645 = vunpack.c.h.b16 %v475
        %v646 = vunpack.c.l.b16 %v476
        %v647 = vunpack.c.h.b16 %v476
        %v648 = vunpack.c.l.b16 %v477
        %v649 = vunpack.c.h.b16 %v477
        %v650 = vunpack.c.l.b16 %v478
        %v651 = vunpack.c.h.b16 %v478
        %v652 = vunpack.c.l.b16 %v479
        %v653 = vunpack.c.h.b16 %v479
        %v654 = vunpack.c.l.b16 %v480
        %v655 = vunpack.c.h.b16 %v480
        %v656 = vunpack.c.l.b16 %v481
        %v657 = vunpack.c.h.b16 %v481
        %v658 = vpack.c.b16 %v596, %v594
        %v659 = vpack.c.b16 %v597, %v595
        %v660 = vpack.c.b16 %v600, %v598
        %v661 = vpack.c.b16 %v601, %v599
        %v662 = vpack.c.b16 %v604, %v602
        %v663 = vpack.c.b16 %v605, %v603
        %v664 = vpack.c.b16 %v608, %v606
        %v665 = vpack.c.b16 %v609, %v607
        %v666 = vpack.c.b16 %v612, %v610
        %v667 = vpack.c.b16 %v613, %v611
        %v668 = vpack.c.b16 %v616, %v614
        %v669 = vpack.c.b16 %v617, %v615
        %v670 = vpack.c.b16 %v620, %v618
        %v671 = vpack.c.b16 %v621, %v619
        %v672 = vpack.c.b16 %v624, %v622
        %v673 = vpack.c.b16 %v625, %v623
        %v674 = vpack.c.b16 %v628, %v626
        %v675 = vpack.c.b16 %v629, %v627
        %v676 = vpack.c.b16 %v632, %v630
        %v677 = vpack.c.b16 %v633, %v631
        %v678 = vpack.c.b16 %v636, %v634
        %v679 = vpack.c.b16 %v637, %v635
        %v680 = vpack.c.b16 %v640, %v638
        %v681 = vpack.c.b16 %v641, %v639
        %v682 = vpack.c.b16 %v644, %v642
        %v683 = vpack.c.b16 %v645, %v643
        %v684 = vpack.c.b16 %v648, %v646
        %v685 = vpack.c.b16 %v649, %v647
        %v686 = vpack.c.b16 %v652, %v650
        %v687 = vpack.c.b16 %v653, %v651
        %v688 = vpack.c.b16 %v656, %v654
        %v689 = vpack.c.b16 %v657, %v655
        %722 = vmatprep.subr.bf16.mxu0 %v659
        %723 = vmatpush1.bf16.msra.mxu0 %v658
        %724 = vmatprep.subr.bf16.mxu0 %v661
        %725 = vmatpush1.bf16.msra.mxu0 %v660
        %726 = vmatprep.subr.bf16.mxu0 %v663
        %727 = vmatpush1.bf16.msra.mxu0 %v662
        %728 = vmatprep.subr.bf16.mxu0 %v665
        %729 = vmatpush1.bf16.msra.mxu0 %v664
        %730 = vmatprep.subr.bf16.mxu0 %v667
        %731 = vmatpush1.bf16.msra.mxu0 %v666
        %732 = vmatprep.subr.bf16.mxu0 %v669
        %733 = vmatpush1.bf16.msra.mxu0 %v668
        %734 = vmatprep.subr.bf16.mxu0 %v671
        %735 = vmatpush1.bf16.msra.mxu0 %v670
        %736 = vmatprep.subr.bf16.mxu0 %v673
        %737 = vmatpush1.bf16.msra.mxu0 %v672
        %738 = vmatprep.subr.bf16.mxu0 %v675
        %739 = vmatpush1.bf16.msra.mxu0 %v674
        %740 = vmatprep.subr.bf16.mxu0 %v677
        %741 = vmatpush1.bf16.msra.mxu0 %v676
        %742 = vmatprep.subr.bf16.mxu0 %v679
        %743 = vmatpush1.bf16.msra.mxu0 %v678
        %744 = vmatprep.subr.bf16.mxu0 %v681
        %745 = vmatpush1.bf16.msra.mxu0 %v680
        %746 = vmatprep.subr.bf16.mxu0 %v683
        %747 = vmatpush1.bf16.msra.mxu0 %v682
        %748 = vmatprep.subr.bf16.mxu0 %v685
        %749 = vmatpush1.bf16.msra.mxu0 %v684
        %750 = vmatprep.subr.bf16.mxu0 %v687
        %751 = vmatpush1.bf16.msra.mxu0 %v686
        %752 = vmatprep.subr.bf16.mxu0 %v689
        %753 = vmatpush1.bf16.msra.mxu0 %v688
        %754 = vmatprep.mubr.bf16.mxu0 %v531
        %755 = vmatmul.mubr.bf16.gmra.mrb[0].mxu0 %v530
        %v756 = vpop.f32.mrb[0].mxu0
        %v757 = vadd.f32 0.0, %v756
        %v758 = vpop.f32.mrb[0].mxu0
        %v759 = vadd.f32 0.0, %v758
        %v760 = vpop.f32.mrb[0].mxu0
        %v761 = vadd.f32 0.0, %v760
        %v762 = vpop.f32.mrb[0].mxu0
        %v763 = vadd.f32 0.0, %v762
        %764 = vmatprep.mubr.bf16.mxu0 %v533
        %765 = vmatmul.mubr.bf16.gmra.mrb[0].mxu0 %v532
        %v766 = vpop.f32.mrb[0].mxu0
        %v767 = vadd.f32 0.0, %v766
        %v768 = vpop.f32.mrb[0].mxu0
        %v769 = vadd.f32 0.0, %v768
        %v770 = vpop.f32.mrb[0].mxu0
        %v771 = vadd.f32 0.0, %v770
        %v772 = vpop.f32.mrb[0].mxu0
        %v773 = vadd.f32 0.0, %v772
        %774 = vmatprep.mubr.bf16.mxu0 %v535
        %775 = vmatmul.mubr.bf16.gmra.mrb[0].mxu0 %v534
        %v776 = vpop.f32.mrb[0].mxu0
        %v777 = vadd.f32 0.0, %v776
        %v778 = vpop.f32.mrb[0].mxu0
        %v779 = vadd.f32 0.0, %v778
        %v780 = vpop.f32.mrb[0].mxu0
        %v781 = vadd.f32 0.0, %v780
        %v782 = vpop.f32.mrb[0].mxu0
        %v783 = vadd.f32 0.0, %v782
        %784 = vmatprep.mubr.bf16.mxu0 %v537
        %785 = vmatmul.mubr.bf16.gmra.mrb[0].mxu0 %v536
        %v786 = vpop.f32.mrb[0].mxu0
        %v787 = vadd.f32 0.0, %v786
        %v788 = vpop.f32.mrb[0].mxu0
        %v789 = vadd.f32 0.0, %v788
        %v790 = vpop.f32.mrb[0].mxu0
        %v791 = vadd.f32 0.0, %v790
        %v792 = vpop.f32.mrb[0].mxu0
        %v793 = vadd.f32 0.0, %v792
        %794 = vmatprep.mubr.bf16.mxu0 %v539
        %795 = vmatmul.mubr.bf16.gmra.mrb[0].mxu0 %v538
        %v796 = vpop.f32.mrb[0].mxu0
        %v797 = vadd.f32 0.0, %v796
        %v798 = vpop.f32.mrb[0].mxu0
        %v799 = vadd.f32 0.0, %v798
        %v800 = vpop.f32.mrb[0].mxu0
        %v801 = vadd.f32 0.0, %v800
        %v802 = vpop.f32.mrb[0].mxu0
        %v803 = vadd.f32 0.0, %v802
        %804 = vmatprep.mubr.bf16.mxu0 %v541
        %805 = vmatmul.mubr.bf16.gmra.mrb[0].mxu0 %v540
        %v806 = vpop.f32.mrb[0].mxu0
        %v807 = vadd.f32 0.0, %v806
        %v808 = vpop.f32.mrb[0].mxu0
        %v809 = vadd.f32 0.0, %v808
        %v810 = vpop.f32.mrb[0].mxu0
        %v811 = vadd.f32 0.0, %v810
        %v812 = vpop.f32.mrb[0].mxu0
        %v813 = vadd.f32 0.0, %v812
        %814 = vmatprep.mubr.bf16.mxu0 %v543
        %815 = vmatmul.mubr.bf16.gmra.mrb[0].mxu0 %v542
        %v816 = vpop.f32.mrb[0].mxu0
        %v817 = vadd.f32 0.0, %v816
        %v818 = vpop.f32.mrb[0].mxu0
        %v819 = vadd.f32 0.0, %v818
        %v820 = vpop.f32.mrb[0].mxu0
        %v821 = vadd.f32 0.0, %v820
        %v822 = vpop.f32.mrb[0].mxu0
        %v823 = vadd.f32 0.0, %v822
        %824 = vmatprep.mubr.bf16.mxu0 %v545
        %825 = vmatmul.mubr.bf16.gmra.mrb[0].mxu0 %v544
        %v826 = vpop.f32.mrb[0].mxu0
        %v827 = vadd.f32 0.0, %v826
        %v828 = vpop.f32.mrb[0].mxu0
        %v829 = vadd.f32 0.0, %v828
        %v830 = vpop.f32.mrb[0].mxu0
        %v831 = vadd.f32 0.0, %v830
        %v832 = vpop.f32.mrb[0].mxu0
        %v833 = vadd.f32 0.0, %v832
        %834 = vdwg.mxu0
        %v835 = vadd.f32 %v402, %v757
        %v836 = vadd.f32 %v403, %v759
        %v837 = vadd.f32 %v404, %v761
        %v838 = vadd.f32 %v405, %v763
        %v839 = vadd.f32 %v406, %v767
        %v840 = vadd.f32 %v407, %v769
        %v841 = vadd.f32 %v408, %v771
        %v842 = vadd.f32 %v409, %v773
        %v843 = vadd.f32 %v410, %v777
        %v844 = vadd.f32 %v411, %v779
        %v845 = vadd.f32 %v412, %v781
        %v846 = vadd.f32 %v413, %v783
        %v847 = vadd.f32 %v414, %v787
        %v848 = vadd.f32 %v415, %v789
        %v849 = vadd.f32 %v416, %v791
        %v850 = vadd.f32 %v417, %v793
        %v851 = vadd.f32 %v418, %v797
        %v852 = vadd.f32 %v419, %v799
        %v853 = vadd.f32 %v420, %v801
        %v854 = vadd.f32 %v421, %v803
        %v855 = vadd.f32 %v422, %v807
        %v856 = vadd.f32 %v423, %v809
        %v857 = vadd.f32 %v424, %v811
        %v858 = vadd.f32 %v425, %v813
        %v859 = vadd.f32 %v426, %v817
        %v860 = vadd.f32 %v427, %v819
        %v861 = vadd.f32 %v428, %v821
        %v862 = vadd.f32 %v429, %v823
        %v863 = vadd.f32 %v430, %v827
        %v864 = vadd.f32 %v431, %v829
        %v865 = vadd.f32 %v432, %v831
        %v866 = vadd.f32 %v433, %v833
        %867 = vst [vmem:[#allocation2] sm:$0xff] %v835
        %868 = vst [vmem:[#allocation2 + $0x8] sm:$0xff] %v836
        %869 = vst [vmem:[#allocation2 + $0x10] sm:$0xff] %v837
        %870 = vst [vmem:[#allocation2 + $0x18] sm:$0xff] %v838
        %871 = vst [vmem:[#allocation2 + $0x20] sm:$0xff] %v839
        %872 = vst [vmem:[#allocation2 + $0x28] sm:$0xff] %v840
        %873 = vst [vmem:[#allocation2 + $0x30] sm:$0xff] %v841
        %874 = vst [vmem:[#allocation2 + $0x38] sm:$0xff] %v842
        %875 = vst [vmem:[#allocation2 + $0x40] sm:$0xff] %v843
        %876 = vst [vmem:[#allocation2 + $0x48] sm:$0xff] %v844
        %877 = vst [vmem:[#allocation2 + $0x50] sm:$0xff] %v845
        %878 = vst [vmem:[#allocation2 + $0x58] sm:$0xff] %v846
        %879 = vst [vmem:[#allocation2 + $0x60] sm:$0xff] %v847
        %880 = vst [vmem:[#allocation2 + $0x68] sm:$0xff] %v848
        %881 = vst [vmem:[#allocation2 + $0x70] sm:$0xff] %v849
        %882 = vst [vmem:[#allocation2 + $0x78] sm:$0xff] %v850
        %883 = vst [vmem:[#allocation2 + $0x80] sm:$0xff] %v851
        %884 = vst [vmem:[#allocation2 + $0x88] sm:$0xff] %v852
        %885 = vst [vmem:[#allocation2 + $0x90] sm:$0xff] %v853
        %886 = vst [vmem:[#allocation2 + $0x98] sm:$0xff] %v854
        %887 = vst [vmem:[#allocation2 + $0xa0] sm:$0xff] %v855
        %888 = vst [vmem:[#allocation2 + $0xa8] sm:$0xff] %v856
        %889 = vst [vmem:[#allocation2 + $0xb0] sm:$0xff] %v857
        %890 = vst [vmem:[#allocation2 + $0xb8] sm:$0xff] %v858
        %891 = vst [vmem:[#allocation2 + $0xc0] sm:$0xff] %v859
        %892 = vst [vmem:[#allocation2 + $0xc8] sm:$0xff] %v860
        %893 = vst [vmem:[#allocation2 + $0xd0] sm:$0xff] %v861
        %894 = vst [vmem:[#allocation2 + $0xd8] sm:$0xff] %v862
        %895 = vst [vmem:[#allocation2 + $0xe0] sm:$0xff] %v863
        %896 = vst [vmem:[#allocation2 + $0xe8] sm:$0xff] %v864
        %897 = vst [vmem:[#allocation2 + $0xf0] sm:$0xff] %v865
        %898 = vst [vmem:[#allocation2 + $0xf8] sm:$0xff] %v866
        %p899 = scmp.eq.s32.totalorder %s21, 8
        // Predicated region
        $region75: #{net_forward.26} parent=65 // pred_check
          %p900 = pneg %p899
        $region76: #{net_forward.26} parent=65 // pred_check_branch
          %902 = sbr.rel (%p900) target = $region78
        $region77: #{net_forward.26} parent=65 // pred_region
          %v903 = vld [vmem:[#allocation2] sm:$0xff]
          %v904 = vld [vmem:[#allocation2 + $0x8] sm:$0xff]
          %v905 = vld [vmem:[#allocation2 + $0x10] sm:$0xff]
          %v906 = vld [vmem:[#allocation2 + $0x18] sm:$0xff]
          %v907 = vld [vmem:[#allocation2 + $0x20] sm:$0xff]
          %v908 = vld [vmem:[#allocation2 + $0x28] sm:$0xff]
          %v909 = vld [vmem:[#allocation2 + $0x30] sm:$0xff]
          %v910 = vld [vmem:[#allocation2 + $0x38] sm:$0xff]
          %v911 = vld [vmem:[#allocation2 + $0x40] sm:$0xff]
          %v912 = vld [vmem:[#allocation2 + $0x48] sm:$0xff]
          %v913 = vld [vmem:[#allocation2 + $0x50] sm:$0xff]
          %v914 = vld [vmem:[#allocation2 + $0x58] sm:$0xff]
          %v915 = vld [vmem:[#allocation2 + $0x60] sm:$0xff]
          %v916 = vld [vmem:[#allocation2 + $0x68] sm:$0xff]
          %v917 = vld [vmem:[#allocation2 + $0x70] sm:$0xff]
          %v918 = vld [vmem:[#allocation2 + $0x78] sm:$0xff]
          %v919 = vld [vmem:[#allocation2 + $0x80] sm:$0xff]
          %v920 = vld [vmem:[#allocation2 + $0x88] sm:$0xff]
          %v921 = vld [vmem:[#allocation2 + $0x90] sm:$0xff]
          %v922 = vld [vmem:[#allocation2 + $0x98] sm:$0xff]
          %v923 = vld [vmem:[#allocation2 + $0xa0] sm:$0xff]
          %v924 = vld [vmem:[#allocation2 + $0xa8] sm:$0xff]
          %v925 = vld [vmem:[#allocation2 + $0xb0] sm:$0xff]
          %v926 = vld [vmem:[#allocation2 + $0xb8] sm:$0xff]
          %v927 = vld [vmem:[#allocation2 + $0xc0] sm:$0xff]
          %v928 = vld [vmem:[#allocation2 + $0xc8] sm:$0xff]
          %v929 = vld [vmem:[#allocation2 + $0xd0] sm:$0xff]
          %v930 = vld [vmem:[#allocation2 + $0xd8] sm:$0xff]
          %v931 = vld [vmem:[#allocation2 + $0xe0] sm:$0xff]
          %v932 = vld [vmem:[#allocation2 + $0xe8] sm:$0xff]
          %v933 = vld [vmem:[#allocation2 + $0xf0] sm:$0xff]
          %v934 = vld [vmem:[#allocation2 + $0xf8] sm:$0xff]
          %v935 = vld [vmem:[%s352] sm:$0x3]
          %v937 = vlaneseq
          %v938 = vshrl.u32 %v937, 7
          %v939 = vsub.s32 0, %v938
          %v940 = vrot.slane %v935, %v939
          %v941 = vlaneseq
          %v942 = vshrl.u32 %v941, 7
          %v943 = vsub.s32 1, %v942
          %v944 = vrot.slane %v935, %v943
          %v947 = vadd.f32 %v903, %v940
          %v948 = vadd.f32 %v904, %v944
          %v949 = vadd.f32 %v905, %v940
          %v950 = vadd.f32 %v906, %v944
          %v951 = vadd.f32 %v907, %v940
          %v952 = vadd.f32 %v908, %v944
          %v953 = vadd.f32 %v909, %v940
          %v954 = vadd.f32 %v910, %v944
          %v955 = vadd.f32 %v911, %v940
          %v956 = vadd.f32 %v912, %v944
          %v957 = vadd.f32 %v913, %v940
          %v958 = vadd.f32 %v914, %v944
          %v959 = vadd.f32 %v915, %v940
          %v960 = vadd.f32 %v916, %v944
          %v961 = vadd.f32 %v917, %v940
          %v962 = vadd.f32 %v918, %v944
          %v963 = vadd.f32 %v919, %v940
          %v964 = vadd.f32 %v920, %v944
          %v965 = vadd.f32 %v921, %v940
          %v966 = vadd.f32 %v922, %v944
          %v967 = vadd.f32 %v923, %v940
          %v968 = vadd.f32 %v924, %v944
          %v969 = vadd.f32 %v925, %v940
          %v970 = vadd.f32 %v926, %v944
          %v971 = vadd.f32 %v927, %v940
          %v972 = vadd.f32 %v928, %v944
          %v973 = vadd.f32 %v929, %v940
          %v974 = vadd.f32 %v930, %v944
          %v975 = vadd.f32 %v931, %v940
          %v976 = vadd.f32 %v932, %v944
          %v977 = vadd.f32 %v933, %v940
          %v978 = vadd.f32 %v934, %v944
          %979 = vst [vmem:[%s363] sm:$0xff] %v947
          %980 = vst [vmem:[%s363 + $0x8] sm:$0xff] %v948
          %981 = vst [vmem:[%s363 + $0x10] sm:$0xff] %v949
          %982 = vst [vmem:[%s363 + $0x18] sm:$0xff] %v950
          %983 = vst [vmem:[%s363 + $0x20] sm:$0xff] %v951
          %984 = vst [vmem:[%s363 + $0x28] sm:$0xff] %v952
          %985 = vst [vmem:[%s363 + $0x30] sm:$0xff] %v953
          %986 = vst [vmem:[%s363 + $0x38] sm:$0xff] %v954
          %987 = vst [vmem:[%s363 + $0x40] sm:$0xff] %v955
          %988 = vst [vmem:[%s363 + $0x48] sm:$0xff] %v956
          %989 = vst [vmem:[%s363 + $0x50] sm:$0xff] %v957
          %990 = vst [vmem:[%s363 + $0x58] sm:$0xff] %v958
          %991 = vst [vmem:[%s363 + $0x60] sm:$0xff] %v959
          %992 = vst [vmem:[%s363 + $0x68] sm:$0xff] %v960
          %993 = vst [vmem:[%s363 + $0x70] sm:$0xff] %v961
          %994 = vst [vmem:[%s363 + $0x78] sm:$0xff] %v962
          %995 = vst [vmem:[%s363 + $0x80] sm:$0xff] %v963
          %996 = vst [vmem:[%s363 + $0x88] sm:$0xff] %v964
          %997 = vst [vmem:[%s363 + $0x90] sm:$0xff] %v965
          %998 = vst [vmem:[%s363 + $0x98] sm:$0xff] %v966
          %999 = vst [vmem:[%s363 + $0xa0] sm:$0xff] %v967
          %1000 = vst [vmem:[%s363 + $0xa8] sm:$0xff] %v968
          %1001 = vst [vmem:[%s363 + $0xb0] sm:$0xff] %v969
          %1002 = vst [vmem:[%s363 + $0xb8] sm:$0xff] %v970
          %1003 = vst [vmem:[%s363 + $0xc0] sm:$0xff] %v971
          %1004 = vst [vmem:[%s363 + $0xc8] sm:$0xff] %v972
          %1005 = vst [vmem:[%s363 + $0xd0] sm:$0xff] %v973
          %1006 = vst [vmem:[%s363 + $0xd8] sm:$0xff] %v974
          %1007 = vst [vmem:[%s363 + $0xe0] sm:$0xff] %v975
          %1008 = vst [vmem:[%s363 + $0xe8] sm:$0xff] %v976
          %1009 = vst [vmem:[%s363 + $0xf0] sm:$0xff] %v977
          %1010 = vst [vmem:[%s363 + $0xf8] sm:$0xff] %v978
        $region78: #{net_forward.26} parent=65 // pred_fallthru
          _
        %s1011 = smul.u32 16, %s19
        %s1012 = smul.u32 2, %s20
        %p1013 = scmp.lt.s32.totalorder %s1011, 15
        %s1014 = scalar_select %p1013, %s1011, 15
        %p1015 = scmp.lt.s32.totalorder %s1012, 1
        %s1016 = scalar_select %p1015, %s1012, 1
        %s1017 = smul.addr %s1014, 2
        %s1018 = sadd.s32 %s1016, %s1017
        %s1019 = smul.addr %s1018, 8
        %s1020 = scalar_lea.vmem %s3, %s1019
        // Predicated region
        $region79: #{net_forward.26} parent=65 // pred_check
          %p1021 = pneg %p135
        $region80: #{net_forward.26} parent=65 // pred_check_branch
          %1023 = sbr.rel (%p1021) target = $region82
        $region81: #{net_forward.26} parent=65 // pred_region
          %s1024 = smul.u32 16, %s19
          %s1025 = smul.u32 2, %s20
        $region82: #{net_forward.26} parent=65 // pred_fallthru
          _
        // Predicated region
        $region83: #{net_forward.26} parent=65 // pred_check
          %p1026 = pneg %p135
        $region84: #{net_forward.26} parent=65 // pred_check_branch
          %1028 = sbr.rel (%p1026) target = $region86
        $region85: #{net_forward.26} parent=65 // pred_region
          %s1029 = smul.u32 16, %s19
          %s1030 = smul.u32 2, %s20
          %p1031 = scmp.lt.s32.totalorder %s1029, 15
          %s1032 = scalar_select %p1031, %s1029, 15
          %p1033 = scmp.lt.s32.totalorder %s1030, 1
          %s1034 = scalar_select %p1033, %s1030, 1
          %s1035 = smul.addr %s1032, 2
          %s1036 = sadd.s32 %s1034, %s1035
          %s1037 = smul.addr %s1036, 8
          %s1038 = scalar_lea.vmem %s3, %s1037
        $region86: #{net_forward.26} parent=65 // pred_fallthru
          _
      $region66: #{net_forward.26} parent=5 // pred_fallthru
        _
      %p1039 = scmp.le.s32.totalorder 2, %s9
      // Predicated region
      $region87: #{net_forward.26} parent=5 // pred_check
        %p1040 = pneg %p1039
      $region88: #{net_forward.26} parent=5 // pred_check_branch
        %1042 = sbr.rel (%p1040) target = $region90
      $region89: #{net_forward.26} parent=5 // pred_region
        %s1043 = ssub.s32 %s9, 2
      $region90: #{net_forward.26} parent=5 // pred_fallthru
        _
    $region6: #{net_forward.26} parent=1 // loop_footer
      %s13 = sadd.s32 1, %s9
    $region7: #{net_forward.26} parent=1 // loop_footer_branch
      %8 = sbr.rel target = $region3
    $region8: #{net_forward.26} parent=1 // loop_exit
      _

// kernel: net_forward.34
$region0: #{net_forward.34}
  #allocation0 [shape = 'u32[]', space=smem, size = 0x4, offset = 0x4, fixed_abs, tag = 'smem constant byte address 0x4 - core index']
  #allocation1 [shape = 'u32[144,128]{1,0:T(1,128)}', space=vmem, size = 0x12000, scoped, tag = 'internal scratch']
  #allocation2 [shape = 'f32[128,128]{1,0:T(8,128)}', space=vmem, size = 0x10000, scoped, tag = 'scratch operand']
  %s0 = inlined_call_operand.vmem [shape: bf16[128,2304], index: 0, kind: input, shape index: {}]
  %s1 = inlined_call_operand.vmem [shape: bf16[2304,128], index: 1, kind: input, shape index: {}]
  %s2 = inlined_call_operand.vmem [shape: f32[1,128], index: 2, kind: input, shape index: {}]
  %s3 = inlined_call_operand.vmem [shape: f32[128,128], index: 3, kind: output, shape index: {}]
  %s4 = sld [smem:[#allocation0]]
  $region91: #{net_forward.34} parent=0
    _
  %s6 = ssub.s32 1, %s4
  %s7 = scalar_select 0, %s6, %s4
  $region1: #{net_forward.34} parent=0
    #allocation3 [shape = 'u8[131072]{0}', space=vmem, size = 0x20000, scoped, tag = 'input window, operand 0']
    loop: start=0, step=1, limit=11
    $region2: #{net_forward.34} parent=1 // loop_pre_header
      _
    $region3: #{net_forward.34} parent=1 // loop_header
      %s9 = sphi 0, %s13
      %p10 = scmp.ge.s32.totalorder %s9, 11
      %s16 = sphi 0, %s35
      %s17 = sphi 0, %s31
      %s18 = sphi 0, %s27
      %s19 = sphi 0, %s16
      %s20 = sphi 0, %s17
      %s21 = sphi 0, %s18
      %s22 = sphi 0, %s19
      %s23 = sphi 0, %s20
      %s24 = sphi 0, %s21
      %s40 = sphi 0, %s42
      %s43 = sphi 0, %s40
      %s44 = sphi 0, %s43
      %s60 = sphi 0, %s44
      %s68 = sphi 0, %s70
      %s71 = sphi 0, %s68
      %s72 = sphi 0, %s71
      %s88 = sphi 0, %s72
      %s94 = sphi 0, %s96
      %s97 = sphi 0, %s94
      %s98 = sphi 0, %s97
      %s114 = sphi 0, %s98
      %s122 = sphi 0, %s124
      %s125 = sphi 0, %s122
      %s126 = sphi 0, %s125
      %s142 = sphi 0, %s126
    $region4: #{net_forward.34} parent=1 // loop_header_branch
      %12 = sbr.rel (%p10) target = $region8
    $region5: #{net_forward.34} parent=1 // loop_body
      %s14 = ssub.s32 %s9, 1
      %s15 = ssub.s32 %s9, 2
      %s25 = sadd.s32 1, %s18
      %p26 = scmp.ge.s32.totalorder %s25, 9
      %s27 = scalar_select %p26, 0, %s25
      %s28 = sadd.s32 1, %s17
      %s29 = scalar_select %p26, %s28, %s17
      %p30 = scmp.ge.s32.totalorder %s29, 1
      %s31 = scalar_select %p30, 0, %s29
      %s32 = sadd.s32 1, %s16
      %s33 = scalar_select %p30, %s32, %s16
      %p34 = scmp.ge.s32.totalorder %s33, 1
      %s35 = scalar_select %p34, 0, %s33
      %s36 = ssub.s32 %s16, %s35
      %s37 = ssub.s32 %s18, %s27
      %s38 = sor.u32 %s36, %s37
      %p39 = scmp.eq.s32.totalorder %s38, 0
      %s41 = sadd.s32 %s40, 1
      %s42 = scalar_select %p39, %s40, %s41
      %p45 = pneg %p39
      %p46 = scmp.eq.s32.totalorder %s9, 8
      %p47 = por %p45, %p46
      %p48 = scmp.ne.s32.totalorder %s40, %s43
      %p49 = scmp.eq.s32.totalorder %s9, 0
      %p50 = por %p48, %p49
      %p51 = scmp.ne.s32.totalorder %s40, %s43
      %p52 = scmp.eq.s32.totalorder %s14, 8
      %p53 = por %p51, %p52
      %p54 = scmp.ne.s32.totalorder %s43, %s44
      %p55 = scmp.eq.s32.totalorder %s14, 0
      %p56 = por %p54, %p55
      %p57 = scmp.ne.s32.totalorder %s43, %s44
      %p58 = scmp.eq.s32.totalorder %s15, 8
      %p59 = por %p57, %p58
      %p61 = scmp.ne.s32.totalorder %s44, %s60
      %p62 = scmp.eq.s32.totalorder %s15, 0
      %p63 = por %p61, %p62
      %s64 = ssub.s32 %s18, %s27
      %s65 = ssub.s32 %s17, %s31
      %s66 = sor.u32 %s64, %s65
      %p67 = scmp.eq.s32.totalorder %s66, 0
      %s69 = sadd.s32 %s68, 1
      %s70 = scalar_select %p67, %s68, %s69
      %p73 = pneg %p67
      %p74 = scmp.eq.s32.totalorder %s9, 8
      %p75 = por %p73, %p74
      %p76 = scmp.ne.s32.totalorder %s68, %s71
      %p77 = scmp.eq.s32.totalorder %s9, 0
      %p78 = por %p76, %p77
      %p79 = scmp.ne.s32.totalorder %s68, %s71
      %p80 = scmp.eq.s32.totalorder %s14, 8
      %p81 = por %p79, %p80
      %p82 = scmp.ne.s32.totalorder %s71, %s72
      %p83 = scmp.eq.s32.totalorder %s14, 0
      %p84 = por %p82, %p83
      %p85 = scmp.ne.s32.totalorder %s71, %s72
      %p86 = scmp.eq.s32.totalorder %s15, 8
      %p87 = por %p85, %p86
      %p89 = scmp.ne.s32.totalorder %s72, %s88
      %p90 = scmp.eq.s32.totalorder %s15, 0
      %p91 = por %p89, %p90
      %s92 = ssub.s32 %s17, %s31
      %p93 = scmp.eq.s32.totalorder %s92, 0
      %s95 = sadd.s32 %s94, 1
      %s96 = scalar_select %p93, %s94, %s95
      %p99 = pneg %p93
      %p100 = scmp.eq.s32.totalorder %s9, 8
      %p101 = por %p99, %p100
      %p102 = scmp.ne.s32.totalorder %s94, %s97
      %p103 = scmp.eq.s32.totalorder %s9, 0
      %p104 = por %p102, %p103
      %p105 = scmp.ne.s32.totalorder %s94, %s97
      %p106 = scmp.eq.s32.totalorder %s14, 8
      %p107 = por %p105, %p106
      %p108 = scmp.ne.s32.totalorder %s97, %s98
      %p109 = scmp.eq.s32.totalorder %s14, 0
      %p110 = por %p108, %p109
      %p111 = scmp.ne.s32.totalorder %s97, %s98
      %p112 = scmp.eq.s32.totalorder %s15, 8
      %p113 = por %p111, %p112
      %p115 = scmp.ne.s32.totalorder %s98, %s114
      %p116 = scmp.eq.s32.totalorder %s15, 0
      %p117 = por %p115, %p116
      %s118 = ssub.s32 %s16, %s35
      %s119 = ssub.s32 %s17, %s31
      %s120 = sor.u32 %s118, %s119
      %p121 = scmp.eq.s32.totalorder %s120, 0
      %s123 = sadd.s32 %s122, 1
      %s124 = scalar_select %p121, %s122, %s123
      %p127 = pneg %p121
      %p128 = scmp.eq.s32.totalorder %s9, 8
      %p129 = por %p127, %p128
      %p130 = scmp.ne.s32.totalorder %s122, %s125
      %p131 = scmp.eq.s32.totalorder %s9, 0
      %p132 = por %p130, %p131
      %p133 = scmp.ne.s32.totalorder %s122, %s125
      %p134 = scmp.eq.s32.totalorder %s14, 8
      %p135 = por %p133, %p134
      %p136 = scmp.ne.s32.totalorder %s125, %s126
      %p137 = scmp.eq.s32.totalorder %s14, 0
      %p138 = por %p136, %p137
      %p139 = scmp.ne.s32.totalorder %s125, %s126
      %p140 = scmp.eq.s32.totalorder %s15, 8
      %p141 = por %p139, %p140
      %p143 = scmp.ne.s32.totalorder %s126, %s142
      %p144 = scmp.eq.s32.totalorder %s15, 0
      %p145 = por %p143, %p144
      %p146 = scmp.le.s32.totalorder 1, %s9
      %p147 = scmp.lt.s32.totalorder %s9, 10
      %p148 = pnand %p146, %p147
      %p149 = pneg %p148
      // Predicated region
      $region9: #{net_forward.34} parent=5 // pred_check
        _
      $region10: #{net_forward.34} parent=5 // pred_check_branch
        %151 = sbr.rel (%p148) target = $region12
      $region11: #{net_forward.34} parent=5 // pred_region
        %s152 = ssub.s32 %s9, 1
        // Predicated region
        $region13: #{net_forward.34} parent=11 // pred_check
          %p153 = pneg %p110
        $region14: #{net_forward.34} parent=11 // pred_check_branch
          %155 = sbr.rel (%p153) target = $region16
        $region15: #{net_forward.34} parent=11 // pred_region
          %p156 = scmp.lt.s32.totalorder %s20, 0
          %s157 = scalar_select %p156, %s20, 0
          %s158 = scalar_lea.vmem %s2, %s157
        $region16: #{net_forward.34} parent=11 // pred_fallthru
          _
      $region12: #{net_forward.34} parent=5 // pred_fallthru
        _
      %p159 = scmp.lt.s32.totalorder %s9, 9
      // Predicated region
      $region17: #{net_forward.34} parent=5 // pred_check
        %p160 = pneg %p159
      $region18: #{net_forward.34} parent=5 // pred_check_branch
        %162 = sbr.rel (%p160) target = $region20
      $region19: #{net_forward.34} parent=5 // pred_region
        // Predicated region
        $region21: #{net_forward.34} parent=19 // pred_check
          %p163 = pneg %p50
        $region22: #{net_forward.34} parent=19 // pred_check_branch
          %165 = sbr.rel (%p163) target = $region24
        $region23: #{net_forward.34} parent=19 // pred_region
          %s166 = sand.u32 %s40, 1
          %s167 = sand.u32 %s40, 1
          %s168 = smul.addr %s167, 128
          %s169 = scalar_lea.vmem [#allocation3], %s168
          %s170 = smul.u32 16, %s16
          %s171 = smul.u32 2, %s18
          %s172 = smul.addr %s170, 18
          %s173 = sadd.s32 %s171, %s172
          %s174 = smul.addr %s173, 4
          %s175 = scalar_lea.vmem %s0, %s174
          // Predicated region
          $region25: #{net_forward.34} parent=23 // pred_check
            _
          $region26: #{net_forward.34} parent=23 // pred_check_branch
            %177 = sbr.rel (0) target = $region28
          $region27: #{net_forward.34} parent=23 // pred_region
            // Predicated region
            $region29: #{net_forward.34} parent=27 // pred_check
              _
            $region30: #{net_forward.34} parent=27 // pred_check_branch
              %179 = sbr.rel (0) target = $region32
            $region31: #{net_forward.34} parent=27 // pred_region
              // Predicated region
              $region44: #{net_forward.34} parent=31 // pred_check
                _
              $region45: #{net_forward.34} parent=31 // pred_check_branch
                %224 = sbr.rel (0) target = $region47
              $region46: #{net_forward.34} parent=31 // pred_region
                loop: start=0, step=1, limit=1
                $region48: #{net_forward.34} parent=46 // loop_pre_header
                  _
                $region49: #{net_forward.34} parent=46 // loop_header
                  %s226 = sphi 0, %s230
                  %p227 = scmp.ge.s32.totalorder %s226, 1
                  %s231 = sphi %s175, %s175
                  %s232 = sphi %s169, %s169
                $region50: #{net_forward.34} parent=46 // loop_header_branch
                  %229 = sbr.rel (%p227) target = $region54
                $region51: #{net_forward.34} parent=46 // loop_body
                  %v233 = vld [vmem:[%s231] sm:$0xff]
                  %234 = vst [vmem:[%s232] sm:$0xff] %v233
                  %v235 = vld [vmem:[%s231 + $0x48] sm:$0xff]
                  %236 = vst [vmem:[%s232 + $0x8] sm:$0xff] %v235
                  %v237 = vld [vmem:[%s231 + $0x90] sm:$0xff]
                  %238 = vst [vmem:[%s232 + $0x10] sm:$0xff] %v237
                  %v239 = vld [vmem:[%s231 + $0xd8] sm:$0xff]
                  %240 = vst [vmem:[%s232 + $0x18] sm:$0xff] %v239
                  %v241 = vld [vmem:[%s231 + $0x120] sm:$0xff]
                  %242 = vst [vmem:[%s232 + $0x20] sm:$0xff] %v241
                  %v243 = vld [vmem:[%s231 + $0x168] sm:$0xff]
                  %244 = vst [vmem:[%s232 + $0x28] sm:$0xff] %v243
                  %v245 = vld [vmem:[%s231 + $0x1b0] sm:$0xff]
                  %246 = vst [vmem:[%s232 + $0x30] sm:$0xff] %v245
                  %v247 = vld [vmem:[%s231 + $0x1f8] sm:$0xff]
                  %248 = vst [vmem:[%s232 + $0x38] sm:$0xff] %v247
                  %v249 = vld [vmem:[%s231 + $0x240] sm:$0xff]
                  %250 = vst [vmem:[%s232 + $0x40] sm:$0xff] %v249
                  %v251 = vld [vmem:[%s231 + $0x288] sm:$0xff]
                  %252 = vst [vmem:[%s232 + $0x48] sm:$0xff] %v251
                  %v253 = vld [vmem:[%s231 + $0x2d0] sm:$0xff]
                  %254 = vst [vmem:[%s232 + $0x50] sm:$0xff] %v253
                  %v255 = vld [vmem:[%s231 + $0x318] sm:$0xff]
                  %256 = vst [vmem:[%s232 + $0x58] sm:$0xff] %v255
                  %v257 = vld [vmem:[%s231 + $0x360] sm:$0xff]
                  %258 = vst [vmem:[%s232 + $0x60] sm:$0xff] %v257
                  %v259 = vld [vmem:[%s231 + $0x3a8] sm:$0xff]
                  %260 = vst [vmem:[%s232 + $0x68] sm:$0xff] %v259
                  %v261 = vld [vmem:[%s231 + $0x3f0] sm:$0xff]
                  %262 = vst [vmem:[%s232 + $0x70] sm:$0xff] %v261
                  %v263 = vld [vmem:[%s231 + $0x438] sm:$0xff]
                  %264 = vst [vmem:[%s232 + $0x78] sm:$0xff] %v263
                $region52: #{net_forward.34} parent=46 // loop_footer
                  %s230 = sadd.s32 1, %s226
                $region53: #{net_forward.34} parent=46 // loop_footer_branch
                  %225 = sbr.rel target = $region49
                $region54: #{net_forward.34} parent=46 // loop_exit
                  _
              $region47: #{net_forward.34} parent=31 // pred_fallthru
                _
              // Predicated region
              $region55: #{net_forward.34} parent=31 // pred_check
                _
              $region56: #{net_forward.34} parent=31 // pred_check_branch
                %266 = sbr.rel target = $region58
              $region57: #{net_forward.34} parent=31 // pred_region
                _
              $region58: #{net_forward.34} parent=31 // pred_fallthru
                _
            $region32: #{net_forward.34} parent=27 // pred_fallthru
              _
            // Predicated region
            $region33: #{net_forward.34} parent=27 // pred_check
              _
            $region34: #{net_forward.34} parent=27 // pred_check_branch
              %181 = sbr.rel target = $region36
            $region35: #{net_forward.34} parent=27 // pred_region
              loop: start=0, step=1, limit=1
              $region37: #{net_forward.34} parent=35 // loop_pre_header
                _
              $region38: #{net_forward.34} parent=35 // loop_header
                %s184 = sphi 0, %s188
                %p185 = scmp.ge.s32.totalorder %s184, 1
                %s189 = sphi %s175, %s175
                %s190 = sphi %s169, %s169
              $region39: #{net_forward.34} parent=35 // loop_header_branch
                %187 = sbr.rel (%p185) target = $region43
              $region40: #{net_forward.34} parent=35 // loop_body
                %v191 = vld [vmem:[%s189] sm:$0xff]
                %192 = vst [vmem:[%s190] sm:$0xff] %v191
                %v193 = vld [vmem:[%s189 + $0x48] sm:$0xff]
                %194 = vst [vmem:[%s190 + $0x8] sm:$0xff] %v193
                %v195 = vld [vmem:[%s189 + $0x90] sm:$0xff]
                %196 = vst [vmem:[%s190 + $0x10] sm:$0xff] %v195
                %v197 = vld [vmem:[%s189 + $0xd8] sm:$0xff]
                %198 = vst [vmem:[%s190 + $0x18] sm:$0xff] %v197
                %v199 = vld [vmem:[%s189 + $0x120] sm:$0xff]
                %200 = vst [vmem:[%s190 + $0x20] sm:$0xff] %v199
                %v201 = vld [vmem:[%s189 + $0x168] sm:$0xff]
                %202 = vst [vmem:[%s190 + $0x28] sm:$0xff] %v201
                %v203 = vld [vmem:[%s189 + $0x1b0] sm:$0xff]
                %204 = vst [vmem:[%s190 + $0x30] sm:$0xff] %v203
                %v205 = vld [vmem:[%s189 + $0x1f8] sm:$0xff]
                %206 = vst [vmem:[%s190 + $0x38] sm:$0xff] %v205
                %v207 = vld [vmem:[%s189 + $0x240] sm:$0xff]
                %208 = vst [vmem:[%s190 + $0x40] sm:$0xff] %v207
                %v209 = vld [vmem:[%s189 + $0x288] sm:$0xff]
                %210 = vst [vmem:[%s190 + $0x48] sm:$0xff] %v209
                %v211 = vld [vmem:[%s189 + $0x2d0] sm:$0xff]
                %212 = vst [vmem:[%s190 + $0x50] sm:$0xff] %v211
                %v213 = vld [vmem:[%s189 + $0x318] sm:$0xff]
                %214 = vst [vmem:[%s190 + $0x58] sm:$0xff] %v213
                %v215 = vld [vmem:[%s189 + $0x360] sm:$0xff]
                %216 = vst [vmem:[%s190 + $0x60] sm:$0xff] %v215
                %v217 = vld [vmem:[%s189 + $0x3a8] sm:$0xff]
                %218 = vst [vmem:[%s190 + $0x68] sm:$0xff] %v217
                %v219 = vld [vmem:[%s189 + $0x3f0] sm:$0xff]
                %220 = vst [vmem:[%s190 + $0x70] sm:$0xff] %v219
                %v221 = vld [vmem:[%s189 + $0x438] sm:$0xff]
                %222 = vst [vmem:[%s190 + $0x78] sm:$0xff] %v221
              $region41: #{net_forward.34} parent=35 // loop_footer
                %s188 = sadd.s32 1, %s184
              $region42: #{net_forward.34} parent=35 // loop_footer_branch
                %183 = sbr.rel target = $region38
              $region43: #{net_forward.34} parent=35 // loop_exit
                _
            $region36: #{net_forward.34} parent=27 // pred_fallthru
              _
          $region28: #{net_forward.34} parent=23 // pred_fallthru
            _
          %267 = vnop
        $region24: #{net_forward.34} parent=19 // pred_fallthru
          _
        // Predicated region
        $region59: #{net_forward.34} parent=19 // pred_check
          %p268 = pneg %p78
        $region60: #{net_forward.34} parent=19 // pred_check_branch
          %270 = sbr.rel (%p268) target = $region62
        $region61: #{net_forward.34} parent=19 // pred_region
          %s271 = smul.u32 32, %s18
          %p272 = scmp.lt.s32.totalorder %s271, 287
          %s273 = scalar_select %p272, %s271, 287
          %p274 = scmp.lt.s32.totalorder %s17, 0
          %s275 = scalar_select %p274, %s17, 0
          %s276 = sadd.s32 %s275, %s273
          %s277 = smul.addr %s276, 4
          %s278 = scalar_lea.vmem %s1, %s277
          %s279 = smul.u32 32, %s18
        $region62: #{net_forward.34} parent=19 // pred_fallthru
          _
      $region20: #{net_forward.34} parent=5 // pred_fallthru
        _
      %p280 = scmp.le.s32.totalorder 1, %s9
      %p281 = scmp.lt.s32.totalorder %s9, 10
      %p282 = pnand %p280, %p281
      %p283 = pneg %p282
      // Predicated region
      $region63: #{net_forward.34} parent=5 // pred_check
        _
      $region64: #{net_forward.34} parent=5 // pred_check_branch
        %285 = sbr.rel (%p282) target = $region66
      $region65: #{net_forward.34} parent=5 // pred_region
        %s286 = ssub.s32 %s9, 1
        %s287 = sand.u32 %s43, 1
        %s288 = sand.u32 %s43, 1
        %s289 = smul.addr %s288, 128
        %s290 = scalar_lea.vmem [#allocation3], %s289
        // Predicated region
        $region67: #{net_forward.34} parent=65 // pred_check
          %p291 = pneg %p56
        $region68: #{net_forward.34} parent=65 // pred_check_branch
          %293 = sbr.rel (%p291) target = $region70
        $region69: #{net_forward.34} parent=65 // pred_region
          _
        $region70: #{net_forward.34} parent=65 // pred_fallthru
          _
        %s294 = sand.u32 %s43, 1
        %s295 = sand.u32 %s43, 1
        %s296 = smul.addr %s295, 128
        %s297 = scalar_lea.vmem [#allocation3], %s296
        %p298 = pneg %p56
        %p299 = pneg %p53
        %s300 = smul.u32 32, %s21
        %p301 = scmp.lt.s32.totalorder %s300, 287
        %s302 = scalar_select %p301, %s300, 287
        %p303 = scmp.lt.s32.totalorder %s20, 0
        %s304 = scalar_select %p303, %s20, 0
        %s305 = sadd.s32 %s304, %s302
        %s306 = smul.addr %s305, 4
        %s307 = scalar_lea.vmem %s1, %s306
        %p308 = pneg %p84
        %p309 = pneg %p81
        %p310 = scmp.lt.s32.totalorder %s20, 0
        %s311 = scalar_select %p310, %s20, 0
        %s312 = scalar_lea.vmem %s2, %s311
        %p313 = pneg %p110
        %p314 = pneg %p107
        %p315 = pneg %p138
        %p316 = pneg %p135
        %s317 = smul.u32 16, %s19
        %p318 = scmp.lt.s32.totalorder %s317, 15
        %s319 = scalar_select %p318, %s317, 15
        %p320 = scmp.lt.s32.totalorder %s20, 0
        %s321 = scalar_select %p320, %s20, 0
        %s322 = sadd.s32 %s321, %s319
        %s323 = smul.addr %s322, 8
        %s324 = scalar_lea.vmem %s3, %s323
        %s325 = smul.u32 16, %s19
        %s326 = smul.u32 2, %s21
        %s327 = smul.u32 32, %s21
        %p328 = scmp.lt.s32.totalorder %s327, 287
        %s329 = scalar_select %p328, %s327, 287
        %p330 = scmp.lt.s32.totalorder %s20, 0
        %s331 = scalar_select %p330, %s20, 0
        %s332 = sadd.s32 %s331, %s329
        %s333 = smul.addr %s332, 4
        %s334 = scalar_lea.vmem %s1, %s333
        %s335 = smul.u32 32, %s21
        %p336 = scmp.lt.s32.totalorder %s20, 0
        %s337 = scalar_select %p336, %s20, 0
        %s338 = scalar_lea.vmem %s2, %s337
        %s339 = smul.u32 16, %s19
        %p340 = scmp.lt.s32.totalorder %s339, 15
        %s341 = scalar_select %p340, %s339, 15
        %p342 = scmp.lt.s32.totalorder %s20, 0
        %s343 = scalar_select %p342, %s20, 0
        %s344 = sadd.s32 %s343, %s341
        %s345 = smul.addr %s344, 8
        %s346 = scalar_lea.vmem %s3, %s345
        %s347 = smul.u32 16, %s19
        %p349 = scmp.eq.s32.totalorder %s21, 0
        // Predicated region
        $region71: #{net_forward.34} parent=65 // pred_check
          %p350 = pneg %p349
        $region72: #{net_forward.34} parent=65 // pred_check_branch
          %352 = sbr.rel (%p350) target = $region74
        $region73: #{net_forward.34} parent=65 // pred_region
          %353 = vst [vmem:[#allocation2] sm:$0xff] 0.0
          %354 = vst [vmem:[#allocation2 + $0x8] sm:$0xff] 0.0
          %355 = vst [vmem:[#allocation2 + $0x10] sm:$0xff] 0.0
          %356 = vst [vmem:[#allocation2 + $0x18] sm:$0xff] 0.0
          %357 = vst [vmem:[#allocation2 + $0x20] sm:$0xff] 0.0
          %358 = vst [vmem:[#allocation2 + $0x28] sm:$0xff] 0.0
          %359 = vst [vmem:[#allocation2 + $0x30] sm:$0xff] 0.0
          %360 = vst [vmem:[#allocation2 + $0x38] sm:$0xff] 0.0
          %361 = vst [vmem:[#allocation2 + $0x40] sm:$0xff] 0.0
          %362 = vst [vmem:[#allocation2 + $0x48] sm:$0xff] 0.0
          %363 = vst [vmem:[#allocation2 + $0x50] sm:$0xff] 0.0
          %364 = vst [vmem:[#allocation2 + $0x58] sm:$0xff] 0.0
          %365 = vst [vmem:[#allocation2 + $0x60] sm:$0xff] 0.0
          %366 = vst [vmem:[#allocation2 + $0x68] sm:$0xff] 0.0
          %367 = vst [vmem:[#allocation2 + $0x70] sm:$0xff] 0.0
          %368 = vst [vmem:[#allocation2 + $0x78] sm:$0xff] 0.0
        $region74: #{net_forward.34} parent=65 // pred_fallthru
          _
        %v369 = vld [vmem:[#allocation2] sm:$0xff]
        %v370 = vld [vmem:[#allocation2 + $0x8] sm:$0xff]
        %v371 = vld [vmem:[#allocation2 + $0x10] sm:$0xff]
        %v372 = vld [vmem:[#allocation2 + $0x18] sm:$0xff]
        %v373 = vld [vmem:[#allocation2 + $0x20] sm:$0xff]
        %v374 = vld [vmem:[#allocation2 + $0x28] sm:$0xff]
        %v375 = vld [vmem:[#allocation2 + $0x30] sm:$0xff]
        %v376 = vld [vmem:[#allocation2 + $0x38] sm:$0xff]
        %v377 = vld [vmem:[#allocation2 + $0x40] sm:$0xff]
        %v378 = vld [vmem:[#allocation2 + $0x48] sm:$0xff]
        %v379 = vld [vmem:[#allocation2 + $0x50] sm:$0xff]
        %v380 = vld [vmem:[#allocation2 + $0x58] sm:$0xff]
        %v381 = vld [vmem:[#allocation2 + $0x60] sm:$0xff]
        %v382 = vld [vmem:[#allocation2 + $0x68] sm:$0xff]
        %v383 = vld [vmem:[#allocation2 + $0x70] sm:$0xff]
        %v384 = vld [vmem:[#allocation2 + $0x78] sm:$0xff]
        %v385 = vld [vmem:[%s290] sm:$0xff]
        %v386 = vld [vmem:[%s290 + $0x8] sm:$0xff]
        %v387 = vld [vmem:[%s290 + $0x10] sm:$0xff]
        %v388 = vld [vmem:[%s290 + $0x18] sm:$0xff]
        %v389 = vld [vmem:[%s290 + $0x20] sm:$0xff]
        %v390 = vld [vmem:[%s290 + $0x28] sm:$0xff]
        %v391 = vld [vmem:[%s290 + $0x30] sm:$0xff]
        %v392 = vld [vmem:[%s290 + $0x38] sm:$0xff]
        %v393 = vld [vmem:[%s290 + $0x40] sm:$0xff]
        %v394 = vld [vmem:[%s290 + $0x48] sm:$0xff]
        %v395 = vld [vmem:[%s290 + $0x50] sm:$0xff]
        %v396 = vld [vmem:[%s290 + $0x58] sm:$0xff]
        %v397 = vld [vmem:[%s290 + $0x60] sm:$0xff]
        %v398 = vld [vmem:[%s290 + $0x68] sm:$0xff]
        %v399 = vld [vmem:[%s290 + $0x70] sm:$0xff]
        %v400 = vld [vmem:[%s290 + $0x78] sm:$0xff]
        %v401 = vld [vmem:[%s334] sm:$0xf]
        %v402 = vld [vmem:[%s334 + $0x4] sm:$0xf]
        %v403 = vld [vmem:[%s334 + $0x8] sm:$0xf]
        %v404 = vld [vmem:[%s334 + $0xc] sm:$0xf]
        %v405 = vld [vmem:[%s334 + $0x10] sm:$0xf]
        %v406 = vld [vmem:[%s334 + $0x14] sm:$0xf]
        %v407 = vld [vmem:[%s334 + $0x18] sm:$0xf]
        %v408 = vld [vmem:[%s334 + $0x1c] sm:$0xf]
        %v409 = vld [vmem:[%s334 + $0x20] sm:$0xf]
        %v410 = vld [vmem:[%s334 + $0x24] sm:$0xf]
        %v411 = vld [vmem:[%s334 + $0x28] sm:$0xf]
        %v412 = vld [vmem:[%s334 + $0x2c] sm:$0xf]
        %v413 = vld [vmem:[%s334 + $0x30] sm:$0xf]
        %v414 = vld [vmem:[%s334 + $0x34] sm:$0xf]
        %v415 = vld [vmem:[%s334 + $0x38] sm:$0xf]
        %v416 = vld [vmem:[%s334 + $0x3c] sm:$0xf]
        %v417 = vld [vmem:[%s334 + $0x40] sm:$0xf]
        %v418 = vld [vmem:[%s334 + $0x44] sm:$0xf]
        %v419 = vld [vmem:[%s334 + $0x48] sm:$0xf]
        %v420 = vld [vmem:[%s334 + $0x4c] sm:$0xf]
        %v421 = vld [vmem:[%s334 + $0x50] sm:$0xf]
        %v422 = vld [vmem:[%s334 + $0x54] sm:$0xf]
        %v423 = vld [vmem:[%s334 + $0x58] sm:$0xf]
        %v424 = vld [vmem:[%s334 + $0x5c] sm:$0xf]
        %v425 = vld [vmem:[%s334 + $0x60] sm:$0xf]
        %v426 = vld [vmem:[%s334 + $0x64] sm:$0xf]
        %v427 = vld [vmem:[%s334 + $0x68] sm:$0xf]
        %v428 = vld [vmem:[%s334 + $0x6c] sm:$0xf]
        %v429 = vld [vmem:[%s334 + $0x70] sm:$0xf]
        %v430 = vld [vmem:[%s334 + $0x74] sm:$0xf]
        %v431 = vld [vmem:[%s334 + $0x78] sm:$0xf]
        %v432 = vld [vmem:[%s334 + $0x7c] sm:$0xf]
        %v449 = vunpack.c.l.b16 %v385
        %v450 = vunpack.c.h.b16 %v385
        %v451 = vunpack.c.l.b16 %v386
        %v452 = vunpack.c.h.b16 %v386
        %v453 = vunpack.c.l.b16 %v387
        %v454 = vunpack.c.h.b16 %v387
        %v455 = vunpack.c.l.b16 %v388
        %v456 = vunpack.c.h.b16 %v388
        %v457 = vunpack.c.l.b16 %v389
        %v458 = vunpack.c.h.b16 %v389
        %v459 = vunpack.c.l.b16 %v390
        %v460 = vunpack.c.h.b16 %v390
        %v461 = vunpack.c.l.b16 %v391
        %v462 = vunpack.c.h.b16 %v391
        %v463 = vunpack.c.l.b16 %v392
        %v464 = vunpack.c.h.b16 %v392
        %v465 = vunpack.c.l.b16 %v393
        %v466 = vunpack.c.h.b16 %v393
        %v467 = vunpack.c.l.b16 %v394
        %v468 = vunpack.c.h.b16 %v394
        %v469 = vunpack.c.l.b16 %v395
        %v470 = vunpack.c.h.b16 %v395
        %v471 = vunpack.c.l.b16 %v396
        %v472 = vunpack.c.h.b16 %v396
        %v473 = vunpack.c.l.b16 %v397
        %v474 = vunpack.c.h.b16 %v397
        %v475 = vunpack.c.l.b16 %v398
        %v476 = vunpack.c.h.b16 %v398
        %v477 = vunpack.c.l.b16 %v399
        %v478 = vunpack.c.h.b16 %v399
        %v479 = vunpack.c.l.b16 %v400
        %v480 = vunpack.c.h.b16 %v400
        %v481 = vpack.c.b16 %v451, %v449
        %v482 = vpack.c.b16 %v452, %v450
        %v483 = vpack.c.b16 %v455, %v453
        %v484 = vpack.c.b16 %v456, %v454
        %v485 = vpack.c.b16 %v459, %v457
        %v486 = vpack.c.b16 %v460, %v458
        %v487 = vpack.c.b16 %v463, %v461
        %v488 = vpack.c.b16 %v464, %v462
        %v489 = vpack.c.b16 %v467, %v465
        %v490 = vpack.c.b16 %v468, %v466
        %v491 = vpack.c.b16 %v471, %v469
        %v492 = vpack.c.b16 %v472, %v470
        %v493 = vpack.c.b16 %v475, %v473
        %v494 = vpack.c.b16 %v476, %v474
        %v495 = vpack.c.b16 %v479, %v477
        %v496 = vpack.c.b16 %v480, %v478
        %v545 = vunpack.c.l.b16 %v401
        %v546 = vunpack.c.l.b16 %v402
        %v547 = vunpack.c.l.b16 %v403
        %v548 = vunpack.c.l.b16 %v404
        %v549 = vunpack.c.l.b16 %v405
        %v550 = vunpack.c.l.b16 %v406
        %v551 = vunpack.c.l.b16 %v407
        %v552 = vunpack.c.l.b16 %v408
        %v553 = vunpack.c.l.b16 %v409
        %v554 = vunpack.c.l.b16 %v410
        %v555 = vunpack.c.l.b16 %v411
        %v556 = vunpack.c.l.b16 %v412
        %v557 = vunpack.c.l.b16 %v413
        %v558 = vunpack.c.l.b16 %v414
        %v559 = vunpack.c.l.b16 %v415
        %v560 = vunpack.c.l.b16 %v416
        %v561 = vunpack.c.l.b16 %v417
        %v562 = vunpack.c.l.b16 %v418
        %v563 = vunpack.c.l.b16 %v419
        %v564 = vunpack.c.l.b16 %v420
        %v565 = vunpack.c.l.b16 %v421
        %v566 = vunpack.c.l.b16 %v422
        %v567 = vunpack.c.l.b16 %v423
        %v568 = vunpack.c.l.b16 %v424
        %v569 = vunpack.c.l.b16 %v425
        %v570 = vunpack.c.l.b16 %v426
        %v571 = vunpack.c.l.b16 %v427
        %v572 = vunpack.c.l.b16 %v428
        %v573 = vunpack.c.l.b16 %v429
        %v574 = vunpack.c.l.b16 %v430
        %v575 = vunpack.c.l.b16 %v431
        %v576 = vunpack.c.l.b16 %v432
        %v577 = vpack.c.b16 %v546, %v545
        %v578 = vpack.c.b16 %v548, %v547
        %v579 = vpack.c.b16 %v550, %v549
        %v580 = vpack.c.b16 %v552, %v551
        %v581 = vpack.c.b16 %v554, %v553
        %v582 = vpack.c.b16 %v556, %v555
        %v583 = vpack.c.b16 %v558, %v557
        %v584 = vpack.c.b16 %v560, %v559
        %v585 = vpack.c.b16 %v562, %v561
        %v586 = vpack.c.b16 %v564, %v563
        %v587 = vpack.c.b16 %v566, %v565
        %v588 = vpack.c.b16 %v568, %v567
        %v589 = vpack.c.b16 %v570, %v569
        %v590 = vpack.c.b16 %v572, %v571
        %v591 = vpack.c.b16 %v574, %v573
        %v592 = vpack.c.b16 %v576, %v575
        %609 = vmatprep.subr.bf16.mxu0 0
        %610 = vmatpush1.bf16.msra.mxu0 %v577
        %611 = vmatprep.subr.bf16.mxu0 0
        %612 = vmatpush1.bf16.msra.mxu0 %v578
        %613 = vmatprep.subr.bf16.mxu0 0
        %614 = vmatpush1.bf16.msra.mxu0 %v579
        %615 = vmatprep.subr.bf16.mxu0 0
        %616 = vmatpush1.bf16.msra.mxu0 %v580
        %617 = vmatprep.subr.bf16.mxu0 0
        %618 = vmatpush1.bf16.msra.mxu0 %v581
        %619 = vmatprep.subr.bf16.mxu0 0
        %620 = vmatpush1.bf16.msra.mxu0 %v582
        %621 = vmatprep.subr.bf16.mxu0 0
        %622 = vmatpush1.bf16.msra.mxu0 %v583
        %623 = vmatprep.subr.bf16.mxu0 0
        %624 = vmatpush1.bf16.msra.mxu0 %v584
        %625 = vmatprep.subr.bf16.mxu0 0
        %626 = vmatpush1.bf16.msra.mxu0 %v585
        %627 = vmatprep.subr.bf16.mxu0 0
        %628 = vmatpush1.bf16.msra.mxu0 %v586
        %629 = vmatprep.subr.bf16.mxu0 0
        %630 = vmatpush1.bf16.msra.mxu0 %v587
        %631 = vmatprep.subr.bf16.mxu0 0
        %632 = vmatpush1.bf16.msra.mxu0 %v588
        %633 = vmatprep.subr.bf16.mxu0 0
        %634 = vmatpush1.bf16.msra.mxu0 %v589
        %635 = vmatprep.subr.bf16.mxu0 0
        %636 = vmatpush1.bf16.msra.mxu0 %v590
        %637 = vmatprep.subr.bf16.mxu0 0
        %638 = vmatpush1.bf16.msra.mxu0 %v591
        %639 = vmatprep.subr.bf16.mxu0 0
        %640 = vmatpush1.bf16.msra.mxu0 %v592
        %641 = vmatprep.mubr.bf16.mxu0 %v482
        %642 = vmatmul.mubr.bf16.gmra.mrb[0].mxu0 %v481
        %v643 = vpop.f32.mrb[0].mxu0
        %v644 = vadd.f32 0.0, %v643
        %v645 = vpop.f32.mrb[0].mxu0
        %v646 = vpop.f32.mrb[0].mxu0
        %v647 = vadd.f32 0.0, %v646
        %v648 = vpop.f32.mrb[0].mxu0
        %649 = vmatprep.mubr.bf16.mxu0 %v484
        %650 = vmatmul.mubr.bf16.gmra.mrb[0].mxu0 %v483
        %v651 = vpop.f32.mrb[0].mxu0
        %v652 = vadd.f32 0.0, %v651
        %v653 = vpop.f32.mrb[0].mxu0
        %v654 = vpop.f32.mrb[0].mxu0
        %v655 = vadd.f32 0.0, %v654
        %v656 = vpop.f32.mrb[0].mxu0
        %657 = vmatprep.mubr.bf16.mxu0 %v486
        %658 = vmatmul.mubr.bf16.gmra.mrb[0].mxu0 %v485
        %v659 = vpop.f32.mrb[0].mxu0
        %v660 = vadd.f32 0.0, %v659
        %v661 = vpop.f32.mrb[0].mxu0
        %v662 = vpop.f32.mrb[0].mxu0
        %v663 = vadd.f32 0.0, %v662
        %v664 = vpop.f32.mrb[0].mxu0
        %665 = vmatprep.mubr.bf16.mxu0 %v488
        %666 = vmatmul.mubr.bf16.gmra.mrb[0].mxu0 %v487
        %v667 = vpop.f32.mrb[0].mxu0
        %v668 = vadd.f32 0.0, %v667
        %v669 = vpop.f32.mrb[0].mxu0
        %v670 = vpop.f32.mrb[0].mxu0
        %v671 = vadd.f32 0.0, %v670
        %v672 = vpop.f32.mrb[0].mxu0
        %673 = vmatprep.mubr.bf16.mxu0 %v490
        %674 = vmatmul.mubr.bf16.gmra.mrb[0].mxu0 %v489
        %v675 = vpop.f32.mrb[0].mxu0
        %v676 = vadd.f32 0.0, %v675
        %v677 = vpop.f32.mrb[0].mxu0
        %v678 = vpop.f32.mrb[0].mxu0
        %v679 = vadd.f32 0.0, %v678
        %v680 = vpop.f32.mrb[0].mxu0
        %681 = vmatprep.mubr.bf16.mxu0 %v492
        %682 = vmatmul.mubr.bf16.gmra.mrb[0].mxu0 %v491
        %v683 = vpop.f32.mrb[0].mxu0
        %v684 = vadd.f32 0.0, %v683
        %v685 = vpop.f32.mrb[0].mxu0
        %v686 = vpop.f32.mrb[0].mxu0
        %v687 = vadd.f32 0.0, %v686
        %v688 = vpop.f32.mrb[0].mxu0
        %689 = vmatprep.mubr.bf16.mxu0 %v494
        %690 = vmatmul.mubr.bf16.gmra.mrb[0].mxu0 %v493
        %v691 = vpop.f32.mrb[0].mxu0
        %v692 = vadd.f32 0.0, %v691
        %v693 = vpop.f32.mrb[0].mxu0
        %v694 = vpop.f32.mrb[0].mxu0
        %v695 = vadd.f32 0.0, %v694
        %v696 = vpop.f32.mrb[0].mxu0
        %697 = vmatprep.mubr.bf16.mxu0 %v496
        %698 = vmatmul.mubr.bf16.gmra.mrb[0].mxu0 %v495
        %v699 = vpop.f32.mrb[0].mxu0
        %v700 = vadd.f32 0.0, %v699
        %v701 = vpop.f32.mrb[0].mxu0
        %v702 = vpop.f32.mrb[0].mxu0
        %v703 = vadd.f32 0.0, %v702
        %v704 = vpop.f32.mrb[0].mxu0
        %705 = vdwg.mxu0
        %v706 = vadd.f32 %v369, %v644
        %v707 = vadd.f32 %v370, %v647
        %v708 = vadd.f32 %v371, %v652
        %v709 = vadd.f32 %v372, %v655
        %v710 = vadd.f32 %v373, %v660
        %v711 = vadd.f32 %v374, %v663
        %v712 = vadd.f32 %v375, %v668
        %v713 = vadd.f32 %v376, %v671
        %v714 = vadd.f32 %v377, %v676
        %v715 = vadd.f32 %v378, %v679
        %v716 = vadd.f32 %v379, %v684
        %v717 = vadd.f32 %v380, %v687
        %v718 = vadd.f32 %v381, %v692
        %v719 = vadd.f32 %v382, %v695
        %v720 = vadd.f32 %v383, %v700
        %v721 = vadd.f32 %v384, %v703
        %722 = vst [vmem:[#allocation2] sm:$0xff] %v706
        %723 = vst [vmem:[#allocation2 + $0x8] sm:$0xff] %v707
        %724 = vst [vmem:[#allocation2 + $0x10] sm:$0xff] %v708
        %725 = vst [vmem:[#allocation2 + $0x18] sm:$0xff] %v709
        %726 = vst [vmem:[#allocation2 + $0x20] sm:$0xff] %v710
        %727 = vst [vmem:[#allocation2 + $0x28] sm:$0xff] %v711
        %728 = vst [vmem:[#allocation2 + $0x30] sm:$0xff] %v712
        %729 = vst [vmem:[#allocation2 + $0x38] sm:$0xff] %v713
        %730 = vst [vmem:[#allocation2 + $0x40] sm:$0xff] %v714
        %731 = vst [vmem:[#allocation2 + $0x48] sm:$0xff] %v715
        %732 = vst [vmem:[#allocation2 + $0x50] sm:$0xff] %v716
        %733 = vst [vmem:[#allocation2 + $0x58] sm:$0xff] %v717
        %734 = vst [vmem:[#allocation2 + $0x60] sm:$0xff] %v718
        %735 = vst [vmem:[#allocation2 + $0x68] sm:$0xff] %v719
        %736 = vst [vmem:[#allocation2 + $0x70] sm:$0xff] %v720
        %737 = vst [vmem:[#allocation2 + $0x78] sm:$0xff] %v721
        %p738 = scmp.eq.s32.totalorder %s21, 8
        // Predicated region
        $region75: #{net_forward.34} parent=65 // pred_check
          %p739 = pneg %p738
        $region76: #{net_forward.34} parent=65 // pred_check_branch
          %741 = sbr.rel (%p739) target = $region78
        $region77: #{net_forward.34} parent=65 // pred_region
          %v742 = vld [vmem:[#allocation2] sm:$0xff]
          %v743 = vld [vmem:[#allocation2 + $0x8] sm:$0xff]
          %v744 = vld [vmem:[#allocation2 + $0x10] sm:$0xff]
          %v745 = vld [vmem:[#allocation2 + $0x18] sm:$0xff]
          %v746 = vld [vmem:[#allocation2 + $0x20] sm:$0xff]
          %v747 = vld [vmem:[#allocation2 + $0x28] sm:$0xff]
          %v748 = vld [vmem:[#allocation2 + $0x30] sm:$0xff]
          %v749 = vld [vmem:[#allocation2 + $0x38] sm:$0xff]
          %v750 = vld [vmem:[#allocation2 + $0x40] sm:$0xff]
          %v751 = vld [vmem:[#allocation2 + $0x48] sm:$0xff]
          %v752 = vld [vmem:[#allocation2 + $0x50] sm:$0xff]
          %v753 = vld [vmem:[#allocation2 + $0x58] sm:$0xff]
          %v754 = vld [vmem:[#allocation2 + $0x60] sm:$0xff]
          %v755 = vld [vmem:[#allocation2 + $0x68] sm:$0xff]
          %v756 = vld [vmem:[#allocation2 + $0x70] sm:$0xff]
          %v757 = vld [vmem:[#allocation2 + $0x78] sm:$0xff]
          %v758 = vld [vmem:[%s338] sm:$0x1]
          %v760 = vlaneseq
          %v761 = vshrl.u32 %v760, 7
          %v762 = vsub.s32 0, %v761
          %v763 = vrot.slane %v758, %v762
          %v765 = vadd.f32 %v742, %v763
          %v766 = vadd.f32 %v743, %v763
          %v767 = vadd.f32 %v744, %v763
          %v768 = vadd.f32 %v745, %v763
          %v769 = vadd.f32 %v746, %v763
          %v770 = vadd.f32 %v747, %v763
          %v771 = vadd.f32 %v748, %v763
          %v772 = vadd.f32 %v749, %v763
          %v773 = vadd.f32 %v750, %v763
          %v774 = vadd.f32 %v751, %v763
          %v775 = vadd.f32 %v752, %v763
          %v776 = vadd.f32 %v753, %v763
          %v777 = vadd.f32 %v754, %v763
          %v778 = vadd.f32 %v755, %v763
          %v779 = vadd.f32 %v756, %v763
          %v780 = vadd.f32 %v757, %v763
          %781 = vst [vmem:[%s346] sm:$0xff] %v765
          %782 = vst [vmem:[%s346 + $0x8] sm:$0xff] %v766
          %783 = vst [vmem:[%s346 + $0x10] sm:$0xff] %v767
          %784 = vst [vmem:[%s346 + $0x18] sm:$0xff] %v768
          %785 = vst [vmem:[%s346 + $0x20] sm:$0xff] %v769
          %786 = vst [vmem:[%s346 + $0x28] sm:$0xff] %v770
          %787 = vst [vmem:[%s346 + $0x30] sm:$0xff] %v771
          %788 = vst [vmem:[%s346 + $0x38] sm:$0xff] %v772
          %789 = vst [vmem:[%s346 + $0x40] sm:$0xff] %v773
          %790 = vst [vmem:[%s346 + $0x48] sm:$0xff] %v774
          %791 = vst [vmem:[%s346 + $0x50] sm:$0xff] %v775
          %792 = vst [vmem:[%s346 + $0x58] sm:$0xff] %v776
          %793 = vst [vmem:[%s346 + $0x60] sm:$0xff] %v777
          %794 = vst [vmem:[%s346 + $0x68] sm:$0xff] %v778
          %795 = vst [vmem:[%s346 + $0x70] sm:$0xff] %v779
          %796 = vst [vmem:[%s346 + $0x78] sm:$0xff] %v780
        $region78: #{net_forward.34} parent=65 // pred_fallthru
          _
        %s797 = smul.u32 16, %s19
        %p798 = scmp.lt.s32.totalorder %s797, 15
        %s799 = scalar_select %p798, %s797, 15
        %p800 = scmp.lt.s32.totalorder %s20, 0
        %s801 = scalar_select %p800, %s20, 0
        %s802 = sadd.s32 %s801, %s799
        %s803 = smul.addr %s802, 8
        %s804 = scalar_lea.vmem %s3, %s803
        // Predicated region
        $region79: #{net_forward.34} parent=65 // pred_check
          %p805 = pneg %p135
        $region80: #{net_forward.34} parent=65 // pred_check_branch
          %807 = sbr.rel (%p805) target = $region82
        $region81: #{net_forward.34} parent=65 // pred_region
          %s808 = smul.u32 16, %s19
        $region82: #{net_forward.34} parent=65 // pred_fallthru
          _
        // Predicated region
        $region83: #{net_forward.34} parent=65 // pred_check
          %p809 = pneg %p135
        $region84: #{net_forward.34} parent=65 // pred_check_branch
          %811 = sbr.rel (%p809) target = $region86
        $region85: #{net_forward.34} parent=65 // pred_region
          %s812 = smul.u32 16, %s19
          %p813 = scmp.lt.s32.totalorder %s812, 15
          %s814 = scalar_select %p813, %s812, 15
          %p815 = scmp.lt.s32.totalorder %s20, 0
          %s816 = scalar_select %p815, %s20, 0
          %s817 = sadd.s32 %s816, %s814
          %s818 = smul.addr %s817, 8
          %s819 = scalar_lea.vmem %s3, %s818
        $region86: #{net_forward.34} parent=65 // pred_fallthru
          _
      $region66: #{net_forward.34} parent=5 // pred_fallthru
        _
      %p820 = scmp.le.s32.totalorder 2, %s9
      // Predicated region
      $region87: #{net_forward.34} parent=5 // pred_check
        %p821 = pneg %p820
      $region88: #{net_forward.34} parent=5 // pred_check_branch
        %823 = sbr.rel (%p821) target = $region90
      $region89: #{net_forward.34} parent=5 // pred_region
        %s824 = ssub.s32 %s9, 2
      $region90: #{net_forward.34} parent=5 // pred_fallthru
        _
    $region6: #{net_forward.34} parent=1 // loop_footer
      %s13 = sadd.s32 1, %s9
    $region7: #{net_forward.34} parent=1 // loop_footer_branch
      %8 = sbr.rel target = $region3
    $region8: #{net_forward.34} parent=1 // loop_exit
      _

// kernel: net_forward.36
$region0: #{net_forward.36}
  #allocation0 [shape = 'u32[]', space=smem, size = 0x4, offset = 0x4, fixed_abs, tag = 'smem constant byte address 0x4 - core index']
  #allocation1 [shape = 'u32[144,128]{1,0:T(1,128)}', space=vmem, size = 0x12000, scoped, tag = 'internal scratch']
  #allocation2 [shape = 'f32[256,128]{1,0:T(8,128)}', space=vmem, size = 0x20000, scoped, tag = 'scratch operand']
  %s0 = inlined_call_operand.vmem [shape: bf16[512,1280], index: 0, kind: input, shape index: {}]
  %s1 = inlined_call_operand.vmem [shape: bf16[1280,128], index: 1, kind: input, shape index: {}]
  %s2 = inlined_call_operand.vmem [shape: f32[1,128], index: 2, kind: input, shape index: {}]
  %s3 = inlined_call_operand.vmem [shape: f32[512,128], index: 3, kind: output, shape index: {}]
  %s4 = sld [smem:[#allocation0]]
  $region91: #{net_forward.36} parent=0
    _
  %s6 = ssub.s32 1, %s4
  %s7 = scalar_select 0, %s6, %s4
  $region1: #{net_forward.36} parent=0
    #allocation3 [shape = 'u8[262144]{0}', space=vmem, size = 0x40000, scoped, tag = 'input window, operand 0']
    loop: start=0, step=1, limit=12
    $region2: #{net_forward.36} parent=1 // loop_pre_header
      _
    $region3: #{net_forward.36} parent=1 // loop_header
      %s9 = sphi 0, %s13
      %p10 = scmp.ge.s32.totalorder %s9, 12
      %s16 = sphi 0, %s35
      %s17 = sphi 0, %s31
      %s18 = sphi 0, %s27
      %s19 = sphi 0, %s16
      %s20 = sphi 0, %s17
      %s21 = sphi 0, %s18
      %s22 = sphi 0, %s19
      %s23 = sphi 0, %s20
      %s24 = sphi 0, %s21
      %s40 = sphi 0, %s42
      %s43 = sphi 0, %s40
      %s44 = sphi 0, %s43
      %s60 = sphi 0, %s44
      %s68 = sphi 0, %s70
      %s71 = sphi 0, %s68
      %s72 = sphi 0, %s71
      %s88 = sphi 0, %s72
      %s94 = sphi 0, %s96
      %s97 = sphi 0, %s94
      %s98 = sphi 0, %s97
      %s114 = sphi 0, %s98
      %s122 = sphi 0, %s124
      %s125 = sphi 0, %s122
      %s126 = sphi 0, %s125
      %s142 = sphi 0, %s126
    $region4: #{net_forward.36} parent=1 // loop_header_branch
      %12 = sbr.rel (%p10) target = $region8
    $region5: #{net_forward.36} parent=1 // loop_body
      %s14 = ssub.s32 %s9, 1
      %s15 = ssub.s32 %s9, 2
      %s25 = sadd.s32 1, %s18
      %p26 = scmp.ge.s32.totalorder %s25, 5
      %s27 = scalar_select %p26, 0, %s25
      %s28 = sadd.s32 1, %s17
      %s29 = scalar_select %p26, %s28, %s17
      %p30 = scmp.ge.s32.totalorder %s29, 1
      %s31 = scalar_select %p30, 0, %s29
      %s32 = sadd.s32 1, %s16
      %s33 = scalar_select %p30, %s32, %s16
      %p34 = scmp.ge.s32.totalorder %s33, 2
      %s35 = scalar_select %p34, 0, %s33
      %s36 = ssub.s32 %s16, %s35
      %s37 = ssub.s32 %s18, %s27
      %s38 = sor.u32 %s36, %s37
      %p39 = scmp.eq.s32.totalorder %s38, 0
      %s41 = sadd.s32 %s40, 1
      %s42 = scalar_select %p39, %s40, %s41
      %p45 = pneg %p39
      %p46 = scmp.eq.s32.totalorder %s9, 9
      %p47 = por %p45, %p46
      %p48 = scmp.ne.s32.totalorder %s40, %s43
      %p49 = scmp.eq.s32.totalorder %s9, 0
      %p50 = por %p48, %p49
      %p51 = scmp.ne.s32.totalorder %s40, %s43
      %p52 = scmp.eq.s32.totalorder %s14, 9
      %p53 = por %p51, %p52
      %p54 = scmp.ne.s32.totalorder %s43, %s44
      %p55 = scmp.eq.s32.totalorder %s14, 0
      %p56 = por %p54, %p55
      %p57 = scmp.ne.s32.totalorder %s43, %s44
      %p58 = scmp.eq.s32.totalorder %s15, 9
      %p59 = por %p57, %p58
      %p61 = scmp.ne.s32.totalorder %s44, %s60
      %p62 = scmp.eq.s32.totalorder %s15, 0
      %p63 = por %p61, %p62
      %s64 = ssub.s32 %s18, %s27
      %s65 = ssub.s32 %s17, %s31
      %s66 = sor.u32 %s64, %s65
      %p67 = scmp.eq.s32.totalorder %s66, 0
      %s69 = sadd.s32 %s68, 1
      %s70 = scalar_select %p67, %s68, %s69
      %p73 = pneg %p67
      %p74 = scmp.eq.s32.totalorder %s9, 9
      %p75 = por %p73, %p74
      %p76 = scmp.ne.s32.totalorder %s68, %s71
      %p77 = scmp.eq.s32.totalorder %s9, 0
      %p78 = por %p76, %p77
      %p79 = scmp.ne.s32.totalorder %s68, %s71
      %p80 = scmp.eq.s32.totalorder %s14, 9
      %p81 = por %p79, %p80
      %p82 = scmp.ne.s32.totalorder %s71, %s72
      %p83 = scmp.eq.s32.totalorder %s14, 0
      %p84 = por %p82, %p83
      %p85 = scmp.ne.s32.totalorder %s71, %s72
      %p86 = scmp.eq.s32.totalorder %s15, 9
      %p87 = por %p85, %p86
      %p89 = scmp.ne.s32.totalorder %s72, %s88
      %p90 = scmp.eq.s32.totalorder %s15, 0
      %p91 = por %p89, %p90
      %s92 = ssub.s32 %s17, %s31
      %p93 = scmp.eq.s32.totalorder %s92, 0
      %s95 = sadd.s32 %s94, 1
      %s96 = scalar_select %p93, %s94, %s95
      %p99 = pneg %p93
      %p100 = scmp.eq.s32.totalorder %s9, 9
      %p101 = por %p99, %p100
      %p102 = scmp.ne.s32.totalorder %s94, %s97
      %p103 = scmp.eq.s32.totalorder %s9, 0
      %p104 = por %p102, %p103
      %p105 = scmp.ne.s32.totalorder %s94, %s97
      %p106 = scmp.eq.s32.totalorder %s14, 9
      %p107 = por %p105, %p106
      %p108 = scmp.ne.s32.totalorder %s97, %s98
      %p109 = scmp.eq.s32.totalorder %s14, 0
      %p110 = por %p108, %p109
      %p111 = scmp.ne.s32.totalorder %s97, %s98
      %p112 = scmp.eq.s32.totalorder %s15, 9
      %p113 = por %p111, %p112
      %p115 = scmp.ne.s32.totalorder %s98, %s114
      %p116 = scmp.eq.s32.totalorder %s15, 0
      %p117 = por %p115, %p116
      %s118 = ssub.s32 %s16, %s35
      %s119 = ssub.s32 %s17, %s31
      %s120 = sor.u32 %s118, %s119
      %p121 = scmp.eq.s32.totalorder %s120, 0
      %s123 = sadd.s32 %s122, 1
      %s124 = scalar_select %p121, %s122, %s123
      %p127 = pneg %p121
      %p128 = scmp.eq.s32.totalorder %s9, 9
      %p129 = por %p127, %p128
      %p130 = scmp.ne.s32.totalorder %s122, %s125
      %p131 = scmp.eq.s32.totalorder %s9, 0
      %p132 = por %p130, %p131
      %p133 = scmp.ne.s32.totalorder %s122, %s125
      %p134 = scmp.eq.s32.totalorder %s14, 9
      %p135 = por %p133, %p134
      %p136 = scmp.ne.s32.totalorder %s125, %s126
      %p137 = scmp.eq.s32.totalorder %s14, 0
      %p138 = por %p136, %p137
      %p139 = scmp.ne.s32.totalorder %s125, %s126
      %p140 = scmp.eq.s32.totalorder %s15, 9
      %p141 = por %p139, %p140
      %p143 = scmp.ne.s32.totalorder %s126, %s142
      %p144 = scmp.eq.s32.totalorder %s15, 0
      %p145 = por %p143, %p144
      %p146 = scmp.le.s32.totalorder 1, %s9
      %p147 = scmp.lt.s32.totalorder %s9, 11
      %p148 = pnand %p146, %p147
      %p149 = pneg %p148
      // Predicated region
      $region9: #{net_forward.36} parent=5 // pred_check
        _
      $region10: #{net_forward.36} parent=5 // pred_check_branch
        %151 = sbr.rel (%p148) target = $region12
      $region11: #{net_forward.36} parent=5 // pred_region
        %s152 = ssub.s32 %s9, 1
        // Predicated region
        $region13: #{net_forward.36} parent=11 // pred_check
          %p153 = pneg %p110
        $region14: #{net_forward.36} parent=11 // pred_check_branch
          %155 = sbr.rel (%p153) target = $region16
        $region15: #{net_forward.36} parent=11 // pred_region
          %p156 = scmp.lt.s32.totalorder %s20, 0
          %s157 = scalar_select %p156, %s20, 0
          %s158 = scalar_lea.vmem %s2, %s157
        $region16: #{net_forward.36} parent=11 // pred_fallthru
          _
      $region12: #{net_forward.36} parent=5 // pred_fallthru
        _
      %p159 = scmp.lt.s32.totalorder %s9, 10
      // Predicated region
      $region17: #{net_forward.36} parent=5 // pred_check
        %p160 = pneg %p159
      $region18: #{net_forward.36} parent=5 // pred_check_branch
        %162 = sbr.rel (%p160) target = $region20
      $region19: #{net_forward.36} parent=5 // pred_region
        // Predicated region
        $region21: #{net_forward.36} parent=19 // pred_check
          %p163 = pneg %p50
        $region22: #{net_forward.36} parent=19 // pred_check_branch
          %165 = sbr.rel (%p163) target = $region24
        $region23: #{net_forward.36} parent=19 // pred_region
          %s166 = sand.u32 %s40, 1
          %s167 = sand.u32 %s40, 1
          %s168 = smul.addr %s167, 256
          %s169 = scalar_lea.vmem [#allocation3], %s168
          %s170 = smul.u32 32, %s16
          %s171 = smul.u32 2, %s18
          %s172 = smul.addr %s170, 10
          %s173 = sadd.s32 %s171, %s172
          %s174 = smul.addr %s173, 4
          %s175 = scalar_lea.vmem %s0, %s174
          // Predicated region
          $region25: #{net_forward.36} parent=23 // pred_check
            _
          $region26: #{net_forward.36} parent=23 // pred_check_branch
            %177 = sbr.rel (0) target = $region28
          $region27: #{net_forward.36} parent=23 // pred_region
            // Predicated region
            $region29: #{net_forward.36} parent=27 // pred_check
              _
            $region30: #{net_forward.36} parent=27 // pred_check_branch
              %179 = sbr.rel (0) target = $region32
            $region31: #{net_forward.36} parent=27 // pred_region
              // Predicated region
              $region44: #{net_forward.36} parent=31 // pred_check
                _
              $region45: #{net_forward.36} parent=31 // pred_check_branch
                %256 = sbr.rel (0) target = $region47
              $region46: #{net_forward.36} parent=31 // pred_region
                loop: start=0, step=1, limit=1
                $region48: #{net_forward.36} parent=46 // loop_pre_header
                  _
                $region49: #{net_forward.36} parent=46 // loop_header
                  %s258 = sphi 0, %s262
                  %p259 = scmp.ge.s32.totalorder %s258, 1
                  %s263 = sphi %s175, %s175
                  %s264 = sphi %s169, %s169
                $region50: #{net_forward.36} parent=46 // loop_header_branch
                  %261 = sbr.rel (%p259) target = $region54
                $region51: #{net_forward.36} parent=46 // loop_body
                  %v265 = vld [vmem:[%s263] sm:$0xff]
                  %266 = vst [vmem:[%s264] sm:$0xff] %v265
                  %v267 = vld [vmem:[%s263 + $0x28] sm:$0xff]
                  %268 = vst [vmem:[%s264 + $0x8] sm:$0xff] %v267
                  %v269 = vld [vmem:[%s263 + $0x50] sm:$0xff]
                  %270 = vst [vmem:[%s264 + $0x10] sm:$0xff] %v269
                  %v271 = vld [vmem:[%s263 + $0x78] sm:$0xff]
                  %272 = vst [vmem:[%s264 + $0x18] sm:$0xff] %v271
                  %v273 = vld [vmem:[%s263 + $0xa0] sm:$0xff]
                  %274 = vst [vmem:[%s264 + $0x20] sm:$0xff] %v273
                  %v275 = vld [vmem:[%s263 + $0xc8] sm:$0xff]
                  %276 = vst [vmem:[%s264 + $0x28] sm:$0xff] %v275
                  %v277 = vld [vmem:[%s263 + $0xf0] sm:$0xff]
                  %278 = vst [vmem:[%s264 + $0x30] sm:$0xff] %v277
                  %v279 = vld [vmem:[%s263 + $0x118] sm:$0xff]
                  %280 = vst [vmem:[%s264 + $0x38] sm:$0xff] %v279
                  %v281 = vld [vmem:[%s263 + $0x140] sm:$0xff]
                  %282 = vst [vmem:[%s264 + $0x40] sm:$0xff] %v281
                  %v283 = vld [vmem:[%s263 + $0x168] sm:$0xff]
                  %284 = vst [vmem:[%s264 + $0x48] sm:$0xff] %v283
                  %v285 = vld [vmem:[%s263 + $0x190] sm:$0xff]
                  %286 = vst [vmem:[%s264 + $0x50] sm:$0xff] %v285
                  %v287 = vld [vmem:[%s263 + $0x1b8] sm:$0xff]
                  %288 = vst [vmem:[%s264 + $0x58] sm:$0xff] %v287
                  %v289 = vld [vmem:[%s263 + $0x1e0] sm:$0xff]
                  %290 = vst [vmem:[%s264 + $0x60] sm:$0xff] %v289
                  %v291 = vld [vmem:[%s263 + $0x208] sm:$0xff]
                  %292 = vst [vmem:[%s264 + $0x68] sm:$0xff] %v291
                  %v293 = vld [vmem:[%s263 + $0x230] sm:$0xff]
                  %294 = vst [vmem:[%s264 + $0x70] sm:$0xff] %v293
                  %v295 = vld [vmem:[%s263 + $0x258] sm:$0xff]
                  %296 = vst [vmem:[%s264 + $0x78] sm:$0xff] %v295
                  %v297 = vld [vmem:[%s263 + $0x280] sm:$0xff]
                  %298 = vst [vmem:[%s264 + $0x80] sm:$0xff] %v297
                  %v299 = vld [vmem:[%s263 + $0x2a8] sm:$0xff]
                  %300 = vst [vmem:[%s264 + $0x88] sm:$0xff] %v299
                  %v301 = vld [vmem:[%s263 + $0x2d0] sm:$0xff]
                  %302 = vst [vmem:[%s264 + $0x90] sm:$0xff] %v301
                  %v303 = vld [vmem:[%s263 + $0x2f8] sm:$0xff]
                  %304 = vst [vmem:[%s264 + $0x98] sm:$0xff] %v303
                  %v305 = vld [vmem:[%s263 + $0x320] sm:$0xff]
                  %306 = vst [vmem:[%s264 + $0xa0] sm:$0xff] %v305
                  %v307 = vld [vmem:[%s263 + $0x348] sm:$0xff]
                  %308 = vst [vmem:[%s264 + $0xa8] sm:$0xff] %v307
                  %v309 = vld [vmem:[%s263 + $0x370] sm:$0xff]
                  %310 = vst [vmem:[%s264 + $0xb0] sm:$0xff] %v309
                  %v311 = vld [vmem:[%s263 + $0x398] sm:$0xff]
                  %312 = vst [vmem:[%s264 + $0xb8] sm:$0xff] %v311
                  %v313 = vld [vmem:[%s263 + $0x3c0] sm:$0xff]
                  %314 = vst [vmem:[%s264 + $0xc0] sm:$0xff] %v313
                  %v315 = vld [vmem:[%s263 + $0x3e8] sm:$0xff]
                  %316 = vst [vmem:[%s264 + $0xc8] sm:$0xff] %v315
                  %v317 = vld [vmem:[%s263 + $0x410] sm:$0xff]
                  %318 = vst [vmem:[%s264 + $0xd0] sm:$0xff] %v317
                  %v319 = vld [vmem:[%s263 + $0x438] sm:$0xff]
                  %320 = vst [vmem:[%s264 + $0xd8] sm:$0xff] %v319
                  %v321 = vld [vmem:[%s263 + $0x460] sm:$0xff]
                  %322 = vst [vmem:[%s264 + $0xe0] sm:$0xff] %v321
                  %v323 = vld [vmem:[%s263 + $0x488] sm:$0xff]
                  %324 = vst [vmem:[%s264 + $0xe8] sm:$0xff] %v323
                  %v325 = vld [vmem:[%s263 + $0x4b0] sm:$0xff]
                  %326 = vst [vmem:[%s264 + $0xf0] sm:$0xff] %v325
                  %v327 = vld [vmem:[%s263 + $0x4d8] sm:$0xff]
                  %328 = vst [vmem:[%s264 + $0xf8] sm:$0xff] %v327
                $region52: #{net_forward.36} parent=46 // loop_footer
                  %s262 = sadd.s32 1, %s258
                $region53: #{net_forward.36} parent=46 // loop_footer_branch
                  %257 = sbr.rel target = $region49
                $region54: #{net_forward.36} parent=46 // loop_exit
                  _
              $region47: #{net_forward.36} parent=31 // pred_fallthru
                _
              // Predicated region
              $region55: #{net_forward.36} parent=31 // pred_check
                _
              $region56: #{net_forward.36} parent=31 // pred_check_branch
                %330 = sbr.rel target = $region58
              $region57: #{net_forward.36} parent=31 // pred_region
                _
              $region58: #{net_forward.36} parent=31 // pred_fallthru
                _
            $region32: #{net_forward.36} parent=27 // pred_fallthru
              _
            // Predicated region
            $region33: #{net_forward.36} parent=27 // pred_check
              _
            $region34: #{net_forward.36} parent=27 // pred_check_branch
              %181 = sbr.rel target = $region36
            $region35: #{net_forward.36} parent=27 // pred_region
              loop: start=0, step=1, limit=1
              $region37: #{net_forward.36} parent=35 // loop_pre_header
                _
              $region38: #{net_forward.36} parent=35 // loop_header
                %s184 = sphi 0, %s188
                %p185 = scmp.ge.s32.totalorder %s184, 1
                %s189 = sphi %s175, %s175
                %s190 = sphi %s169, %s169
              $region39: #{net_forward.36} parent=35 // loop_header_branch
                %187 = sbr.rel (%p185) target = $region43
              $region40: #{net_forward.36} parent=35 // loop_body
                %v191 = vld [vmem:[%s189] sm:$0xff]
                %192 = vst [vmem:[%s190] sm:$0xff] %v191
                %v193 = vld [vmem:[%s189 + $0x28] sm:$0xff]
                %194 = vst [vmem:[%s190 + $0x8] sm:$0xff] %v193
                %v195 = vld [vmem:[%s189 + $0x50] sm:$0xff]
                %196 = vst [vmem:[%s190 + $0x10] sm:$0xff] %v195
                %v197 = vld [vmem:[%s189 + $0x78] sm:$0xff]
                %198 = vst [vmem:[%s190 + $0x18] sm:$0xff] %v197
                %v199 = vld [vmem:[%s189 + $0xa0] sm:$0xff]
                %200 = vst [vmem:[%s190 + $0x20] sm:$0xff] %v199
                %v201 = vld [vmem:[%s189 + $0xc8] sm:$0xff]
                %202 = vst [vmem:[%s190 + $0x28] sm:$0xff] %v201
                %v203 = vld [vmem:[%s189 + $0xf0] sm:$0xff]
                %204 = vst [vmem:[%s190 + $0x30] sm:$0xff] %v203
                %v205 = vld [vmem:[%s189 + $0x118] sm:$0xff]
                %206 = vst [vmem:[%s190 + $0x38] sm:$0xff] %v205
                %v207 = vld [vmem:[%s189 + $0x140] sm:$0xff]
                %208 = vst [vmem:[%s190 + $0x40] sm:$0xff] %v207
                %v209 = vld [vmem:[%s189 + $0x168] sm:$0xff]
                %210 = vst [vmem:[%s190 + $0x48] sm:$0xff] %v209
                %v211 = vld [vmem:[%s189 + $0x190] sm:$0xff]
                %212 = vst [vmem:[%s190 + $0x50] sm:$0xff] %v211
                %v213 = vld [vmem:[%s189 + $0x1b8] sm:$0xff]
                %214 = vst [vmem:[%s190 + $0x58] sm:$0xff] %v213
                %v215 = vld [vmem:[%s189 + $0x1e0] sm:$0xff]
                %216 = vst [vmem:[%s190 + $0x60] sm:$0xff] %v215
                %v217 = vld [vmem:[%s189 + $0x208] sm:$0xff]
                %218 = vst [vmem:[%s190 + $0x68] sm:$0xff] %v217
                %v219 = vld [vmem:[%s189 + $0x230] sm:$0xff]
                %220 = vst [vmem:[%s190 + $0x70] sm:$0xff] %v219
                %v221 = vld [vmem:[%s189 + $0x258] sm:$0xff]
                %222 = vst [vmem:[%s190 + $0x78] sm:$0xff] %v221
                %v223 = vld [vmem:[%s189 + $0x280] sm:$0xff]
                %224 = vst [vmem:[%s190 + $0x80] sm:$0xff] %v223
                %v225 = vld [vmem:[%s189 + $0x2a8] sm:$0xff]
                %226 = vst [vmem:[%s190 + $0x88] sm:$0xff] %v225
                %v227 = vld [vmem:[%s189 + $0x2d0] sm:$0xff]
                %228 = vst [vmem:[%s190 + $0x90] sm:$0xff] %v227
                %v229 = vld [vmem:[%s189 + $0x2f8] sm:$0xff]
                %230 = vst [vmem:[%s190 + $0x98] sm:$0xff] %v229
                %v231 = vld [vmem:[%s189 + $0x320] sm:$0xff]
                %232 = vst [vmem:[%s190 + $0xa0] sm:$0xff] %v231
                %v233 = vld [vmem:[%s189 + $0x348] sm:$0xff]
                %234 = vst [vmem:[%s190 + $0xa8] sm:$0xff] %v233
                %v235 = vld [vmem:[%s189 + $0x370] sm:$0xff]
                %236 = vst [vmem:[%s190 + $0xb0] sm:$0xff] %v235
                %v237 = vld [vmem:[%s189 + $0x398] sm:$0xff]
                %238 = vst [vmem:[%s190 + $0xb8] sm:$0xff] %v237
                %v239 = vld [vmem:[%s189 + $0x3c0] sm:$0xff]
                %240 = vst [vmem:[%s190 + $0xc0] sm:$0xff] %v239
                %v241 = vld [vmem:[%s189 + $0x3e8] sm:$0xff]
                %242 = vst [vmem:[%s190 + $0xc8] sm:$0xff] %v241
                %v243 = vld [vmem:[%s189 + $0x410] sm:$0xff]
                %244 = vst [vmem:[%s190 + $0xd0] sm:$0xff] %v243
                %v245 = vld [vmem:[%s189 + $0x438] sm:$0xff]
                %246 = vst [vmem:[%s190 + $0xd8] sm:$0xff] %v245
                %v247 = vld [vmem:[%s189 + $0x460] sm:$0xff]
                %248 = vst [vmem:[%s190 + $0xe0] sm:$0xff] %v247
                %v249 = vld [vmem:[%s189 + $0x488] sm:$0xff]
                %250 = vst [vmem:[%s190 + $0xe8] sm:$0xff] %v249
                %v251 = vld [vmem:[%s189 + $0x4b0] sm:$0xff]
                %252 = vst [vmem:[%s190 + $0xf0] sm:$0xff] %v251
                %v253 = vld [vmem:[%s189 + $0x4d8] sm:$0xff]
                %254 = vst [vmem:[%s190 + $0xf8] sm:$0xff] %v253
              $region41: #{net_forward.36} parent=35 // loop_footer
                %s188 = sadd.s32 1, %s184
              $region42: #{net_forward.36} parent=35 // loop_footer_branch
                %183 = sbr.rel target = $region38
              $region43: #{net_forward.36} parent=35 // loop_exit
                _
            $region36: #{net_forward.36} parent=27 // pred_fallthru
              _
          $region28: #{net_forward.36} parent=23 // pred_fallthru
            _
          %331 = vnop
        $region24: #{net_forward.36} parent=19 // pred_fallthru
          _
        // Predicated region
        $region59: #{net_forward.36} parent=19 // pred_check
          %p332 = pneg %p78
        $region60: #{net_forward.36} parent=19 // pred_check_branch
          %334 = sbr.rel (%p332) target = $region62
        $region61: #{net_forward.36} parent=19 // pred_region
          %s335 = smul.u32 32, %s18
          %p336 = scmp.lt.s32.totalorder %s335, 159
          %s337 = scalar_select %p336, %s335, 159
          %p338 = scmp.lt.s32.totalorder %s17, 0
          %s339 = scalar_select %p338, %s17, 0
          %s340 = sadd.s32 %s339, %s337
          %s341 = smul.addr %s340, 4
          %s342 = scalar_lea.vmem %s1, %s341
          %s343 = smul.u32 32, %s18
        $region62: #{net_forward.36} parent=19 // pred_fallthru
          _
      $region20: #{net_forward.36} parent=5 // pred_fallthru
        _
      %p344 = scmp.le.s32.totalorder 1, %s9
      %p345 = scmp.lt.s32.totalorder %s9, 11
      %p346 = pnand %p344, %p345
      %p347 = pneg %p346
      // Predicated region
      $region63: #{net_forward.36} parent=5 // pred_check
        _
      $region64: #{net_forward.36} parent=5 // pred_check_branch
        %349 = sbr.rel (%p346) target = $region66
      $region65: #{net_forward.36} parent=5 // pred_region
        %s350 = ssub.s32 %s9, 1
        %s351 = sand.u32 %s43, 1
        %s352 = sand.u32 %s43, 1
        %s353 = smul.addr %s352, 256
        %s354 = scalar_lea.vmem [#allocation3], %s353
        // Predicated region
        $region67: #{net_forward.36} parent=65 // pred_check
          %p355 = pneg %p56
        $region68: #{net_forward.36} parent=65 // pred_check_branch
          %357 = sbr.rel (%p355) target = $region70
        $region69: #{net_forward.36} parent=65 // pred_region
          _
        $region70: #{net_forward.36} parent=65 // pred_fallthru
          _
        %s358 = sand.u32 %s43, 1
        %s359 = sand.u32 %s43, 1
        %s360 = smul.addr %s359, 256
        %s361 = scalar_lea.vmem [#allocation3], %s360
        %p362 = pneg %p56
        %p363 = pneg %p53
        %s364 = smul.u32 32, %s21
        %p365 = scmp.lt.s32.totalorder %s364, 159
        %s366 = scalar_select %p365, %s364, 159
        %p367 = scmp.lt.s32.totalorder %s20, 0
        %s368 = scalar_select %p367, %s20, 0
        %s369 = sadd.s32 %s368, %s366
        %s370 = smul.addr %s369, 4
        %s371 = scalar_lea.vmem %s1, %s370
        %p372 = pneg %p84
        %p373 = pneg %p81
        %p374 = scmp.lt.s32.totalorder %s20, 0
        %s375 = scalar_select %p374, %s20, 0
        %s376 = scalar_lea.vmem %s2, %s375
        %p377 = pneg %p110
        %p378 = pneg %p107
        %p379 = pneg %p138
        %p380 = pneg %p135
        %s381 = smul.u32 32, %s19
        %p382 = scmp.lt.s32.totalorder %s381, 63
        %s383 = scalar_select %p382, %s381, 63
        %p384 = scmp.lt.s32.totalorder %s20, 0
        %s385 = scalar_select %p384, %s20, 0
        %s386 = sadd.s32 %s385, %s383
        %s387 = smul.addr %s386, 8
        %s388 = scalar_lea.vmem %s3, %s387
        %s389 = smul.u32 32, %s19
        %s390 = smul.u32 2, %s21
        %s391 = smul.u32 32, %s21
        %p392 = scmp.lt.s32.totalorder %s391, 159
        %s393 = scalar_select %p392, %s391, 159
        %p394 = scmp.lt.s32.totalorder %s20, 0
        %s395 = scalar_select %p394, %s20, 0
        %s396 = sadd.s32 %s395, %s393
        %s397 = smul.addr %s396, 4
        %s398 = scalar_lea.vmem %s1, %s397
        %s399 = smul.u32 32, %s21
        %p400 = scmp.lt.s32.totalorder %s20, 0
        %s401 = scalar_select %p400, %s20, 0
        %s402 = scalar_lea.vmem %s2, %s401
        %s403 = smul.u32 32, %s19
        %p404 = scmp.lt.s32.totalorder %s403, 63
        %s405 = scalar_select %p404, %s403, 63
        %p406 = scmp.lt.s32.totalorder %s20, 0
        %s407 = scalar_select %p406, %s20, 0
        %s408 = sadd.s32 %s407, %s405
        %s409 = smul.addr %s408, 8
        %s410 = scalar_lea.vmem %s3, %s409
        %s411 = smul.u32 32, %s19
        %p413 = scmp.eq.s32.totalorder %s21, 0
        // Predicated region
        $region71: #{net_forward.36} parent=65 // pred_check
          %p414 = pneg %p413
        $region72: #{net_forward.36} parent=65 // pred_check_branch
          %416 = sbr.rel (%p414) target = $region74
        $region73: #{net_forward.36} parent=65 // pred_region
          %417 = vst [vmem:[#allocation2] sm:$0xff] 0.0
          %418 = vst [vmem:[#allocation2 + $0x8] sm:$0xff] 0.0
          %419 = vst [vmem:[#allocation2 + $0x10] sm:$0xff] 0.0
          %420 = vst [vmem:[#allocation2 + $0x18] sm:$0xff] 0.0
          %421 = vst [vmem:[#allocation2 + $0x20] sm:$0xff] 0.0
          %422 = vst [vmem:[#allocation2 + $0x28] sm:$0xff] 0.0
          %423 = vst [vmem:[#allocation2 + $0x30] sm:$0xff] 0.0
          %424 = vst [vmem:[#allocation2 + $0x38] sm:$0xff] 0.0
          %425 = vst [vmem:[#allocation2 + $0x40] sm:$0xff] 0.0
          %426 = vst [vmem:[#allocation2 + $0x48] sm:$0xff] 0.0
          %427 = vst [vmem:[#allocation2 + $0x50] sm:$0xff] 0.0
          %428 = vst [vmem:[#allocation2 + $0x58] sm:$0xff] 0.0
          %429 = vst [vmem:[#allocation2 + $0x60] sm:$0xff] 0.0
          %430 = vst [vmem:[#allocation2 + $0x68] sm:$0xff] 0.0
          %431 = vst [vmem:[#allocation2 + $0x70] sm:$0xff] 0.0
          %432 = vst [vmem:[#allocation2 + $0x78] sm:$0xff] 0.0
          %433 = vst [vmem:[#allocation2 + $0x80] sm:$0xff] 0.0
          %434 = vst [vmem:[#allocation2 + $0x88] sm:$0xff] 0.0
          %435 = vst [vmem:[#allocation2 + $0x90] sm:$0xff] 0.0
          %436 = vst [vmem:[#allocation2 + $0x98] sm:$0xff] 0.0
          %437 = vst [vmem:[#allocation2 + $0xa0] sm:$0xff] 0.0
          %438 = vst [vmem:[#allocation2 + $0xa8] sm:$0xff] 0.0
          %439 = vst [vmem:[#allocation2 + $0xb0] sm:$0xff] 0.0
          %440 = vst [vmem:[#allocation2 + $0xb8] sm:$0xff] 0.0
          %441 = vst [vmem:[#allocation2 + $0xc0] sm:$0xff] 0.0
          %442 = vst [vmem:[#allocation2 + $0xc8] sm:$0xff] 0.0
          %443 = vst [vmem:[#allocation2 + $0xd0] sm:$0xff] 0.0
          %444 = vst [vmem:[#allocation2 + $0xd8] sm:$0xff] 0.0
          %445 = vst [vmem:[#allocation2 + $0xe0] sm:$0xff] 0.0
          %446 = vst [vmem:[#allocation2 + $0xe8] sm:$0xff] 0.0
          %447 = vst [vmem:[#allocation2 + $0xf0] sm:$0xff] 0.0
          %448 = vst [vmem:[#allocation2 + $0xf8] sm:$0xff] 0.0
        $region74: #{net_forward.36} parent=65 // pred_fallthru
          _
        %v449 = vld [vmem:[#allocation2] sm:$0xff]
        %v450 = vld [vmem:[#allocation2 + $0x8] sm:$0xff]
        %v451 = vld [vmem:[#allocation2 + $0x10] sm:$0xff]
        %v452 = vld [vmem:[#allocation2 + $0x18] sm:$0xff]
        %v453 = vld [vmem:[#allocation2 + $0x20] sm:$0xff]
        %v454 = vld [vmem:[#allocation2 + $0x28] sm:$0xff]
        %v455 = vld [vmem:[#allocation2 + $0x30] sm:$0xff]
        %v456 = vld [vmem:[#allocation2 + $0x38] sm:$0xff]
        %v457 = vld [vmem:[#allocation2 + $0x40] sm:$0xff]
        %v458 = vld [vmem:[#allocation2 + $0x48] sm:$0xff]
        %v459 = vld [vmem:[#allocation2 + $0x50] sm:$0xff]
        %v460 = vld [vmem:[#allocation2 + $0x58] sm:$0xff]
        %v461 = vld [vmem:[#allocation2 + $0x60] sm:$0xff]
        %v462 = vld [vmem:[#allocation2 + $0x68] sm:$0xff]
        %v463 = vld [vmem:[#allocation2 + $0x70] sm:$0xff]
        %v464 = vld [vmem:[#allocation2 + $0x78] sm:$0xff]
        %v465 = vld [vmem:[#allocation2 + $0x80] sm:$0xff]
        %v466 = vld [vmem:[#allocation2 + $0x88] sm:$0xff]
        %v467 = vld [vmem:[#allocation2 + $0x90] sm:$0xff]
        %v468 = vld [vmem:[#allocation2 + $0x98] sm:$0xff]
        %v469 = vld [vmem:[#allocation2 + $0xa0] sm:$0xff]
        %v470 = vld [vmem:[#allocation2 + $0xa8] sm:$0xff]
        %v471 = vld [vmem:[#allocation2 + $0xb0] sm:$0xff]
        %v472 = vld [vmem:[#allocation2 + $0xb8] sm:$0xff]
        %v473 = vld [vmem:[#allocation2 + $0xc0] sm:$0xff]
        %v474 = vld [vmem:[#allocation2 + $0xc8] sm:$0xff]
        %v475 = vld [vmem:[#allocation2 + $0xd0] sm:$0xff]
        %v476 = vld [vmem:[#allocation2 + $0xd8] sm:$0xff]
        %v477 = vld [vmem:[#allocation2 + $0xe0] sm:$0xff]
        %v478 = vld [vmem:[#allocation2 + $0xe8] sm:$0xff]
        %v479 = vld [vmem:[#allocation2 + $0xf0] sm:$0xff]
        %v480 = vld [vmem:[#allocation2 + $0xf8] sm:$0xff]
        %v481 = vld [vmem:[%s354] sm:$0xff]
        %v482 = vld [vmem:[%s354 + $0x8] sm:$0xff]
        %v483 = vld [vmem:[%s354 + $0x10] sm:$0xff]
        %v484 = vld [vmem:[%s354 + $0x18] sm:$0xff]
        %v485 = vld [vmem:[%s354 + $0x20] sm:$0xff]
        %v486 = vld [vmem:[%s354 + $0x28] sm:$0xff]
        %v487 = vld [vmem:[%s354 + $0x30] sm:$0xff]
        %v488 = vld [vmem:[%s354 + $0x38] sm:$0xff]
        %v489 = vld [vmem:[%s354 + $0x40] sm:$0xff]
        %v490 = vld [vmem:[%s354 + $0x48] sm:$0xff]
        %v491 = vld [vmem:[%s354 + $0x50] sm:$0xff]
        %v492 = vld [vmem:[%s354 + $0x58] sm:$0xff]
        %v493 = vld [vmem:[%s354 + $0x60] sm:$0xff]
        %v494 = vld [vmem:[%s354 + $0x68] sm:$0xff]
        %v495 = vld [vmem:[%s354 + $0x70] sm:$0xff]
        %v496 = vld [vmem:[%s354 + $0x78] sm:$0xff]
        %v497 = vld [vmem:[%s354 + $0x80] sm:$0xff]
        %v498 = vld [vmem:[%s354 + $0x88] sm:$0xff]
        %v499 = vld [vmem:[%s354 + $0x90] sm:$0xff]
        %v500 = vld [vmem:[%s354 + $0x98] sm:$0xff]
        %v501 = vld [vmem:[%s354 + $0xa0] sm:$0xff]
        %v502 = vld [vmem:[%s354 + $0xa8] sm:$0xff]
        %v503 = vld [vmem:[%s354 + $0xb0] sm:$0xff]
        %v504 = vld [vmem:[%s354 + $0xb8] sm:$0xff]
        %v505 = vld [vmem:[%s354 + $0xc0] sm:$0xff]
        %v506 = vld [vmem:[%s354 + $0xc8] sm:$0xff]
        %v507 = vld [vmem:[%s354 + $0xd0] sm:$0xff]
        %v508 = vld [vmem:[%s354 + $0xd8] sm:$0xff]
        %v509 = vld [vmem:[%s354 + $0xe0] sm:$0xff]
        %v510 = vld [vmem:[%s354 + $0xe8] sm:$0xff]
        %v511 = vld [vmem:[%s354 + $0xf0] sm:$0xff]
        %v512 = vld [vmem:[%s354 + $0xf8] sm:$0xff]
        %v513 = vld [vmem:[%s398] sm:$0xf]
        %v514 = vld [vmem:[%s398 + $0x4] sm:$0xf]
        %v515 = vld [vmem:[%s398 + $0x8] sm:$0xf]
        %v516 = vld [vmem:[%s398 + $0xc] sm:$0xf]
        %v517 = vld [vmem:[%s398 + $0x10] sm:$0xf]
        %v518 = vld [vmem:[%s398 + $0x14] sm:$0xf]
        %v519 = vld [vmem:[%s398 + $0x18] sm:$0xf]
        %v520 = vld [vmem:[%s398 + $0x1c] sm:$0xf]
        %v521 = vld [vmem:[%s398 + $0x20] sm:$0xf]
        %v522 = vld [vmem:[%s398 + $0x24] sm:$0xf]
        %v523 = vld [vmem:[%s398 + $0x28] sm:$0xf]
        %v524 = vld [vmem:[%s398 + $0x2c] sm:$0xf]
        %v525 = vld [vmem:[%s398 + $0x30] sm:$0xf]
        %v526 = vld [vmem:[%s398 + $0x34] sm:$0xf]
        %v527 = vld [vmem:[%s398 + $0x38] sm:$0xf]
        %v528 = vld [vmem:[%s398 + $0x3c] sm:$0xf]
        %v529 = vld [vmem:[%s398 + $0x40] sm:$0xf]
        %v530 = vld [vmem:[%s398 + $0x44] sm:$0xf]
        %v531 = vld [vmem:[%s398 + $0x48] sm:$0xf]
        %v532 = vld [vmem:[%s398 + $0x4c] sm:$0xf]
        %v533 = vld [vmem:[%s398 + $0x50] sm:$0xf]
        %v534 = vld [vmem:[%s398 + $0x54] sm:$0xf]
        %v535 = vld [vmem:[%s398 + $0x58] sm:$0xf]
        %v536 = vld [vmem:[%s398 + $0x5c] sm:$0xf]
        %v537 = vld [vmem:[%s398 + $0x60] sm:$0xf]
        %v538 = vld [vmem:[%s398 + $0x64] sm:$0xf]
        %v539 = vld [vmem:[%s398 + $0x68] sm:$0xf]
        %v540 = vld [vmem:[%s398 + $0x6c] sm:$0xf]
        %v541 = vld [vmem:[%s398 + $0x70] sm:$0xf]
        %v542 = vld [vmem:[%s398 + $0x74] sm:$0xf]
        %v543 = vld [vmem:[%s398 + $0x78] sm:$0xf]
        %v544 = vld [vmem:[%s398 + $0x7c] sm:$0xf]
        %v577 = vunpack.c.l.b16 %v481
        %v578 = vunpack.c.h.b16 %v481
        %v579 = vunpack.c.l.b16 %v482
        %v580 = vunpack.c.h.b16 %v482
        %v581 = vunpack.c.l.b16 %v483
        %v582 = vunpack.c.h.b16 %v483
        %v583 = vunpack.c.l.b16 %v484
        %v584 = vunpack.c.h.b16 %v484
        %v585 = vunpack.c.l.b16 %v485
        %v586 = vunpack.c.h.b16 %v485
        %v587 = vunpack.c.l.b16 %v486
        %v588 = vunpack.c.h.b16 %v486
        %v589 = vunpack.c.l.b16 %v487
        %v590 = vunpack.c.h.b16 %v487
        %v591 = vunpack.c.l.b16 %v488
        %v592 = vunpack.c.h.b16 %v488
        %v593 = vunpack.c.l.b16 %v489
        %v594 = vunpack.c.h.b16 %v489
        %v595 = vunpack.c.l.b16 %v490
        %v596 = vunpack.c.h.b16 %v490
        %v597 = vunpack.c.l.b16 %v491
        %v598 = vunpack.c.h.b16 %v491
        %v599 = vunpack.c.l.b16 %v492
        %v600 = vunpack.c.h.b16 %v492
        %v601 = vunpack.c.l.b16 %v493
        %v602 = vunpack.c.h.b16 %v493
        %v603 = vunpack.c.l.b16 %v494
        %v604 = vunpack.c.h.b16 %v494
        %v605 = vunpack.c.l.b16 %v495
        %v606 = vunpack.c.h.b16 %v495
        %v607 = vunpack.c.l.b16 %v496
        %v608 = vunpack.c.h.b16 %v496
        %v609 = vunpack.c.l.b16 %v497
        %v610 = vunpack.c.h.b16 %v497
        %v611 = vunpack.c.l.b16 %v498
        %v612 = vunpack.c.h.b16 %v498
        %v613 = vunpack.c.l.b16 %v499
        %v614 = vunpack.c.h.b16 %v499
        %v615 = vunpack.c.l.b16 %v500
        %v616 = vunpack.c.h.b16 %v500
        %v617 = vunpack.c.l.b16 %v501
        %v618 = vunpack.c.h.b16 %v501
        %v619 = vunpack.c.l.b16 %v502
        %v620 = vunpack.c.h.b16 %v502
        %v621 = vunpack.c.l.b16 %v503
        %v622 = vunpack.c.h.b16 %v503
        %v623 = vunpack.c.l.b16 %v504
        %v624 = vunpack.c.h.b16 %v504
        %v625 = vunpack.c.l.b16 %v505
        %v626 = vunpack.c.h.b16 %v505
        %v627 = vunpack.c.l.b16 %v506
        %v628 = vunpack.c.h.b16 %v506
        %v629 = vunpack.c.l.b16 %v507
        %v630 = vunpack.c.h.b16 %v507
        %v631 = vunpack.c.l.b16 %v508
        %v632 = vunpack.c.h.b16 %v508
        %v633 = vunpack.c.l.b16 %v509
        %v634 = vunpack.c.h.b16 %v509
        %v635 = vunpack.c.l.b16 %v510
        %v636 = vunpack.c.h.b16 %v510
        %v637 = vunpack.c.l.b16 %v511
        %v638 = vunpack.c.h.b16 %v511
        %v639 = vunpack.c.l.b16 %v512
        %v640 = vunpack.c.h.b16 %v512
        %v641 = vpack.c.b16 %v579, %v577
        %v642 = vpack.c.b16 %v580, %v578
        %v643 = vpack.c.b16 %v583, %v581
        %v644 = vpack.c.b16 %v584, %v582
        %v645 = vpack.c.b16 %v587, %v585
        %v646 = vpack.c.b16 %v588, %v586
        %v647 = vpack.c.b16 %v591, %v589
        %v648 = vpack.c.b16 %v592, %v590
        %v649 = vpack.c.b16 %v595, %v593
        %v650 = vpack.c.b16 %v596, %v594
        %v651 = vpack.c.b16 %v599, %v597
        %v652 = vpack.c.b16 %v600, %v598
        %v653 = vpack.c.b16 %v603, %v601
        %v654 = vpack.c.b16 %v604, %v602
        %v655 = vpack.c.b16 %v607, %v605
        %v656 = vpack.c.b16 %v608, %v606
        %v657 = vpack.c.b16 %v611, %v609
        %v658 = vpack.c.b16 %v612, %v610
        %v659 = vpack.c.b16 %v615, %v613
        %v660 = vpack.c.b16 %v616, %v614
        %v661 = vpack.c.b16 %v619, %v617
        %v662 = vpack.c.b16 %v620, %v618
        %v663 = vpack.c.b16 %v623, %v621
        %v664 = vpack.c.b16 %v624, %v622
        %v665 = vpack.c.b16 %v627, %v625
        %v666 = vpack.c.b16 %v628, %v626
        %v667 = vpack.c.b16 %v631, %v629
        %v668 = vpack.c.b16 %v632, %v630
        %v669 = vpack.c.b16 %v635, %v633
        %v670 = vpack.c.b16 %v636, %v634
        %v671 = vpack.c.b16 %v639, %v637
        %v672 = vpack.c.b16 %v640, %v638
        %v737 = vunpack.c.l.b16 %v513
        %v738 = vunpack.c.l.b16 %v514
        %v739 = vunpack.c.l.b16 %v515
        %v740 = vunpack.c.l.b16 %v516
        %v741 = vunpack.c.l.b16 %v517
        %v742 = vunpack.c.l.b16 %v518
        %v743 = vunpack.c.l.b16 %v519
        %v744 = vunpack.c.l.b16 %v520
        %v745 = vunpack.c.l.b16 %v521
        %v746 = vunpack.c.l.b16 %v522
        %v747 = vunpack.c.l.b16 %v523
        %v748 = vunpack.c.l.b16 %v524
        %v749 = vunpack.c.l.b16 %v525
        %v750 = vunpack.c.l.b16 %v526
        %v751 = vunpack.c.l.b16 %v527
        %v752 = vunpack.c.l.b16 %v528
        %v753 = vunpack.c.l.b16 %v529
        %v754 = vunpack.c.l.b16 %v530
        %v755 = vunpack.c.l.b16 %v531
        %v756 = vunpack.c.l.b16 %v532
        %v757 = vunpack.c.l.b16 %v533
        %v758 = vunpack.c.l.b16 %v534
        %v759 = vunpack.c.l.b16 %v535
        %v760 = vunpack.c.l.b16 %v536
        %v761 = vunpack.c.l.b16 %v537
        %v762 = vunpack.c.l.b16 %v538
        %v763 = vunpack.c.l.b16 %v539
        %v764 = vunpack.c.l.b16 %v540
        %v765 = vunpack.c.l.b16 %v541
        %v766 = vunpack.c.l.b16 %v542
        %v767 = vunpack.c.l.b16 %v543
        %v768 = vunpack.c.l.b16 %v544
        %v769 = vpack.c.b16 %v738, %v737
        %v770 = vpack.c.b16 %v740, %v739
        %v771 = vpack.c.b16 %v742, %v741
        %v772 = vpack.c.b16 %v744, %v743
        %v773 = vpack.c.b16 %v746, %v745
        %v774 = vpack.c.b16 %v748, %v747
        %v775 = vpack.c.b16 %v750, %v749
        %v776 = vpack.c.b16 %v752, %v751
        %v777 = vpack.c.b16 %v754, %v753
        %v778 = vpack.c.b16 %v756, %v755
        %v779 = vpack.c.b16 %v758, %v757
        %v780 = vpack.c.b16 %v760, %v759
        %v781 = vpack.c.b16 %v762, %v761
        %v782 = vpack.c.b16 %v764, %v763
        %v783 = vpack.c.b16 %v766, %v765
        %v784 = vpack.c.b16 %v768, %v767
        %801 = vmatprep.subr.bf16.mxu0 0
        %802 = vmatpush1.bf16.msra.mxu0 %v769
        %803 = vmatprep.subr.bf16.mxu0 0
        %804 = vmatpush1.bf16.msra.mxu0 %v770
        %805 = vmatprep.subr.bf16.mxu0 0
        %806 = vmatpush1.bf16.msra.mxu0 %v771
        %807 = vmatprep.subr.bf16.mxu0 0
        %808 = vmatpush1.bf16.msra.mxu0 %v772
        %809 = vmatprep.subr.bf16.mxu0 0
        %810 = vmatpush1.bf16.msra.mxu0 %v773
        %811 = vmatprep.subr.bf16.mxu0 0
        %812 = vmatpush1.bf16.msra.mxu0 %v774
        %813 = vmatprep.subr.bf16.mxu0 0
        %814 = vmatpush1.bf16.msra.mxu0 %v775
        %815 = vmatprep.subr.bf16.mxu0 0
        %816 = vmatpush1.bf16.msra.mxu0 %v776
        %817 = vmatprep.subr.bf16.mxu0 0
        %818 = vmatpush1.bf16.msra.mxu0 %v777
        %819 = vmatprep.subr.bf16.mxu0 0
        %820 = vmatpush1.bf16.msra.mxu0 %v778
        %821 = vmatprep.subr.bf16.mxu0 0
        %822 = vmatpush1.bf16.msra.mxu0 %v779
        %823 = vmatprep.subr.bf16.mxu0 0
        %824 = vmatpush1.bf16.msra.mxu0 %v780
        %825 = vmatprep.subr.bf16.mxu0 0
        %826 = vmatpush1.bf16.msra.mxu0 %v781
        %827 = vmatprep.subr.bf16.mxu0 0
        %828 = vmatpush1.bf16.msra.mxu0 %v782
        %829 = vmatprep.subr.bf16.mxu0 0
        %830 = vmatpush1.bf16.msra.mxu0 %v783
        %831 = vmatprep.subr.bf16.mxu0 0
        %832 = vmatpush1.bf16.msra.mxu0 %v784
        %833 = vmatprep.mubr.bf16.mxu0 %v642
        %834 = vmatmul.mubr.bf16.gmra.mrb[0].mxu0 %v641
        %v835 = vpop.f32.mrb[0].mxu0
        %v836 = vadd.f32 0.0, %v835
        %v837 = vpop.f32.mrb[0].mxu0
        %v838 = vpop.f32.mrb[0].mxu0
        %v839 = vadd.f32 0.0, %v838
        %v840 = vpop.f32.mrb[0].mxu0
        %841 = vmatprep.mubr.bf16.mxu0 %v644
        %842 = vmatmul.mubr.bf16.gmra.mrb[0].mxu0 %v643
        %v843 = vpop.f32.mrb[0].mxu0
        %v844 = vadd.f32 0.0, %v843
        %v845 = vpop.f32.mrb[0].mxu0
        %v846 = vpop.f32.mrb[0].mxu0
        %v847 = vadd.f32 0.0, %v846
        %v848 = vpop.f32.mrb[0].mxu0
        %849 = vmatprep.mubr.bf16.mxu0 %v646
        %850 = vmatmul.mubr.bf16.gmra.mrb[0].mxu0 %v645
        %v851 = vpop.f32.mrb[0].mxu0
        %v852 = vadd.f32 0.0, %v851
        %v853 = vpop.f32.mrb[0].mxu0
        %v854 = vpop.f32.mrb[0].mxu0
        %v855 = vadd.f32 0.0, %v854
        %v856 = vpop.f32.mrb[0].mxu0
        %857 = vmatprep.mubr.bf16.mxu0 %v648
        %858 = vmatmul.mubr.bf16.gmra.mrb[0].mxu0 %v647
        %v859 = vpop.f32.mrb[0].mxu0
        %v860 = vadd.f32 0.0, %v859
        %v861 = vpop.f32.mrb[0].mxu0
        %v862 = vpop.f32.mrb[0].mxu0
        %v863 = vadd.f32 0.0, %v862
        %v864 = vpop.f32.mrb[0].mxu0
        %865 = vmatprep.mubr.bf16.mxu0 %v650
        %866 = vmatmul.mubr.bf16.gmra.mrb[0].mxu0 %v649
        %v867 = vpop.f32.mrb[0].mxu0
        %v868 = vadd.f32 0.0, %v867
        %v869 = vpop.f32.mrb[0].mxu0
        %v870 = vpop.f32.mrb[0].mxu0
        %v871 = vadd.f32 0.0, %v870
        %v872 = vpop.f32.mrb[0].mxu0
        %873 = vmatprep.mubr.bf16.mxu0 %v652
        %874 = vmatmul.mubr.bf16.gmra.mrb[0].mxu0 %v651
        %v875 = vpop.f32.mrb[0].mxu0
        %v876 = vadd.f32 0.0, %v875
        %v877 = vpop.f32.mrb[0].mxu0
        %v878 = vpop.f32.mrb[0].mxu0
        %v879 = vadd.f32 0.0, %v878
        %v880 = vpop.f32.mrb[0].mxu0
        %881 = vmatprep.mubr.bf16.mxu0 %v654
        %882 = vmatmul.mubr.bf16.gmra.mrb[0].mxu0 %v653
        %v883 = vpop.f32.mrb[0].mxu0
        %v884 = vadd.f32 0.0, %v883
        %v885 = vpop.f32.mrb[0].mxu0
        %v886 = vpop.f32.mrb[0].mxu0
        %v887 = vadd.f32 0.0, %v886
        %v888 = vpop.f32.mrb[0].mxu0
        %889 = vmatprep.mubr.bf16.mxu0 %v656
        %890 = vmatmul.mubr.bf16.gmra.mrb[0].mxu0 %v655
        %v891 = vpop.f32.mrb[0].mxu0
        %v892 = vadd.f32 0.0, %v891
        %v893 = vpop.f32.mrb[0].mxu0
        %v894 = vpop.f32.mrb[0].mxu0
        %v895 = vadd.f32 0.0, %v894
        %v896 = vpop.f32.mrb[0].mxu0
        %897 = vmatprep.mubr.bf16.mxu0 %v658
        %898 = vmatmul.mubr.bf16.gmra.mrb[0].mxu0 %v657
        %v899 = vpop.f32.mrb[0].mxu0
        %v900 = vadd.f32 0.0, %v899
        %v901 = vpop.f32.mrb[0].mxu0
        %v902 = vpop.f32.mrb[0].mxu0
        %v903 = vadd.f32 0.0, %v902
        %v904 = vpop.f32.mrb[0].mxu0
        %905 = vmatprep.mubr.bf16.mxu0 %v660
        %906 = vmatmul.mubr.bf16.gmra.mrb[0].mxu0 %v659
        %v907 = vpop.f32.mrb[0].mxu0
        %v908 = vadd.f32 0.0, %v907
        %v909 = vpop.f32.mrb[0].mxu0
        %v910 = vpop.f32.mrb[0].mxu0
        %v911 = vadd.f32 0.0, %v910
        %v912 = vpop.f32.mrb[0].mxu0
        %913 = vmatprep.mubr.bf16.mxu0 %v662
        %914 = vmatmul.mubr.bf16.gmra.mrb[0].mxu0 %v661
        %v915 = vpop.f32.mrb[0].mxu0
        %v916 = vadd.f32 0.0, %v915
        %v917 = vpop.f32.mrb[0].mxu0
        %v918 = vpop.f32.mrb[0].mxu0
        %v919 = vadd.f32 0.0, %v918
        %v920 = vpop.f32.mrb[0].mxu0
        %921 = vmatprep.mubr.bf16.mxu0 %v664
        %922 = vmatmul.mubr.bf16.gmra.mrb[0].mxu0 %v663
        %v923 = vpop.f32.mrb[0].mxu0
        %v924 = vadd.f32 0.0, %v923
        %v925 = vpop.f32.mrb[0].mxu0
        %v926 = vpop.f32.mrb[0].mxu0
        %v927 = vadd.f32 0.0, %v926
        %v928 = vpop.f32.mrb[0].mxu0
        %929 = vmatprep.mubr.bf16.mxu0 %v666
        %930 = vmatmul.mubr.bf16.gmra.mrb[0].mxu0 %v665
        %v931 = vpop.f32.mrb[0].mxu0
        %v932 = vadd.f32 0.0, %v931
        %v933 = vpop.f32.mrb[0].mxu0
        %v934 = vpop.f32.mrb[0].mxu0
        %v935 = vadd.f32 0.0, %v934
        %v936 = vpop.f32.mrb[0].mxu0
        %937 = vmatprep.mubr.bf16.mxu0 %v668
        %938 = vmatmul.mubr.bf16.gmra.mrb[0].mxu0 %v667
        %v939 = vpop.f32.mrb[0].mxu0
        %v940 = vadd.f32 0.0, %v939
        %v941 = vpop.f32.mrb[0].mxu0
        %v942 = vpop.f32.mrb[0].mxu0
        %v943 = vadd.f32 0.0, %v942
        %v944 = vpop.f32.mrb[0].mxu0
        %945 = vmatprep.mubr.bf16.mxu0 %v670
        %946 = vmatmul.mubr.bf16.gmra.mrb[0].mxu0 %v669
        %v947 = vpop.f32.mrb[0].mxu0
        %v948 = vadd.f32 0.0, %v947
        %v949 = vpop.f32.mrb[0].mxu0
        %v950 = vpop.f32.mrb[0].mxu0
        %v951 = vadd.f32 0.0, %v950
        %v952 = vpop.f32.mrb[0].mxu0
        %953 = vmatprep.mubr.bf16.mxu0 %v672
        %954 = vmatmul.mubr.bf16.gmra.mrb[0].mxu0 %v671
        %v955 = vpop.f32.mrb[0].mxu0
        %v956 = vadd.f32 0.0, %v955
        %v957 = vpop.f32.mrb[0].mxu0
        %v958 = vpop.f32.mrb[0].mxu0
        %v959 = vadd.f32 0.0, %v958
        %v960 = vpop.f32.mrb[0].mxu0
        %961 = vdwg.mxu0
        %v962 = vadd.f32 %v449, %v836
        %v963 = vadd.f32 %v450, %v839
        %v964 = vadd.f32 %v451, %v844
        %v965 = vadd.f32 %v452, %v847
        %v966 = vadd.f32 %v453, %v852
        %v967 = vadd.f32 %v454, %v855
        %v968 = vadd.f32 %v455, %v860
        %v969 = vadd.f32 %v456, %v863
        %v970 = vadd.f32 %v457, %v868
        %v971 = vadd.f32 %v458, %v871
        %v972 = vadd.f32 %v459, %v876
        %v973 = vadd.f32 %v460, %v879
        %v974 = vadd.f32 %v461, %v884
        %v975 = vadd.f32 %v462, %v887
        %v976 = vadd.f32 %v463, %v892
        %v977 = vadd.f32 %v464, %v895
        %v978 = vadd.f32 %v465, %v900
        %v979 = vadd.f32 %v466, %v903
        %v980 = vadd.f32 %v467, %v908
        %v981 = vadd.f32 %v468, %v911
        %v982 = vadd.f32 %v469, %v916
        %v983 = vadd.f32 %v470, %v919
        %v984 = vadd.f32 %v471, %v924
        %v985 = vadd.f32 %v472, %v927
        %v986 = vadd.f32 %v473, %v932
        %v987 = vadd.f32 %v474, %v935
        %v988 = vadd.f32 %v475, %v940
        %v989 = vadd.f32 %v476, %v943
        %v990 = vadd.f32 %v477, %v948
        %v991 = vadd.f32 %v478, %v951
        %v992 = vadd.f32 %v479, %v956
        %v993 = vadd.f32 %v480, %v959
        %994 = vst [vmem:[#allocation2] sm:$0xff] %v962
        %995 = vst [vmem:[#allocation2 + $0x8] sm:$0xff] %v963
        %996 = vst [vmem:[#allocation2 + $0x10] sm:$0xff] %v964
        %997 = vst [vmem:[#allocation2 + $0x18] sm:$0xff] %v965
        %998 = vst [vmem:[#allocation2 + $0x20] sm:$0xff] %v966
        %999 = vst [vmem:[#allocation2 + $0x28] sm:$0xff] %v967
        %1000 = vst [vmem:[#allocation2 + $0x30] sm:$0xff] %v968
        %1001 = vst [vmem:[#allocation2 + $0x38] sm:$0xff] %v969
        %1002 = vst [vmem:[#allocation2 + $0x40] sm:$0xff] %v970
        %1003 = vst [vmem:[#allocation2 + $0x48] sm:$0xff] %v971
        %1004 = vst [vmem:[#allocation2 + $0x50] sm:$0xff] %v972
        %1005 = vst [vmem:[#allocation2 + $0x58] sm:$0xff] %v973
        %1006 = vst [vmem:[#allocation2 + $0x60] sm:$0xff] %v974
        %1007 = vst [vmem:[#allocation2 + $0x68] sm:$0xff] %v975
        %1008 = vst [vmem:[#allocation2 + $0x70] sm:$0xff] %v976
        %1009 = vst [vmem:[#allocation2 + $0x78] sm:$0xff] %v977
        %1010 = vst [vmem:[#allocation2 + $0x80] sm:$0xff] %v978
        %1011 = vst [vmem:[#allocation2 + $0x88] sm:$0xff] %v979
        %1012 = vst [vmem:[#allocation2 + $0x90] sm:$0xff] %v980
        %1013 = vst [vmem:[#allocation2 + $0x98] sm:$0xff] %v981
        %1014 = vst [vmem:[#allocation2 + $0xa0] sm:$0xff] %v982
        %1015 = vst [vmem:[#allocation2 + $0xa8] sm:$0xff] %v983
        %1016 = vst [vmem:[#allocation2 + $0xb0] sm:$0xff] %v984
        %1017 = vst [vmem:[#allocation2 + $0xb8] sm:$0xff] %v985
        %1018 = vst [vmem:[#allocation2 + $0xc0] sm:$0xff] %v986
        %1019 = vst [vmem:[#allocation2 + $0xc8] sm:$0xff] %v987
        %1020 = vst [vmem:[#allocation2 + $0xd0] sm:$0xff] %v988
        %1021 = vst [vmem:[#allocation2 + $0xd8] sm:$0xff] %v989
        %1022 = vst [vmem:[#allocation2 + $0xe0] sm:$0xff] %v990
        %1023 = vst [vmem:[#allocation2 + $0xe8] sm:$0xff] %v991
        %1024 = vst [vmem:[#allocation2 + $0xf0] sm:$0xff] %v992
        %1025 = vst [vmem:[#allocation2 + $0xf8] sm:$0xff] %v993
        %p1026 = scmp.eq.s32.totalorder %s21, 4
        // Predicated region
        $region75: #{net_forward.36} parent=65 // pred_check
          %p1027 = pneg %p1026
        $region76: #{net_forward.36} parent=65 // pred_check_branch
          %1029 = sbr.rel (%p1027) target = $region78
        $region77: #{net_forward.36} parent=65 // pred_region
          %v1030 = vld [vmem:[#allocation2] sm:$0xff]
          %v1031 = vld [vmem:[#allocation2 + $0x8] sm:$0xff]
          %v1032 = vld [vmem:[#allocation2 + $0x10] sm:$0xff]
          %v1033 = vld [vmem:[#allocation2 + $0x18] sm:$0xff]
          %v1034 = vld [vmem:[#allocation2 + $0x20] sm:$0xff]
          %v1035 = vld [vmem:[#allocation2 + $0x28] sm:$0xff]
          %v1036 = vld [vmem:[#allocation2 + $0x30] sm:$0xff]
          %v1037 = vld [vmem:[#allocation2 + $0x38] sm:$0xff]
          %v1038 = vld [vmem:[#allocation2 + $0x40] sm:$0xff]
          %v1039 = vld [vmem:[#allocation2 + $0x48] sm:$0xff]
          %v1040 = vld [vmem:[#allocation2 + $0x50] sm:$0xff]
          %v1041 = vld [vmem:[#allocation2 + $0x58] sm:$0xff]
          %v1042 = vld [vmem:[#allocation2 + $0x60] sm:$0xff]
          %v1043 = vld [vmem:[#allocation2 + $0x68] sm:$0xff]
          %v1044 = vld [vmem:[#allocation2 + $0x70] sm:$0xff]
          %v1045 = vld [vmem:[#allocation2 + $0x78] sm:$0xff]
          %v1046 = vld [vmem:[#allocation2 + $0x80] sm:$0xff]
          %v1047 = vld [vmem:[#allocation2 + $0x88] sm:$0xff]
          %v1048 = vld [vmem:[#allocation2 + $0x90] sm:$0xff]
          %v1049 = vld [vmem:[#allocation2 + $0x98] sm:$0xff]
          %v1050 = vld [vmem:[#allocation2 + $0xa0] sm:$0xff]
          %v1051 = vld [vmem:[#allocation2 + $0xa8] sm:$0xff]
          %v1052 = vld [vmem:[#allocation2 + $0xb0] sm:$0xff]
          %v1053 = vld [vmem:[#allocation2 + $0xb8] sm:$0xff]
          %v1054 = vld [vmem:[#allocation2 + $0xc0] sm:$0xff]
          %v1055 = vld [vmem:[#allocation2 + $0xc8] sm:$0xff]
          %v1056 = vld [vmem:[#allocation2 + $0xd0] sm:$0xff]
          %v1057 = vld [vmem:[#allocation2 + $0xd8] sm:$0xff]
          %v1058 = vld [vmem:[#allocation2 + $0xe0] sm:$0xff]
          %v1059 = vld [vmem:[#allocation2 + $0xe8] sm:$0xff]
          %v1060 = vld [vmem:[#allocation2 + $0xf0] sm:$0xff]
          %v1061 = vld [vmem:[#allocation2 + $0xf8] sm:$0xff]
          %v1062 = vld [vmem:[%s402] sm:$0x1]
          %v1064 = vlaneseq
          %v1065 = vshrl.u32 %v1064, 7
          %v1066 = vsub.s32 0, %v1065
          %v1067 = vrot.slane %v1062, %v1066
          %v1069 = vadd.f32 %v1030, %v1067
          %v1070 = vadd.f32 %v1031, %v1067
          %v1071 = vadd.f32 %v1032, %v1067
          %v1072 = vadd.f32 %v1033, %v1067
          %v1073 = vadd.f32 %v1034, %v1067
          %v1074 = vadd.f32 %v1035, %v1067
          %v1075 = vadd.f32 %v1036, %v1067
          %v1076 = vadd.f32 %v1037, %v1067
          %v1077 = vadd.f32 %v1038, %v1067
          %v1078 = vadd.f32 %v1039, %v1067
          %v1079 = vadd.f32 %v1040, %v1067
          %v1080 = vadd.f32 %v1041, %v1067
          %v1081 = vadd.f32 %v1042, %v1067
          %v1082 = vadd.f32 %v1043, %v1067
          %v1083 = vadd.f32 %v1044, %v1067
          %v1084 = vadd.f32 %v1045, %v1067
          %v1085 = vadd.f32 %v1046, %v1067
          %v1086 = vadd.f32 %v1047, %v1067
          %v1087 = vadd.f32 %v1048, %v1067
          %v1088 = vadd.f32 %v1049, %v1067
          %v1089 = vadd.f32 %v1050, %v1067
          %v1090 = vadd.f32 %v1051, %v1067
          %v1091 = vadd.f32 %v1052, %v1067
          %v1092 = vadd.f32 %v1053, %v1067
          %v1093 = vadd.f32 %v1054, %v1067
          %v1094 = vadd.f32 %v1055, %v1067
          %v1095 = vadd.f32 %v1056, %v1067
          %v1096 = vadd.f32 %v1057, %v1067
          %v1097 = vadd.f32 %v1058, %v1067
          %v1098 = vadd.f32 %v1059, %v1067
          %v1099 = vadd.f32 %v1060, %v1067
          %v1100 = vadd.f32 %v1061, %v1067
          %1101 = vst [vmem:[%s410] sm:$0xff] %v1069
          %1102 = vst [vmem:[%s410 + $0x8] sm:$0xff] %v1070
          %1103 = vst [vmem:[%s410 + $0x10] sm:$0xff] %v1071
          %1104 = vst [vmem:[%s410 + $0x18] sm:$0xff] %v1072
          %1105 = vst [vmem:[%s410 + $0x20] sm:$0xff] %v1073
          %1106 = vst [vmem:[%s410 + $0x28] sm:$0xff] %v1074
          %1107 = vst [vmem:[%s410 + $0x30] sm:$0xff] %v1075
          %1108 = vst [vmem:[%s410 + $0x38] sm:$0xff] %v1076
          %1109 = vst [vmem:[%s410 + $0x40] sm:$0xff] %v1077
          %1110 = vst [vmem:[%s410 + $0x48] sm:$0xff] %v1078
          %1111 = vst [vmem:[%s410 + $0x50] sm:$0xff] %v1079
          %1112 = vst [vmem:[%s410 + $0x58] sm:$0xff] %v1080
          %1113 = vst [vmem:[%s410 + $0x60] sm:$0xff] %v1081
          %1114 = vst [vmem:[%s410 + $0x68] sm:$0xff] %v1082
          %1115 = vst [vmem:[%s410 + $0x70] sm:$0xff] %v1083
          %1116 = vst [vmem:[%s410 + $0x78] sm:$0xff] %v1084
          %1117 = vst [vmem:[%s410 + $0x80] sm:$0xff] %v1085
          %1118 = vst [vmem:[%s410 + $0x88] sm:$0xff] %v1086
          %1119 = vst [vmem:[%s410 + $0x90] sm:$0xff] %v1087
          %1120 = vst [vmem:[%s410 + $0x98] sm:$0xff] %v1088
          %1121 = vst [vmem:[%s410 + $0xa0] sm:$0xff] %v1089
          %1122 = vst [vmem:[%s410 + $0xa8] sm:$0xff] %v1090
          %1123 = vst [vmem:[%s410 + $0xb0] sm:$0xff] %v1091
          %1124 = vst [vmem:[%s410 + $0xb8] sm:$0xff] %v1092
          %1125 = vst [vmem:[%s410 + $0xc0] sm:$0xff] %v1093
          %1126 = vst [vmem:[%s410 + $0xc8] sm:$0xff] %v1094
          %1127 = vst [vmem:[%s410 + $0xd0] sm:$0xff] %v1095
          %1128 = vst [vmem:[%s410 + $0xd8] sm:$0xff] %v1096
          %1129 = vst [vmem:[%s410 + $0xe0] sm:$0xff] %v1097
          %1130 = vst [vmem:[%s410 + $0xe8] sm:$0xff] %v1098
          %1131 = vst [vmem:[%s410 + $0xf0] sm:$0xff] %v1099
          %1132 = vst [vmem:[%s410 + $0xf8] sm:$0xff] %v1100
        $region78: #{net_forward.36} parent=65 // pred_fallthru
          _
        %s1133 = smul.u32 32, %s19
        %p1134 = scmp.lt.s32.totalorder %s1133, 63
        %s1135 = scalar_select %p1134, %s1133, 63
        %p1136 = scmp.lt.s32.totalorder %s20, 0
        %s1137 = scalar_select %p1136, %s20, 0
        %s1138 = sadd.s32 %s1137, %s1135
        %s1139 = smul.addr %s1138, 8
        %s1140 = scalar_lea.vmem %s3, %s1139
        // Predicated region
        $region79: #{net_forward.36} parent=65 // pred_check
          %p1141 = pneg %p135
        $region80: #{net_forward.36} parent=65 // pred_check_branch
          %1143 = sbr.rel (%p1141) target = $region82
        $region81: #{net_forward.36} parent=65 // pred_region
          %s1144 = smul.u32 32, %s19
        $region82: #{net_forward.36} parent=65 // pred_fallthru
          _
      $region66: #{net_forward.36} parent=5 // pred_fallthru
        _
      %p1145 = scmp.le.s32.totalorder 2, %s9
      // Predicated region
      $region83: #{net_forward.36} parent=5 // pred_check
        %p1146 = pneg %p1145
      $region84: #{net_forward.36} parent=5 // pred_check_branch
        %1148 = sbr.rel (%p1146) target = $region86
      $region85: #{net_forward.36} parent=5 // pred_region
        %s1149 = ssub.s32 %s9, 2
        // Predicated region
        $region87: #{net_forward.36} parent=85 // pred_check
          %p1150 = pneg %p141
        $region88: #{net_forward.36} parent=85 // pred_check_branch
          %1152 = sbr.rel (%p1150) target = $region90
        $region89: #{net_forward.36} parent=85 // pred_region
          %s1153 = smul.u32 32, %s22
          %p1154 = scmp.lt.s32.totalorder %s1153, 63
          %s1155 = scalar_select %p1154, %s1153, 63
          %p1156 = scmp.lt.s32.totalorder %s23, 0
          %s1157 = scalar_select %p1156, %s23, 0
          %s1158 = sadd.s32 %s1157, %s1155
          %s1159 = smul.addr %s1158, 8
          %s1160 = scalar_lea.vmem %s3, %s1159
        $region90: #{net_forward.36} parent=85 // pred_fallthru
          _
      $region86: #{net_forward.36} parent=5 // pred_fallthru
        _
    $region6: #{net_forward.36} parent=1 // loop_footer
      %s13 = sadd.s32 1, %s9
    $region7: #{net_forward.36} parent=1 // loop_footer_branch
      %8 = sbr.rel target = $region3
    $region8: #{net_forward.36} parent=1 // loop_exit
      _

// kernel: net_forward.38
$region0: #{net_forward.38}
  #allocation0 [shape = 'u32[]', space=smem, size = 0x4, offset = 0x4, fixed_abs, tag = 'smem constant byte address 0x4 - core index']
  #allocation1 [shape = 'u32[144,128]{1,0:T(1,128)}', space=vmem, size = 0x12000, scoped, tag = 'internal scratch']
  #allocation2 [shape = 'f32[256,128]{1,0:T(8,128)}', space=vmem, size = 0x20000, scoped, tag = 'scratch operand']
  %s0 = inlined_call_operand.vmem [shape: bf16[512,3328], index: 0, kind: input, shape index: {}]
  %s1 = inlined_call_operand.vmem [shape: bf16[3328,128], index: 1, kind: input, shape index: {}]
  %s2 = inlined_call_operand.vmem [shape: f32[1,128], index: 2, kind: input, shape index: {}]
  %s3 = inlined_call_operand.vmem [shape: f32[512,128], index: 3, kind: output, shape index: {}]
  %s4 = sld [smem:[#allocation0]]
  $region91: #{net_forward.38} parent=0
    _
  %s6 = ssub.s32 1, %s4
  %s7 = scalar_select 0, %s6, %s4
  $region1: #{net_forward.38} parent=0
    #allocation3 [shape = 'u8[262144]{0}', space=vmem, size = 0x40000, scoped, tag = 'input window, operand 0']
    loop: start=0, step=1, limit=28
    $region2: #{net_forward.38} parent=1 // loop_pre_header
      _
    $region3: #{net_forward.38} parent=1 // loop_header
      %s9 = sphi 0, %s13
      %p10 = scmp.ge.s32.totalorder %s9, 28
      %s16 = sphi 0, %s35
      %s17 = sphi 0, %s31
      %s18 = sphi 0, %s27
      %s19 = sphi 0, %s16
      %s20 = sphi 0, %s17
      %s21 = sphi 0, %s18
      %s22 = sphi 0, %s19
      %s23 = sphi 0, %s20
      %s24 = sphi 0, %s21
      %s40 = sphi 0, %s42
      %s43 = sphi 0, %s40
      %s44 = sphi 0, %s43
      %s60 = sphi 0, %s44
      %s68 = sphi 0, %s70
      %s71 = sphi 0, %s68
      %s72 = sphi 0, %s71
      %s88 = sphi 0, %s72
      %s94 = sphi 0, %s96
      %s97 = sphi 0, %s94
      %s98 = sphi 0, %s97
      %s114 = sphi 0, %s98
      %s122 = sphi 0, %s124
      %s125 = sphi 0, %s122
      %s126 = sphi 0, %s125
      %s142 = sphi 0, %s126
    $region4: #{net_forward.38} parent=1 // loop_header_branch
      %12 = sbr.rel (%p10) target = $region8
    $region5: #{net_forward.38} parent=1 // loop_body
      %s14 = ssub.s32 %s9, 1
      %s15 = ssub.s32 %s9, 2
      %s25 = sadd.s32 1, %s18
      %p26 = scmp.ge.s32.totalorder %s25, 13
      %s27 = scalar_select %p26, 0, %s25
      %s28 = sadd.s32 1, %s17
      %s29 = scalar_select %p26, %s28, %s17
      %p30 = scmp.ge.s32.totalorder %s29, 1
      %s31 = scalar_select %p30, 0, %s29
      %s32 = sadd.s32 1, %s16
      %s33 = scalar_select %p30, %s32, %s16
      %p34 = scmp.ge.s32.totalorder %s33, 2
      %s35 = scalar_select %p34, 0, %s33
      %s36 = ssub.s32 %s16, %s35
      %s37 = ssub.s32 %s18, %s27
      %s38 = sor.u32 %s36, %s37
      %p39 = scmp.eq.s32.totalorder %s38, 0
      %s41 = sadd.s32 %s40, 1
      %s42 = scalar_select %p39, %s40, %s41
      %p45 = pneg %p39
      %p46 = scmp.eq.s32.totalorder %s9, 25
      %p47 = por %p45, %p46
      %p48 = scmp.ne.s32.totalorder %s40, %s43
      %p49 = scmp.eq.s32.totalorder %s9, 0
      %p50 = por %p48, %p49
      %p51 = scmp.ne.s32.totalorder %s40, %s43
      %p52 = scmp.eq.s32.totalorder %s14, 25
      %p53 = por %p51, %p52
      %p54 = scmp.ne.s32.totalorder %s43, %s44
      %p55 = scmp.eq.s32.totalorder %s14, 0
      %p56 = por %p54, %p55
      %p57 = scmp.ne.s32.totalorder %s43, %s44
      %p58 = scmp.eq.s32.totalorder %s15, 25
      %p59 = por %p57, %p58
      %p61 = scmp.ne.s32.totalorder %s44, %s60
      %p62 = scmp.eq.s32.totalorder %s15, 0
      %p63 = por %p61, %p62
      %s64 = ssub.s32 %s18, %s27
      %s65 = ssub.s32 %s17, %s31
      %s66 = sor.u32 %s64, %s65
      %p67 = scmp.eq.s32.totalorder %s66, 0
      %s69 = sadd.s32 %s68, 1
      %s70 = scalar_select %p67, %s68, %s69
      %p73 = pneg %p67
      %p74 = scmp.eq.s32.totalorder %s9, 25
      %p75 = por %p73, %p74
      %p76 = scmp.ne.s32.totalorder %s68, %s71
      %p77 = scmp.eq.s32.totalorder %s9, 0
      %p78 = por %p76, %p77
      %p79 = scmp.ne.s32.totalorder %s68, %s71
      %p80 = scmp.eq.s32.totalorder %s14, 25
      %p81 = por %p79, %p80
      %p82 = scmp.ne.s32.totalorder %s71, %s72
      %p83 = scmp.eq.s32.totalorder %s14, 0
      %p84 = por %p82, %p83
      %p85 = scmp.ne.s32.totalorder %s71, %s72
      %p86 = scmp.eq.s32.totalorder %s15, 25
      %p87 = por %p85, %p86
      %p89 = scmp.ne.s32.totalorder %s72, %s88
      %p90 = scmp.eq.s32.totalorder %s15, 0
      %p91 = por %p89, %p90
      %s92 = ssub.s32 %s17, %s31
      %p93 = scmp.eq.s32.totalorder %s92, 0
      %s95 = sadd.s32 %s94, 1
      %s96 = scalar_select %p93, %s94, %s95
      %p99 = pneg %p93
      %p100 = scmp.eq.s32.totalorder %s9, 25
      %p101 = por %p99, %p100
      %p102 = scmp.ne.s32.totalorder %s94, %s97
      %p103 = scmp.eq.s32.totalorder %s9, 0
      %p104 = por %p102, %p103
      %p105 = scmp.ne.s32.totalorder %s94, %s97
      %p106 = scmp.eq.s32.totalorder %s14, 25
      %p107 = por %p105, %p106
      %p108 = scmp.ne.s32.totalorder %s97, %s98
      %p109 = scmp.eq.s32.totalorder %s14, 0
      %p110 = por %p108, %p109
      %p111 = scmp.ne.s32.totalorder %s97, %s98
      %p112 = scmp.eq.s32.totalorder %s15, 25
      %p113 = por %p111, %p112
      %p115 = scmp.ne.s32.totalorder %s98, %s114
      %p116 = scmp.eq.s32.totalorder %s15, 0
      %p117 = por %p115, %p116
      %s118 = ssub.s32 %s16, %s35
      %s119 = ssub.s32 %s17, %s31
      %s120 = sor.u32 %s118, %s119
      %p121 = scmp.eq.s32.totalorder %s120, 0
      %s123 = sadd.s32 %s122, 1
      %s124 = scalar_select %p121, %s122, %s123
      %p127 = pneg %p121
      %p128 = scmp.eq.s32.totalorder %s9, 25
      %p129 = por %p127, %p128
      %p130 = scmp.ne.s32.totalorder %s122, %s125
      %p131 = scmp.eq.s32.totalorder %s9, 0
      %p132 = por %p130, %p131
      %p133 = scmp.ne.s32.totalorder %s122, %s125
      %p134 = scmp.eq.s32.totalorder %s14, 25
      %p135 = por %p133, %p134
      %p136 = scmp.ne.s32.totalorder %s125, %s126
      %p137 = scmp.eq.s32.totalorder %s14, 0
      %p138 = por %p136, %p137
      %p139 = scmp.ne.s32.totalorder %s125, %s126
      %p140 = scmp.eq.s32.totalorder %s15, 25
      %p141 = por %p139, %p140
      %p143 = scmp.ne.s32.totalorder %s126, %s142
      %p144 = scmp.eq.s32.totalorder %s15, 0
      %p145 = por %p143, %p144
      %p146 = scmp.le.s32.totalorder 1, %s9
      %p147 = scmp.lt.s32.totalorder %s9, 27
      %p148 = pnand %p146, %p147
      %p149 = pneg %p148
      // Predicated region
      $region9: #{net_forward.38} parent=5 // pred_check
        _
      $region10: #{net_forward.38} parent=5 // pred_check_branch
        %151 = sbr.rel (%p148) target = $region12
      $region11: #{net_forward.38} parent=5 // pred_region
        %s152 = ssub.s32 %s9, 1
        // Predicated region
        $region13: #{net_forward.38} parent=11 // pred_check
          %p153 = pneg %p110
        $region14: #{net_forward.38} parent=11 // pred_check_branch
          %155 = sbr.rel (%p153) target = $region16
        $region15: #{net_forward.38} parent=11 // pred_region
          %p156 = scmp.lt.s32.totalorder %s20, 0
          %s157 = scalar_select %p156, %s20, 0
          %s158 = scalar_lea.vmem %s2, %s157
        $region16: #{net_forward.38} parent=11 // pred_fallthru
          _
      $region12: #{net_forward.38} parent=5 // pred_fallthru
        _
      %p159 = scmp.lt.s32.totalorder %s9, 26
      // Predicated region
      $region17: #{net_forward.38} parent=5 // pred_check
        %p160 = pneg %p159
      $region18: #{net_forward.38} parent=5 // pred_check_branch
        %162 = sbr.rel (%p160) target = $region20
      $region19: #{net_forward.38} parent=5 // pred_region
        // Predicated region
        $region21: #{net_forward.38} parent=19 // pred_check
          %p163 = pneg %p50
        $region22: #{net_forward.38} parent=19 // pred_check_branch
          %165 = sbr.rel (%p163) target = $region24
        $region23: #{net_forward.38} parent=19 // pred_region
          %s166 = sand.u32 %s40, 1
          %s167 = sand.u32 %s40, 1
          %s168 = smul.addr %s167, 256
          %s169 = scalar_lea.vmem [#allocation3], %s168
          %s170 = smul.u32 32, %s16
          %s171 = smul.u32 2, %s18
          %s172 = smul.addr %s170, 26
          %s173 = sadd.s32 %s171, %s172
          %s174 = smul.addr %s173, 4
          %s175 = scalar_lea.vmem %s0, %s174
          // Predicated region
          $region25: #{net_forward.38} parent=23 // pred_check
            _
          $region26: #{net_forward.38} parent=23 // pred_check_branch
            %177 = sbr.rel (0) target = $region28
          $region27: #{net_forward.38} parent=23 // pred_region
            // Predicated region
            $region29: #{net_forward.38} parent=27 // pred_check
              _
            $region30: #{net_forward.38} parent=27 // pred_check_branch
              %179 = sbr.rel (0) target = $region32
            $region31: #{net_forward.38} parent=27 // pred_region
              // Predicated region
              $region44: #{net_forward.38} parent=31 // pred_check
                _
              $region45: #{net_forward.38} parent=31 // pred_check_branch
                %256 = sbr.rel (0) target = $region47
              $region46: #{net_forward.38} parent=31 // pred_region
                loop: start=0, step=1, limit=1
                $region48: #{net_forward.38} parent=46 // loop_pre_header
                  _
                $region49: #{net_forward.38} parent=46 // loop_header
                  %s258 = sphi 0, %s262
                  %p259 = scmp.ge.s32.totalorder %s258, 1
                  %s263 = sphi %s175, %s175
                  %s264 = sphi %s169, %s169
                $region50: #{net_forward.38} parent=46 // loop_header_branch
                  %261 = sbr.rel (%p259) target = $region54
                $region51: #{net_forward.38} parent=46 // loop_body
                  %v265 = vld [vmem:[%s263] sm:$0xff]
                  %266 = vst [vmem:[%s264] sm:$0xff] %v265
                  %v267 = vld [vmem:[%s263 + $0x68] sm:$0xff]
                  %268 = vst [vmem:[%s264 + $0x8] sm:$0xff] %v267
                  %v269 = vld [vmem:[%s263 + $0xd0] sm:$0xff]
                  %270 = vst [vmem:[%s264 + $0x10] sm:$0xff] %v269
                  %v271 = vld [vmem:[%s263 + $0x138] sm:$0xff]
                  %272 = vst [vmem:[%s264 + $0x18] sm:$0xff] %v271
                  %v273 = vld [vmem:[%s263 + $0x1a0] sm:$0xff]
                  %274 = vst [vmem:[%s264 + $0x20] sm:$0xff] %v273
                  %v275 = vld [vmem:[%s263 + $0x208] sm:$0xff]
                  %276 = vst [vmem:[%s264 + $0x28] sm:$0xff] %v275
                  %v277 = vld [vmem:[%s263 + $0x270] sm:$0xff]
                  %278 = vst [vmem:[%s264 + $0x30] sm:$0xff] %v277
                  %v279 = vld [vmem:[%s263 + $0x2d8] sm:$0xff]
                  %280 = vst [vmem:[%s264 + $0x38] sm:$0xff] %v279
                  %v281 = vld [vmem:[%s263 + $0x340] sm:$0xff]
                  %282 = vst [vmem:[%s264 + $0x40] sm:$0xff] %v281
                  %v283 = vld [vmem:[%s263 + $0x3a8] sm:$0xff]
                  %284 = vst [vmem:[%s264 + $0x48] sm:$0xff] %v283
                  %v285 = vld [vmem:[%s263 + $0x410] sm:$0xff]
                  %286 = vst [vmem:[%s264 + $0x50] sm:$0xff] %v285
                  %v287 = vld [vmem:[%s263 + $0x478] sm:$0xff]
                  %288 = vst [vmem:[%s264 + $0x58] sm:$0xff] %v287
                  %v289 = vld [vmem:[%s263 + $0x4e0] sm:$0xff]
                  %290 = vst [vmem:[%s264 + $0x60] sm:$0xff] %v289
                  %v291 = vld [vmem:[%s263 + $0x548] sm:$0xff]
                  %292 = vst [vmem:[%s264 + $0x68] sm:$0xff] %v291
                  %v293 = vld [vmem:[%s263 + $0x5b0] sm:$0xff]
                  %294 = vst [vmem:[%s264 + $0x70] sm:$0xff] %v293
                  %v295 = vld [vmem:[%s263 + $0x618] sm:$0xff]
                  %296 = vst [vmem:[%s264 + $0x78] sm:$0xff] %v295
                  %v297 = vld [vmem:[%s263 + $0x680] sm:$0xff]
                  %298 = vst [vmem:[%s264 + $0x80] sm:$0xff] %v297
                  %v299 = vld [vmem:[%s263 + $0x6e8] sm:$0xff]
                  %300 = vst [vmem:[%s264 + $0x88] sm:$0xff] %v299
                  %v301 = vld [vmem:[%s263 + $0x750] sm:$0xff]
                  %302 = vst [vmem:[%s264 + $0x90] sm:$0xff] %v301
                  %v303 = vld [vmem:[%s263 + $0x7b8] sm:$0xff]
                  %304 = vst [vmem:[%s264 + $0x98] sm:$0xff] %v303
                  %v305 = vld [vmem:[%s263 + $0x820] sm:$0xff]
                  %306 = vst [vmem:[%s264 + $0xa0] sm:$0xff] %v305
                  %v307 = vld [vmem:[%s263 + $0x888] sm:$0xff]
                  %308 = vst [vmem:[%s264 + $0xa8] sm:$0xff] %v307
                  %v309 = vld [vmem:[%s263 + $0x8f0] sm:$0xff]
                  %310 = vst [vmem:[%s264 + $0xb0] sm:$0xff] %v309
                  %v311 = vld [vmem:[%s263 + $0x958] sm:$0xff]
                  %312 = vst [vmem:[%s264 + $0xb8] sm:$0xff] %v311
                  %v313 = vld [vmem:[%s263 + $0x9c0] sm:$0xff]
                  %314 = vst [vmem:[%s264 + $0xc0] sm:$0xff] %v313
                  %v315 = vld [vmem:[%s263 + $0xa28] sm:$0xff]
                  %316 = vst [vmem:[%s264 + $0xc8] sm:$0xff] %v315
                  %v317 = vld [vmem:[%s263 + $0xa90] sm:$0xff]
                  %318 = vst [vmem:[%s264 + $0xd0] sm:$0xff] %v317
                  %v319 = vld [vmem:[%s263 + $0xaf8] sm:$0xff]
                  %320 = vst [vmem:[%s264 + $0xd8] sm:$0xff] %v319
                  %v321 = vld [vmem:[%s263 + $0xb60] sm:$0xff]
                  %322 = vst [vmem:[%s264 + $0xe0] sm:$0xff] %v321
                  %v323 = vld [vmem:[%s263 + $0xbc8] sm:$0xff]
                  %324 = vst [vmem:[%s264 + $0xe8] sm:$0xff] %v323
                  %v325 = vld [vmem:[%s263 + $0xc30] sm:$0xff]
                  %326 = vst [vmem:[%s264 + $0xf0] sm:$0xff] %v325
                  %v327 = vld [vmem:[%s263 + $0xc98] sm:$0xff]
                  %328 = vst [vmem:[%s264 + $0xf8] sm:$0xff] %v327
                $region52: #{net_forward.38} parent=46 // loop_footer
                  %s262 = sadd.s32 1, %s258
                $region53: #{net_forward.38} parent=46 // loop_footer_branch
                  %257 = sbr.rel target = $region49
                $region54: #{net_forward.38} parent=46 // loop_exit
                  _
              $region47: #{net_forward.38} parent=31 // pred_fallthru
                _
              // Predicated region
              $region55: #{net_forward.38} parent=31 // pred_check
                _
              $region56: #{net_forward.38} parent=31 // pred_check_branch
                %330 = sbr.rel target = $region58
              $region57: #{net_forward.38} parent=31 // pred_region
                _
              $region58: #{net_forward.38} parent=31 // pred_fallthru
                _
            $region32: #{net_forward.38} parent=27 // pred_fallthru
              _
            // Predicated region
            $region33: #{net_forward.38} parent=27 // pred_check
              _
            $region34: #{net_forward.38} parent=27 // pred_check_branch
              %181 = sbr.rel target = $region36
            $region35: #{net_forward.38} parent=27 // pred_region
              loop: start=0, step=1, limit=1
              $region37: #{net_forward.38} parent=35 // loop_pre_header
                _
              $region38: #{net_forward.38} parent=35 // loop_header
                %s184 = sphi 0, %s188
                %p185 = scmp.ge.s32.totalorder %s184, 1
                %s189 = sphi %s175, %s175
                %s190 = sphi %s169, %s169
              $region39: #{net_forward.38} parent=35 // loop_header_branch
                %187 = sbr.rel (%p185) target = $region43
              $region40: #{net_forward.38} parent=35 // loop_body
                %v191 = vld [vmem:[%s189] sm:$0xff]
                %192 = vst [vmem:[%s190] sm:$0xff] %v191
                %v193 = vld [vmem:[%s189 + $0x68] sm:$0xff]
                %194 = vst [vmem:[%s190 + $0x8] sm:$0xff] %v193
                %v195 = vld [vmem:[%s189 + $0xd0] sm:$0xff]
                %196 = vst [vmem:[%s190 + $0x10] sm:$0xff] %v195
                %v197 = vld [vmem:[%s189 + $0x138] sm:$0xff]
                %198 = vst [vmem:[%s190 + $0x18] sm:$0xff] %v197
                %v199 = vld [vmem:[%s189 + $0x1a0] sm:$0xff]
                %200 = vst [vmem:[%s190 + $0x20] sm:$0xff] %v199
                %v201 = vld [vmem:[%s189 + $0x208] sm:$0xff]
                %202 = vst [vmem:[%s190 + $0x28] sm:$0xff] %v201
                %v203 = vld [vmem:[%s189 + $0x270] sm:$0xff]
                %204 = vst [vmem:[%s190 + $0x30] sm:$0xff] %v203
                %v205 = vld [vmem:[%s189 + $0x2d8] sm:$0xff]
                %206 = vst [vmem:[%s190 + $0x38] sm:$0xff] %v205
                %v207 = vld [vmem:[%s189 + $0x340] sm:$0xff]
                %208 = vst [vmem:[%s190 + $0x40] sm:$0xff] %v207
                %v209 = vld [vmem:[%s189 + $0x3a8] sm:$0xff]
                %210 = vst [vmem:[%s190 + $0x48] sm:$0xff] %v209
                %v211 = vld [vmem:[%s189 + $0x410] sm:$0xff]
                %212 = vst [vmem:[%s190 + $0x50] sm:$0xff] %v211
                %v213 = vld [vmem:[%s189 + $0x478] sm:$0xff]
                %214 = vst [vmem:[%s190 + $0x58] sm:$0xff] %v213
                %v215 = vld [vmem:[%s189 + $0x4e0] sm:$0xff]
                %216 = vst [vmem:[%s190 + $0x60] sm:$0xff] %v215
                %v217 = vld [vmem:[%s189 + $0x548] sm:$0xff]
                %218 = vst [vmem:[%s190 + $0x68] sm:$0xff] %v217
                %v219 = vld [vmem:[%s189 + $0x5b0] sm:$0xff]
                %220 = vst [vmem:[%s190 + $0x70] sm:$0xff] %v219
                %v221 = vld [vmem:[%s189 + $0x618] sm:$0xff]
                %222 = vst [vmem:[%s190 + $0x78] sm:$0xff] %v221
                %v223 = vld [vmem:[%s189 + $0x680] sm:$0xff]
                %224 = vst [vmem:[%s190 + $0x80] sm:$0xff] %v223
                %v225 = vld [vmem:[%s189 + $0x6e8] sm:$0xff]
                %226 = vst [vmem:[%s190 + $0x88] sm:$0xff] %v225
                %v227 = vld [vmem:[%s189 + $0x750] sm:$0xff]
                %228 = vst [vmem:[%s190 + $0x90] sm:$0xff] %v227
                %v229 = vld [vmem:[%s189 + $0x7b8] sm:$0xff]
                %230 = vst [vmem:[%s190 + $0x98] sm:$0xff] %v229
                %v231 = vld [vmem:[%s189 + $0x820] sm:$0xff]
                %232 = vst [vmem:[%s190 + $0xa0] sm:$0xff] %v231
                %v233 = vld [vmem:[%s189 + $0x888] sm:$0xff]
                %234 = vst [vmem:[%s190 + $0xa8] sm:$0xff] %v233
                %v235 = vld [vmem:[%s189 + $0x8f0] sm:$0xff]
                %236 = vst [vmem:[%s190 + $0xb0] sm:$0xff] %v235
                %v237 = vld [vmem:[%s189 + $0x958] sm:$0xff]
                %238 = vst [vmem:[%s190 + $0xb8] sm:$0xff] %v237
                %v239 = vld [vmem:[%s189 + $0x9c0] sm:$0xff]
                %240 = vst [vmem:[%s190 + $0xc0] sm:$0xff] %v239
                %v241 = vld [vmem:[%s189 + $0xa28] sm:$0xff]
                %242 = vst [vmem:[%s190 + $0xc8] sm:$0xff] %v241
                %v243 = vld [vmem:[%s189 + $0xa90] sm:$0xff]
                %244 = vst [vmem:[%s190 + $0xd0] sm:$0xff] %v243
                %v245 = vld [vmem:[%s189 + $0xaf8] sm:$0xff]
                %246 = vst [vmem:[%s190 + $0xd8] sm:$0xff] %v245
                %v247 = vld [vmem:[%s189 + $0xb60] sm:$0xff]
                %248 = vst [vmem:[%s190 + $0xe0] sm:$0xff] %v247
                %v249 = vld [vmem:[%s189 + $0xbc8] sm:$0xff]
                %250 = vst [vmem:[%s190 + $0xe8] sm:$0xff] %v249
                %v251 = vld [vmem:[%s189 + $0xc30] sm:$0xff]
                %252 = vst [vmem:[%s190 + $0xf0] sm:$0xff] %v251
                %v253 = vld [vmem:[%s189 + $0xc98] sm:$0xff]
                %254 = vst [vmem:[%s190 + $0xf8] sm:$0xff] %v253
              $region41: #{net_forward.38} parent=35 // loop_footer
                %s188 = sadd.s32 1, %s184
              $region42: #{net_forward.38} parent=35 // loop_footer_branch
                %183 = sbr.rel target = $region38
              $region43: #{net_forward.38} parent=35 // loop_exit
                _
            $region36: #{net_forward.38} parent=27 // pred_fallthru
              _
          $region28: #{net_forward.38} parent=23 // pred_fallthru
            _
          %331 = vnop
        $region24: #{net_forward.38} parent=19 // pred_fallthru
          _
        // Predicated region
        $region59: #{net_forward.38} parent=19 // pred_check
          %p332 = pneg %p78
        $region60: #{net_forward.38} parent=19 // pred_check_branch
          %334 = sbr.rel (%p332) target = $region62
        $region61: #{net_forward.38} parent=19 // pred_region
          %s335 = smul.u32 32, %s18
          %p336 = scmp.lt.s32.totalorder %s335, 415
          %s337 = scalar_select %p336, %s335, 415
          %p338 = scmp.lt.s32.totalorder %s17, 0
          %s339 = scalar_select %p338, %s17, 0
          %s340 = sadd.s32 %s339, %s337
          %s341 = smul.addr %s340, 4
          %s342 = scalar_lea.vmem %s1, %s341
          %s343 = smul.u32 32, %s18
        $region62: #{net_forward.38} parent=19 // pred_fallthru
          _
      $region20: #{net_forward.38} parent=5 // pred_fallthru
        _
      %p344 = scmp.le.s32.totalorder 1, %s9
      %p345 = scmp.lt.s32.totalorder %s9, 27
      %p346 = pnand %p344, %p345
      %p347 = pneg %p346
      // Predicated region
      $region63: #{net_forward.38} parent=5 // pred_check
        _
      $region64: #{net_forward.38} parent=5 // pred_check_branch
        %349 = sbr.rel (%p346) target = $region66
      $region65: #{net_forward.38} parent=5 // pred_region
        %s350 = ssub.s32 %s9, 1
        %s351 = sand.u32 %s43, 1
        %s352 = sand.u32 %s43, 1
        %s353 = smul.addr %s352, 256
        %s354 = scalar_lea.vmem [#allocation3], %s353
        // Predicated region
        $region67: #{net_forward.38} parent=65 // pred_check
          %p355 = pneg %p56
        $region68: #{net_forward.38} parent=65 // pred_check_branch
          %357 = sbr.rel (%p355) target = $region70
        $region69: #{net_forward.38} parent=65 // pred_region
          _
        $region70: #{net_forward.38} parent=65 // pred_fallthru
          _
        %s358 = sand.u32 %s43, 1
        %s359 = sand.u32 %s43, 1
        %s360 = smul.addr %s359, 256
        %s361 = scalar_lea.vmem [#allocation3], %s360
        %p362 = pneg %p56
        %p363 = pneg %p53
        %s364 = smul.u32 32, %s21
        %p365 = scmp.lt.s32.totalorder %s364, 415
        %s366 = scalar_select %p365, %s364, 415
        %p367 = scmp.lt.s32.totalorder %s20, 0
        %s368 = scalar_select %p367, %s20, 0
        %s369 = sadd.s32 %s368, %s366
        %s370 = smul.addr %s369, 4
        %s371 = scalar_lea.vmem %s1, %s370
        %p372 = pneg %p84
        %p373 = pneg %p81
        %p374 = scmp.lt.s32.totalorder %s20, 0
        %s375 = scalar_select %p374, %s20, 0
        %s376 = scalar_lea.vmem %s2, %s375
        %p377 = pneg %p110
        %p378 = pneg %p107
        %p379 = pneg %p138
        %p380 = pneg %p135
        %s381 = smul.u32 32, %s19
        %p382 = scmp.lt.s32.totalorder %s381, 63
        %s383 = scalar_select %p382, %s381, 63
        %p384 = scmp.lt.s32.totalorder %s20, 0
        %s385 = scalar_select %p384, %s20, 0
        %s386 = sadd.s32 %s385, %s383
        %s387 = smul.addr %s386, 8
        %s388 = scalar_lea.vmem %s3, %s387
        %s389 = smul.u32 32, %s19
        %s390 = smul.u32 2, %s21
        %s391 = smul.u32 32, %s21
        %p392 = scmp.lt.s32.totalorder %s391, 415
        %s393 = scalar_select %p392, %s391, 415
        %p394 = scmp.lt.s32.totalorder %s20, 0
        %s395 = scalar_select %p394, %s20, 0
        %s396 = sadd.s32 %s395, %s393
        %s397 = smul.addr %s396, 4
        %s398 = scalar_lea.vmem %s1, %s397
        %s399 = smul.u32 32, %s21
        %p400 = scmp.lt.s32.totalorder %s20, 0
        %s401 = scalar_select %p400, %s20, 0
        %s402 = scalar_lea.vmem %s2, %s401
        %s403 = smul.u32 32, %s19
        %p404 = scmp.lt.s32.totalorder %s403, 63
        %s405 = scalar_select %p404, %s403, 63
        %p406 = scmp.lt.s32.totalorder %s20, 0
        %s407 = scalar_select %p406, %s20, 0
        %s408 = sadd.s32 %s407, %s405
        %s409 = smul.addr %s408, 8
        %s410 = scalar_lea.vmem %s3, %s409
        %s411 = smul.u32 32, %s19
        %p413 = scmp.eq.s32.totalorder %s21, 0
        // Predicated region
        $region71: #{net_forward.38} parent=65 // pred_check
          %p414 = pneg %p413
        $region72: #{net_forward.38} parent=65 // pred_check_branch
          %416 = sbr.rel (%p414) target = $region74
        $region73: #{net_forward.38} parent=65 // pred_region
          %417 = vst [vmem:[#allocation2] sm:$0xff] 0.0
          %418 = vst [vmem:[#allocation2 + $0x8] sm:$0xff] 0.0
          %419 = vst [vmem:[#allocation2 + $0x10] sm:$0xff] 0.0
          %420 = vst [vmem:[#allocation2 + $0x18] sm:$0xff] 0.0
          %421 = vst [vmem:[#allocation2 + $0x20] sm:$0xff] 0.0
          %422 = vst [vmem:[#allocation2 + $0x28] sm:$0xff] 0.0
          %423 = vst [vmem:[#allocation2 + $0x30] sm:$0xff] 0.0
          %424 = vst [vmem:[#allocation2 + $0x38] sm:$0xff] 0.0
          %425 = vst [vmem:[#allocation2 + $0x40] sm:$0xff] 0.0
          %426 = vst [vmem:[#allocation2 + $0x48] sm:$0xff] 0.0
          %427 = vst [vmem:[#allocation2 + $0x50] sm:$0xff] 0.0
          %428 = vst [vmem:[#allocation2 + $0x58] sm:$0xff] 0.0
          %429 = vst [vmem:[#allocation2 + $0x60] sm:$0xff] 0.0
          %430 = vst [vmem:[#allocation2 + $0x68] sm:$0xff] 0.0
          %431 = vst [vmem:[#allocation2 + $0x70] sm:$0xff] 0.0
          %432 = vst [vmem:[#allocation2 + $0x78] sm:$0xff] 0.0
          %433 = vst [vmem:[#allocation2 + $0x80] sm:$0xff] 0.0
          %434 = vst [vmem:[#allocation2 + $0x88] sm:$0xff] 0.0
          %435 = vst [vmem:[#allocation2 + $0x90] sm:$0xff] 0.0
          %436 = vst [vmem:[#allocation2 + $0x98] sm:$0xff] 0.0
          %437 = vst [vmem:[#allocation2 + $0xa0] sm:$0xff] 0.0
          %438 = vst [vmem:[#allocation2 + $0xa8] sm:$0xff] 0.0
          %439 = vst [vmem:[#allocation2 + $0xb0] sm:$0xff] 0.0
          %440 = vst [vmem:[#allocation2 + $0xb8] sm:$0xff] 0.0
          %441 = vst [vmem:[#allocation2 + $0xc0] sm:$0xff] 0.0
          %442 = vst [vmem:[#allocation2 + $0xc8] sm:$0xff] 0.0
          %443 = vst [vmem:[#allocation2 + $0xd0] sm:$0xff] 0.0
          %444 = vst [vmem:[#allocation2 + $0xd8] sm:$0xff] 0.0
          %445 = vst [vmem:[#allocation2 + $0xe0] sm:$0xff] 0.0
          %446 = vst [vmem:[#allocation2 + $0xe8] sm:$0xff] 0.0
          %447 = vst [vmem:[#allocation2 + $0xf0] sm:$0xff] 0.0
          %448 = vst [vmem:[#allocation2 + $0xf8] sm:$0xff] 0.0
        $region74: #{net_forward.38} parent=65 // pred_fallthru
          _
        %v449 = vld [vmem:[#allocation2] sm:$0xff]
        %v450 = vld [vmem:[#allocation2 + $0x8] sm:$0xff]
        %v451 = vld [vmem:[#allocation2 + $0x10] sm:$0xff]
        %v452 = vld [vmem:[#allocation2 + $0x18] sm:$0xff]
        %v453 = vld [vmem:[#allocation2 + $0x20] sm:$0xff]
        %v454 = vld [vmem:[#allocation2 + $0x28] sm:$0xff]
        %v455 = vld [vmem:[#allocation2 + $0x30] sm:$0xff]
        %v456 = vld [vmem:[#allocation2 + $0x38] sm:$0xff]
        %v457 = vld [vmem:[#allocation2 + $0x40] sm:$0xff]
        %v458 = vld [vmem:[#allocation2 + $0x48] sm:$0xff]
        %v459 = vld [vmem:[#allocation2 + $0x50] sm:$0xff]
        %v460 = vld [vmem:[#allocation2 + $0x58] sm:$0xff]
        %v461 = vld [vmem:[#allocation2 + $0x60] sm:$0xff]
        %v462 = vld [vmem:[#allocation2 + $0x68] sm:$0xff]
        %v463 = vld [vmem:[#allocation2 + $0x70] sm:$0xff]
        %v464 = vld [vmem:[#allocation2 + $0x78] sm:$0xff]
        %v465 = vld [vmem:[#allocation2 + $0x80] sm:$0xff]
        %v466 = vld [vmem:[#allocation2 + $0x88] sm:$0xff]
        %v467 = vld [vmem:[#allocation2 + $0x90] sm:$0xff]
        %v468 = vld [vmem:[#allocation2 + $0x98] sm:$0xff]
        %v469 = vld [vmem:[#allocation2 + $0xa0] sm:$0xff]
        %v470 = vld [vmem:[#allocation2 + $0xa8] sm:$0xff]
        %v471 = vld [vmem:[#allocation2 + $0xb0] sm:$0xff]
        %v472 = vld [vmem:[#allocation2 + $0xb8] sm:$0xff]
        %v473 = vld [vmem:[#allocation2 + $0xc0] sm:$0xff]
        %v474 = vld [vmem:[#allocation2 + $0xc8] sm:$0xff]
        %v475 = vld [vmem:[#allocation2 + $0xd0] sm:$0xff]
        %v476 = vld [vmem:[#allocation2 + $0xd8] sm:$0xff]
        %v477 = vld [vmem:[#allocation2 + $0xe0] sm:$0xff]
        %v478 = vld [vmem:[#allocation2 + $0xe8] sm:$0xff]
        %v479 = vld [vmem:[#allocation2 + $0xf0] sm:$0xff]
        %v480 = vld [vmem:[#allocation2 + $0xf8] sm:$0xff]
        %v481 = vld [vmem:[%s354] sm:$0xff]
        %v482 = vld [vmem:[%s354 + $0x8] sm:$0xff]
        %v483 = vld [vmem:[%s354 + $0x10] sm:$0xff]
        %v484 = vld [vmem:[%s354 + $0x18] sm:$0xff]
        %v485 = vld [vmem:[%s354 + $0x20] sm:$0xff]
        %v486 = vld [vmem:[%s354 + $0x28] sm:$0xff]
        %v487 = vld [vmem:[%s354 + $0x30] sm:$0xff]
        %v488 = vld [vmem:[%s354 + $0x38] sm:$0xff]
        %v489 = vld [vmem:[%s354 + $0x40] sm:$0xff]
        %v490 = vld [vmem:[%s354 + $0x48] sm:$0xff]
        %v491 = vld [vmem:[%s354 + $0x50] sm:$0xff]
        %v492 = vld [vmem:[%s354 + $0x58] sm:$0xff]
        %v493 = vld [vmem:[%s354 + $0x60] sm:$0xff]
        %v494 = vld [vmem:[%s354 + $0x68] sm:$0xff]
        %v495 = vld [vmem:[%s354 + $0x70] sm:$0xff]
        %v496 = vld [vmem:[%s354 + $0x78] sm:$0xff]
        %v497 = vld [vmem:[%s354 + $0x80] sm:$0xff]
        %v498 = vld [vmem:[%s354 + $0x88] sm:$0xff]
        %v499 = vld [vmem:[%s354 + $0x90] sm:$0xff]
        %v500 = vld [vmem:[%s354 + $0x98] sm:$0xff]
        %v501 = vld [vmem:[%s354 + $0xa0] sm:$0xff]
        %v502 = vld [vmem:[%s354 + $0xa8] sm:$0xff]
        %v503 = vld [vmem:[%s354 + $0xb0] sm:$0xff]
        %v504 = vld [vmem:[%s354 + $0xb8] sm:$0xff]
        %v505 = vld [vmem:[%s354 + $0xc0] sm:$0xff]
        %v506 = vld [vmem:[%s354 + $0xc8] sm:$0xff]
        %v507 = vld [vmem:[%s354 + $0xd0] sm:$0xff]
        %v508 = vld [vmem:[%s354 + $0xd8] sm:$0xff]
        %v509 = vld [vmem:[%s354 + $0xe0] sm:$0xff]
        %v510 = vld [vmem:[%s354 + $0xe8] sm:$0xff]
        %v511 = vld [vmem:[%s354 + $0xf0] sm:$0xff]
        %v512 = vld [vmem:[%s354 + $0xf8] sm:$0xff]
        %v513 = vld [vmem:[%s398] sm:$0xf]
        %v514 = vld [vmem:[%s398 + $0x4] sm:$0xf]
        %v515 = vld [vmem:[%s398 + $0x8] sm:$0xf]
        %v516 = vld [vmem:[%s398 + $0xc] sm:$0xf]
        %v517 = vld [vmem:[%s398 + $0x10] sm:$0xf]
        %v518 = vld [vmem:[%s398 + $0x14] sm:$0xf]
        %v519 = vld [vmem:[%s398 + $0x18] sm:$0xf]
        %v520 = vld [vmem:[%s398 + $0x1c] sm:$0xf]
        %v521 = vld [vmem:[%s398 + $0x20] sm:$0xf]
        %v522 = vld [vmem:[%s398 + $0x24] sm:$0xf]
        %v523 = vld [vmem:[%s398 + $0x28] sm:$0xf]
        %v524 = vld [vmem:[%s398 + $0x2c] sm:$0xf]
        %v525 = vld [vmem:[%s398 + $0x30] sm:$0xf]
        %v526 = vld [vmem:[%s398 + $0x34] sm:$0xf]
        %v527 = vld [vmem:[%s398 + $0x38] sm:$0xf]
        %v528 = vld [vmem:[%s398 + $0x3c] sm:$0xf]
        %v529 = vld [vmem:[%s398 + $0x40] sm:$0xf]
        %v530 = vld [vmem:[%s398 + $0x44] sm:$0xf]
        %v531 = vld [vmem:[%s398 + $0x48] sm:$0xf]
        %v532 = vld [vmem:[%s398 + $0x4c] sm:$0xf]
        %v533 = vld [vmem:[%s398 + $0x50] sm:$0xf]
        %v534 = vld [vmem:[%s398 + $0x54] sm:$0xf]
        %v535 = vld [vmem:[%s398 + $0x58] sm:$0xf]
        %v536 = vld [vmem:[%s398 + $0x5c] sm:$0xf]
        %v537 = vld [vmem:[%s398 + $0x60] sm:$0xf]
        %v538 = vld [vmem:[%s398 + $0x64] sm:$0xf]
        %v539 = vld [vmem:[%s398 + $0x68] sm:$0xf]
        %v540 = vld [vmem:[%s398 + $0x6c] sm:$0xf]
        %v541 = vld [vmem:[%s398 + $0x70] sm:$0xf]
        %v542 = vld [vmem:[%s398 + $0x74] sm:$0xf]
        %v543 = vld [vmem:[%s398 + $0x78] sm:$0xf]
        %v544 = vld [vmem:[%s398 + $0x7c] sm:$0xf]
        %v577 = vunpack.c.l.b16 %v481
        %v578 = vunpack.c.h.b16 %v481
        %v579 = vunpack.c.l.b16 %v482
        %v580 = vunpack.c.h.b16 %v482
        %v581 = vunpack.c.l.b16 %v483
        %v582 = vunpack.c.h.b16 %v483
        %v583 = vunpack.c.l.b16 %v484
        %v584 = vunpack.c.h.b16 %v484
        %v585 = vunpack.c.l.b16 %v485
        %v586 = vunpack.c.h.b16 %v485
        %v587 = vunpack.c.l.b16 %v486
        %v588 = vunpack.c.h.b16 %v486
        %v589 = vunpack.c.l.b16 %v487
        %v590 = vunpack.c.h.b16 %v487
        %v591 = vunpack.c.l.b16 %v488
        %v592 = vunpack.c.h.b16 %v488
        %v593 = vunpack.c.l.b16 %v489
        %v594 = vunpack.c.h.b16 %v489
        %v595 = vunpack.c.l.b16 %v490
        %v596 = vunpack.c.h.b16 %v490
        %v597 = vunpack.c.l.b16 %v491
        %v598 = vunpack.c.h.b16 %v491
        %v599 = vunpack.c.l.b16 %v492
        %v600 = vunpack.c.h.b16 %v492
        %v601 = vunpack.c.l.b16 %v493
        %v602 = vunpack.c.h.b16 %v493
        %v603 = vunpack.c.l.b16 %v494
        %v604 = vunpack.c.h.b16 %v494
        %v605 = vunpack.c.l.b16 %v495
        %v606 = vunpack.c.h.b16 %v495
        %v607 = vunpack.c.l.b16 %v496
        %v608 = vunpack.c.h.b16 %v496
        %v609 = vunpack.c.l.b16 %v497
        %v610 = vunpack.c.h.b16 %v497
        %v611 = vunpack.c.l.b16 %v498
        %v612 = vunpack.c.h.b16 %v498
        %v613 = vunpack.c.l.b16 %v499
        %v614 = vunpack.c.h.b16 %v499
        %v615 = vunpack.c.l.b16 %v500
        %v616 = vunpack.c.h.b16 %v500
        %v617 = vunpack.c.l.b16 %v501
        %v618 = vunpack.c.h.b16 %v501
        %v619 = vunpack.c.l.b16 %v502
        %v620 = vunpack.c.h.b16 %v502
        %v621 = vunpack.c.l.b16 %v503
        %v622 = vunpack.c.h.b16 %v503
        %v623 = vunpack.c.l.b16 %v504
        %v624 = vunpack.c.h.b16 %v504
        %v625 = vunpack.c.l.b16 %v505
        %v626 = vunpack.c.h.b16 %v505
        %v627 = vunpack.c.l.b16 %v506
        %v628 = vunpack.c.h.b16 %v506
        %v629 = vunpack.c.l.b16 %v507
        %v630 = vunpack.c.h.b16 %v507
        %v631 = vunpack.c.l.b16 %v508
        %v632 = vunpack.c.h.b16 %v508
        %v633 = vunpack.c.l.b16 %v509
        %v634 = vunpack.c.h.b16 %v509
        %v635 = vunpack.c.l.b16 %v510
        %v636 = vunpack.c.h.b16 %v510
        %v637 = vunpack.c.l.b16 %v511
        %v638 = vunpack.c.h.b16 %v511
        %v639 = vunpack.c.l.b16 %v512
        %v640 = vunpack.c.h.b16 %v512
        %v641 = vpack.c.b16 %v579, %v577
        %v642 = vpack.c.b16 %v580, %v578
        %v643 = vpack.c.b16 %v583, %v581
        %v644 = vpack.c.b16 %v584, %v582
        %v645 = vpack.c.b16 %v587, %v585
        %v646 = vpack.c.b16 %v588, %v586
        %v647 = vpack.c.b16 %v591, %v589
        %v648 = vpack.c.b16 %v592, %v590
        %v649 = vpack.c.b16 %v595, %v593
        %v650 = vpack.c.b16 %v596, %v594
        %v651 = vpack.c.b16 %v599, %v597
        %v652 = vpack.c.b16 %v600, %v598
        %v653 = vpack.c.b16 %v603, %v601
        %v654 = vpack.c.b16 %v604, %v602
        %v655 = vpack.c.b16 %v607, %v605
        %v656 = vpack.c.b16 %v608, %v606
        %v657 = vpack.c.b16 %v611, %v609
        %v658 = vpack.c.b16 %v612, %v610
        %v659 = vpack.c.b16 %v615, %v613
        %v660 = vpack.c.b16 %v616, %v614
        %v661 = vpack.c.b16 %v619, %v617
        %v662 = vpack.c.b16 %v620, %v618
        %v663 = vpack.c.b16 %v623, %v621
        %v664 = vpack.c.b16 %v624, %v622
        %v665 = vpack.c.b16 %v627, %v625
        %v666 = vpack.c.b16 %v628, %v626
        %v667 = vpack.c.b16 %v631, %v629
        %v668 = vpack.c.b16 %v632, %v630
        %v669 = vpack.c.b16 %v635, %v633
        %v670 = vpack.c.b16 %v636, %v634
        %v671 = vpack.c.b16 %v639, %v637
        %v672 = vpack.c.b16 %v640, %v638
        %v737 = vunpack.c.l.b16 %v513
        %v738 = vunpack.c.l.b16 %v514
        %v739 = vunpack.c.l.b16 %v515
        %v740 = vunpack.c.l.b16 %v516
        %v741 = vunpack.c.l.b16 %v517
        %v742 = vunpack.c.l.b16 %v518
        %v743 = vunpack.c.l.b16 %v519
        %v744 = vunpack.c.l.b16 %v520
        %v745 = vunpack.c.l.b16 %v521
        %v746 = vunpack.c.l.b16 %v522
        %v747 = vunpack.c.l.b16 %v523
        %v748 = vunpack.c.l.b16 %v524
        %v749 = vunpack.c.l.b16 %v525
        %v750 = vunpack.c.l.b16 %v526
        %v751 = vunpack.c.l.b16 %v527
        %v752 = vunpack.c.l.b16 %v528
        %v753 = vunpack.c.l.b16 %v529
        %v754 = vunpack.c.l.b16 %v530
        %v755 = vunpack.c.l.b16 %v531
        %v756 = vunpack.c.l.b16 %v532
        %v757 = vunpack.c.l.b16 %v533
        %v758 = vunpack.c.l.b16 %v534
        %v759 = vunpack.c.l.b16 %v535
        %v760 = vunpack.c.l.b16 %v536
        %v761 = vunpack.c.l.b16 %v537
        %v762 = vunpack.c.l.b16 %v538
        %v763 = vunpack.c.l.b16 %v539
        %v764 = vunpack.c.l.b16 %v540
        %v765 = vunpack.c.l.b16 %v541
        %v766 = vunpack.c.l.b16 %v542
        %v767 = vunpack.c.l.b16 %v543
        %v768 = vunpack.c.l.b16 %v544
        %v769 = vpack.c.b16 %v738, %v737
        %v770 = vpack.c.b16 %v740, %v739
        %v771 = vpack.c.b16 %v742, %v741
        %v772 = vpack.c.b16 %v744, %v743
        %v773 = vpack.c.b16 %v746, %v745
        %v774 = vpack.c.b16 %v748, %v747
        %v775 = vpack.c.b16 %v750, %v749
        %v776 = vpack.c.b16 %v752, %v751
        %v777 = vpack.c.b16 %v754, %v753
        %v778 = vpack.c.b16 %v756, %v755
        %v779 = vpack.c.b16 %v758, %v757
        %v780 = vpack.c.b16 %v760, %v759
        %v781 = vpack.c.b16 %v762, %v761
        %v782 = vpack.c.b16 %v764, %v763
        %v783 = vpack.c.b16 %v766, %v765
        %v784 = vpack.c.b16 %v768, %v767
        %801 = vmatprep.subr.bf16.mxu0 0
        %802 = vmatpush1.bf16.msra.mxu0 %v769
        %803 = vmatprep.subr.bf16.mxu0 0
        %804 = vmatpush1.bf16.msra.mxu0 %v770
        %805 = vmatprep.subr.bf16.mxu0 0
        %806 = vmatpush1.bf16.msra.mxu0 %v771
        %807 = vmatprep.subr.bf16.mxu0 0
        %808 = vmatpush1.bf16.msra.mxu0 %v772
        %809 = vmatprep.subr.bf16.mxu0 0
        %810 = vmatpush1.bf16.msra.mxu0 %v773
        %811 = vmatprep.subr.bf16.mxu0 0
        %812 = vmatpush1.bf16.msra.mxu0 %v774
        %813 = vmatprep.subr.bf16.mxu0 0
        %814 = vmatpush1.bf16.msra.mxu0 %v775
        %815 = vmatprep.subr.bf16.mxu0 0
        %816 = vmatpush1.bf16.msra.mxu0 %v776
        %817 = vmatprep.subr.bf16.mxu0 0
        %818 = vmatpush1.bf16.msra.mxu0 %v777
        %819 = vmatprep.subr.bf16.mxu0 0
        %820 = vmatpush1.bf16.msra.mxu0 %v778
        %821 = vmatprep.subr.bf16.mxu0 0
        %822 = vmatpush1.bf16.msra.mxu0 %v779
        %823 = vmatprep.subr.bf16.mxu0 0
        %824 = vmatpush1.bf16.msra.mxu0 %v780
        %825 = vmatprep.subr.bf16.mxu0 0
        %826 = vmatpush1.bf16.msra.mxu0 %v781
        %827 = vmatprep.subr.bf16.mxu0 0
        %828 = vmatpush1.bf16.msra.mxu0 %v782
        %829 = vmatprep.subr.bf16.mxu0 0
        %830 = vmatpush1.bf16.msra.mxu0 %v783
        %831 = vmatprep.subr.bf16.mxu0 0
        %832 = vmatpush1.bf16.msra.mxu0 %v784
        %833 = vmatprep.mubr.bf16.mxu0 %v642
        %834 = vmatmul.mubr.bf16.gmra.mrb[0].mxu0 %v641
        %v835 = vpop.f32.mrb[0].mxu0
        %v836 = vadd.f32 0.0, %v835
        %v837 = vpop.f32.mrb[0].mxu0
        %v838 = vpop.f32.mrb[0].mxu0
        %v839 = vadd.f32 0.0, %v838
        %v840 = vpop.f32.mrb[0].mxu0
        %841 = vmatprep.mubr.bf16.mxu0 %v644
        %842 = vmatmul.mubr.bf16.gmra.mrb[0].mxu0 %v643
        %v843 = vpop.f32.mrb[0].mxu0
        %v844 = vadd.f32 0.0, %v843
        %v845 = vpop.f32.mrb[0].mxu0
        %v846 = vpop.f32.mrb[0].mxu0
        %v847 = vadd.f32 0.0, %v846
        %v848 = vpop.f32.mrb[0].mxu0
        %849 = vmatprep.mubr.bf16.mxu0 %v646
        %850 = vmatmul.mubr.bf16.gmra.mrb[0].mxu0 %v645
        %v851 = vpop.f32.mrb[0].mxu0
        %v852 = vadd.f32 0.0, %v851
        %v853 = vpop.f32.mrb[0].mxu0
        %v854 = vpop.f32.mrb[0].mxu0
        %v855 = vadd.f32 0.0, %v854
        %v856 = vpop.f32.mrb[0].mxu0
        %857 = vmatprep.mubr.bf16.mxu0 %v648
        %858 = vmatmul.mubr.bf16.gmra.mrb[0].mxu0 %v647
        %v859 = vpop.f32.mrb[0].mxu0
        %v860 = vadd.f32 0.0, %v859
        %v861 = vpop.f32.mrb[0].mxu0
        %v862 = vpop.f32.mrb[0].mxu0
        %v863 = vadd.f32 0.0, %v862
        %v864 = vpop.f32.mrb[0].mxu0
        %865 = vmatprep.mubr.bf16.mxu0 %v650
        %866 = vmatmul.mubr.bf16.gmra.mrb[0].mxu0 %v649
        %v867 = vpop.f32.mrb[0].mxu0
        %v868 = vadd.f32 0.0, %v867
        %v869 = vpop.f32.mrb[0].mxu0
        %v870 = vpop.f32.mrb[0].mxu0
        %v871 = vadd.f32 0.0, %v870
        %v872 = vpop.f32.mrb[0].mxu0
        %873 = vmatprep.mubr.bf16.mxu0 %v652
        %874 = vmatmul.mubr.bf16.gmra.mrb[0].mxu0 %v651
        %v875 = vpop.f32.mrb[0].mxu0
        %v876 = vadd.f32 0.0, %v875
        %v877 = vpop.f32.mrb[0].mxu0
        %v878 = vpop.f32.mrb[0].mxu0
        %v879 = vadd.f32 0.0, %v878
        %v880 = vpop.f32.mrb[0].mxu0
        %881 = vmatprep.mubr.bf16.mxu0 %v654
        %882 = vmatmul.mubr.bf16.gmra.mrb[0].mxu0 %v653
        %v883 = vpop.f32.mrb[0].mxu0
        %v884 = vadd.f32 0.0, %v883
        %v885 = vpop.f32.mrb[0].mxu0
        %v886 = vpop.f32.mrb[0].mxu0
        %v887 = vadd.f32 0.0, %v886
        %v888 = vpop.f32.mrb[0].mxu0
        %889 = vmatprep.mubr.bf16.mxu0 %v656
        %890 = vmatmul.mubr.bf16.gmra.mrb[0].mxu0 %v655
        %v891 = vpop.f32.mrb[0].mxu0
        %v892 = vadd.f32 0.0, %v891
        %v893 = vpop.f32.mrb[0].mxu0
        %v894 = vpop.f32.mrb[0].mxu0
        %v895 = vadd.f32 0.0, %v894
        %v896 = vpop.f32.mrb[0].mxu0
        %897 = vmatprep.mubr.bf16.mxu0 %v658
        %898 = vmatmul.mubr.bf16.gmra.mrb[0].mxu0 %v657
        %v899 = vpop.f32.mrb[0].mxu0
        %v900 = vadd.f32 0.0, %v899
        %v901 = vpop.f32.mrb[0].mxu0
        %v902 = vpop.f32.mrb[0].mxu0
        %v903 = vadd.f32 0.0, %v902
        %v904 = vpop.f32.mrb[0].mxu0
        %905 = vmatprep.mubr.bf16.mxu0 %v660
        %906 = vmatmul.mubr.bf16.gmra.mrb[0].mxu0 %v659
        %v907 = vpop.f32.mrb[0].mxu0
        %v908 = vadd.f32 0.0, %v907
        %v909 = vpop.f32.mrb[0].mxu0
        %v910 = vpop.f32.mrb[0].mxu0
        %v911 = vadd.f32 0.0, %v910
        %v912 = vpop.f32.mrb[0].mxu0
        %913 = vmatprep.mubr.bf16.mxu0 %v662
        %914 = vmatmul.mubr.bf16.gmra.mrb[0].mxu0 %v661
        %v915 = vpop.f32.mrb[0].mxu0
        %v916 = vadd.f32 0.0, %v915
        %v917 = vpop.f32.mrb[0].mxu0
        %v918 = vpop.f32.mrb[0].mxu0
        %v919 = vadd.f32 0.0, %v918
        %v920 = vpop.f32.mrb[0].mxu0
        %921 = vmatprep.mubr.bf16.mxu0 %v664
        %922 = vmatmul.mubr.bf16.gmra.mrb[0].mxu0 %v663
        %v923 = vpop.f32.mrb[0].mxu0
        %v924 = vadd.f32 0.0, %v923
        %v925 = vpop.f32.mrb[0].mxu0
        %v926 = vpop.f32.mrb[0].mxu0
        %v927 = vadd.f32 0.0, %v926
        %v928 = vpop.f32.mrb[0].mxu0
        %929 = vmatprep.mubr.bf16.mxu0 %v666
        %930 = vmatmul.mubr.bf16.gmra.mrb[0].mxu0 %v665
        %v931 = vpop.f32.mrb[0].mxu0
        %v932 = vadd.f32 0.0, %v931
        %v933 = vpop.f32.mrb[0].mxu0
        %v934 = vpop.f32.mrb[0].mxu0
        %v935 = vadd.f32 0.0, %v934
        %v936 = vpop.f32.mrb[0].mxu0
        %937 = vmatprep.mubr.bf16.mxu0 %v668
        %938 = vmatmul.mubr.bf16.gmra.mrb[0].mxu0 %v667
        %v939 = vpop.f32.mrb[0].mxu0
        %v940 = vadd.f32 0.0, %v939
        %v941 = vpop.f32.mrb[0].mxu0
        %v942 = vpop.f32.mrb[0].mxu0
        %v943 = vadd.f32 0.0, %v942
        %v944 = vpop.f32.mrb[0].mxu0
        %945 = vmatprep.mubr.bf16.mxu0 %v670
        %946 = vmatmul.mubr.bf16.gmra.mrb[0].mxu0 %v669
        %v947 = vpop.f32.mrb[0].mxu0
        %v948 = vadd.f32 0.0, %v947
        %v949 = vpop.f32.mrb[0].mxu0
        %v950 = vpop.f32.mrb[0].mxu0
        %v951 = vadd.f32 0.0, %v950
        %v952 = vpop.f32.mrb[0].mxu0
        %953 = vmatprep.mubr.bf16.mxu0 %v672
        %954 = vmatmul.mubr.bf16.gmra.mrb[0].mxu0 %v671
        %v955 = vpop.f32.mrb[0].mxu0
        %v956 = vadd.f32 0.0, %v955
        %v957 = vpop.f32.mrb[0].mxu0
        %v958 = vpop.f32.mrb[0].mxu0
        %v959 = vadd.f32 0.0, %v958
        %v960 = vpop.f32.mrb[0].mxu0
        %961 = vdwg.mxu0
        %v962 = vadd.f32 %v449, %v836
        %v963 = vadd.f32 %v450, %v839
        %v964 = vadd.f32 %v451, %v844
        %v965 = vadd.f32 %v452, %v847
        %v966 = vadd.f32 %v453, %v852
        %v967 = vadd.f32 %v454, %v855
        %v968 = vadd.f32 %v455, %v860
        %v969 = vadd.f32 %v456, %v863
        %v970 = vadd.f32 %v457, %v868
        %v971 = vadd.f32 %v458, %v871
        %v972 = vadd.f32 %v459, %v876
        %v973 = vadd.f32 %v460, %v879
        %v974 = vadd.f32 %v461, %v884
        %v975 = vadd.f32 %v462, %v887
        %v976 = vadd.f32 %v463, %v892
        %v977 = vadd.f32 %v464, %v895
        %v978 = vadd.f32 %v465, %v900
        %v979 = vadd.f32 %v466, %v903
        %v980 = vadd.f32 %v467, %v908
        %v981 = vadd.f32 %v468, %v911
        %v982 = vadd.f32 %v469, %v916
        %v983 = vadd.f32 %v470, %v919
        %v984 = vadd.f32 %v471, %v924
        %v985 = vadd.f32 %v472, %v927
        %v986 = vadd.f32 %v473, %v932
        %v987 = vadd.f32 %v474, %v935
        %v988 = vadd.f32 %v475, %v940
        %v989 = vadd.f32 %v476, %v943
        %v990 = vadd.f32 %v477, %v948
        %v991 = vadd.f32 %v478, %v951
        %v992 = vadd.f32 %v479, %v956
        %v993 = vadd.f32 %v480, %v959
        %994 = vst [vmem:[#allocation2] sm:$0xff] %v962
        %995 = vst [vmem:[#allocation2 + $0x8] sm:$0xff] %v963
        %996 = vst [vmem:[#allocation2 + $0x10] sm:$0xff] %v964
        %997 = vst [vmem:[#allocation2 + $0x18] sm:$0xff] %v965
        %998 = vst [vmem:[#allocation2 + $0x20] sm:$0xff] %v966
        %999 = vst [vmem:[#allocation2 + $0x28] sm:$0xff] %v967
        %1000 = vst [vmem:[#allocation2 + $0x30] sm:$0xff] %v968
        %1001 = vst [vmem:[#allocation2 + $0x38] sm:$0xff] %v969
        %1002 = vst [vmem:[#allocation2 + $0x40] sm:$0xff] %v970
        %1003 = vst [vmem:[#allocation2 + $0x48] sm:$0xff] %v971
        %1004 = vst [vmem:[#allocation2 + $0x50] sm:$0xff] %v972
        %1005 = vst [vmem:[#allocation2 + $0x58] sm:$0xff] %v973
        %1006 = vst [vmem:[#allocation2 + $0x60] sm:$0xff] %v974
        %1007 = vst [vmem:[#allocation2 + $0x68] sm:$0xff] %v975
        %1008 = vst [vmem:[#allocation2 + $0x70] sm:$0xff] %v976
        %1009 = vst [vmem:[#allocation2 + $0x78] sm:$0xff] %v977
        %1010 = vst [vmem:[#allocation2 + $0x80] sm:$0xff] %v978
        %1011 = vst [vmem:[#allocation2 + $0x88] sm:$0xff] %v979
        %1012 = vst [vmem:[#allocation2 + $0x90] sm:$0xff] %v980
        %1013 = vst [vmem:[#allocation2 + $0x98] sm:$0xff] %v981
        %1014 = vst [vmem:[#allocation2 + $0xa0] sm:$0xff] %v982
        %1015 = vst [vmem:[#allocation2 + $0xa8] sm:$0xff] %v983
        %1016 = vst [vmem:[#allocation2 + $0xb0] sm:$0xff] %v984
        %1017 = vst [vmem:[#allocation2 + $0xb8] sm:$0xff] %v985
        %1018 = vst [vmem:[#allocation2 + $0xc0] sm:$0xff] %v986
        %1019 = vst [vmem:[#allocation2 + $0xc8] sm:$0xff] %v987
        %1020 = vst [vmem:[#allocation2 + $0xd0] sm:$0xff] %v988
        %1021 = vst [vmem:[#allocation2 + $0xd8] sm:$0xff] %v989
        %1022 = vst [vmem:[#allocation2 + $0xe0] sm:$0xff] %v990
        %1023 = vst [vmem:[#allocation2 + $0xe8] sm:$0xff] %v991
        %1024 = vst [vmem:[#allocation2 + $0xf0] sm:$0xff] %v992
        %1025 = vst [vmem:[#allocation2 + $0xf8] sm:$0xff] %v993
        %p1026 = scmp.eq.s32.totalorder %s21, 12
        // Predicated region
        $region75: #{net_forward.38} parent=65 // pred_check
          %p1027 = pneg %p1026
        $region76: #{net_forward.38} parent=65 // pred_check_branch
          %1029 = sbr.rel (%p1027) target = $region78
        $region77: #{net_forward.38} parent=65 // pred_region
          %v1030 = vld [vmem:[#allocation2] sm:$0xff]
          %v1031 = vld [vmem:[#allocation2 + $0x8] sm:$0xff]
          %v1032 = vld [vmem:[#allocation2 + $0x10] sm:$0xff]
          %v1033 = vld [vmem:[#allocation2 + $0x18] sm:$0xff]
          %v1034 = vld [vmem:[#allocation2 + $0x20] sm:$0xff]
          %v1035 = vld [vmem:[#allocation2 + $0x28] sm:$0xff]
          %v1036 = vld [vmem:[#allocation2 + $0x30] sm:$0xff]
          %v1037 = vld [vmem:[#allocation2 + $0x38] sm:$0xff]
          %v1038 = vld [vmem:[#allocation2 + $0x40] sm:$0xff]
          %v1039 = vld [vmem:[#allocation2 + $0x48] sm:$0xff]
          %v1040 = vld [vmem:[#allocation2 + $0x50] sm:$0xff]
          %v1041 = vld [vmem:[#allocation2 + $0x58] sm:$0xff]
          %v1042 = vld [vmem:[#allocation2 + $0x60] sm:$0xff]
          %v1043 = vld [vmem:[#allocation2 + $0x68] sm:$0xff]
          %v1044 = vld [vmem:[#allocation2 + $0x70] sm:$0xff]
          %v1045 = vld [vmem:[#allocation2 + $0x78] sm:$0xff]
          %v1046 = vld [vmem:[#allocation2 + $0x80] sm:$0xff]
          %v1047 = vld [vmem:[#allocation2 + $0x88] sm:$0xff]
          %v1048 = vld [vmem:[#allocation2 + $0x90] sm:$0xff]
          %v1049 = vld [vmem:[#allocation2 + $0x98] sm:$0xff]
          %v1050 = vld [vmem:[#allocation2 + $0xa0] sm:$0xff]
          %v1051 = vld [vmem:[#allocation2 + $0xa8] sm:$0xff]
          %v1052 = vld [vmem:[#allocation2 + $0xb0] sm:$0xff]
          %v1053 = vld [vmem:[#allocation2 + $0xb8] sm:$0xff]
          %v1054 = vld [vmem:[#allocation2 + $0xc0] sm:$0xff]
          %v1055 = vld [vmem:[#allocation2 + $0xc8] sm:$0xff]
          %v1056 = vld [vmem:[#allocation2 + $0xd0] sm:$0xff]
          %v1057 = vld [vmem:[#allocation2 + $0xd8] sm:$0xff]
          %v1058 = vld [vmem:[#allocation2 + $0xe0] sm:$0xff]
          %v1059 = vld [vmem:[#allocation2 + $0xe8] sm:$0xff]
          %v1060 = vld [vmem:[#allocation2 + $0xf0] sm:$0xff]
          %v1061 = vld [vmem:[#allocation2 + $0xf8] sm:$0xff]
          %v1062 = vld [vmem:[%s402] sm:$0x1]
          %v1064 = vlaneseq
          %v1065 = vshrl.u32 %v1064, 7
          %v1066 = vsub.s32 0, %v1065
          %v1067 = vrot.slane %v1062, %v1066
          %v1069 = vadd.f32 %v1030, %v1067
          %v1070 = vadd.f32 %v1031, %v1067
          %v1071 = vadd.f32 %v1032, %v1067
          %v1072 = vadd.f32 %v1033, %v1067
          %v1073 = vadd.f32 %v1034, %v1067
          %v1074 = vadd.f32 %v1035, %v1067
          %v1075 = vadd.f32 %v1036, %v1067
          %v1076 = vadd.f32 %v1037, %v1067
          %v1077 = vadd.f32 %v1038, %v1067
          %v1078 = vadd.f32 %v1039, %v1067
          %v1079 = vadd.f32 %v1040, %v1067
          %v1080 = vadd.f32 %v1041, %v1067
          %v1081 = vadd.f32 %v1042, %v1067
          %v1082 = vadd.f32 %v1043, %v1067
          %v1083 = vadd.f32 %v1044, %v1067
          %v1084 = vadd.f32 %v1045, %v1067
          %v1085 = vadd.f32 %v1046, %v1067
          %v1086 = vadd.f32 %v1047, %v1067
          %v1087 = vadd.f32 %v1048, %v1067
          %v1088 = vadd.f32 %v1049, %v1067
          %v1089 = vadd.f32 %v1050, %v1067
          %v1090 = vadd.f32 %v1051, %v1067
          %v1091 = vadd.f32 %v1052, %v1067
          %v1092 = vadd.f32 %v1053, %v1067
          %v1093 = vadd.f32 %v1054, %v1067
          %v1094 = vadd.f32 %v1055, %v1067
          %v1095 = vadd.f32 %v1056, %v1067
          %v1096 = vadd.f32 %v1057, %v1067
          %v1097 = vadd.f32 %v1058, %v1067
          %v1098 = vadd.f32 %v1059, %v1067
          %v1099 = vadd.f32 %v1060, %v1067
          %v1100 = vadd.f32 %v1061, %v1067
          %1101 = vst [vmem:[%s410] sm:$0xff] %v1069
          %1102 = vst [vmem:[%s410 + $0x8] sm:$0xff] %v1070
          %1103 = vst [vmem:[%s410 + $0x10] sm:$0xff] %v1071
          %1104 = vst [vmem:[%s410 + $0x18] sm:$0xff] %v1072
          %1105 = vst [vmem:[%s410 + $0x20] sm:$0xff] %v1073
          %1106 = vst [vmem:[%s410 + $0x28] sm:$0xff] %v1074
          %1107 = vst [vmem:[%s410 + $0x30] sm:$0xff] %v1075
          %1108 = vst [vmem:[%s410 + $0x38] sm:$0xff] %v1076
          %1109 = vst [vmem:[%s410 + $0x40] sm:$0xff] %v1077
          %1110 = vst [vmem:[%s410 + $0x48] sm:$0xff] %v1078
          %1111 = vst [vmem:[%s410 + $0x50] sm:$0xff] %v1079
          %1112 = vst [vmem:[%s410 + $0x58] sm:$0xff] %v1080
          %1113 = vst [vmem:[%s410 + $0x60] sm:$0xff] %v1081
          %1114 = vst [vmem:[%s410 + $0x68] sm:$0xff] %v1082
          %1115 = vst [vmem:[%s410 + $0x70] sm:$0xff] %v1083
          %1116 = vst [vmem:[%s410 + $0x78] sm:$0xff] %v1084
          %1117 = vst [vmem:[%s410 + $0x80] sm:$0xff] %v1085
          %1118 = vst [vmem:[%s410 + $0x88] sm:$0xff] %v1086
          %1119 = vst [vmem:[%s410 + $0x90] sm:$0xff] %v1087
          %1120 = vst [vmem:[%s410 + $0x98] sm:$0xff] %v1088
          %1121 = vst [vmem:[%s410 + $0xa0] sm:$0xff] %v1089
          %1122 = vst [vmem:[%s410 + $0xa8] sm:$0xff] %v1090
          %1123 = vst [vmem:[%s410 + $0xb0] sm:$0xff] %v1091
          %1124 = vst [vmem:[%s410 + $0xb8] sm:$0xff] %v1092
          %1125 = vst [vmem:[%s410 + $0xc0] sm:$0xff] %v1093
          %1126 = vst [vmem:[%s410 + $0xc8] sm:$0xff] %v1094
          %1127 = vst [vmem:[%s410 + $0xd0] sm:$0xff] %v1095
          %1128 = vst [vmem:[%s410 + $0xd8] sm:$0xff] %v1096
          %1129 = vst [vmem:[%s410 + $0xe0] sm:$0xff] %v1097
          %1130 = vst [vmem:[%s410 + $0xe8] sm:$0xff] %v1098
          %1131 = vst [vmem:[%s410 + $0xf0] sm:$0xff] %v1099
          %1132 = vst [vmem:[%s410 + $0xf8] sm:$0xff] %v1100
        $region78: #{net_forward.38} parent=65 // pred_fallthru
          _
        %s1133 = smul.u32 32, %s19
        %p1134 = scmp.lt.s32.totalorder %s1133, 63
        %s1135 = scalar_select %p1134, %s1133, 63
        %p1136 = scmp.lt.s32.totalorder %s20, 0
        %s1137 = scalar_select %p1136, %s20, 0
        %s1138 = sadd.s32 %s1137, %s1135
        %s1139 = smul.addr %s1138, 8
        %s1140 = scalar_lea.vmem %s3, %s1139
        // Predicated region
        $region79: #{net_forward.38} parent=65 // pred_check
          %p1141 = pneg %p135
        $region80: #{net_forward.38} parent=65 // pred_check_branch
          %1143 = sbr.rel (%p1141) target = $region82
        $region81: #{net_forward.38} parent=65 // pred_region
          %s1144 = smul.u32 32, %s19
        $region82: #{net_forward.38} parent=65 // pred_fallthru
          _
      $region66: #{net_forward.38} parent=5 // pred_fallthru
        _
      %p1145 = scmp.le.s32.totalorder 2, %s9
      // Predicated region
      $region83: #{net_forward.38} parent=5 // pred_check
        %p1146 = pneg %p1145
      $region84: #{net_forward.38} parent=5 // pred_check_branch
        %1148 = sbr.rel (%p1146) target = $region86
      $region85: #{net_forward.38} parent=5 // pred_region
        %s1149 = ssub.s32 %s9, 2
        // Predicated region
        $region87: #{net_forward.38} parent=85 // pred_check
          %p1150 = pneg %p141
        $region88: #{net_forward.38} parent=85 // pred_check_branch
          %1152 = sbr.rel (%p1150) target = $region90
        $region89: #{net_forward.38} parent=85 // pred_region
          %s1153 = smul.u32 32, %s22
          %p1154 = scmp.lt.s32.totalorder %s1153, 63
          %s1155 = scalar_select %p1154, %s1153, 63
          %p1156 = scmp.lt.s32.totalorder %s23, 0
          %s1157 = scalar_select %p1156, %s23, 0
          %s1158 = sadd.s32 %s1157, %s1155
          %s1159 = smul.addr %s1158, 8
          %s1160 = scalar_lea.vmem %s3, %s1159
        $region90: #{net_forward.38} parent=85 // pred_fallthru
          _
      $region86: #{net_forward.38} parent=5 // pred_fallthru
        _
    $region6: #{net_forward.38} parent=1 // loop_footer
      %s13 = sadd.s32 1, %s9
    $region7: #{net_forward.38} parent=1 // loop_footer_branch
      %8 = sbr.rel target = $region3
    $region8: #{net_forward.38} parent=1 // loop_exit
      _

// kernel: net_forward.39
$region0: #{net_forward.39}
  #allocation0 [shape = 'u32[]', space=smem, size = 0x4, offset = 0x4, fixed_abs, tag = 'smem constant byte address 0x4 - core index']
  #allocation1 [shape = 'u32[144,128]{1,0:T(1,128)}', space=vmem, size = 0x12000, scoped, tag = 'internal scratch']
  %s0 = inlined_call_operand.vmem [shape: f32[2,3,256], index: 0, kind: input, shape index: {}]
  %s1 = inlined_call_operand.vmem [shape: f32[2,256], index: 1, kind: input, shape index: {}]
  %s2 = inlined_call_operand.vmem [shape: f32[1,2], index: 2, kind: input, shape index: {}]
  %s3 = inlined_call_operand.vmem [shape: f32[2,3,2], index: 3, kind: output, shape index: {}]
  %s4 = sld [smem:[#allocation0]]
  $region22: #{net_forward.39} parent=0
    _
  %s6 = ssub.s32 1, %s4
  %s7 = scalar_select 0, %s6, %s4
  // Predicated region
  $region2: #{net_forward.39} parent=0 // pred_check
    _
  $region3: #{net_forward.39} parent=0 // pred_check_branch
    %9 = sbr.rel (0) target = $region5
  $region4: #{net_forward.39} parent=0 // pred_region
    _
  $region5: #{net_forward.39} parent=0 // pred_fallthru
    _
  // Predicated region
  $region6: #{net_forward.39} parent=0 // pred_check
    _
  $region7: #{net_forward.39} parent=0 // pred_check_branch
    %11 = sbr.rel (0) target = $region9
  $region8: #{net_forward.39} parent=0 // pred_region
    _
  $region9: #{net_forward.39} parent=0 // pred_fallthru
    _
  // Predicated region
  $region10: #{net_forward.39} parent=0 // pred_check
    _
  $region11: #{net_forward.39} parent=0 // pred_check_branch
    %13 = sbr.rel (0) target = $region13
  $region12: #{net_forward.39} parent=0 // pred_region
    _
  $region13: #{net_forward.39} parent=0 // pred_fallthru
    _
  %v14 = vld [vmem:[%s1] sm:$0xf]
  %v15 = vld [vmem:[%s2] sm:$0x1]
  %v16 = vld [vmem:[%s0] sm:$0x77]
  %v18 = vlaneseq
  %v19 = vshrl.u32 %v18, 7
  %v20 = vsub.s32 0, %v19
  %v21 = vrot.slane %v14, %v20
  %v22 = vlaneseq
  %v23 = vshrl.u32 %v22, 7
  %v24 = vsub.s32 2, %v23
  %v25 = vrot.slane %v14, %v24
  %v28 = vlaneseq
  %v29 = vshrl.u32 %v28, 7
  %v30 = vsub.s32 0, %v29
  %v31 = vrot.slane %v21, %v30
  %v32 = vlaneseq
  %v33 = vshrl.u32 %v32, 7
  %v34 = vsub.s32 0, %v33
  %v35 = vrot.slane %v25, %v34
  %v38 = vcombine.low %v31, %v35
  %v40 = vmul.f32 %v16, %v38
  %v42 = vcombine.high %v40, %v40
  %vm44 = vcmask 1042432
  %v45 = vsel %vm44, %v40, 0.0
  %v46 = vsel %vm44, %v42, 0.0
  %v47 = vadd.f32 %v45, %v46
  %48 = vadd.xlane.f32.xlu0 %v47
  %v49 = vpop.xlane.xlu0 %48
  %v50 = vlaneseq
  %v51 = vshrl.u32 %v50, 7
  %v52 = vsub.s32 1, %v51
  %v53 = vrot.slane %v14, %v52
  %v54 = vlaneseq
  %v55 = vshrl.u32 %v54, 7
  %v56 = vsub.s32 3, %v55
  %v57 = vrot.slane %v14, %v56
  %v60 = vlaneseq
  %v61 = vshrl.u32 %v60, 7
  %v62 = vsub.s32 1, %v61
  %v63 = vrot.slane %v53, %v62
  %v64 = vlaneseq
  %v65 = vshrl.u32 %v64, 7
  %v66 = vsub.s32 1, %v65
  %v67 = vrot.slane %v57, %v66
  %v70 = vcombine.low %v63, %v67
  %v72 = vmul.f32 %v16, %v70
  %v74 = vcombine.high %v72, %v72
  %v76 = vsel %vm44, %v72, 0.0
  %v77 = vsel %vm44, %v74, 0.0
  %v78 = vadd.f32 %v76, %v77
  %79 = vadd.xlane.f32.xlu0 %v78
  %v80 = vpop.xlane.xlu0 %79
  %vm81 = vcmask 7168
  %v82 = vsel %vm81, %v49, %v80
  %v84 = vlaneseq
  %v85 = vshrl.u32 %v84, 7
  %v86 = vsub.s32 0, %v85
  %v87 = vrot.slane %v15, %v86
  %v89 = vadd.f32 %v82, %v87
  %v90 = vtanh.pop %v89
  %s91 = scalar_lea.vmem %s0, 8
  %v92 = vld [vmem:[%s91] sm:$0x77]
  %v93 = vmul.f32 %v92, %v38
  %v95 = vcombine.high %v93, %v93
  %v97 = vsel %vm44, %v93, 0.0
  %v98 = vsel %vm44, %v95, 0.0
  %v99 = vadd.f32 %v97, %v98
  %100 = vadd.xlane.f32.xlu0 %v99
  %v101 = vpop.xlane.xlu0 %100
  %v102 = vmul.f32 %v92, %v70
  %v104 = vcombine.high %v102, %v102
  %v106 = vsel %vm44, %v102, 0.0
  %v107 = vsel %vm44, %v104, 0.0
  %v108 = vadd.f32 %v106, %v107
  %109 = vadd.xlane.f32.xlu0 %v108
  %v110 = vpop.xlane.xlu0 %109
  %v111 = vsel %vm81, %v101, %v110
  %v112 = vadd.f32 %v111, %v87
  %v113 = vtanh.pop %v112
  %v114 = vmax.f32 %v90, %v113
  %v115 = vsub.f32 %v90, %v114
  %v116 = vmul.f32 %v115, 1.442695
  %v117 = vpow.pop %v116
  %v118 = vadd.f32 %v117, 0.0
  %v119 = vsub.f32 %v113, %v114
  %v120 = vmul.f32 %v119, 1.442695
  %v121 = vpow.pop %v120
  %v122 = vadd.f32 %v118, %v121
  %v123 = vlog2.pop %v122
  %v124 = vmul.f32 %v123, 0.6931472
  %v125 = vadd.f32 %v114, %v124
  %v126 = vsub.f32 %v90, %v125
  %vm127 = vcmask 10240
  %128 = vst.msk [vmem:[%s3] sm:$0x7] %vm127, %v126
  %v129 = vsub.f32 %v113, %v125
  %s130 = scalar_lea.vmem %s3, 4
  %131 = vst.msk [vmem:[%s130] sm:$0x7] %vm127, %v129
  // Predicated region
  $region14: #{net_forward.39} parent=0 // pred_check
    _
  $region15: #{net_forward.39} parent=0 // pred_check_branch
    %133 = sbr.rel (0) target = $region17
  $region16: #{net_forward.39} parent=0 // pred_region
    _
  $region17: #{net_forward.39} parent=0 // pred_fallthru
    _
  // Predicated region
  $region18: #{net_forward.39} parent=0 // pred_check
    _
  $region19: #{net_forward.39} parent=0 // pred_check_branch
    %135 = sbr.rel (0) target = $region21
  $region20: #{net_forward.39} parent=0 // pred_region
    _
  $region21: #{net_forward.39} parent=0 // pred_fallthru
    _

</llo_original>
